<compile_context>
chip_gen: v7x
topology: tpu7x:2x2x1
jax: 0.10.0
libtpu: 0.0.40
codegen_flags: <defaults>
</compile_context>

<pallas_src>
import functools

import jax
import jax.numpy as jnp
from jax import lax
from jax.experimental import pallas as pl
from jax.experimental.pallas import tpu as pltpu


CFG = (32, 'M', 64, 'M', 512, 'M')   # feature config; 8x8 input -> 1x1x512 features
IN_HW = 8
NUM_CLASSES = 10
_OUT_PAD = 128                       # logits padded 10 -> 128 for lane-dense stores


# ------------------------------ static shape helpers ------------------------------ #

def _stages(cfg, in_hw, in_c):
    """Static per-stage dims: ('conv', H, W, Cin, Cout) or ('pool', H, W, C)."""
    h = w = in_hw
    c = in_c
    out = []
    for v in cfg:
        if v == 'M':
            out.append(('pool', h, w, c))
            h //= 2
            w //= 2
        else:
            out.append(('conv', h, w, c, v))
            c = v
    return out, (h, w, c)


def _pick_batch_block(n, target=16):
    """Images per grid step: fill MXU rows, but keep >= 2 grid steps for v7x's 2 TCs."""
    if n <= 1:
        return 1
    return max(1, min(target, (n + 1) // 2))


# ------------------------------ fused Pallas kernel ------------------------------ #

def _make_fused_kernel(stages, n_fc, B):
    conv_stages = [s for s in stages if s[0] == 'conv']
    n_conv = len(conv_stages)

    def kernel(cols_ref, *refs):
        conv_params = refs[:2 * n_conv]
        fc_params = refs[2 * n_conv:2 * n_conv + 2 * n_fc]
        o_ref = refs[2 * n_conv + 2 * n_fc]
        scratches = refs[2 * n_conv + 2 * n_fc + 1:]   # (pad, im2col) per inner conv

        act = None
        conv_i = 0
        sc_i = 0
        for s in stages:
            if s[0] == 'conv':
                _, H, W, Cin, Cout = s
                w_ref = conv_params[2 * conv_i]          # (K, Cout) bf16, tap-major K
                b_ref = conv_params[2 * conv_i + 1]      # (1, Cout) f32
                if conv_i == 0:
                    # First conv: im2col done in the wrapper -> single (B*H*W, 32)x(32, Cout) dot.
                    lhs = cols_ref[0]
                else:
                    # Inner conv: build a (B*H*W, 9*Cin) im2col block in VMEM, one big-K dot.
                    pad_ref = scratches[sc_i]
                    im2col_ref = scratches[sc_i + 1]
                    sc_i += 2
                    # Zero only the 1-wide halo border; interior is fully overwritten below.
                    zr = jnp.zeros((B, 1, W + 2, Cin), jnp.bfloat16)
                    zc = jnp.zeros((B, H + 2, 1, Cin), jnp.bfloat16)
                    pad_ref[:, 0:1, :, :] = zr
                    pad_ref[:, H + 1:H + 2, :, :] = zr
                    pad_ref[:, :, 0:1, :] = zc
                    pad_ref[:, :, W + 1:W + 2, :] = zc
                    pad_ref[:, 1:1 + H, 1:1 + W, :] = act.astype(jnp.bfloat16)
                    for t in range(9):
                        dy, dx = divmod(t, 3)
                        tap = pad_ref[:, dy:dy + H, dx:dx + W, :].reshape(B * H * W, Cin)
                        im2col_ref[:, t * Cin:(t + 1) * Cin] = tap
                    lhs = im2col_ref[...]
                acc = jnp.dot(lhs, w_ref[...], preferred_element_type=jnp.float32)
                # Bias + ReLU in f32 (VPU path; v5e has no bf16 VALU).
                act = jnp.maximum(acc + b_ref[...], 0.0).reshape(B, H, W, Cout)
                conv_i += 1
            else:
                # Vectorized 2x2 max-pool, stride 2 (no scalar per-element stores).
                _, H, W, C = s
                a = act.reshape(B, H, W // 2, 2, C)
                a = jnp.maximum(a[:, :, :, 0, :], a[:, :, :, 1, :])     # pool along W
                a = a.reshape(B, H // 2, 2, W // 2, C)
                act = jnp.maximum(a[:, :, 0], a[:, :, 1])               # pool along H

        # Classifier: Dropout -> Linear -> ReLU -> Dropout -> Linear -> ReLU -> Linear
        # TODO(synk): nn.Dropout is stochastic in train mode; treated as identity (eval mode).
        h = act.reshape(B, act.shape[-1])                               # (B, 512) f32
        for i in range(n_fc):
            w_ref = fc_params[2 * i]
            b_ref = fc_params[2 * i + 1]
            h = jnp.dot(h.astype(jnp.bfloat16), w_ref[...],
                        preferred_element_type=jnp.float32) + b_ref[...]
            if i < n_fc - 1:
                h = jnp.maximum(h, 0.0)
        o_ref[0] = h                                                    # (B, 128) f32, lane-dense

    return kernel


# ------------------------------ wrapper ------------------------------------------ #

def _im2col3x3(x_nhwc):
    """(N, H, W, C) -> (N, H*W, 9*C) patches; tap order ky*3+kx, channels fastest."""
    N, H, W, C = x_nhwc.shape
    xp = jnp.pad(x_nhwc, ((0, 0), (1, 1), (1, 1), (0, 0)))
    taps = [xp[:, dy:dy + H, dx:dx + W, :] for dy in range(3) for dx in range(3)]
    return jnp.concatenate(taps, axis=-1).reshape(N, H * W, 9 * C)


@functools.partial(jax.jit, static_argnames=("cfg", "num_classes", "batch_block"))
def vgg_forward(x_nchw, kconvs, kfcs, *, cfg, num_classes=NUM_CLASSES, batch_block=None):
    N, Cin, H, W = x_nchw.shape
    B = batch_block if batch_block is not None else _pick_batch_block(N)
    G = -(-N // B)                 # grid steps (>= 2 whenever N >= 2)
    N_pad = G * B

    stages, (fh, fw, fcin) = _stages(cfg, H, Cin)
    assert stages and stages[0][0] == 'conv'
    assert fh == 1 and fw == 1, "classifier expects a 1x1 final feature map"
    assert fcin == kfcs[0][0].shape[0]
    conv_stages = [s for s in stages if s[0] == 'conv']
    n_fc = len(kfcs)
    ncls_pad = kfcs[-1][0].shape[1]        # padded (128) logits width
    k1p = kconvs[0][0].shape[0]            # padded first-conv K (27 -> 32)
    assert k1p >= 9 * Cin

    # One-time (per call) input prep in XLA: NCHW -> NHWC, im2col, pad K and batch.
    x = jnp.transpose(x_nchw, (0, 2, 3, 1))
    cols = _im2col3x3(x)                                          # (N, H*W, 9*Cin) f32
    cols = jnp.pad(cols, ((0, N_pad - N), (0, 0), (0, k1p - 9 * Cin)))
    cols = cols.astype(jnp.bfloat16).reshape(G, B * H * W, k1p)   # batch-blocked

    flat_params = []
    for w, b in kconvs:
        flat_params += [w, b]
    for w, b in kfcs:
        flat_params += [w, b]

    def full_spec(a):
        # Whole array resident in VMEM; constant block index => no re-fetch per step.
        return pl.BlockSpec(a.shape, lambda g, _z=(0,) * a.ndim: _z)

    in_specs = [pl.BlockSpec((1, B * H * W, k1p), lambda g: (g, 0, 0))]
    in_specs += [full_spec(a) for a in flat_params]

    # Per inner conv: halo-padded activation scratch + (B*H*W, 9*Cin) im2col scratch.
    scratch_shapes = []
    for s in conv_stages[1:]:
        _, ch, cw, cc, _ = s
        scratch_shapes.append(pltpu.VMEM((B, ch + 2, cw + 2, cc), jnp.bfloat16))
        scratch_shapes.append(pltpu.VMEM((B * ch * cw, 9 * cc), jnp.bfloat16))

    # Advisory cost estimate so XLA overlaps surrounding ops with the custom call.
    per_img_flops = sum(2 * s[1] * s[2] * (9 * s[3]) * s[4] for s in conv_stages)
    per_img_flops += sum(2 * int(w.shape[0]) * int(w.shape[1]) for w, _ in kfcs)
    param_bytes = sum(int(p.size) * p.dtype.itemsize for p in flat_params)
    cost = pl.CostEstimate(
        flops=int(N_pad * per_img_flops),
        transcendentals=0,
        bytes_accessed=int(cols.size * cols.dtype.itemsize + param_bytes
                           + N_pad * ncls_pad * 4),
    )

    out = pl.pallas_call(
        _make_fused_kernel(stages, n_fc, B),
        out_shape=jax.ShapeDtypeStruct((G, B, ncls_pad), jnp.float32),
        grid=(G,),
        in_specs=in_specs,
        out_specs=pl.BlockSpec((1, B, ncls_pad), lambda g: (g, 0, 0)),
        scratch_shapes=scratch_shapes,
        compiler_params=pltpu.CompilerParams(dimension_semantics=("parallel",)),
        cost_estimate=cost,
    )(cols, *flat_params)

    return out.reshape(N_pad, ncls_pad)[:N, :num_classes]


# ------------------------------ params ------------------------------------------- #

def init_params(key, cfg, in_channels=3):
    convs = []
    for v in cfg:
        if v == 'M':
            continue
        key, k1 = jax.random.split(key)
        # PyTorch init in VGG.__init__: normal(0, sqrt(2/n)), n = kh*kw*out_channels; bias zero.
        n = 3 * 3 * v
        w = jax.random.normal(k1, (v, in_channels, 3, 3), jnp.float32) * jnp.sqrt(2.0 / n)
        b = jnp.zeros((v,), jnp.float32)
        convs.append((w, b))
        in_channels = v

    def linear(k, fin, fout):
        k1, k2 = jax.random.split(k)
        bound = 1.0 / jnp.sqrt(jnp.float32(fin))
        w = jax.random.uniform(k1, (fout, fin), jnp.float32, -bound, bound)
        b = jax.random.uniform(k2, (fout,), jnp.float32, -bound, bound)
        return w, b

    key, ka, kb, kc = jax.random.split(key, 4)
    fcs = (linear(ka, 512, 512), linear(kb, 512, 512), linear(kc, 512, NUM_CLASSES))
    return convs, fcs


def prepare_kernel_params(convs, fcs):
    """One-time layout prep (hoisted out of the forward):
       conv OIHW -> tap-major (9*Cin, Cout) bf16 (first conv K padded to 32);
       FC weights transposed bf16; last FC padded to 128 output lanes."""
    kconvs = []
    for i, (w, b) in enumerate(convs):
        cout, cin = int(w.shape[0]), int(w.shape[1])
        wk = jnp.transpose(w, (2, 3, 1, 0)).reshape(9 * cin, cout)    # (ky,kx,Cin,Cout) tap-major
        if i == 0:
            k1p = -(-9 * cin // 32) * 32                              # 27 -> 32
            wk = jnp.pad(wk, ((0, k1p - 9 * cin), (0, 0)))
        kconvs.append((wk.astype(jnp.bfloat16), b.reshape(1, cout)))

    kfcs = []
    for j, (w, b) in enumerate(fcs):
        wt = w.T
        bt = b.reshape(1, -1)
        if j == len(fcs) - 1:
            pad = _OUT_PAD - wt.shape[1]
            wt = jnp.pad(wt, ((0, 0), (0, pad)))
            bt = jnp.pad(bt, ((0, 0), (0, pad)))
        kfcs.append((wt.astype(jnp.bfloat16), bt))
    return kconvs, kfcs


# ------------------------------ reference ----------------------------------------- #

def reference_forward(x_nchw, convs, fcs, cfg):
    # Mirrors the kernel's numerics: bf16 matmul operands, f32 accumulation/epilogue.
    x = jnp.transpose(x_nchw, (0, 2, 3, 1))                    # NHWC, f32
    ci = 0
    for v in cfg:
        if v == 'M':
            x = lax.reduce_window(x, -jnp.inf, lax.max, (1, 2, 2, 1), (1, 2, 2, 1), 'VALID')
        else:
            w, b = convs[ci]
            ci += 1
            wk = jnp.transpose(w, (2, 3, 1, 0)).astype(jnp.bfloat16)   # OIHW -> HWIO
            y = lax.conv_general_dilated(
                x.astype(jnp.bfloat16), wk, (1, 1), 'SAME',
                dimension_numbers=('NHWC', 'HWIO', 'NHWC'),
                preferred_element_type=jnp.float32)
            x = jnp.maximum(y + b, 0.0)
    N = x.shape[0]
    feat = jnp.transpose(x, (0, 3, 1, 2)).reshape(N, -1)       # torch x.view(N, -1) order

    def lin(h, w, b):
        return jnp.dot(h.astype(jnp.bfloat16), w.T.astype(jnp.bfloat16),
                       preferred_element_type=jnp.float32) + b

    (w1, b1), (w2, b2), (w3, b3) = fcs
    h = jnp.maximum(lin(feat, w1, b1), 0.0)
    h = jnp.maximum(lin(h, w2, b2), 0.0)
    return lin(h, w3, b3)


if __name__ == "__main__":
    # Small VGG-style feature config; final flattened feature size must be 512 to match
    # the classifier nn.Linear(512, 512).  8x8 input -> 3 maxpools -> 1x1x512.
    cfg = CFG

    key = jax.random.PRNGKey(0)
    kx, kp = jax.random.split(key)
    N = 8                                                       # batch -> B=4 per step, grid=2
    x = jax.random.normal(kx, (N, 3, IN_HW, IN_HW), jnp.float32)   # NCHW, like PyTorch
    convs, fcs = init_params(kp, cfg, in_channels=3)
    kconvs, kfcs = prepare_kernel_params(convs, fcs)            # hoisted layout prep

    out = vgg_forward(x, kconvs, kfcs, cfg=cfg)
    out = jax.block_until_ready(out)

    ref = reference_forward(x, convs, fcs, cfg)
    assert out.shape == (N, NUM_CLASSES), out.shape
    assert jnp.allclose(out, ref, atol=2e-2, rtol=2e-2), (out, ref)

    print("KERNEL_OK")
</pallas_src>

<mosaic_0001>
module attributes {stable_mosaic.version = 11 : i64} {
  func.func @kernel(%arg0: i32, %arg1: memref<1x256x32xbf16, #tpu.memory_space<vmem>>, %arg2: memref<32x32xbf16, #tpu.memory_space<vmem>>, %arg3: memref<1x32xf32, #tpu.memory_space<vmem>>, %arg4: memref<288x64xbf16, #tpu.memory_space<vmem>>, %arg5: memref<1x64xf32, #tpu.memory_space<vmem>>, %arg6: memref<576x512xbf16, #tpu.memory_space<vmem>>, %arg7: memref<1x512xf32, #tpu.memory_space<vmem>>, %arg8: memref<512x512xbf16, #tpu.memory_space<vmem>>, %arg9: memref<1x512xf32, #tpu.memory_space<vmem>>, %arg10: memref<512x512xbf16, #tpu.memory_space<vmem>>, %arg11: memref<1x512xf32, #tpu.memory_space<vmem>>, %arg12: memref<512x128xbf16, #tpu.memory_space<vmem>>, %arg13: memref<1x128xf32, #tpu.memory_space<vmem>>, %arg14: memref<1x4x128xf32, #tpu.memory_space<vmem>>, %arg15: memref<4x6x6x32xbf16, #tpu.memory_space<vmem>>, %arg16: memref<64x288xbf16, #tpu.memory_space<vmem>>, %arg17: memref<4x4x4x64xbf16, #tpu.memory_space<vmem>>, %arg18: memref<16x576xbf16, #tpu.memory_space<vmem>>) attributes {dimension_semantics = [#tpu.dimension_semantics<parallel>], iteration_bounds = array<i64: 2>, scalar_prefetch = 0 : i64, scratch_operands = 4 : i64, tpu.core_type = #tpu.core_type<tc>, window_params = [{transform_indices = @transform_0, window_bounds = array<i64: 1, 256, 32>}, {pipeline_mode = #tpu.pipeline_mode<synchronous>, transform_indices = @transform_1, window_bounds = array<i64: 32, 32>}, {pipeline_mode = #tpu.pipeline_mode<synchronous>, transform_indices = @transform_2, window_bounds = array<i64: 1, 32>}, {pipeline_mode = #tpu.pipeline_mode<synchronous>, transform_indices = @transform_3, window_bounds = array<i64: 288, 64>}, {pipeline_mode = #tpu.pipeline_mode<synchronous>, transform_indices = @transform_4, window_bounds = array<i64: 1, 64>}, {pipeline_mode = #tpu.pipeline_mode<synchronous>, transform_indices = @transform_5, window_bounds = array<i64: 576, 512>}, {pipeline_mode = #tpu.pipeline_mode<synchronous>, transform_indices = @transform_6, window_bounds = array<i64: 1, 512>}, {pipeline_mode = #tpu.pipeline_mode<synchronous>, transform_indices = @transform_7, window_bounds = array<i64: 512, 512>}, {pipeline_mode = #tpu.pipeline_mode<synchronous>, transform_indices = @transform_8, window_bounds = array<i64: 1, 512>}, {pipeline_mode = #tpu.pipeline_mode<synchronous>, transform_indices = @transform_9, window_bounds = array<i64: 512, 512>}, {pipeline_mode = #tpu.pipeline_mode<synchronous>, transform_indices = @transform_10, window_bounds = array<i64: 1, 512>}, {pipeline_mode = #tpu.pipeline_mode<synchronous>, transform_indices = @transform_11, window_bounds = array<i64: 512, 128>}, {pipeline_mode = #tpu.pipeline_mode<synchronous>, transform_indices = @transform_12, window_bounds = array<i64: 1, 128>}, {transform_indices = @transform_13, window_bounds = array<i64: 1, 4, 128>}]} {
    %c0 = arith.constant 0 : index
    %c0_0 = arith.constant 0 : index
    %c0_1 = arith.constant 0 : index
    %0 = vector.load %arg1[%c0, %c0_0, %c0_1] : memref<1x256x32xbf16, #tpu.memory_space<vmem>>, vector<1x256x32xbf16>
    %1 = vector.shape_cast %0 : vector<1x256x32xbf16> to vector<256x32xbf16>
    %c0_2 = arith.constant 0 : index
    %c0_3 = arith.constant 0 : index
    %2 = vector.load %arg2[%c0_2, %c0_3] : memref<32x32xbf16, #tpu.memory_space<vmem>>, vector<32x32xbf16>
    %cst = arith.constant dense<0.000000e+00> : vector<256x32xf32>
    %3 = tpu.matmul %1, %2, %cst {dimension_numbers = #tpu.dot_dimension_numbers<[1], [0], [0], [1], [0, 0, 1, 1], [], []>} : vector<256x32xbf16>, vector<32x32xbf16>, vector<256x32xf32> -> vector<256x32xf32>
    %c0_4 = arith.constant 0 : index
    %c0_5 = arith.constant 0 : index
    %4 = vector.load %arg3[%c0_4, %c0_5] : memref<1x32xf32, #tpu.memory_space<vmem>>, vector<1x32xf32>
    %5 = vector.broadcast %4 : vector<1x32xf32> to vector<256x32xf32>
    %6 = arith.addf %3, %5 : vector<256x32xf32>
    %cst_6 = arith.constant 0.000000e+00 : f32
    %7 = vector.broadcast %cst_6 : f32 to vector<256x32xf32>
    %8 = arith.maximumf %6, %7 : vector<256x32xf32>
    %9 = vector.shape_cast %8 : vector<256x32xf32> to vector<4x8x8x32xf32>
    %10 = vector.shape_cast %9 : vector<4x8x8x32xf32> to vector<4x8x4x2x32xf32>
    %11 = vector.extract_strided_slice %10 {offsets = [0, 0, 0, 0, 0], sizes = [4, 8, 4, 1, 32], strides = [1, 1, 1, 1, 1]} : vector<4x8x4x2x32xf32> to vector<4x8x4x1x32xf32>
    %12 = vector.shape_cast %11 : vector<4x8x4x1x32xf32> to vector<4x8x4x32xf32>
    %13 = vector.extract_strided_slice %10 {offsets = [0, 0, 0, 1, 0], sizes = [4, 8, 4, 1, 32], strides = [1, 1, 1, 1, 1]} : vector<4x8x4x2x32xf32> to vector<4x8x4x1x32xf32>
    %14 = vector.shape_cast %13 : vector<4x8x4x1x32xf32> to vector<4x8x4x32xf32>
    %15 = arith.maximumf %12, %14 : vector<4x8x4x32xf32>
    %16 = vector.shape_cast %15 : vector<4x8x4x32xf32> to vector<4x4x2x4x32xf32>
    %17 = vector.extract_strided_slice %16 {offsets = [0, 0, 0, 0, 0], sizes = [4, 4, 1, 4, 32], strides = [1, 1, 1, 1, 1]} : vector<4x4x2x4x32xf32> to vector<4x4x1x4x32xf32>
    %18 = vector.shape_cast %17 : vector<4x4x1x4x32xf32> to vector<4x4x4x32xf32>
    %19 = vector.extract_strided_slice %16 {offsets = [0, 0, 1, 0, 0], sizes = [4, 4, 1, 4, 32], strides = [1, 1, 1, 1, 1]} : vector<4x4x2x4x32xf32> to vector<4x4x1x4x32xf32>
    %20 = vector.shape_cast %19 : vector<4x4x1x4x32xf32> to vector<4x4x4x32xf32>
    %21 = arith.maximumf %18, %20 : vector<4x4x4x32xf32>
    %cst_7 = arith.constant 0.000000e+00 : bf16
    %22 = vector.broadcast %cst_7 : bf16 to vector<4x1x6x32xbf16>
    %cst_8 = arith.constant 0.000000e+00 : bf16
    %23 = vector.broadcast %cst_8 : bf16 to vector<4x6x1x32xbf16>
    %c0_9 = arith.constant 0 : index
    %c0_10 = arith.constant 0 : index
    %c0_11 = arith.constant 0 : index
    %c0_12 = arith.constant 0 : index
    %24 = vector.load %arg15[%c0_9, %c0_10, %c0_11, %c0_12] : memref<4x6x6x32xbf16, #tpu.memory_space<vmem>>, vector<4x1x6x32xbf16>
    tpu.vector_store %arg15[%c0_9, %c0_10, %c0_11, %c0_12], %22 {strides = array<i32>} : memref<4x6x6x32xbf16, #tpu.memory_space<vmem>>, vector<4x1x6x32xbf16>,
    %c0_13 = arith.constant 0 : index
    %c5 = arith.constant 5 : index
    %c0_14 = arith.constant 0 : index
    %c0_15 = arith.constant 0 : index
    %25 = vector.load %arg15[%c0_13, %c5, %c0_14, %c0_15] : memref<4x6x6x32xbf16, #tpu.memory_space<vmem>>, vector<4x1x6x32xbf16>
    tpu.vector_store %arg15[%c0_13, %c5, %c0_14, %c0_15], %22 {strides = array<i32>} : memref<4x6x6x32xbf16, #tpu.memory_space<vmem>>, vector<4x1x6x32xbf16>,
    %c0_16 = arith.constant 0 : index
    %c0_17 = arith.constant 0 : index
    %c0_18 = arith.constant 0 : index
    %c0_19 = arith.constant 0 : index
    %26 = vector.load %arg15[%c0_16, %c0_17, %c0_18, %c0_19] : memref<4x6x6x32xbf16, #tpu.memory_space<vmem>>, vector<4x6x1x32xbf16>
    tpu.vector_store %arg15[%c0_16, %c0_17, %c0_18, %c0_19], %23 {strides = array<i32>} : memref<4x6x6x32xbf16, #tpu.memory_space<vmem>>, vector<4x6x1x32xbf16>,
    %c0_20 = arith.constant 0 : index
    %c0_21 = arith.constant 0 : index
    %c5_22 = arith.constant 5 : index
    %c0_23 = arith.constant 0 : index
    %27 = vector.load %arg15[%c0_20, %c0_21, %c5_22, %c0_23] : memref<4x6x6x32xbf16, #tpu.memory_space<vmem>>, vector<4x6x1x32xbf16>
    tpu.vector_store %arg15[%c0_20, %c0_21, %c5_22, %c0_23], %23 {strides = array<i32>} : memref<4x6x6x32xbf16, #tpu.memory_space<vmem>>, vector<4x6x1x32xbf16>,
    %28 = arith.truncf %21 : vector<4x4x4x32xf32> to vector<4x4x4x32xbf16>
    %c0_24 = arith.constant 0 : index
    %c1 = arith.constant 1 : index
    %c1_25 = arith.constant 1 : index
    %c0_26 = arith.constant 0 : index
    %29 = vector.load %arg15[%c0_24, %c1, %c1_25, %c0_26] : memref<4x6x6x32xbf16, #tpu.memory_space<vmem>>, vector<4x4x4x32xbf16>
    tpu.vector_store %arg15[%c0_24, %c1, %c1_25, %c0_26], %28 {strides = array<i32>} : memref<4x6x6x32xbf16, #tpu.memory_space<vmem>>, vector<4x4x4x32xbf16>,
    %c0_27 = arith.constant 0 : index
    %c0_28 = arith.constant 0 : index
    %c0_29 = arith.constant 0 : index
    %c0_30 = arith.constant 0 : index
    %30 = vector.load %arg15[%c0_27, %c0_28, %c0_29, %c0_30] : memref<4x6x6x32xbf16, #tpu.memory_space<vmem>>, vector<4x4x4x32xbf16>
    %31 = vector.shape_cast %30 : vector<4x4x4x32xbf16> to vector<64x32xbf16>
    %c0_31 = arith.constant 0 : index
    %c0_32 = arith.constant 0 : index
    %32 = vector.load %arg16[%c0_31, %c0_32] : memref<64x288xbf16, #tpu.memory_space<vmem>>, vector<64x32xbf16>
    tpu.vector_store %arg16[%c0_31, %c0_32], %31 {strides = array<i32>} : memref<64x288xbf16, #tpu.memory_space<vmem>>, vector<64x32xbf16>,
    %c0_33 = arith.constant 0 : index
    %c0_34 = arith.constant 0 : index
    %c1_35 = arith.constant 1 : index
    %c0_36 = arith.constant 0 : index
    %33 = vector.load %arg15[%c0_33, %c0_34, %c1_35, %c0_36] : memref<4x6x6x32xbf16, #tpu.memory_space<vmem>>, vector<4x4x4x32xbf16>
    %34 = vector.shape_cast %33 : vector<4x4x4x32xbf16> to vector<64x32xbf16>
    %c0_37 = arith.constant 0 : index
    %c32 = arith.constant 32 : index
    %35 = vector.load %arg16[%c0_37, %c32] : memref<64x288xbf16, #tpu.memory_space<vmem>>, vector<64x32xbf16>
    tpu.vector_store %arg16[%c0_37, %c32], %34 {strides = array<i32>} : memref<64x288xbf16, #tpu.memory_space<vmem>>, vector<64x32xbf16>,
    %c0_38 = arith.constant 0 : index
    %c0_39 = arith.constant 0 : index
    %c2 = arith.constant 2 : index
    %c0_40 = arith.constant 0 : index
    %36 = vector.load %arg15[%c0_38, %c0_39, %c2, %c0_40] : memref<4x6x6x32xbf16, #tpu.memory_space<vmem>>, vector<4x4x4x32xbf16>
    %37 = vector.shape_cast %36 : vector<4x4x4x32xbf16> to vector<64x32xbf16>
    %c0_41 = arith.constant 0 : index
    %c64 = arith.constant 64 : index
    %38 = vector.load %arg16[%c0_41, %c64] : memref<64x288xbf16, #tpu.memory_space<vmem>>, vector<64x32xbf16>
    tpu.vector_store %arg16[%c0_41, %c64], %37 {strides = array<i32>} : memref<64x288xbf16, #tpu.memory_space<vmem>>, vector<64x32xbf16>,
    %c0_42 = arith.constant 0 : index
    %c1_43 = arith.constant 1 : index
    %c0_44 = arith.constant 0 : index
    %c0_45 = arith.constant 0 : index
    %39 = vector.load %arg15[%c0_42, %c1_43, %c0_44, %c0_45] : memref<4x6x6x32xbf16, #tpu.memory_space<vmem>>, vector<4x4x4x32xbf16>
    %40 = vector.shape_cast %39 : vector<4x4x4x32xbf16> to vector<64x32xbf16>
    %c0_46 = arith.constant 0 : index
    %c96 = arith.constant 96 : index
    %41 = vector.load %arg16[%c0_46, %c96] : memref<64x288xbf16, #tpu.memory_space<vmem>>, vector<64x32xbf16>
    tpu.vector_store %arg16[%c0_46, %c96], %40 {strides = array<i32>} : memref<64x288xbf16, #tpu.memory_space<vmem>>, vector<64x32xbf16>,
    %c0_47 = arith.constant 0 : index
    %c1_48 = arith.constant 1 : index
    %c1_49 = arith.constant 1 : index
    %c0_50 = arith.constant 0 : index
    %42 = vector.load %arg15[%c0_47, %c1_48, %c1_49, %c0_50] : memref<4x6x6x32xbf16, #tpu.memory_space<vmem>>, vector<4x4x4x32xbf16>
    %43 = vector.shape_cast %42 : vector<4x4x4x32xbf16> to vector<64x32xbf16>
    %c0_51 = arith.constant 0 : index
    %c128 = arith.constant 128 : index
    %44 = vector.load %arg16[%c0_51, %c128] : memref<64x288xbf16, #tpu.memory_space<vmem>>, vector<64x32xbf16>
    tpu.vector_store %arg16[%c0_51, %c128], %43 {strides = array<i32>} : memref<64x288xbf16, #tpu.memory_space<vmem>>, vector<64x32xbf16>,
    %c0_52 = arith.constant 0 : index
    %c1_53 = arith.constant 1 : index
    %c2_54 = arith.constant 2 : index
    %c0_55 = arith.constant 0 : index
    %45 = vector.load %arg15[%c0_52, %c1_53, %c2_54, %c0_55] : memref<4x6x6x32xbf16, #tpu.memory_space<vmem>>, vector<4x4x4x32xbf16>
    %46 = vector.shape_cast %45 : vector<4x4x4x32xbf16> to vector<64x32xbf16>
    %c0_56 = arith.constant 0 : index
    %c160 = arith.constant 160 : index
    %47 = vector.load %arg16[%c0_56, %c160] : memref<64x288xbf16, #tpu.memory_space<vmem>>, vector<64x32xbf16>
    tpu.vector_store %arg16[%c0_56, %c160], %46 {strides = array<i32>} : memref<64x288xbf16, #tpu.memory_space<vmem>>, vector<64x32xbf16>,
    %c0_57 = arith.constant 0 : index
    %c2_58 = arith.constant 2 : index
    %c0_59 = arith.constant 0 : index
    %c0_60 = arith.constant 0 : index
    %48 = vector.load %arg15[%c0_57, %c2_58, %c0_59, %c0_60] : memref<4x6x6x32xbf16, #tpu.memory_space<vmem>>, vector<4x4x4x32xbf16>
    %49 = vector.shape_cast %48 : vector<4x4x4x32xbf16> to vector<64x32xbf16>
    %c0_61 = arith.constant 0 : index
    %c192 = arith.constant 192 : index
    %50 = vector.load %arg16[%c0_61, %c192] : memref<64x288xbf16, #tpu.memory_space<vmem>>, vector<64x32xbf16>
    tpu.vector_store %arg16[%c0_61, %c192], %49 {strides = array<i32>} : memref<64x288xbf16, #tpu.memory_space<vmem>>, vector<64x32xbf16>,
    %c0_62 = arith.constant 0 : index
    %c2_63 = arith.constant 2 : index
    %c1_64 = arith.constant 1 : index
    %c0_65 = arith.constant 0 : index
    %51 = vector.load %arg15[%c0_62, %c2_63, %c1_64, %c0_65] : memref<4x6x6x32xbf16, #tpu.memory_space<vmem>>, vector<4x4x4x32xbf16>
    %52 = vector.shape_cast %51 : vector<4x4x4x32xbf16> to vector<64x32xbf16>
    %c0_66 = arith.constant 0 : index
    %c224 = arith.constant 224 : index
    %53 = vector.load %arg16[%c0_66, %c224] : memref<64x288xbf16, #tpu.memory_space<vmem>>, vector<64x32xbf16>
    tpu.vector_store %arg16[%c0_66, %c224], %52 {strides = array<i32>} : memref<64x288xbf16, #tpu.memory_space<vmem>>, vector<64x32xbf16>,
    %c0_67 = arith.constant 0 : index
    %c2_68 = arith.constant 2 : index
    %c2_69 = arith.constant 2 : index
    %c0_70 = arith.constant 0 : index
    %54 = vector.load %arg15[%c0_67, %c2_68, %c2_69, %c0_70] : memref<4x6x6x32xbf16, #tpu.memory_space<vmem>>, vector<4x4x4x32xbf16>
    %55 = vector.shape_cast %54 : vector<4x4x4x32xbf16> to vector<64x32xbf16>
    %c0_71 = arith.constant 0 : index
    %c256 = arith.constant 256 : index
    %56 = vector.load %arg16[%c0_71, %c256] : memref<64x288xbf16, #tpu.memory_space<vmem>>, vector<64x32xbf16>
    tpu.vector_store %arg16[%c0_71, %c256], %55 {strides = array<i32>} : memref<64x288xbf16, #tpu.memory_space<vmem>>, vector<64x32xbf16>,
    %c0_72 = arith.constant 0 : index
    %c0_73 = arith.constant 0 : index
    %57 = vector.load %arg16[%c0_72, %c0_73] : memref<64x288xbf16, #tpu.memory_space<vmem>>, vector<64x288xbf16>
    %c0_74 = arith.constant 0 : index
    %c0_75 = arith.constant 0 : index
    %58 = vector.load %arg4[%c0_74, %c0_75] : memref<288x64xbf16, #tpu.memory_space<vmem>>, vector<288x64xbf16>
    %cst_76 = arith.constant dense<0.000000e+00> : vector<64x64xf32>
    %59 = tpu.matmul %57, %58, %cst_76 {dimension_numbers = #tpu.dot_dimension_numbers<[1], [0], [0], [1], [0, 0, 1, 1], [], []>} : vector<64x288xbf16>, vector<288x64xbf16>, vector<64x64xf32> -> vector<64x64xf32>
    %c0_77 = arith.constant 0 : index
    %c0_78 = arith.constant 0 : index
    %60 = vector.load %arg5[%c0_77, %c0_78] : memref<1x64xf32, #tpu.memory_space<vmem>>, vector<1x64xf32>
    %61 = vector.broadcast %60 : vector<1x64xf32> to vector<64x64xf32>
    %62 = arith.addf %59, %61 : vector<64x64xf32>
    %cst_79 = arith.constant 0.000000e+00 : f32
    %63 = vector.broadcast %cst_79 : f32 to vector<64x64xf32>
    %64 = arith.maximumf %62, %63 : vector<64x64xf32>
    %65 = vector.shape_cast %64 : vector<64x64xf32> to vector<4x4x4x64xf32>
    %66 = vector.shape_cast %65 : vector<4x4x4x64xf32> to vector<4x4x2x2x64xf32>
    %67 = vector.extract_strided_slice %66 {offsets = [0, 0, 0, 0, 0], sizes = [4, 4, 2, 1, 64], strides = [1, 1, 1, 1, 1]} : vector<4x4x2x2x64xf32> to vector<4x4x2x1x64xf32>
    %68 = vector.shape_cast %67 : vector<4x4x2x1x64xf32> to vector<4x4x2x64xf32>
    %69 = vector.extract_strided_slice %66 {offsets = [0, 0, 0, 1, 0], sizes = [4, 4, 2, 1, 64], strides = [1, 1, 1, 1, 1]} : vector<4x4x2x2x64xf32> to vector<4x4x2x1x64xf32>
    %70 = vector.shape_cast %69 : vector<4x4x2x1x64xf32> to vector<4x4x2x64xf32>
    %71 = arith.maximumf %68, %70 : vector<4x4x2x64xf32>
    %72 = vector.shape_cast %71 : vector<4x4x2x64xf32> to vector<4x2x2x2x64xf32>
    %73 = vector.extract_strided_slice %72 {offsets = [0, 0, 0, 0, 0], sizes = [4, 2, 1, 2, 64], strides = [1, 1, 1, 1, 1]} : vector<4x2x2x2x64xf32> to vector<4x2x1x2x64xf32>
    %74 = vector.shape_cast %73 : vector<4x2x1x2x64xf32> to vector<4x2x2x64xf32>
    %75 = vector.extract_strided_slice %72 {offsets = [0, 0, 1, 0, 0], sizes = [4, 2, 1, 2, 64], strides = [1, 1, 1, 1, 1]} : vector<4x2x2x2x64xf32> to vector<4x2x1x2x64xf32>
    %76 = vector.shape_cast %75 : vector<4x2x1x2x64xf32> to vector<4x2x2x64xf32>
    %77 = arith.maximumf %74, %76 : vector<4x2x2x64xf32>
    %cst_80 = arith.constant 0.000000e+00 : bf16
    %78 = vector.broadcast %cst_80 : bf16 to vector<4x1x4x64xbf16>
    %cst_81 = arith.constant 0.000000e+00 : bf16
    %79 = vector.broadcast %cst_81 : bf16 to vector<4x4x1x64xbf16>
    %c0_82 = arith.constant 0 : index
    %c0_83 = arith.constant 0 : index
    %c0_84 = arith.constant 0 : index
    %c0_85 = arith.constant 0 : index
    %80 = vector.load %arg17[%c0_82, %c0_83, %c0_84, %c0_85] : memref<4x4x4x64xbf16, #tpu.memory_space<vmem>>, vector<4x1x4x64xbf16>
    tpu.vector_store %arg17[%c0_82, %c0_83, %c0_84, %c0_85], %78 {strides = array<i32>} : memref<4x4x4x64xbf16, #tpu.memory_space<vmem>>, vector<4x1x4x64xbf16>,
    %c0_86 = arith.constant 0 : index
    %c3 = arith.constant 3 : index
    %c0_87 = arith.constant 0 : index
    %c0_88 = arith.constant 0 : index
    %81 = vector.load %arg17[%c0_86, %c3, %c0_87, %c0_88] : memref<4x4x4x64xbf16, #tpu.memory_space<vmem>>, vector<4x1x4x64xbf16>
    tpu.vector_store %arg17[%c0_86, %c3, %c0_87, %c0_88], %78 {strides = array<i32>} : memref<4x4x4x64xbf16, #tpu.memory_space<vmem>>, vector<4x1x4x64xbf16>,
    %c0_89 = arith.constant 0 : index
    %c0_90 = arith.constant 0 : index
    %c0_91 = arith.constant 0 : index
    %c0_92 = arith.constant 0 : index
    %82 = vector.load %arg17[%c0_89, %c0_90, %c0_91, %c0_92] : memref<4x4x4x64xbf16, #tpu.memory_space<vmem>>, vector<4x4x1x64xbf16>
    tpu.vector_store %arg17[%c0_89, %c0_90, %c0_91, %c0_92], %79 {strides = array<i32>} : memref<4x4x4x64xbf16, #tpu.memory_space<vmem>>, vector<4x4x1x64xbf16>,
    %c0_93 = arith.constant 0 : index
    %c0_94 = arith.constant 0 : index
    %c3_95 = arith.constant 3 : index
    %c0_96 = arith.constant 0 : index
    %83 = vector.load %arg17[%c0_93, %c0_94, %c3_95, %c0_96] : memref<4x4x4x64xbf16, #tpu.memory_space<vmem>>, vector<4x4x1x64xbf16>
    tpu.vector_store %arg17[%c0_93, %c0_94, %c3_95, %c0_96], %79 {strides = array<i32>} : memref<4x4x4x64xbf16, #tpu.memory_space<vmem>>, vector<4x4x1x64xbf16>,
    %84 = arith.truncf %77 : vector<4x2x2x64xf32> to vector<4x2x2x64xbf16>
    %c0_97 = arith.constant 0 : index
    %c1_98 = arith.constant 1 : index
    %c1_99 = arith.constant 1 : index
    %c0_100 = arith.constant 0 : index
    %85 = vector.load %arg17[%c0_97, %c1_98, %c1_99, %c0_100] : memref<4x4x4x64xbf16, #tpu.memory_space<vmem>>, vector<4x2x2x64xbf16>
    tpu.vector_store %arg17[%c0_97, %c1_98, %c1_99, %c0_100], %84 {strides = array<i32>} : memref<4x4x4x64xbf16, #tpu.memory_space<vmem>>, vector<4x2x2x64xbf16>,
    %c0_101 = arith.constant 0 : index
    %c0_102 = arith.constant 0 : index
    %c0_103 = arith.constant 0 : index
    %c0_104 = arith.constant 0 : index
    %86 = vector.load %arg17[%c0_101, %c0_102, %c0_103, %c0_104] : memref<4x4x4x64xbf16, #tpu.memory_space<vmem>>, vector<4x2x2x64xbf16>
    %87 = vector.shape_cast %86 : vector<4x2x2x64xbf16> to vector<16x64xbf16>
    %c0_105 = arith.constant 0 : index
    %c0_106 = arith.constant 0 : index
    %88 = vector.load %arg18[%c0_105, %c0_106] : memref<16x576xbf16, #tpu.memory_space<vmem>>, vector<16x64xbf16>
    tpu.vector_store %arg18[%c0_105, %c0_106], %87 {strides = array<i32>} : memref<16x576xbf16, #tpu.memory_space<vmem>>, vector<16x64xbf16>,
    %c0_107 = arith.constant 0 : index
    %c0_108 = arith.constant 0 : index
    %c1_109 = arith.constant 1 : index
    %c0_110 = arith.constant 0 : index
    %89 = vector.load %arg17[%c0_107, %c0_108, %c1_109, %c0_110] : memref<4x4x4x64xbf16, #tpu.memory_space<vmem>>, vector<4x2x2x64xbf16>
    %90 = vector.shape_cast %89 : vector<4x2x2x64xbf16> to vector<16x64xbf16>
    %c0_111 = arith.constant 0 : index
    %c64_112 = arith.constant 64 : index
    %91 = vector.load %arg18[%c0_111, %c64_112] : memref<16x576xbf16, #tpu.memory_space<vmem>>, vector<16x64xbf16>
    tpu.vector_store %arg18[%c0_111, %c64_112], %90 {strides = array<i32>} : memref<16x576xbf16, #tpu.memory_space<vmem>>, vector<16x64xbf16>,
    %c0_113 = arith.constant 0 : index
    %c0_114 = arith.constant 0 : index
    %c2_115 = arith.constant 2 : index
    %c0_116 = arith.constant 0 : index
    %92 = vector.load %arg17[%c0_113, %c0_114, %c2_115, %c0_116] : memref<4x4x4x64xbf16, #tpu.memory_space<vmem>>, vector<4x2x2x64xbf16>
    %93 = vector.shape_cast %92 : vector<4x2x2x64xbf16> to vector<16x64xbf16>
    %c0_117 = arith.constant 0 : index
    %c128_118 = arith.constant 128 : index
    %94 = vector.load %arg18[%c0_117, %c128_118] : memref<16x576xbf16, #tpu.memory_space<vmem>>, vector<16x64xbf16>
    tpu.vector_store %arg18[%c0_117, %c128_118], %93 {strides = array<i32>} : memref<16x576xbf16, #tpu.memory_space<vmem>>, vector<16x64xbf16>,
    %c0_119 = arith.constant 0 : index
    %c1_120 = arith.constant 1 : index
    %c0_121 = arith.constant 0 : index
    %c0_122 = arith.constant 0 : index
    %95 = vector.load %arg17[%c0_119, %c1_120, %c0_121, %c0_122] : memref<4x4x4x64xbf16, #tpu.memory_space<vmem>>, vector<4x2x2x64xbf16>
    %96 = vector.shape_cast %95 : vector<4x2x2x64xbf16> to vector<16x64xbf16>
    %c0_123 = arith.constant 0 : index
    %c192_124 = arith.constant 192 : index
    %97 = vector.load %arg18[%c0_123, %c192_124] : memref<16x576xbf16, #tpu.memory_space<vmem>>, vector<16x64xbf16>
    tpu.vector_store %arg18[%c0_123, %c192_124], %96 {strides = array<i32>} : memref<16x576xbf16, #tpu.memory_space<vmem>>, vector<16x64xbf16>,
    %c0_125 = arith.constant 0 : index
    %c1_126 = arith.constant 1 : index
    %c1_127 = arith.constant 1 : index
    %c0_128 = arith.constant 0 : index
    %98 = vector.load %arg17[%c0_125, %c1_126, %c1_127, %c0_128] : memref<4x4x4x64xbf16, #tpu.memory_space<vmem>>, vector<4x2x2x64xbf16>
    %99 = vector.shape_cast %98 : vector<4x2x2x64xbf16> to vector<16x64xbf16>
    %c0_129 = arith.constant 0 : index
    %c256_130 = arith.constant 256 : index
    %100 = vector.load %arg18[%c0_129, %c256_130] : memref<16x576xbf16, #tpu.memory_space<vmem>>, vector<16x64xbf16>
    tpu.vector_store %arg18[%c0_129, %c256_130], %99 {strides = array<i32>} : memref<16x576xbf16, #tpu.memory_space<vmem>>, vector<16x64xbf16>,
    %c0_131 = arith.constant 0 : index
    %c1_132 = arith.constant 1 : index
    %c2_133 = arith.constant 2 : index
    %c0_134 = arith.constant 0 : index
    %101 = vector.load %arg17[%c0_131, %c1_132, %c2_133, %c0_134] : memref<4x4x4x64xbf16, #tpu.memory_space<vmem>>, vector<4x2x2x64xbf16>
    %102 = vector.shape_cast %101 : vector<4x2x2x64xbf16> to vector<16x64xbf16>
    %c0_135 = arith.constant 0 : index
    %c320 = arith.constant 320 : index
    %103 = vector.load %arg18[%c0_135, %c320] : memref<16x576xbf16, #tpu.memory_space<vmem>>, vector<16x64xbf16>
    tpu.vector_store %arg18[%c0_135, %c320], %102 {strides = array<i32>} : memref<16x576xbf16, #tpu.memory_space<vmem>>, vector<16x64xbf16>,
    %c0_136 = arith.constant 0 : index
    %c2_137 = arith.constant 2 : index
    %c0_138 = arith.constant 0 : index
    %c0_139 = arith.constant 0 : index
    %104 = vector.load %arg17[%c0_136, %c2_137, %c0_138, %c0_139] : memref<4x4x4x64xbf16, #tpu.memory_space<vmem>>, vector<4x2x2x64xbf16>
    %105 = vector.shape_cast %104 : vector<4x2x2x64xbf16> to vector<16x64xbf16>
    %c0_140 = arith.constant 0 : index
    %c384 = arith.constant 384 : index
    %106 = vector.load %arg18[%c0_140, %c384] : memref<16x576xbf16, #tpu.memory_space<vmem>>, vector<16x64xbf16>
    tpu.vector_store %arg18[%c0_140, %c384], %105 {strides = array<i32>} : memref<16x576xbf16, #tpu.memory_space<vmem>>, vector<16x64xbf16>,
    %c0_141 = arith.constant 0 : index
    %c2_142 = arith.constant 2 : index
    %c1_143 = arith.constant 1 : index
    %c0_144 = arith.constant 0 : index
    %107 = vector.load %arg17[%c0_141, %c2_142, %c1_143, %c0_144] : memref<4x4x4x64xbf16, #tpu.memory_space<vmem>>, vector<4x2x2x64xbf16>
    %108 = vector.shape_cast %107 : vector<4x2x2x64xbf16> to vector<16x64xbf16>
    %c0_145 = arith.constant 0 : index
    %c448 = arith.constant 448 : index
    %109 = vector.load %arg18[%c0_145, %c448] : memref<16x576xbf16, #tpu.memory_space<vmem>>, vector<16x64xbf16>
    tpu.vector_store %arg18[%c0_145, %c448], %108 {strides = array<i32>} : memref<16x576xbf16, #tpu.memory_space<vmem>>, vector<16x64xbf16>,
    %c0_146 = arith.constant 0 : index
    %c2_147 = arith.constant 2 : index
    %c2_148 = arith.constant 2 : index
    %c0_149 = arith.constant 0 : index
    %110 = vector.load %arg17[%c0_146, %c2_147, %c2_148, %c0_149] : memref<4x4x4x64xbf16, #tpu.memory_space<vmem>>, vector<4x2x2x64xbf16>
    %111 = vector.shape_cast %110 : vector<4x2x2x64xbf16> to vector<16x64xbf16>
    %c0_150 = arith.constant 0 : index
    %c512 = arith.constant 512 : index
    %112 = vector.load %arg18[%c0_150, %c512] : memref<16x576xbf16, #tpu.memory_space<vmem>>, vector<16x64xbf16>
    tpu.vector_store %arg18[%c0_150, %c512], %111 {strides = array<i32>} : memref<16x576xbf16, #tpu.memory_space<vmem>>, vector<16x64xbf16>,
    %c0_151 = arith.constant 0 : index
    %c0_152 = arith.constant 0 : index
    %113 = vector.load %arg18[%c0_151, %c0_152] : memref<16x576xbf16, #tpu.memory_space<vmem>>, vector<16x576xbf16>
    %c0_153 = arith.constant 0 : index
    %c0_154 = arith.constant 0 : index
    %114 = vector.load %arg6[%c0_153, %c0_154] : memref<576x512xbf16, #tpu.memory_space<vmem>>, vector<576x512xbf16>
    %cst_155 = arith.constant dense<0.000000e+00> : vector<16x512xf32>
    %115 = tpu.matmul %113, %114, %cst_155 {dimension_numbers = #tpu.dot_dimension_numbers<[1], [0], [0], [1], [0, 0, 1, 1], [], []>} : vector<16x576xbf16>, vector<576x512xbf16>, vector<16x512xf32> -> vector<16x512xf32>
    %c0_156 = arith.constant 0 : index
    %c0_157 = arith.constant 0 : index
    %116 = vector.load %arg7[%c0_156, %c0_157] : memref<1x512xf32, #tpu.memory_space<vmem>>, vector<1x512xf32>
    %117 = vector.broadcast %116 : vector<1x512xf32> to vector<16x512xf32>
    %118 = arith.addf %115, %117 : vector<16x512xf32>
    %cst_158 = arith.constant 0.000000e+00 : f32
    %119 = vector.broadcast %cst_158 : f32 to vector<16x512xf32>
    %120 = arith.maximumf %118, %119 : vector<16x512xf32>
    %121 = vector.shape_cast %120 : vector<16x512xf32> to vector<4x2x2x512xf32>
    %122 = vector.shape_cast %121 : vector<4x2x2x512xf32> to vector<4x2x1x2x512xf32>
    %123 = vector.extract_strided_slice %122 {offsets = [0, 0, 0, 0, 0], sizes = [4, 2, 1, 1, 512], strides = [1, 1, 1, 1, 1]} : vector<4x2x1x2x512xf32> to vector<4x2x1x1x512xf32>
    %124 = vector.shape_cast %123 : vector<4x2x1x1x512xf32> to vector<4x2x1x512xf32>
    %125 = vector.extract_strided_slice %122 {offsets = [0, 0, 0, 1, 0], sizes = [4, 2, 1, 1, 512], strides = [1, 1, 1, 1, 1]} : vector<4x2x1x2x512xf32> to vector<4x2x1x1x512xf32>
    %126 = vector.shape_cast %125 : vector<4x2x1x1x512xf32> to vector<4x2x1x512xf32>
    %127 = arith.maximumf %124, %126 : vector<4x2x1x512xf32>
    %128 = vector.shape_cast %127 : vector<4x2x1x512xf32> to vector<4x1x2x1x512xf32>
    %129 = vector.extract_strided_slice %128 {offsets = [0, 0, 0, 0, 0], sizes = [4, 1, 1, 1, 512], strides = [1, 1, 1, 1, 1]} : vector<4x1x2x1x512xf32> to vector<4x1x1x1x512xf32>
    %130 = vector.shape_cast %129 : vector<4x1x1x1x512xf32> to vector<4x1x1x512xf32>
    %131 = vector.extract_strided_slice %128 {offsets = [0, 0, 1, 0, 0], sizes = [4, 1, 1, 1, 512], strides = [1, 1, 1, 1, 1]} : vector<4x1x2x1x512xf32> to vector<4x1x1x1x512xf32>
    %132 = vector.shape_cast %131 : vector<4x1x1x1x512xf32> to vector<4x1x1x512xf32>
    %133 = arith.maximumf %130, %132 : vector<4x1x1x512xf32>
    %134 = vector.shape_cast %133 : vector<4x1x1x512xf32> to vector<4x512xf32>
    %135 = arith.truncf %134 : vector<4x512xf32> to vector<4x512xbf16>
    %c0_159 = arith.constant 0 : index
    %c0_160 = arith.constant 0 : index
    %136 = vector.load %arg8[%c0_159, %c0_160] : memref<512x512xbf16, #tpu.memory_space<vmem>>, vector<512x512xbf16>
    %cst_161 = arith.constant dense<0.000000e+00> : vector<4x512xf32>
    %137 = tpu.matmul %135, %136, %cst_161 {dimension_numbers = #tpu.dot_dimension_numbers<[1], [0], [0], [1], [0, 0, 1, 1], [], []>} : vector<4x512xbf16>, vector<512x512xbf16>, vector<4x512xf32> -> vector<4x512xf32>
    %c0_162 = arith.constant 0 : index
    %c0_163 = arith.constant 0 : index
    %138 = vector.load %arg9[%c0_162, %c0_163] : memref<1x512xf32, #tpu.memory_space<vmem>>, vector<1x512xf32>
    %139 = vector.broadcast %138 : vector<1x512xf32> to vector<4x512xf32>
    %140 = arith.addf %137, %139 : vector<4x512xf32>
    %cst_164 = arith.constant 0.000000e+00 : f32
    %141 = vector.broadcast %cst_164 : f32 to vector<4x512xf32>
    %142 = arith.maximumf %140, %141 : vector<4x512xf32>
    %143 = arith.truncf %142 : vector<4x512xf32> to vector<4x512xbf16>
    %c0_165 = arith.constant 0 : index
    %c0_166 = arith.constant 0 : index
    %144 = vector.load %arg10[%c0_165, %c0_166] : memref<512x512xbf16, #tpu.memory_space<vmem>>, vector<512x512xbf16>
    %cst_167 = arith.constant dense<0.000000e+00> : vector<4x512xf32>
    %145 = tpu.matmul %143, %144, %cst_167 {dimension_numbers = #tpu.dot_dimension_numbers<[1], [0], [0], [1], [0, 0, 1, 1], [], []>} : vector<4x512xbf16>, vector<512x512xbf16>, vector<4x512xf32> -> vector<4x512xf32>
    %c0_168 = arith.constant 0 : index
    %c0_169 = arith.constant 0 : index
    %146 = vector.load %arg11[%c0_168, %c0_169] : memref<1x512xf32, #tpu.memory_space<vmem>>, vector<1x512xf32>
    %147 = vector.broadcast %146 : vector<1x512xf32> to vector<4x512xf32>
    %148 = arith.addf %145, %147 : vector<4x512xf32>
    %cst_170 = arith.constant 0.000000e+00 : f32
    %149 = vector.broadcast %cst_170 : f32 to vector<4x512xf32>
    %150 = arith.maximumf %148, %149 : vector<4x512xf32>
    %151 = arith.truncf %150 : vector<4x512xf32> to vector<4x512xbf16>
    %c0_171 = arith.constant 0 : index
    %c0_172 = arith.constant 0 : index
    %152 = vector.load %arg12[%c0_171, %c0_172] : memref<512x128xbf16, #tpu.memory_space<vmem>>, vector<512x128xbf16>
    %cst_173 = arith.constant dense<0.000000e+00> : vector<4x128xf32>
    %153 = tpu.matmul %151, %152, %cst_173 {dimension_numbers = #tpu.dot_dimension_numbers<[1], [0], [0], [1], [0, 0, 1, 1], [], []>} : vector<4x512xbf16>, vector<512x128xbf16>, vector<4x128xf32> -> vector<4x128xf32>
    %c0_174 = arith.constant 0 : index
    %c0_175 = arith.constant 0 : index
    %154 = vector.load %arg13[%c0_174, %c0_175] : memref<1x128xf32, #tpu.memory_space<vmem>>, vector<1x128xf32>
    %155 = vector.broadcast %154 : vector<1x128xf32> to vector<4x128xf32>
    %156 = arith.addf %153, %155 : vector<4x128xf32>
    %c0_176 = arith.constant 0 : index
    %c0_177 = arith.constant 0 : index
    %c0_178 = arith.constant 0 : index
    %157 = vector.load %arg14[%c0_176, %c0_177, %c0_178] : memref<1x4x128xf32, #tpu.memory_space<vmem>>, vector<1x4x128xf32>
    %158 = vector.shape_cast %157 : vector<1x4x128xf32> to vector<4x128xf32>
    %159 = vector.shape_cast %156 : vector<4x128xf32> to vector<1x4x128xf32>
    tpu.vector_store %arg14[%c0_176, %c0_177, %c0_178], %159 {strides = array<i32>} : memref<1x4x128xf32, #tpu.memory_space<vmem>>, vector<1x4x128xf32>,
    return
  }
  func.func @transform_0(%arg0: i32) -> (i32, i32, i32) {
    %c0_i32 = arith.constant 0 : i32
    %c0_i32_0 = arith.constant 0 : i32
    %c0_i32_1 = arith.constant 0 : i32
    return %arg0, %c0_i32, %c0_i32_0 : i32, i32, i32
  }
  func.func @transform_1(%arg0: i32) -> (i32, i32) {
    %c0_i32 = arith.constant 0 : i32
    %c0_i32_0 = arith.constant 0 : i32
    %c0_i32_1 = arith.constant 0 : i32
    return %c0_i32, %c0_i32_0 : i32, i32
  }
  func.func @transform_2(%arg0: i32) -> (i32, i32) {
    %c0_i32 = arith.constant 0 : i32
    %c0_i32_0 = arith.constant 0 : i32
    %c0_i32_1 = arith.constant 0 : i32
    return %c0_i32, %c0_i32_0 : i32, i32
  }
  func.func @transform_3(%arg0: i32) -> (i32, i32) {
    %c0_i32 = arith.constant 0 : i32
    %c0_i32_0 = arith.constant 0 : i32
    %c0_i32_1 = arith.constant 0 : i32
    return %c0_i32, %c0_i32_0 : i32, i32
  }
  func.func @transform_4(%arg0: i32) -> (i32, i32) {
    %c0_i32 = arith.constant 0 : i32
    %c0_i32_0 = arith.constant 0 : i32
    %c0_i32_1 = arith.constant 0 : i32
    return %c0_i32, %c0_i32_0 : i32, i32
  }
  func.func @transform_5(%arg0: i32) -> (i32, i32) {
    %c0_i32 = arith.constant 0 : i32
    %c0_i32_0 = arith.constant 0 : i32
    %c0_i32_1 = arith.constant 0 : i32
    return %c0_i32, %c0_i32_0 : i32, i32
  }
  func.func @transform_6(%arg0: i32) -> (i32, i32) {
    %c0_i32 = arith.constant 0 : i32
    %c0_i32_0 = arith.constant 0 : i32
    %c0_i32_1 = arith.constant 0 : i32
    return %c0_i32, %c0_i32_0 : i32, i32
  }
  func.func @transform_7(%arg0: i32) -> (i32, i32) {
    %c0_i32 = arith.constant 0 : i32
    %c0_i32_0 = arith.constant 0 : i32
    %c0_i32_1 = arith.constant 0 : i32
    return %c0_i32, %c0_i32_0 : i32, i32
  }
  func.func @transform_8(%arg0: i32) -> (i32, i32) {
    %c0_i32 = arith.constant 0 : i32
    %c0_i32_0 = arith.constant 0 : i32
    %c0_i32_1 = arith.constant 0 : i32
    return %c0_i32, %c0_i32_0 : i32, i32
  }
  func.func @transform_9(%arg0: i32) -> (i32, i32) {
    %c0_i32 = arith.constant 0 : i32
    %c0_i32_0 = arith.constant 0 : i32
    %c0_i32_1 = arith.constant 0 : i32
    return %c0_i32, %c0_i32_0 : i32, i32
  }
  func.func @transform_10(%arg0: i32) -> (i32, i32) {
    %c0_i32 = arith.constant 0 : i32
    %c0_i32_0 = arith.constant 0 : i32
    %c0_i32_1 = arith.constant 0 : i32
    return %c0_i32, %c0_i32_0 : i32, i32
  }
  func.func @transform_11(%arg0: i32) -> (i32, i32) {
    %c0_i32 = arith.constant 0 : i32
    %c0_i32_0 = arith.constant 0 : i32
    %c0_i32_1 = arith.constant 0 : i32
    return %c0_i32, %c0_i32_0 : i32, i32
  }
  func.func @transform_12(%arg0: i32) -> (i32, i32) {
    %c0_i32 = arith.constant 0 : i32
    %c0_i32_0 = arith.constant 0 : i32
    %c0_i32_1 = arith.constant 0 : i32
    return %c0_i32, %c0_i32_0 : i32, i32
  }
  func.func @transform_13(%arg0: i32) -> (i32, i32, i32) {
    %c0_i32 = arith.constant 0 : i32
    %c0_i32_0 = arith.constant 0 : i32
    %c0_i32_1 = arith.constant 0 : i32
    return %arg0, %c0_i32, %c0_i32_0 : i32, i32, i32
  }
}

</mosaic_0001>

<llo_original>
// kernel: vgg_forward.1
$region0: #{vgg_forward.1}
  #allocation0 [shape = 'u32[]', space=smem, size = 0x4, offset = 0x4, fixed_abs, tag = 'smem constant byte address 0x4 - core index']
  #allocation1 [shape = 'u32[144,128]{1,0:T(1,128)}', space=vmem, size = 0x12000, scoped, tag = 'internal scratch']
  #allocation2 [shape = 'bf16[4,6,6,32]{3,2,1,0:T(8,128)(2,1)}', space=vmem, size = 0xc000, scoped, tag = 'scratch operand']
  #allocation3 [shape = 'bf16[64,288]{1,0:T(16,128)(2,1)}', space=vmem, size = 0xc000, scoped, tag = 'scratch operand']
  #allocation4 [shape = 'bf16[4,4,4,64]{3,2,1,0:T(4,128)(2,1)}', space=vmem, size = 0x4000, scoped, tag = 'scratch operand']
  #allocation5 [shape = 'bf16[16,576]{1,0:T(16,128)(2,1)}', space=vmem, size = 0x5000, scoped, tag = 'scratch operand']
  %s0 = inlined_call_operand.vmem [shape: bf16[2,256,32], index: 0, kind: input, shape index: {}]
  %s1 = inlined_call_operand.vmem [shape: bf16[32,32], index: 1, kind: input, shape index: {}]
  %s2 = inlined_call_operand.vmem [shape: f32[1,32], index: 2, kind: input, shape index: {}]
  %s3 = inlined_call_operand.vmem [shape: bf16[288,64], index: 3, kind: input, shape index: {}]
  %s4 = inlined_call_operand.vmem [shape: f32[1,64], index: 4, kind: input, shape index: {}]
  %s5 = inlined_call_operand.vmem [shape: bf16[576,512], index: 5, kind: input, shape index: {}]
  %s6 = inlined_call_operand.vmem [shape: f32[1,512], index: 6, kind: input, shape index: {}]
  %s7 = inlined_call_operand.vmem [shape: bf16[512,512], index: 7, kind: input, shape index: {}]
  %s8 = inlined_call_operand.vmem [shape: f32[1,512], index: 8, kind: input, shape index: {}]
  %s9 = inlined_call_operand.vmem [shape: bf16[512,512], index: 9, kind: input, shape index: {}]
  %s10 = inlined_call_operand.vmem [shape: f32[1,512], index: 10, kind: input, shape index: {}]
  %s11 = inlined_call_operand.vmem [shape: bf16[512,128], index: 11, kind: input, shape index: {}]
  %s12 = inlined_call_operand.vmem [shape: f32[1,128], index: 12, kind: input, shape index: {}]
  %s13 = inlined_call_operand.hbm [shape: f32[2,4,128], index: 13, kind: output, shape index: {}]
  %s14 = sld [smem:[#allocation0]]
  $region85: #{vgg_forward.1} parent=0
    _
  %s16 = ssub.s32 1, %s14
  %s17 = scalar_select 0, %s16, %s14
  $region1: #{vgg_forward.1} parent=0
    #allocation6 [shape = 'u8[4096]{0}', space=vmem, size = 0x1000, scoped, tag = 'output window, operand 0']
    #allocation7 [shape = 's32[2]{0}', space=sflag, size = 0x8, scoped, tag = 'scoped memory for vgg_forward.1']
    %18 = vsyncpa [#allocation7], 0
    %s19 = scalar_lea.sflag [#allocation7], 1
    %20 = vsyncpa %s19, 0
    loop: start=0, step=1, limit=4
    $region2: #{vgg_forward.1} parent=1 // loop_pre_header
      _
    $region3: #{vgg_forward.1} parent=1 // loop_header
      %s22 = sphi 0, %s26
      %p23 = scmp.ge.s32.totalorder %s22, 4
      %s32 = sphi 0, %s34
      %s35 = sphi 0, %s32
      %s36 = sphi 0, %s35
      %s52 = sphi 0, %s36
      %s56 = sphi 0, %s56
      %s58 = sphi 0, %s56
      %s59 = sphi 0, %s58
      %s73 = sphi 0, %s59
      %s77 = sphi 0, %s77
      %s79 = sphi 0, %s77
      %s80 = sphi 0, %s79
      %s94 = sphi 0, %s80
      %s98 = sphi 0, %s98
      %s100 = sphi 0, %s98
      %s101 = sphi 0, %s100
      %s115 = sphi 0, %s101
      %s119 = sphi 0, %s119
      %s121 = sphi 0, %s119
      %s122 = sphi 0, %s121
      %s136 = sphi 0, %s122
      %s140 = sphi 0, %s140
      %s142 = sphi 0, %s140
      %s143 = sphi 0, %s142
      %s157 = sphi 0, %s143
      %s161 = sphi 0, %s161
      %s163 = sphi 0, %s161
      %s164 = sphi 0, %s163
      %s178 = sphi 0, %s164
      %s182 = sphi 0, %s182
      %s184 = sphi 0, %s182
      %s185 = sphi 0, %s184
      %s199 = sphi 0, %s185
      %s203 = sphi 0, %s203
      %s205 = sphi 0, %s203
      %s206 = sphi 0, %s205
      %s220 = sphi 0, %s206
      %s224 = sphi 0, %s224
      %s226 = sphi 0, %s224
      %s227 = sphi 0, %s226
      %s241 = sphi 0, %s227
      %s245 = sphi 0, %s245
      %s247 = sphi 0, %s245
      %s248 = sphi 0, %s247
      %s262 = sphi 0, %s248
      %s266 = sphi 0, %s266
      %s268 = sphi 0, %s266
      %s269 = sphi 0, %s268
      %s283 = sphi 0, %s269
      %s287 = sphi 0, %s287
      %s289 = sphi 0, %s287
      %s290 = sphi 0, %s289
      %s304 = sphi 0, %s290
      %s310 = sphi 0, %s312
      %s313 = sphi 0, %s310
      %s314 = sphi 0, %s313
      %s330 = sphi 0, %s314
    $region4: #{vgg_forward.1} parent=1 // loop_header_branch
      %25 = sbr.rel (%p23) target = $region8
    $region5: #{vgg_forward.1} parent=1 // loop_body
      %s27 = ssub.s32 %s22, 1
      %s28 = ssub.s32 %s22, 2
      %s29 = sadd.s32 %s22, 1
      %s30 = ssub.s32 %s22, %s29
      %p31 = scmp.eq.s32.totalorder %s30, 0
      %s33 = sadd.s32 %s32, 1
      %s34 = scalar_select %p31, %s32, %s33
      %p37 = pneg %p31
      %p38 = scmp.eq.s32.totalorder %s22, 1
      %p39 = por %p37, %p38
      %p40 = scmp.ne.s32.totalorder %s32, %s35
      %p41 = scmp.eq.s32.totalorder %s22, 0
      %p42 = por %p40, %p41
      %p43 = scmp.ne.s32.totalorder %s32, %s35
      %p44 = scmp.eq.s32.totalorder %s27, 1
      %p45 = por %p43, %p44
      %p46 = scmp.ne.s32.totalorder %s35, %s36
      %p47 = scmp.eq.s32.totalorder %s27, 0
      %p48 = por %p46, %p47
      %p49 = scmp.ne.s32.totalorder %s35, %s36
      %p50 = scmp.eq.s32.totalorder %s28, 1
      %p51 = por %p49, %p50
      %p53 = scmp.ne.s32.totalorder %s36, %s52
      %p54 = scmp.eq.s32.totalorder %s28, 0
      %p55 = por %p53, %p54
      %s57 = sadd.s32 %s56, 1
      %p60 = scmp.eq.s32.totalorder %s22, 1
      %p61 = scmp.ne.s32.totalorder %s56, %s58
      %p62 = scmp.eq.s32.totalorder %s22, 0
      %p63 = por %p61, %p62
      %p64 = scmp.ne.s32.totalorder %s56, %s58
      %p65 = scmp.eq.s32.totalorder %s27, 1
      %p66 = por %p64, %p65
      %p67 = scmp.ne.s32.totalorder %s58, %s59
      %p68 = scmp.eq.s32.totalorder %s27, 0
      %p69 = por %p67, %p68
      %p70 = scmp.ne.s32.totalorder %s58, %s59
      %p71 = scmp.eq.s32.totalorder %s28, 1
      %p72 = por %p70, %p71
      %p74 = scmp.ne.s32.totalorder %s59, %s73
      %p75 = scmp.eq.s32.totalorder %s28, 0
      %p76 = por %p74, %p75
      %s78 = sadd.s32 %s77, 1
      %p81 = scmp.eq.s32.totalorder %s22, 1
      %p82 = scmp.ne.s32.totalorder %s77, %s79
      %p83 = scmp.eq.s32.totalorder %s22, 0
      %p84 = por %p82, %p83
      %p85 = scmp.ne.s32.totalorder %s77, %s79
      %p86 = scmp.eq.s32.totalorder %s27, 1
      %p87 = por %p85, %p86
      %p88 = scmp.ne.s32.totalorder %s79, %s80
      %p89 = scmp.eq.s32.totalorder %s27, 0
      %p90 = por %p88, %p89
      %p91 = scmp.ne.s32.totalorder %s79, %s80
      %p92 = scmp.eq.s32.totalorder %s28, 1
      %p93 = por %p91, %p92
      %p95 = scmp.ne.s32.totalorder %s80, %s94
      %p96 = scmp.eq.s32.totalorder %s28, 0
      %p97 = por %p95, %p96
      %s99 = sadd.s32 %s98, 1
      %p102 = scmp.eq.s32.totalorder %s22, 1
      %p103 = scmp.ne.s32.totalorder %s98, %s100
      %p104 = scmp.eq.s32.totalorder %s22, 0
      %p105 = por %p103, %p104
      %p106 = scmp.ne.s32.totalorder %s98, %s100
      %p107 = scmp.eq.s32.totalorder %s27, 1
      %p108 = por %p106, %p107
      %p109 = scmp.ne.s32.totalorder %s100, %s101
      %p110 = scmp.eq.s32.totalorder %s27, 0
      %p111 = por %p109, %p110
      %p112 = scmp.ne.s32.totalorder %s100, %s101
      %p113 = scmp.eq.s32.totalorder %s28, 1
      %p114 = por %p112, %p113
      %p116 = scmp.ne.s32.totalorder %s101, %s115
      %p117 = scmp.eq.s32.totalorder %s28, 0
      %p118 = por %p116, %p117
      %s120 = sadd.s32 %s119, 1
      %p123 = scmp.eq.s32.totalorder %s22, 1
      %p124 = scmp.ne.s32.totalorder %s119, %s121
      %p125 = scmp.eq.s32.totalorder %s22, 0
      %p126 = por %p124, %p125
      %p127 = scmp.ne.s32.totalorder %s119, %s121
      %p128 = scmp.eq.s32.totalorder %s27, 1
      %p129 = por %p127, %p128
      %p130 = scmp.ne.s32.totalorder %s121, %s122
      %p131 = scmp.eq.s32.totalorder %s27, 0
      %p132 = por %p130, %p131
      %p133 = scmp.ne.s32.totalorder %s121, %s122
      %p134 = scmp.eq.s32.totalorder %s28, 1
      %p135 = por %p133, %p134
      %p137 = scmp.ne.s32.totalorder %s122, %s136
      %p138 = scmp.eq.s32.totalorder %s28, 0
      %p139 = por %p137, %p138
      %s141 = sadd.s32 %s140, 1
      %p144 = scmp.eq.s32.totalorder %s22, 1
      %p145 = scmp.ne.s32.totalorder %s140, %s142
      %p146 = scmp.eq.s32.totalorder %s22, 0
      %p147 = por %p145, %p146
      %p148 = scmp.ne.s32.totalorder %s140, %s142
      %p149 = scmp.eq.s32.totalorder %s27, 1
      %p150 = por %p148, %p149
      %p151 = scmp.ne.s32.totalorder %s142, %s143
      %p152 = scmp.eq.s32.totalorder %s27, 0
      %p153 = por %p151, %p152
      %p154 = scmp.ne.s32.totalorder %s142, %s143
      %p155 = scmp.eq.s32.totalorder %s28, 1
      %p156 = por %p154, %p155
      %p158 = scmp.ne.s32.totalorder %s143, %s157
      %p159 = scmp.eq.s32.totalorder %s28, 0
      %p160 = por %p158, %p159
      %s162 = sadd.s32 %s161, 1
      %p165 = scmp.eq.s32.totalorder %s22, 1
      %p166 = scmp.ne.s32.totalorder %s161, %s163
      %p167 = scmp.eq.s32.totalorder %s22, 0
      %p168 = por %p166, %p167
      %p169 = scmp.ne.s32.totalorder %s161, %s163
      %p170 = scmp.eq.s32.totalorder %s27, 1
      %p171 = por %p169, %p170
      %p172 = scmp.ne.s32.totalorder %s163, %s164
      %p173 = scmp.eq.s32.totalorder %s27, 0
      %p174 = por %p172, %p173
      %p175 = scmp.ne.s32.totalorder %s163, %s164
      %p176 = scmp.eq.s32.totalorder %s28, 1
      %p177 = por %p175, %p176
      %p179 = scmp.ne.s32.totalorder %s164, %s178
      %p180 = scmp.eq.s32.totalorder %s28, 0
      %p181 = por %p179, %p180
      %s183 = sadd.s32 %s182, 1
      %p186 = scmp.eq.s32.totalorder %s22, 1
      %p187 = scmp.ne.s32.totalorder %s182, %s184
      %p188 = scmp.eq.s32.totalorder %s22, 0
      %p189 = por %p187, %p188
      %p190 = scmp.ne.s32.totalorder %s182, %s184
      %p191 = scmp.eq.s32.totalorder %s27, 1
      %p192 = por %p190, %p191
      %p193 = scmp.ne.s32.totalorder %s184, %s185
      %p194 = scmp.eq.s32.totalorder %s27, 0
      %p195 = por %p193, %p194
      %p196 = scmp.ne.s32.totalorder %s184, %s185
      %p197 = scmp.eq.s32.totalorder %s28, 1
      %p198 = por %p196, %p197
      %p200 = scmp.ne.s32.totalorder %s185, %s199
      %p201 = scmp.eq.s32.totalorder %s28, 0
      %p202 = por %p200, %p201
      %s204 = sadd.s32 %s203, 1
      %p207 = scmp.eq.s32.totalorder %s22, 1
      %p208 = scmp.ne.s32.totalorder %s203, %s205
      %p209 = scmp.eq.s32.totalorder %s22, 0
      %p210 = por %p208, %p209
      %p211 = scmp.ne.s32.totalorder %s203, %s205
      %p212 = scmp.eq.s32.totalorder %s27, 1
      %p213 = por %p211, %p212
      %p214 = scmp.ne.s32.totalorder %s205, %s206
      %p215 = scmp.eq.s32.totalorder %s27, 0
      %p216 = por %p214, %p215
      %p217 = scmp.ne.s32.totalorder %s205, %s206
      %p218 = scmp.eq.s32.totalorder %s28, 1
      %p219 = por %p217, %p218
      %p221 = scmp.ne.s32.totalorder %s206, %s220
      %p222 = scmp.eq.s32.totalorder %s28, 0
      %p223 = por %p221, %p222
      %s225 = sadd.s32 %s224, 1
      %p228 = scmp.eq.s32.totalorder %s22, 1
      %p229 = scmp.ne.s32.totalorder %s224, %s226
      %p230 = scmp.eq.s32.totalorder %s22, 0
      %p231 = por %p229, %p230
      %p232 = scmp.ne.s32.totalorder %s224, %s226
      %p233 = scmp.eq.s32.totalorder %s27, 1
      %p234 = por %p232, %p233
      %p235 = scmp.ne.s32.totalorder %s226, %s227
      %p236 = scmp.eq.s32.totalorder %s27, 0
      %p237 = por %p235, %p236
      %p238 = scmp.ne.s32.totalorder %s226, %s227
      %p239 = scmp.eq.s32.totalorder %s28, 1
      %p240 = por %p238, %p239
      %p242 = scmp.ne.s32.totalorder %s227, %s241
      %p243 = scmp.eq.s32.totalorder %s28, 0
      %p244 = por %p242, %p243
      %s246 = sadd.s32 %s245, 1
      %p249 = scmp.eq.s32.totalorder %s22, 1
      %p250 = scmp.ne.s32.totalorder %s245, %s247
      %p251 = scmp.eq.s32.totalorder %s22, 0
      %p252 = por %p250, %p251
      %p253 = scmp.ne.s32.totalorder %s245, %s247
      %p254 = scmp.eq.s32.totalorder %s27, 1
      %p255 = por %p253, %p254
      %p256 = scmp.ne.s32.totalorder %s247, %s248
      %p257 = scmp.eq.s32.totalorder %s27, 0
      %p258 = por %p256, %p257
      %p259 = scmp.ne.s32.totalorder %s247, %s248
      %p260 = scmp.eq.s32.totalorder %s28, 1
      %p261 = por %p259, %p260
      %p263 = scmp.ne.s32.totalorder %s248, %s262
      %p264 = scmp.eq.s32.totalorder %s28, 0
      %p265 = por %p263, %p264
      %s267 = sadd.s32 %s266, 1
      %p270 = scmp.eq.s32.totalorder %s22, 1
      %p271 = scmp.ne.s32.totalorder %s266, %s268
      %p272 = scmp.eq.s32.totalorder %s22, 0
      %p273 = por %p271, %p272
      %p274 = scmp.ne.s32.totalorder %s266, %s268
      %p275 = scmp.eq.s32.totalorder %s27, 1
      %p276 = por %p274, %p275
      %p277 = scmp.ne.s32.totalorder %s268, %s269
      %p278 = scmp.eq.s32.totalorder %s27, 0
      %p279 = por %p277, %p278
      %p280 = scmp.ne.s32.totalorder %s268, %s269
      %p281 = scmp.eq.s32.totalorder %s28, 1
      %p282 = por %p280, %p281
      %p284 = scmp.ne.s32.totalorder %s269, %s283
      %p285 = scmp.eq.s32.totalorder %s28, 0
      %p286 = por %p284, %p285
      %s288 = sadd.s32 %s287, 1
      %p291 = scmp.eq.s32.totalorder %s22, 1
      %p292 = scmp.ne.s32.totalorder %s287, %s289
      %p293 = scmp.eq.s32.totalorder %s22, 0
      %p294 = por %p292, %p293
      %p295 = scmp.ne.s32.totalorder %s287, %s289
      %p296 = scmp.eq.s32.totalorder %s27, 1
      %p297 = por %p295, %p296
      %p298 = scmp.ne.s32.totalorder %s289, %s290
      %p299 = scmp.eq.s32.totalorder %s27, 0
      %p300 = por %p298, %p299
      %p301 = scmp.ne.s32.totalorder %s289, %s290
      %p302 = scmp.eq.s32.totalorder %s28, 1
      %p303 = por %p301, %p302
      %p305 = scmp.ne.s32.totalorder %s290, %s304
      %p306 = scmp.eq.s32.totalorder %s28, 0
      %p307 = por %p305, %p306
      %s308 = ssub.s32 %s22, %s29
      %p309 = scmp.eq.s32.totalorder %s308, 0
      %s311 = sadd.s32 %s310, 1
      %s312 = scalar_select %p309, %s310, %s311
      %p315 = pneg %p309
      %p316 = scmp.eq.s32.totalorder %s22, 1
      %p317 = por %p315, %p316
      %p318 = scmp.ne.s32.totalorder %s310, %s313
      %p319 = scmp.eq.s32.totalorder %s22, 0
      %p320 = por %p318, %p319
      %p321 = scmp.ne.s32.totalorder %s310, %s313
      %p322 = scmp.eq.s32.totalorder %s27, 1
      %p323 = por %p321, %p322
      %p324 = scmp.ne.s32.totalorder %s313, %s314
      %p325 = scmp.eq.s32.totalorder %s27, 0
      %p326 = por %p324, %p325
      %p327 = scmp.ne.s32.totalorder %s313, %s314
      %p328 = scmp.eq.s32.totalorder %s28, 1
      %p329 = por %p327, %p328
      %p331 = scmp.ne.s32.totalorder %s314, %s330
      %p332 = scmp.eq.s32.totalorder %s28, 0
      %p333 = por %p331, %p332
      %p334 = scmp.le.s32.totalorder 1, %s22
      %p335 = scmp.lt.s32.totalorder %s22, 3
      %p336 = pnand %p334, %p335
      %p337 = pneg %p336
      // Predicated region
      $region9: #{vgg_forward.1} parent=5 // pred_check
        _
      $region10: #{vgg_forward.1} parent=5 // pred_check_branch
        %339 = sbr.rel (%p336) target = $region12
      $region11: #{vgg_forward.1} parent=5 // pred_region
        %s340 = ssub.s32 %s22, 1
        // Predicated region
        $region13: #{vgg_forward.1} parent=11 // pred_check
          %p341 = pneg %p69
        $region14: #{vgg_forward.1} parent=11 // pred_check_branch
          %343 = sbr.rel (%p341) target = $region16
        $region15: #{vgg_forward.1} parent=11 // pred_region
          _
        $region16: #{vgg_forward.1} parent=11 // pred_fallthru
          _
        // Predicated region
        $region17: #{vgg_forward.1} parent=11 // pred_check
          %p344 = pneg %p90
        $region18: #{vgg_forward.1} parent=11 // pred_check_branch
          %346 = sbr.rel (%p344) target = $region20
        $region19: #{vgg_forward.1} parent=11 // pred_region
          _
        $region20: #{vgg_forward.1} parent=11 // pred_fallthru
          _
        // Predicated region
        $region21: #{vgg_forward.1} parent=11 // pred_check
          %p347 = pneg %p111
        $region22: #{vgg_forward.1} parent=11 // pred_check_branch
          %349 = sbr.rel (%p347) target = $region24
        $region23: #{vgg_forward.1} parent=11 // pred_region
          _
        $region24: #{vgg_forward.1} parent=11 // pred_fallthru
          _
        // Predicated region
        $region25: #{vgg_forward.1} parent=11 // pred_check
          %p350 = pneg %p132
        $region26: #{vgg_forward.1} parent=11 // pred_check_branch
          %352 = sbr.rel (%p350) target = $region28
        $region27: #{vgg_forward.1} parent=11 // pred_region
          _
        $region28: #{vgg_forward.1} parent=11 // pred_fallthru
          _
        // Predicated region
        $region29: #{vgg_forward.1} parent=11 // pred_check
          %p353 = pneg %p153
        $region30: #{vgg_forward.1} parent=11 // pred_check_branch
          %355 = sbr.rel (%p353) target = $region32
        $region31: #{vgg_forward.1} parent=11 // pred_region
          _
        $region32: #{vgg_forward.1} parent=11 // pred_fallthru
          _
        // Predicated region
        $region33: #{vgg_forward.1} parent=11 // pred_check
          %p356 = pneg %p174
        $region34: #{vgg_forward.1} parent=11 // pred_check_branch
          %358 = sbr.rel (%p356) target = $region36
        $region35: #{vgg_forward.1} parent=11 // pred_region
          _
        $region36: #{vgg_forward.1} parent=11 // pred_fallthru
          _
        // Predicated region
        $region37: #{vgg_forward.1} parent=11 // pred_check
          %p359 = pneg %p195
        $region38: #{vgg_forward.1} parent=11 // pred_check_branch
          %361 = sbr.rel (%p359) target = $region40
        $region39: #{vgg_forward.1} parent=11 // pred_region
          _
        $region40: #{vgg_forward.1} parent=11 // pred_fallthru
          _
        // Predicated region
        $region41: #{vgg_forward.1} parent=11 // pred_check
          %p362 = pneg %p216
        $region42: #{vgg_forward.1} parent=11 // pred_check_branch
          %364 = sbr.rel (%p362) target = $region44
        $region43: #{vgg_forward.1} parent=11 // pred_region
          _
        $region44: #{vgg_forward.1} parent=11 // pred_fallthru
          _
        // Predicated region
        $region45: #{vgg_forward.1} parent=11 // pred_check
          %p365 = pneg %p237
        $region46: #{vgg_forward.1} parent=11 // pred_check_branch
          %367 = sbr.rel (%p365) target = $region48
        $region47: #{vgg_forward.1} parent=11 // pred_region
          _
        $region48: #{vgg_forward.1} parent=11 // pred_fallthru
          _
        // Predicated region
        $region49: #{vgg_forward.1} parent=11 // pred_check
          %p368 = pneg %p258
        $region50: #{vgg_forward.1} parent=11 // pred_check_branch
          %370 = sbr.rel (%p368) target = $region52
        $region51: #{vgg_forward.1} parent=11 // pred_region
          _
        $region52: #{vgg_forward.1} parent=11 // pred_fallthru
          _
        // Predicated region
        $region53: #{vgg_forward.1} parent=11 // pred_check
          %p371 = pneg %p279
        $region54: #{vgg_forward.1} parent=11 // pred_check_branch
          %373 = sbr.rel (%p371) target = $region56
        $region55: #{vgg_forward.1} parent=11 // pred_region
          _
        $region56: #{vgg_forward.1} parent=11 // pred_fallthru
          _
        // Predicated region
        $region57: #{vgg_forward.1} parent=11 // pred_check
          %p374 = pneg %p300
        $region58: #{vgg_forward.1} parent=11 // pred_check_branch
          %376 = sbr.rel (%p374) target = $region60
        $region59: #{vgg_forward.1} parent=11 // pred_region
          _
        $region60: #{vgg_forward.1} parent=11 // pred_fallthru
          _
      $region12: #{vgg_forward.1} parent=5 // pred_fallthru
        _
      %p377 = scmp.lt.s32.totalorder %s22, 2
      // Predicated region
      $region61: #{vgg_forward.1} parent=5 // pred_check
        %p378 = pneg %p377
      $region62: #{vgg_forward.1} parent=5 // pred_check_branch
        %380 = sbr.rel (%p378) target = $region64
      $region63: #{vgg_forward.1} parent=5 // pred_region
        // Predicated region
        $region65: #{vgg_forward.1} parent=63 // pred_check
          %p381 = pneg %p42
        $region66: #{vgg_forward.1} parent=63 // pred_check_branch
          %383 = sbr.rel (%p381) target = $region68
        $region67: #{vgg_forward.1} parent=63 // pred_region
          %p384 = scmp.lt.s32.totalorder %s22, 1
          %s385 = scalar_select %p384, %s22, 1
          %s386 = smul.addr %s385, 32
          %s387 = smul.addr %s386, 4
          %s388 = scalar_lea.vmem %s0, %s387
        $region68: #{vgg_forward.1} parent=63 // pred_fallthru
          _
      $region64: #{vgg_forward.1} parent=5 // pred_fallthru
        _
      %p389 = scmp.le.s32.totalorder 1, %s22
      %p390 = scmp.lt.s32.totalorder %s22, 3
      %p391 = pnand %p389, %p390
      %p392 = pneg %p391
      // Predicated region
      $region69: #{vgg_forward.1} parent=5 // pred_check
        _
      $region70: #{vgg_forward.1} parent=5 // pred_check_branch
        %394 = sbr.rel (%p391) target = $region72
      $region71: #{vgg_forward.1} parent=5 // pred_region
        %s395 = ssub.s32 %s22, 1
        %p396 = scmp.lt.s32.totalorder %s27, 1
        %s397 = scalar_select %p396, %s27, 1
        %s398 = smul.addr %s397, 32
        %s399 = smul.addr %s398, 4
        %s400 = scalar_lea.vmem %s0, %s399
        %p401 = pneg %p48
        %p402 = pneg %p45
        %p403 = pneg %p69
        %p404 = pneg %p66
        %p405 = pneg %p90
        %p406 = pneg %p87
        %p407 = pneg %p111
        %p408 = pneg %p108
        %p409 = pneg %p132
        %p410 = pneg %p129
        %p411 = pneg %p153
        %p412 = pneg %p150
        %p413 = pneg %p174
        %p414 = pneg %p171
        %p415 = pneg %p195
        %p416 = pneg %p192
        %p417 = pneg %p216
        %p418 = pneg %p213
        %p419 = pneg %p237
        %p420 = pneg %p234
        %p421 = pneg %p258
        %p422 = pneg %p255
        %p423 = pneg %p279
        %p424 = pneg %p276
        %p425 = pneg %p300
        %p426 = pneg %p297
        %p427 = pneg %p326
        %p428 = pneg %p323
        %s429 = sand.u32 %s313, 1
        %s430 = scalar_lea.sflag [#allocation7], %s429
        %s431 = sand.u32 %s313, 1
        %s432 = smul.addr %s431, 4
        %s433 = scalar_lea.vmem [#allocation6], %s432
        %p434 = scmp.lt.s32.totalorder %s27, 1
        %s435 = scalar_select %p434, %s27, 1
        %s436 = smul.addr %s435, 32
        %s437 = smul.addr %s436, 4
        %s438 = scalar_lea.vmem %s0, %s437
        %v440 = vld [vmem:[%s438] sm:$0xf]
        %v441 = vld [vmem:[%s438 + $0x4] sm:$0xf]
        %v442 = vld [vmem:[%s438 + $0x8] sm:$0xf]
        %v443 = vld [vmem:[%s438 + $0xc] sm:$0xf]
        %v444 = vld [vmem:[%s438 + $0x10] sm:$0xf]
        %v445 = vld [vmem:[%s438 + $0x14] sm:$0xf]
        %v446 = vld [vmem:[%s438 + $0x18] sm:$0xf]
        %v447 = vld [vmem:[%s438 + $0x1c] sm:$0xf]
        %v448 = vld [vmem:[%s438 + $0x20] sm:$0xf]
        %v449 = vld [vmem:[%s438 + $0x24] sm:$0xf]
        %v450 = vld [vmem:[%s438 + $0x28] sm:$0xf]
        %v451 = vld [vmem:[%s438 + $0x2c] sm:$0xf]
        %v452 = vld [vmem:[%s438 + $0x30] sm:$0xf]
        %v453 = vld [vmem:[%s438 + $0x34] sm:$0xf]
        %v454 = vld [vmem:[%s438 + $0x38] sm:$0xf]
        %v455 = vld [vmem:[%s438 + $0x3c] sm:$0xf]
        %v456 = vld [vmem:[%s438 + $0x40] sm:$0xf]
        %v457 = vld [vmem:[%s438 + $0x44] sm:$0xf]
        %v458 = vld [vmem:[%s438 + $0x48] sm:$0xf]
        %v459 = vld [vmem:[%s438 + $0x4c] sm:$0xf]
        %v460 = vld [vmem:[%s438 + $0x50] sm:$0xf]
        %v461 = vld [vmem:[%s438 + $0x54] sm:$0xf]
        %v462 = vld [vmem:[%s438 + $0x58] sm:$0xf]
        %v463 = vld [vmem:[%s438 + $0x5c] sm:$0xf]
        %v464 = vld [vmem:[%s438 + $0x60] sm:$0xf]
        %v465 = vld [vmem:[%s438 + $0x64] sm:$0xf]
        %v466 = vld [vmem:[%s438 + $0x68] sm:$0xf]
        %v467 = vld [vmem:[%s438 + $0x6c] sm:$0xf]
        %v468 = vld [vmem:[%s438 + $0x70] sm:$0xf]
        %v469 = vld [vmem:[%s438 + $0x74] sm:$0xf]
        %v470 = vld [vmem:[%s438 + $0x78] sm:$0xf]
        %v471 = vld [vmem:[%s438 + $0x7c] sm:$0xf]
        %v472 = vld [vmem:[%s1] sm:$0xf]
        %v473 = vld [vmem:[%s1 + $0x4] sm:$0xf]
        %v474 = vld [vmem:[%s1 + $0x8] sm:$0xf]
        %v475 = vld [vmem:[%s1 + $0xc] sm:$0xf]
        %v476 = vld [vmem:[%s2] sm:$0x1]
        %v478 = vlaneseq
        %v479 = vshrl.u32 %v478, 7
        %v480 = vsub.s32 0, %v479
        %v481 = vrot.slane %v476, %v480
        %v515 = vunpack.c.l.b16 %v440
        %v516 = vunpack.c.l.b16 %v441
        %v517 = vunpack.c.l.b16 %v442
        %v518 = vunpack.c.l.b16 %v443
        %v519 = vunpack.c.l.b16 %v444
        %v520 = vunpack.c.l.b16 %v445
        %v521 = vunpack.c.l.b16 %v446
        %v522 = vunpack.c.l.b16 %v447
        %v523 = vunpack.c.l.b16 %v448
        %v524 = vunpack.c.l.b16 %v449
        %v525 = vunpack.c.l.b16 %v450
        %v526 = vunpack.c.l.b16 %v451
        %v527 = vunpack.c.l.b16 %v452
        %v528 = vunpack.c.l.b16 %v453
        %v529 = vunpack.c.l.b16 %v454
        %v530 = vunpack.c.l.b16 %v455
        %v531 = vunpack.c.l.b16 %v456
        %v532 = vunpack.c.l.b16 %v457
        %v533 = vunpack.c.l.b16 %v458
        %v534 = vunpack.c.l.b16 %v459
        %v535 = vunpack.c.l.b16 %v460
        %v536 = vunpack.c.l.b16 %v461
        %v537 = vunpack.c.l.b16 %v462
        %v538 = vunpack.c.l.b16 %v463
        %v539 = vunpack.c.l.b16 %v464
        %v540 = vunpack.c.l.b16 %v465
        %v541 = vunpack.c.l.b16 %v466
        %v542 = vunpack.c.l.b16 %v467
        %v543 = vunpack.c.l.b16 %v468
        %v544 = vunpack.c.l.b16 %v469
        %v545 = vunpack.c.l.b16 %v470
        %v546 = vunpack.c.l.b16 %v471
        %v547 = vpack.c.b16 %v516, %v515
        %v548 = vpack.c.b16 %v518, %v517
        %v549 = vpack.c.b16 %v520, %v519
        %v550 = vpack.c.b16 %v522, %v521
        %v551 = vpack.c.b16 %v524, %v523
        %v552 = vpack.c.b16 %v526, %v525
        %v553 = vpack.c.b16 %v528, %v527
        %v554 = vpack.c.b16 %v530, %v529
        %v555 = vpack.c.b16 %v532, %v531
        %v556 = vpack.c.b16 %v534, %v533
        %v557 = vpack.c.b16 %v536, %v535
        %v558 = vpack.c.b16 %v538, %v537
        %v559 = vpack.c.b16 %v540, %v539
        %v560 = vpack.c.b16 %v542, %v541
        %v561 = vpack.c.b16 %v544, %v543
        %v562 = vpack.c.b16 %v546, %v545
        %v567 = vunpack.c.l.b16 %v472
        %v568 = vunpack.c.l.b16 %v473
        %v569 = vunpack.c.l.b16 %v474
        %v570 = vunpack.c.l.b16 %v475
        %v571 = vpack.c.b16 %v568, %v567
        %v572 = vpack.c.b16 %v570, %v569
        %vm575 = vcmask 261120
        %v577 = vsel %vm575, %v547, 0
        %v580 = vsel %vm575, %v548, 0
        %v583 = vsel %vm575, %v549, 0
        %v586 = vsel %vm575, %v550, 0
        %v589 = vsel %vm575, %v551, 0
        %v592 = vsel %vm575, %v552, 0
        %v595 = vsel %vm575, %v553, 0
        %v598 = vsel %vm575, %v554, 0
        %v601 = vsel %vm575, %v555, 0
        %v604 = vsel %vm575, %v556, 0
        %v607 = vsel %vm575, %v557, 0
        %v610 = vsel %vm575, %v558, 0
        %v613 = vsel %vm575, %v559, 0
        %v616 = vsel %vm575, %v560, 0
        %v619 = vsel %vm575, %v561, 0
        %v622 = vsel %vm575, %v562, 0
        %624 = vmatprep.subr.bf16.mxu0 0
        %625 = vmatpush1.bf16.msra.mxu0 %v571
        %626 = vmatprep.subr.bf16.mxu0 0
        %627 = vmatpush1.bf16.msra.mxu0 %v572
        %628 = vmatprep.subr.bf16.mxu0 0
        %629 = vmatpush1.bf16.msra.mxu0 0
        %630 = vmatprep.subr.bf16.mxu0 0
        %631 = vmatpush1.bf16.msra.mxu0 0
        %632 = vmatprep.subr.bf16.mxu0 0
        %633 = vmatpush1.bf16.msra.mxu0 0
        %634 = vmatprep.subr.bf16.mxu0 0
        %635 = vmatpush1.bf16.msra.mxu0 0
        %636 = vmatprep.subr.bf16.mxu0 0
        %637 = vmatpush1.bf16.msra.mxu0 0
        %638 = vmatprep.subr.bf16.mxu0 0
        %639 = vmatpush1.bf16.msra.mxu0 0
        %640 = vmatprep.subr.bf16.mxu0 0
        %641 = vmatpush1.bf16.msra.mxu0 0
        %642 = vmatprep.subr.bf16.mxu0 0
        %643 = vmatpush1.bf16.msra.mxu0 0
        %644 = vmatprep.subr.bf16.mxu0 0
        %645 = vmatpush1.bf16.msra.mxu0 0
        %646 = vmatprep.subr.bf16.mxu0 0
        %647 = vmatpush1.bf16.msra.mxu0 0
        %648 = vmatprep.subr.bf16.mxu0 0
        %649 = vmatpush1.bf16.msra.mxu0 0
        %650 = vmatprep.subr.bf16.mxu0 0
        %651 = vmatpush1.bf16.msra.mxu0 0
        %652 = vmatprep.subr.bf16.mxu0 0
        %653 = vmatpush1.bf16.msra.mxu0 0
        %654 = vmatprep.subr.bf16.mxu0 0
        %655 = vmatpush1.bf16.msra.mxu0 0
        %656 = vmatprep.mubr.bf16.mxu0 0
        %657 = vmatmul.mubr.bf16.gmra.mrb[0].mxu0 %v577
        %v658 = vpop.f32.mrb[0].mxu0
        %v659 = vadd.f32 %v481, %v658
        %v660 = vpop.f32.mrb[0].mxu0
        %v661 = vpop.f32.mrb[0].mxu0
        %v662 = vadd.f32 %v481, %v661
        %v663 = vpop.f32.mrb[0].mxu0
        %664 = vmatprep.mubr.bf16.mxu0 0
        %665 = vmatmul.mubr.bf16.gmra.mrb[0].mxu0 %v580
        %v666 = vpop.f32.mrb[0].mxu0
        %v667 = vadd.f32 %v481, %v666
        %v668 = vpop.f32.mrb[0].mxu0
        %v669 = vpop.f32.mrb[0].mxu0
        %v670 = vadd.f32 %v481, %v669
        %v671 = vpop.f32.mrb[0].mxu0
        %672 = vmatprep.mubr.bf16.mxu0 0
        %673 = vmatmul.mubr.bf16.gmra.mrb[0].mxu0 %v583
        %v674 = vpop.f32.mrb[0].mxu0
        %v675 = vadd.f32 %v481, %v674
        %v676 = vpop.f32.mrb[0].mxu0
        %v677 = vpop.f32.mrb[0].mxu0
        %v678 = vadd.f32 %v481, %v677
        %v679 = vpop.f32.mrb[0].mxu0
        %680 = vmatprep.mubr.bf16.mxu0 0
        %681 = vmatmul.mubr.bf16.gmra.mrb[0].mxu0 %v586
        %v682 = vpop.f32.mrb[0].mxu0
        %v683 = vadd.f32 %v481, %v682
        %v684 = vpop.f32.mrb[0].mxu0
        %v685 = vpop.f32.mrb[0].mxu0
        %v686 = vadd.f32 %v481, %v685
        %v687 = vpop.f32.mrb[0].mxu0
        %688 = vmatprep.mubr.bf16.mxu0 0
        %689 = vmatmul.mubr.bf16.gmra.mrb[0].mxu0 %v589
        %v690 = vpop.f32.mrb[0].mxu0
        %v691 = vadd.f32 %v481, %v690
        %v692 = vpop.f32.mrb[0].mxu0
        %v693 = vpop.f32.mrb[0].mxu0
        %v694 = vadd.f32 %v481, %v693
        %v695 = vpop.f32.mrb[0].mxu0
        %696 = vmatprep.mubr.bf16.mxu0 0
        %697 = vmatmul.mubr.bf16.gmra.mrb[0].mxu0 %v592
        %v698 = vpop.f32.mrb[0].mxu0
        %v699 = vadd.f32 %v481, %v698
        %v700 = vpop.f32.mrb[0].mxu0
        %v701 = vpop.f32.mrb[0].mxu0
        %v702 = vadd.f32 %v481, %v701
        %v703 = vpop.f32.mrb[0].mxu0
        %704 = vmatprep.mubr.bf16.mxu0 0
        %705 = vmatmul.mubr.bf16.gmra.mrb[0].mxu0 %v595
        %v706 = vpop.f32.mrb[0].mxu0
        %v707 = vadd.f32 %v481, %v706
        %v708 = vpop.f32.mrb[0].mxu0
        %v709 = vpop.f32.mrb[0].mxu0
        %v710 = vadd.f32 %v481, %v709
        %v711 = vpop.f32.mrb[0].mxu0
        %712 = vmatprep.mubr.bf16.mxu0 0
        %713 = vmatmul.mubr.bf16.gmra.mrb[0].mxu0 %v598
        %v714 = vpop.f32.mrb[0].mxu0
        %v715 = vadd.f32 %v481, %v714
        %v716 = vpop.f32.mrb[0].mxu0
        %v717 = vpop.f32.mrb[0].mxu0
        %v718 = vadd.f32 %v481, %v717
        %v719 = vpop.f32.mrb[0].mxu0
        %720 = vmatprep.mubr.bf16.mxu0 0
        %721 = vmatmul.mubr.bf16.gmra.mrb[0].mxu0 %v601
        %v722 = vpop.f32.mrb[0].mxu0
        %v723 = vadd.f32 %v481, %v722
        %v724 = vpop.f32.mrb[0].mxu0
        %v725 = vpop.f32.mrb[0].mxu0
        %v726 = vadd.f32 %v481, %v725
        %v727 = vpop.f32.mrb[0].mxu0
        %728 = vmatprep.mubr.bf16.mxu0 0
        %729 = vmatmul.mubr.bf16.gmra.mrb[0].mxu0 %v604
        %v730 = vpop.f32.mrb[0].mxu0
        %v731 = vadd.f32 %v481, %v730
        %v732 = vpop.f32.mrb[0].mxu0
        %v733 = vpop.f32.mrb[0].mxu0
        %v734 = vadd.f32 %v481, %v733
        %v735 = vpop.f32.mrb[0].mxu0
        %736 = vmatprep.mubr.bf16.mxu0 0
        %737 = vmatmul.mubr.bf16.gmra.mrb[0].mxu0 %v607
        %v738 = vpop.f32.mrb[0].mxu0
        %v739 = vadd.f32 %v481, %v738
        %v740 = vpop.f32.mrb[0].mxu0
        %v741 = vpop.f32.mrb[0].mxu0
        %v742 = vadd.f32 %v481, %v741
        %v743 = vpop.f32.mrb[0].mxu0
        %744 = vmatprep.mubr.bf16.mxu0 0
        %745 = vmatmul.mubr.bf16.gmra.mrb[0].mxu0 %v610
        %v746 = vpop.f32.mrb[0].mxu0
        %v747 = vadd.f32 %v481, %v746
        %v748 = vpop.f32.mrb[0].mxu0
        %v749 = vpop.f32.mrb[0].mxu0
        %v750 = vadd.f32 %v481, %v749
        %v751 = vpop.f32.mrb[0].mxu0
        %752 = vmatprep.mubr.bf16.mxu0 0
        %753 = vmatmul.mubr.bf16.gmra.mrb[0].mxu0 %v613
        %v754 = vpop.f32.mrb[0].mxu0
        %v755 = vadd.f32 %v481, %v754
        %v756 = vpop.f32.mrb[0].mxu0
        %v757 = vpop.f32.mrb[0].mxu0
        %v758 = vadd.f32 %v481, %v757
        %v759 = vpop.f32.mrb[0].mxu0
        %760 = vmatprep.mubr.bf16.mxu0 0
        %761 = vmatmul.mubr.bf16.gmra.mrb[0].mxu0 %v616
        %v762 = vpop.f32.mrb[0].mxu0
        %v763 = vadd.f32 %v481, %v762
        %v764 = vpop.f32.mrb[0].mxu0
        %v765 = vpop.f32.mrb[0].mxu0
        %v766 = vadd.f32 %v481, %v765
        %v767 = vpop.f32.mrb[0].mxu0
        %768 = vmatprep.mubr.bf16.mxu0 0
        %769 = vmatmul.mubr.bf16.gmra.mrb[0].mxu0 %v619
        %v770 = vpop.f32.mrb[0].mxu0
        %v771 = vadd.f32 %v481, %v770
        %v772 = vpop.f32.mrb[0].mxu0
        %v773 = vpop.f32.mrb[0].mxu0
        %v774 = vadd.f32 %v481, %v773
        %v775 = vpop.f32.mrb[0].mxu0
        %776 = vmatprep.mubr.bf16.mxu0 0
        %777 = vmatmul.mubr.bf16.gmra.mrb[0].mxu0 %v622
        %v778 = vpop.f32.mrb[0].mxu0
        %v779 = vadd.f32 %v481, %v778
        %v780 = vpop.f32.mrb[0].mxu0
        %v781 = vpop.f32.mrb[0].mxu0
        %v782 = vadd.f32 %v481, %v781
        %v783 = vpop.f32.mrb[0].mxu0
        %784 = vdwg.mxu0
        %v785 = vmax.f32 %v659, 0.0
        %v786 = vmax.f32 %v662, 0.0
        %v787 = vmax.f32 %v667, 0.0
        %v788 = vmax.f32 %v670, 0.0
        %v789 = vmax.f32 %v675, 0.0
        %v790 = vmax.f32 %v678, 0.0
        %v791 = vmax.f32 %v683, 0.0
        %v792 = vmax.f32 %v686, 0.0
        %v793 = vmax.f32 %v691, 0.0
        %v794 = vmax.f32 %v694, 0.0
        %v795 = vmax.f32 %v699, 0.0
        %v796 = vmax.f32 %v702, 0.0
        %v797 = vmax.f32 %v707, 0.0
        %v798 = vmax.f32 %v710, 0.0
        %v799 = vmax.f32 %v715, 0.0
        %v800 = vmax.f32 %v718, 0.0
        %v801 = vmax.f32 %v723, 0.0
        %v802 = vmax.f32 %v726, 0.0
        %v803 = vmax.f32 %v731, 0.0
        %v804 = vmax.f32 %v734, 0.0
        %v805 = vmax.f32 %v739, 0.0
        %v806 = vmax.f32 %v742, 0.0
        %v807 = vmax.f32 %v747, 0.0
        %v808 = vmax.f32 %v750, 0.0
        %v809 = vmax.f32 %v755, 0.0
        %v810 = vmax.f32 %v758, 0.0
        %v811 = vmax.f32 %v763, 0.0
        %v812 = vmax.f32 %v766, 0.0
        %v813 = vmax.f32 %v771, 0.0
        %v814 = vmax.f32 %v774, 0.0
        %v815 = vmax.f32 %v779, 0.0
        %v816 = vmax.f32 %v782, 0.0
        %v849 = vcombine.high %v785, %v785
        %v851 = vunpack.c.l.s4 1983009808
        %v852 = vunpack.c.0.s8 %v851
        %v853 = vlaneseq
        %v854 = vshrl.u32 %v853, 7
        %v855 = vsub.s32 %v852, %v854
        %v856 = vrot.slane %v785, %v855
        %v858 = vunpack.c.l.s4 1983009808
        %v859 = vunpack.c.0.s8 %v858
        %v860 = vlaneseq
        %v861 = vshrl.u32 %v860, 7
        %v862 = vsub.s32 %v859, %v861
        %v863 = vrot.slane %v849, %v862
        %v864 = vcombine.high %v856, %v856
        %v865 = vcombine.high %v863, %v863
        %v866 = vcombine.high %v786, %v786
        %v868 = vunpack.c.l.s4 1983009808
        %v869 = vunpack.c.0.s8 %v868
        %v870 = vlaneseq
        %v871 = vshrl.u32 %v870, 7
        %v872 = vsub.s32 %v869, %v871
        %v873 = vrot.slane %v786, %v872
        %v875 = vunpack.c.l.s4 1983009808
        %v876 = vunpack.c.0.s8 %v875
        %v877 = vlaneseq
        %v878 = vshrl.u32 %v877, 7
        %v879 = vsub.s32 %v876, %v878
        %v880 = vrot.slane %v866, %v879
        %v881 = vcombine.high %v873, %v873
        %v882 = vcombine.high %v880, %v880
        %v883 = vcombine.high %v787, %v787
        %v885 = vunpack.c.l.s4 1983009808
        %v886 = vunpack.c.0.s8 %v885
        %v887 = vlaneseq
        %v888 = vshrl.u32 %v887, 7
        %v889 = vsub.s32 %v886, %v888
        %v890 = vrot.slane %v787, %v889
        %v892 = vunpack.c.l.s4 1983009808
        %v893 = vunpack.c.0.s8 %v892
        %v894 = vlaneseq
        %v895 = vshrl.u32 %v894, 7
        %v896 = vsub.s32 %v893, %v895
        %v897 = vrot.slane %v883, %v896
        %v898 = vcombine.high %v890, %v890
        %v899 = vcombine.high %v897, %v897
        %v900 = vcombine.high %v788, %v788
        %v902 = vunpack.c.l.s4 1983009808
        %v903 = vunpack.c.0.s8 %v902
        %v904 = vlaneseq
        %v905 = vshrl.u32 %v904, 7
        %v906 = vsub.s32 %v903, %v905
        %v907 = vrot.slane %v788, %v906
        %v909 = vunpack.c.l.s4 1983009808
        %v910 = vunpack.c.0.s8 %v909
        %v911 = vlaneseq
        %v912 = vshrl.u32 %v911, 7
        %v913 = vsub.s32 %v910, %v912
        %v914 = vrot.slane %v900, %v913
        %v915 = vcombine.high %v907, %v907
        %v916 = vcombine.high %v914, %v914
        %v917 = vcombine.high %v789, %v789
        %v919 = vunpack.c.l.s4 1983009808
        %v920 = vunpack.c.0.s8 %v919
        %v921 = vlaneseq
        %v922 = vshrl.u32 %v921, 7
        %v923 = vsub.s32 %v920, %v922
        %v924 = vrot.slane %v789, %v923
        %v926 = vunpack.c.l.s4 1983009808
        %v927 = vunpack.c.0.s8 %v926
        %v928 = vlaneseq
        %v929 = vshrl.u32 %v928, 7
        %v930 = vsub.s32 %v927, %v929
        %v931 = vrot.slane %v917, %v930
        %v932 = vcombine.high %v924, %v924
        %v933 = vcombine.high %v931, %v931
        %v934 = vcombine.high %v790, %v790
        %v936 = vunpack.c.l.s4 1983009808
        %v937 = vunpack.c.0.s8 %v936
        %v938 = vlaneseq
        %v939 = vshrl.u32 %v938, 7
        %v940 = vsub.s32 %v937, %v939
        %v941 = vrot.slane %v790, %v940
        %v943 = vunpack.c.l.s4 1983009808
        %v944 = vunpack.c.0.s8 %v943
        %v945 = vlaneseq
        %v946 = vshrl.u32 %v945, 7
        %v947 = vsub.s32 %v944, %v946
        %v948 = vrot.slane %v934, %v947
        %v949 = vcombine.high %v941, %v941
        %v950 = vcombine.high %v948, %v948
        %v951 = vcombine.high %v791, %v791
        %v953 = vunpack.c.l.s4 1983009808
        %v954 = vunpack.c.0.s8 %v953
        %v955 = vlaneseq
        %v956 = vshrl.u32 %v955, 7
        %v957 = vsub.s32 %v954, %v956
        %v958 = vrot.slane %v791, %v957
        %v960 = vunpack.c.l.s4 1983009808
        %v961 = vunpack.c.0.s8 %v960
        %v962 = vlaneseq
        %v963 = vshrl.u32 %v962, 7
        %v964 = vsub.s32 %v961, %v963
        %v965 = vrot.slane %v951, %v964
        %v966 = vcombine.high %v958, %v958
        %v967 = vcombine.high %v965, %v965
        %v968 = vcombine.high %v792, %v792
        %v970 = vunpack.c.l.s4 1983009808
        %v971 = vunpack.c.0.s8 %v970
        %v972 = vlaneseq
        %v973 = vshrl.u32 %v972, 7
        %v974 = vsub.s32 %v971, %v973
        %v975 = vrot.slane %v792, %v974
        %v977 = vunpack.c.l.s4 1983009808
        %v978 = vunpack.c.0.s8 %v977
        %v979 = vlaneseq
        %v980 = vshrl.u32 %v979, 7
        %v981 = vsub.s32 %v978, %v980
        %v982 = vrot.slane %v968, %v981
        %v983 = vcombine.high %v975, %v975
        %v984 = vcombine.high %v982, %v982
        %v985 = vcombine.high %v793, %v793
        %v987 = vunpack.c.l.s4 1983009808
        %v988 = vunpack.c.0.s8 %v987
        %v989 = vlaneseq
        %v990 = vshrl.u32 %v989, 7
        %v991 = vsub.s32 %v988, %v990
        %v992 = vrot.slane %v793, %v991
        %v994 = vunpack.c.l.s4 1983009808
        %v995 = vunpack.c.0.s8 %v994
        %v996 = vlaneseq
        %v997 = vshrl.u32 %v996, 7
        %v998 = vsub.s32 %v995, %v997
        %v999 = vrot.slane %v985, %v998
        %v1000 = vcombine.high %v992, %v992
        %v1001 = vcombine.high %v999, %v999
        %v1002 = vcombine.high %v794, %v794
        %v1004 = vunpack.c.l.s4 1983009808
        %v1005 = vunpack.c.0.s8 %v1004
        %v1006 = vlaneseq
        %v1007 = vshrl.u32 %v1006, 7
        %v1008 = vsub.s32 %v1005, %v1007
        %v1009 = vrot.slane %v794, %v1008
        %v1011 = vunpack.c.l.s4 1983009808
        %v1012 = vunpack.c.0.s8 %v1011
        %v1013 = vlaneseq
        %v1014 = vshrl.u32 %v1013, 7
        %v1015 = vsub.s32 %v1012, %v1014
        %v1016 = vrot.slane %v1002, %v1015
        %v1017 = vcombine.high %v1009, %v1009
        %v1018 = vcombine.high %v1016, %v1016
        %v1019 = vcombine.high %v795, %v795
        %v1021 = vunpack.c.l.s4 1983009808
        %v1022 = vunpack.c.0.s8 %v1021
        %v1023 = vlaneseq
        %v1024 = vshrl.u32 %v1023, 7
        %v1025 = vsub.s32 %v1022, %v1024
        %v1026 = vrot.slane %v795, %v1025
        %v1028 = vunpack.c.l.s4 1983009808
        %v1029 = vunpack.c.0.s8 %v1028
        %v1030 = vlaneseq
        %v1031 = vshrl.u32 %v1030, 7
        %v1032 = vsub.s32 %v1029, %v1031
        %v1033 = vrot.slane %v1019, %v1032
        %v1034 = vcombine.high %v1026, %v1026
        %v1035 = vcombine.high %v1033, %v1033
        %v1036 = vcombine.high %v796, %v796
        %v1038 = vunpack.c.l.s4 1983009808
        %v1039 = vunpack.c.0.s8 %v1038
        %v1040 = vlaneseq
        %v1041 = vshrl.u32 %v1040, 7
        %v1042 = vsub.s32 %v1039, %v1041
        %v1043 = vrot.slane %v796, %v1042
        %v1045 = vunpack.c.l.s4 1983009808
        %v1046 = vunpack.c.0.s8 %v1045
        %v1047 = vlaneseq
        %v1048 = vshrl.u32 %v1047, 7
        %v1049 = vsub.s32 %v1046, %v1048
        %v1050 = vrot.slane %v1036, %v1049
        %v1051 = vcombine.high %v1043, %v1043
        %v1052 = vcombine.high %v1050, %v1050
        %v1053 = vcombine.high %v797, %v797
        %v1055 = vunpack.c.l.s4 1983009808
        %v1056 = vunpack.c.0.s8 %v1055
        %v1057 = vlaneseq
        %v1058 = vshrl.u32 %v1057, 7
        %v1059 = vsub.s32 %v1056, %v1058
        %v1060 = vrot.slane %v797, %v1059
        %v1062 = vunpack.c.l.s4 1983009808
        %v1063 = vunpack.c.0.s8 %v1062
        %v1064 = vlaneseq
        %v1065 = vshrl.u32 %v1064, 7
        %v1066 = vsub.s32 %v1063, %v1065
        %v1067 = vrot.slane %v1053, %v1066
        %v1068 = vcombine.high %v1060, %v1060
        %v1069 = vcombine.high %v1067, %v1067
        %v1070 = vcombine.high %v798, %v798
        %v1072 = vunpack.c.l.s4 1983009808
        %v1073 = vunpack.c.0.s8 %v1072
        %v1074 = vlaneseq
        %v1075 = vshrl.u32 %v1074, 7
        %v1076 = vsub.s32 %v1073, %v1075
        %v1077 = vrot.slane %v798, %v1076
        %v1079 = vunpack.c.l.s4 1983009808
        %v1080 = vunpack.c.0.s8 %v1079
        %v1081 = vlaneseq
        %v1082 = vshrl.u32 %v1081, 7
        %v1083 = vsub.s32 %v1080, %v1082
        %v1084 = vrot.slane %v1070, %v1083
        %v1085 = vcombine.high %v1077, %v1077
        %v1086 = vcombine.high %v1084, %v1084
        %v1087 = vcombine.high %v799, %v799
        %v1089 = vunpack.c.l.s4 1983009808
        %v1090 = vunpack.c.0.s8 %v1089
        %v1091 = vlaneseq
        %v1092 = vshrl.u32 %v1091, 7
        %v1093 = vsub.s32 %v1090, %v1092
        %v1094 = vrot.slane %v799, %v1093
        %v1096 = vunpack.c.l.s4 1983009808
        %v1097 = vunpack.c.0.s8 %v1096
        %v1098 = vlaneseq
        %v1099 = vshrl.u32 %v1098, 7
        %v1100 = vsub.s32 %v1097, %v1099
        %v1101 = vrot.slane %v1087, %v1100
        %v1102 = vcombine.high %v1094, %v1094
        %v1103 = vcombine.high %v1101, %v1101
        %v1104 = vcombine.high %v800, %v800
        %v1106 = vunpack.c.l.s4 1983009808
        %v1107 = vunpack.c.0.s8 %v1106
        %v1108 = vlaneseq
        %v1109 = vshrl.u32 %v1108, 7
        %v1110 = vsub.s32 %v1107, %v1109
        %v1111 = vrot.slane %v800, %v1110
        %v1113 = vunpack.c.l.s4 1983009808
        %v1114 = vunpack.c.0.s8 %v1113
        %v1115 = vlaneseq
        %v1116 = vshrl.u32 %v1115, 7
        %v1117 = vsub.s32 %v1114, %v1116
        %v1118 = vrot.slane %v1104, %v1117
        %v1119 = vcombine.high %v1111, %v1111
        %v1120 = vcombine.high %v1118, %v1118
        %v1121 = vcombine.high %v801, %v801
        %v1123 = vunpack.c.l.s4 1983009808
        %v1124 = vunpack.c.0.s8 %v1123
        %v1125 = vlaneseq
        %v1126 = vshrl.u32 %v1125, 7
        %v1127 = vsub.s32 %v1124, %v1126
        %v1128 = vrot.slane %v801, %v1127
        %v1130 = vunpack.c.l.s4 1983009808
        %v1131 = vunpack.c.0.s8 %v1130
        %v1132 = vlaneseq
        %v1133 = vshrl.u32 %v1132, 7
        %v1134 = vsub.s32 %v1131, %v1133
        %v1135 = vrot.slane %v1121, %v1134
        %v1136 = vcombine.high %v1128, %v1128
        %v1137 = vcombine.high %v1135, %v1135
        %v1138 = vcombine.high %v802, %v802
        %v1140 = vunpack.c.l.s4 1983009808
        %v1141 = vunpack.c.0.s8 %v1140
        %v1142 = vlaneseq
        %v1143 = vshrl.u32 %v1142, 7
        %v1144 = vsub.s32 %v1141, %v1143
        %v1145 = vrot.slane %v802, %v1144
        %v1147 = vunpack.c.l.s4 1983009808
        %v1148 = vunpack.c.0.s8 %v1147
        %v1149 = vlaneseq
        %v1150 = vshrl.u32 %v1149, 7
        %v1151 = vsub.s32 %v1148, %v1150
        %v1152 = vrot.slane %v1138, %v1151
        %v1153 = vcombine.high %v1145, %v1145
        %v1154 = vcombine.high %v1152, %v1152
        %v1155 = vcombine.high %v803, %v803
        %v1157 = vunpack.c.l.s4 1983009808
        %v1158 = vunpack.c.0.s8 %v1157
        %v1159 = vlaneseq
        %v1160 = vshrl.u32 %v1159, 7
        %v1161 = vsub.s32 %v1158, %v1160
        %v1162 = vrot.slane %v803, %v1161
        %v1164 = vunpack.c.l.s4 1983009808
        %v1165 = vunpack.c.0.s8 %v1164
        %v1166 = vlaneseq
        %v1167 = vshrl.u32 %v1166, 7
        %v1168 = vsub.s32 %v1165, %v1167
        %v1169 = vrot.slane %v1155, %v1168
        %v1170 = vcombine.high %v1162, %v1162
        %v1171 = vcombine.high %v1169, %v1169
        %v1172 = vcombine.high %v804, %v804
        %v1174 = vunpack.c.l.s4 1983009808
        %v1175 = vunpack.c.0.s8 %v1174
        %v1176 = vlaneseq
        %v1177 = vshrl.u32 %v1176, 7
        %v1178 = vsub.s32 %v1175, %v1177
        %v1179 = vrot.slane %v804, %v1178
        %v1181 = vunpack.c.l.s4 1983009808
        %v1182 = vunpack.c.0.s8 %v1181
        %v1183 = vlaneseq
        %v1184 = vshrl.u32 %v1183, 7
        %v1185 = vsub.s32 %v1182, %v1184
        %v1186 = vrot.slane %v1172, %v1185
        %v1187 = vcombine.high %v1179, %v1179
        %v1188 = vcombine.high %v1186, %v1186
        %v1189 = vcombine.high %v805, %v805
        %v1191 = vunpack.c.l.s4 1983009808
        %v1192 = vunpack.c.0.s8 %v1191
        %v1193 = vlaneseq
        %v1194 = vshrl.u32 %v1193, 7
        %v1195 = vsub.s32 %v1192, %v1194
        %v1196 = vrot.slane %v805, %v1195
        %v1198 = vunpack.c.l.s4 1983009808
        %v1199 = vunpack.c.0.s8 %v1198
        %v1200 = vlaneseq
        %v1201 = vshrl.u32 %v1200, 7
        %v1202 = vsub.s32 %v1199, %v1201
        %v1203 = vrot.slane %v1189, %v1202
        %v1204 = vcombine.high %v1196, %v1196
        %v1205 = vcombine.high %v1203, %v1203
        %v1206 = vcombine.high %v806, %v806
        %v1208 = vunpack.c.l.s4 1983009808
        %v1209 = vunpack.c.0.s8 %v1208
        %v1210 = vlaneseq
        %v1211 = vshrl.u32 %v1210, 7
        %v1212 = vsub.s32 %v1209, %v1211
        %v1213 = vrot.slane %v806, %v1212
        %v1215 = vunpack.c.l.s4 1983009808
        %v1216 = vunpack.c.0.s8 %v1215
        %v1217 = vlaneseq
        %v1218 = vshrl.u32 %v1217, 7
        %v1219 = vsub.s32 %v1216, %v1218
        %v1220 = vrot.slane %v1206, %v1219
        %v1221 = vcombine.high %v1213, %v1213
        %v1222 = vcombine.high %v1220, %v1220
        %v1223 = vcombine.high %v807, %v807
        %v1225 = vunpack.c.l.s4 1983009808
        %v1226 = vunpack.c.0.s8 %v1225
        %v1227 = vlaneseq
        %v1228 = vshrl.u32 %v1227, 7
        %v1229 = vsub.s32 %v1226, %v1228
        %v1230 = vrot.slane %v807, %v1229
        %v1232 = vunpack.c.l.s4 1983009808
        %v1233 = vunpack.c.0.s8 %v1232
        %v1234 = vlaneseq
        %v1235 = vshrl.u32 %v1234, 7
        %v1236 = vsub.s32 %v1233, %v1235
        %v1237 = vrot.slane %v1223, %v1236
        %v1238 = vcombine.high %v1230, %v1230
        %v1239 = vcombine.high %v1237, %v1237
        %v1240 = vcombine.high %v808, %v808
        %v1242 = vunpack.c.l.s4 1983009808
        %v1243 = vunpack.c.0.s8 %v1242
        %v1244 = vlaneseq
        %v1245 = vshrl.u32 %v1244, 7
        %v1246 = vsub.s32 %v1243, %v1245
        %v1247 = vrot.slane %v808, %v1246
        %v1249 = vunpack.c.l.s4 1983009808
        %v1250 = vunpack.c.0.s8 %v1249
        %v1251 = vlaneseq
        %v1252 = vshrl.u32 %v1251, 7
        %v1253 = vsub.s32 %v1250, %v1252
        %v1254 = vrot.slane %v1240, %v1253
        %v1255 = vcombine.high %v1247, %v1247
        %v1256 = vcombine.high %v1254, %v1254
        %v1257 = vcombine.high %v809, %v809
        %v1259 = vunpack.c.l.s4 1983009808
        %v1260 = vunpack.c.0.s8 %v1259
        %v1261 = vlaneseq
        %v1262 = vshrl.u32 %v1261, 7
        %v1263 = vsub.s32 %v1260, %v1262
        %v1264 = vrot.slane %v809, %v1263
        %v1266 = vunpack.c.l.s4 1983009808
        %v1267 = vunpack.c.0.s8 %v1266
        %v1268 = vlaneseq
        %v1269 = vshrl.u32 %v1268, 7
        %v1270 = vsub.s32 %v1267, %v1269
        %v1271 = vrot.slane %v1257, %v1270
        %v1272 = vcombine.high %v1264, %v1264
        %v1273 = vcombine.high %v1271, %v1271
        %v1274 = vcombine.high %v810, %v810
        %v1276 = vunpack.c.l.s4 1983009808
        %v1277 = vunpack.c.0.s8 %v1276
        %v1278 = vlaneseq
        %v1279 = vshrl.u32 %v1278, 7
        %v1280 = vsub.s32 %v1277, %v1279
        %v1281 = vrot.slane %v810, %v1280
        %v1283 = vunpack.c.l.s4 1983009808
        %v1284 = vunpack.c.0.s8 %v1283
        %v1285 = vlaneseq
        %v1286 = vshrl.u32 %v1285, 7
        %v1287 = vsub.s32 %v1284, %v1286
        %v1288 = vrot.slane %v1274, %v1287
        %v1289 = vcombine.high %v1281, %v1281
        %v1290 = vcombine.high %v1288, %v1288
        %v1291 = vcombine.high %v811, %v811
        %v1293 = vunpack.c.l.s4 1983009808
        %v1294 = vunpack.c.0.s8 %v1293
        %v1295 = vlaneseq
        %v1296 = vshrl.u32 %v1295, 7
        %v1297 = vsub.s32 %v1294, %v1296
        %v1298 = vrot.slane %v811, %v1297
        %v1300 = vunpack.c.l.s4 1983009808
        %v1301 = vunpack.c.0.s8 %v1300
        %v1302 = vlaneseq
        %v1303 = vshrl.u32 %v1302, 7
        %v1304 = vsub.s32 %v1301, %v1303
        %v1305 = vrot.slane %v1291, %v1304
        %v1306 = vcombine.high %v1298, %v1298
        %v1307 = vcombine.high %v1305, %v1305
        %v1308 = vcombine.high %v812, %v812
        %v1310 = vunpack.c.l.s4 1983009808
        %v1311 = vunpack.c.0.s8 %v1310
        %v1312 = vlaneseq
        %v1313 = vshrl.u32 %v1312, 7
        %v1314 = vsub.s32 %v1311, %v1313
        %v1315 = vrot.slane %v812, %v1314
        %v1317 = vunpack.c.l.s4 1983009808
        %v1318 = vunpack.c.0.s8 %v1317
        %v1319 = vlaneseq
        %v1320 = vshrl.u32 %v1319, 7
        %v1321 = vsub.s32 %v1318, %v1320
        %v1322 = vrot.slane %v1308, %v1321
        %v1323 = vcombine.high %v1315, %v1315
        %v1324 = vcombine.high %v1322, %v1322
        %v1325 = vcombine.high %v813, %v813
        %v1327 = vunpack.c.l.s4 1983009808
        %v1328 = vunpack.c.0.s8 %v1327
        %v1329 = vlaneseq
        %v1330 = vshrl.u32 %v1329, 7
        %v1331 = vsub.s32 %v1328, %v1330
        %v1332 = vrot.slane %v813, %v1331
        %v1334 = vunpack.c.l.s4 1983009808
        %v1335 = vunpack.c.0.s8 %v1334
        %v1336 = vlaneseq
        %v1337 = vshrl.u32 %v1336, 7
        %v1338 = vsub.s32 %v1335, %v1337
        %v1339 = vrot.slane %v1325, %v1338
        %v1340 = vcombine.high %v1332, %v1332
        %v1341 = vcombine.high %v1339, %v1339
        %v1342 = vcombine.high %v814, %v814
        %v1344 = vunpack.c.l.s4 1983009808
        %v1345 = vunpack.c.0.s8 %v1344
        %v1346 = vlaneseq
        %v1347 = vshrl.u32 %v1346, 7
        %v1348 = vsub.s32 %v1345, %v1347
        %v1349 = vrot.slane %v814, %v1348
        %v1351 = vunpack.c.l.s4 1983009808
        %v1352 = vunpack.c.0.s8 %v1351
        %v1353 = vlaneseq
        %v1354 = vshrl.u32 %v1353, 7
        %v1355 = vsub.s32 %v1352, %v1354
        %v1356 = vrot.slane %v1342, %v1355
        %v1357 = vcombine.high %v1349, %v1349
        %v1358 = vcombine.high %v1356, %v1356
        %v1359 = vcombine.high %v815, %v815
        %v1361 = vunpack.c.l.s4 1983009808
        %v1362 = vunpack.c.0.s8 %v1361
        %v1363 = vlaneseq
        %v1364 = vshrl.u32 %v1363, 7
        %v1365 = vsub.s32 %v1362, %v1364
        %v1366 = vrot.slane %v815, %v1365
        %v1368 = vunpack.c.l.s4 1983009808
        %v1369 = vunpack.c.0.s8 %v1368
        %v1370 = vlaneseq
        %v1371 = vshrl.u32 %v1370, 7
        %v1372 = vsub.s32 %v1369, %v1371
        %v1373 = vrot.slane %v1359, %v1372
        %v1374 = vcombine.high %v1366, %v1366
        %v1375 = vcombine.high %v1373, %v1373
        %v1376 = vcombine.high %v816, %v816
        %v1378 = vunpack.c.l.s4 1983009808
        %v1379 = vunpack.c.0.s8 %v1378
        %v1380 = vlaneseq
        %v1381 = vshrl.u32 %v1380, 7
        %v1382 = vsub.s32 %v1379, %v1381
        %v1383 = vrot.slane %v816, %v1382
        %v1385 = vunpack.c.l.s4 1983009808
        %v1386 = vunpack.c.0.s8 %v1385
        %v1387 = vlaneseq
        %v1388 = vshrl.u32 %v1387, 7
        %v1389 = vsub.s32 %v1386, %v1388
        %v1390 = vrot.slane %v1376, %v1389
        %v1391 = vcombine.high %v1383, %v1383
        %v1392 = vcombine.high %v1390, %v1390
        %v1521 = vrot.slane %v856, 7
        %v1522 = vrot.slane %v1521, 2
        %v1523 = vrot.slane %v864, 7
        %v1524 = vrot.slane %v1523, 2
        %v1525 = vrot.slane %v863, 7
        %v1526 = vrot.slane %v1525, 2
        %v1527 = vrot.slane %v865, 7
        %v1528 = vrot.slane %v1527, 2
        %v1529 = vrot.slane %v873, 7
        %v1530 = vrot.slane %v1529, 2
        %v1531 = vrot.slane %v881, 7
        %v1532 = vrot.slane %v1531, 2
        %v1533 = vrot.slane %v880, 7
        %v1534 = vrot.slane %v1533, 2
        %v1535 = vrot.slane %v882, 7
        %v1536 = vrot.slane %v1535, 2
        %v1537 = vrot.slane %v890, 7
        %v1538 = vrot.slane %v1537, 2
        %v1539 = vrot.slane %v898, 7
        %v1540 = vrot.slane %v1539, 2
        %v1541 = vrot.slane %v897, 7
        %v1542 = vrot.slane %v1541, 2
        %v1543 = vrot.slane %v899, 7
        %v1544 = vrot.slane %v1543, 2
        %v1545 = vrot.slane %v907, 7
        %v1546 = vrot.slane %v1545, 2
        %v1547 = vrot.slane %v915, 7
        %v1548 = vrot.slane %v1547, 2
        %v1549 = vrot.slane %v914, 7
        %v1550 = vrot.slane %v1549, 2
        %v1551 = vrot.slane %v916, 7
        %v1552 = vrot.slane %v1551, 2
        %v1553 = vrot.slane %v924, 7
        %v1554 = vrot.slane %v1553, 2
        %v1555 = vrot.slane %v932, 7
        %v1556 = vrot.slane %v1555, 2
        %v1557 = vrot.slane %v931, 7
        %v1558 = vrot.slane %v1557, 2
        %v1559 = vrot.slane %v933, 7
        %v1560 = vrot.slane %v1559, 2
        %v1561 = vrot.slane %v941, 7
        %v1562 = vrot.slane %v1561, 2
        %v1563 = vrot.slane %v949, 7
        %v1564 = vrot.slane %v1563, 2
        %v1565 = vrot.slane %v948, 7
        %v1566 = vrot.slane %v1565, 2
        %v1567 = vrot.slane %v950, 7
        %v1568 = vrot.slane %v1567, 2
        %v1569 = vrot.slane %v958, 7
        %v1570 = vrot.slane %v1569, 2
        %v1571 = vrot.slane %v966, 7
        %v1572 = vrot.slane %v1571, 2
        %v1573 = vrot.slane %v965, 7
        %v1574 = vrot.slane %v1573, 2
        %v1575 = vrot.slane %v967, 7
        %v1576 = vrot.slane %v1575, 2
        %v1577 = vrot.slane %v975, 7
        %v1578 = vrot.slane %v1577, 2
        %v1579 = vrot.slane %v983, 7
        %v1580 = vrot.slane %v1579, 2
        %v1581 = vrot.slane %v982, 7
        %v1582 = vrot.slane %v1581, 2
        %v1583 = vrot.slane %v984, 7
        %v1584 = vrot.slane %v1583, 2
        %v1585 = vrot.slane %v992, 7
        %v1586 = vrot.slane %v1585, 2
        %v1587 = vrot.slane %v1000, 7
        %v1588 = vrot.slane %v1587, 2
        %v1589 = vrot.slane %v999, 7
        %v1590 = vrot.slane %v1589, 2
        %v1591 = vrot.slane %v1001, 7
        %v1592 = vrot.slane %v1591, 2
        %v1593 = vrot.slane %v1009, 7
        %v1594 = vrot.slane %v1593, 2
        %v1595 = vrot.slane %v1017, 7
        %v1596 = vrot.slane %v1595, 2
        %v1597 = vrot.slane %v1016, 7
        %v1598 = vrot.slane %v1597, 2
        %v1599 = vrot.slane %v1018, 7
        %v1600 = vrot.slane %v1599, 2
        %v1601 = vrot.slane %v1026, 7
        %v1602 = vrot.slane %v1601, 2
        %v1603 = vrot.slane %v1034, 7
        %v1604 = vrot.slane %v1603, 2
        %v1605 = vrot.slane %v1033, 7
        %v1606 = vrot.slane %v1605, 2
        %v1607 = vrot.slane %v1035, 7
        %v1608 = vrot.slane %v1607, 2
        %v1609 = vrot.slane %v1043, 7
        %v1610 = vrot.slane %v1609, 2
        %v1611 = vrot.slane %v1051, 7
        %v1612 = vrot.slane %v1611, 2
        %v1613 = vrot.slane %v1050, 7
        %v1614 = vrot.slane %v1613, 2
        %v1615 = vrot.slane %v1052, 7
        %v1616 = vrot.slane %v1615, 2
        %v1617 = vrot.slane %v1060, 7
        %v1618 = vrot.slane %v1617, 2
        %v1619 = vrot.slane %v1068, 7
        %v1620 = vrot.slane %v1619, 2
        %v1621 = vrot.slane %v1067, 7
        %v1622 = vrot.slane %v1621, 2
        %v1623 = vrot.slane %v1069, 7
        %v1624 = vrot.slane %v1623, 2
        %v1625 = vrot.slane %v1077, 7
        %v1626 = vrot.slane %v1625, 2
        %v1627 = vrot.slane %v1085, 7
        %v1628 = vrot.slane %v1627, 2
        %v1629 = vrot.slane %v1084, 7
        %v1630 = vrot.slane %v1629, 2
        %v1631 = vrot.slane %v1086, 7
        %v1632 = vrot.slane %v1631, 2
        %v1633 = vrot.slane %v1094, 7
        %v1634 = vrot.slane %v1633, 2
        %v1635 = vrot.slane %v1102, 7
        %v1636 = vrot.slane %v1635, 2
        %v1637 = vrot.slane %v1101, 7
        %v1638 = vrot.slane %v1637, 2
        %v1639 = vrot.slane %v1103, 7
        %v1640 = vrot.slane %v1639, 2
        %v1641 = vrot.slane %v1111, 7
        %v1642 = vrot.slane %v1641, 2
        %v1643 = vrot.slane %v1119, 7
        %v1644 = vrot.slane %v1643, 2
        %v1645 = vrot.slane %v1118, 7
        %v1646 = vrot.slane %v1645, 2
        %v1647 = vrot.slane %v1120, 7
        %v1648 = vrot.slane %v1647, 2
        %v1649 = vrot.slane %v1128, 7
        %v1650 = vrot.slane %v1649, 2
        %v1651 = vrot.slane %v1136, 7
        %v1652 = vrot.slane %v1651, 2
        %v1653 = vrot.slane %v1135, 7
        %v1654 = vrot.slane %v1653, 2
        %v1655 = vrot.slane %v1137, 7
        %v1656 = vrot.slane %v1655, 2
        %v1657 = vrot.slane %v1145, 7
        %v1658 = vrot.slane %v1657, 2
        %v1659 = vrot.slane %v1153, 7
        %v1660 = vrot.slane %v1659, 2
        %v1661 = vrot.slane %v1152, 7
        %v1662 = vrot.slane %v1661, 2
        %v1663 = vrot.slane %v1154, 7
        %v1664 = vrot.slane %v1663, 2
        %v1665 = vrot.slane %v1162, 7
        %v1666 = vrot.slane %v1665, 2
        %v1667 = vrot.slane %v1170, 7
        %v1668 = vrot.slane %v1667, 2
        %v1669 = vrot.slane %v1169, 7
        %v1670 = vrot.slane %v1669, 2
        %v1671 = vrot.slane %v1171, 7
        %v1672 = vrot.slane %v1671, 2
        %v1673 = vrot.slane %v1179, 7
        %v1674 = vrot.slane %v1673, 2
        %v1675 = vrot.slane %v1187, 7
        %v1676 = vrot.slane %v1675, 2
        %v1677 = vrot.slane %v1186, 7
        %v1678 = vrot.slane %v1677, 2
        %v1679 = vrot.slane %v1188, 7
        %v1680 = vrot.slane %v1679, 2
        %v1681 = vrot.slane %v1196, 7
        %v1682 = vrot.slane %v1681, 2
        %v1683 = vrot.slane %v1204, 7
        %v1684 = vrot.slane %v1683, 2
        %v1685 = vrot.slane %v1203, 7
        %v1686 = vrot.slane %v1685, 2
        %v1687 = vrot.slane %v1205, 7
        %v1688 = vrot.slane %v1687, 2
        %v1689 = vrot.slane %v1213, 7
        %v1690 = vrot.slane %v1689, 2
        %v1691 = vrot.slane %v1221, 7
        %v1692 = vrot.slane %v1691, 2
        %v1693 = vrot.slane %v1220, 7
        %v1694 = vrot.slane %v1693, 2
        %v1695 = vrot.slane %v1222, 7
        %v1696 = vrot.slane %v1695, 2
        %v1697 = vrot.slane %v1230, 7
        %v1698 = vrot.slane %v1697, 2
        %v1699 = vrot.slane %v1238, 7
        %v1700 = vrot.slane %v1699, 2
        %v1701 = vrot.slane %v1237, 7
        %v1702 = vrot.slane %v1701, 2
        %v1703 = vrot.slane %v1239, 7
        %v1704 = vrot.slane %v1703, 2
        %v1705 = vrot.slane %v1247, 7
        %v1706 = vrot.slane %v1705, 2
        %v1707 = vrot.slane %v1255, 7
        %v1708 = vrot.slane %v1707, 2
        %v1709 = vrot.slane %v1254, 7
        %v1710 = vrot.slane %v1709, 2
        %v1711 = vrot.slane %v1256, 7
        %v1712 = vrot.slane %v1711, 2
        %v1713 = vrot.slane %v1264, 7
        %v1714 = vrot.slane %v1713, 2
        %v1715 = vrot.slane %v1272, 7
        %v1716 = vrot.slane %v1715, 2
        %v1717 = vrot.slane %v1271, 7
        %v1718 = vrot.slane %v1717, 2
        %v1719 = vrot.slane %v1273, 7
        %v1720 = vrot.slane %v1719, 2
        %v1721 = vrot.slane %v1281, 7
        %v1722 = vrot.slane %v1721, 2
        %v1723 = vrot.slane %v1289, 7
        %v1724 = vrot.slane %v1723, 2
        %v1725 = vrot.slane %v1288, 7
        %v1726 = vrot.slane %v1725, 2
        %v1727 = vrot.slane %v1290, 7
        %v1728 = vrot.slane %v1727, 2
        %v1729 = vrot.slane %v1298, 7
        %v1730 = vrot.slane %v1729, 2
        %v1731 = vrot.slane %v1306, 7
        %v1732 = vrot.slane %v1731, 2
        %v1733 = vrot.slane %v1305, 7
        %v1734 = vrot.slane %v1733, 2
        %v1735 = vrot.slane %v1307, 7
        %v1736 = vrot.slane %v1735, 2
        %v1737 = vrot.slane %v1315, 7
        %v1738 = vrot.slane %v1737, 2
        %v1739 = vrot.slane %v1323, 7
        %v1740 = vrot.slane %v1739, 2
        %v1741 = vrot.slane %v1322, 7
        %v1742 = vrot.slane %v1741, 2
        %v1743 = vrot.slane %v1324, 7
        %v1744 = vrot.slane %v1743, 2
        %v1745 = vrot.slane %v1332, 7
        %v1746 = vrot.slane %v1745, 2
        %v1747 = vrot.slane %v1340, 7
        %v1748 = vrot.slane %v1747, 2
        %v1749 = vrot.slane %v1339, 7
        %v1750 = vrot.slane %v1749, 2
        %v1751 = vrot.slane %v1341, 7
        %v1752 = vrot.slane %v1751, 2
        %v1753 = vrot.slane %v1349, 7
        %v1754 = vrot.slane %v1753, 2
        %v1755 = vrot.slane %v1357, 7
        %v1756 = vrot.slane %v1755, 2
        %v1757 = vrot.slane %v1356, 7
        %v1758 = vrot.slane %v1757, 2
        %v1759 = vrot.slane %v1358, 7
        %v1760 = vrot.slane %v1759, 2
        %v1761 = vrot.slane %v1366, 7
        %v1762 = vrot.slane %v1761, 2
        %v1763 = vrot.slane %v1374, 7
        %v1764 = vrot.slane %v1763, 2
        %v1765 = vrot.slane %v1373, 7
        %v1766 = vrot.slane %v1765, 2
        %v1767 = vrot.slane %v1375, 7
        %v1768 = vrot.slane %v1767, 2
        %v1769 = vrot.slane %v1383, 7
        %v1770 = vrot.slane %v1769, 2
        %v1771 = vrot.slane %v1391, 7
        %v1772 = vrot.slane %v1771, 2
        %v1773 = vrot.slane %v1390, 7
        %v1774 = vrot.slane %v1773, 2
        %v1775 = vrot.slane %v1392, 7
        %v1776 = vrot.slane %v1775, 2
        %v1905 = vmax.f32 %v856, %v1522
        %v1906 = vmax.f32 %v864, %v1524
        %v1907 = vmax.f32 %v863, %v1526
        %v1908 = vmax.f32 %v865, %v1528
        %v1909 = vmax.f32 %v873, %v1530
        %v1910 = vmax.f32 %v881, %v1532
        %v1911 = vmax.f32 %v880, %v1534
        %v1912 = vmax.f32 %v882, %v1536
        %v1913 = vmax.f32 %v890, %v1538
        %v1914 = vmax.f32 %v898, %v1540
        %v1915 = vmax.f32 %v897, %v1542
        %v1916 = vmax.f32 %v899, %v1544
        %v1917 = vmax.f32 %v907, %v1546
        %v1918 = vmax.f32 %v915, %v1548
        %v1919 = vmax.f32 %v914, %v1550
        %v1920 = vmax.f32 %v916, %v1552
        %v1921 = vmax.f32 %v924, %v1554
        %v1922 = vmax.f32 %v932, %v1556
        %v1923 = vmax.f32 %v931, %v1558
        %v1924 = vmax.f32 %v933, %v1560
        %v1925 = vmax.f32 %v941, %v1562
        %v1926 = vmax.f32 %v949, %v1564
        %v1927 = vmax.f32 %v948, %v1566
        %v1928 = vmax.f32 %v950, %v1568
        %v1929 = vmax.f32 %v958, %v1570
        %v1930 = vmax.f32 %v966, %v1572
        %v1931 = vmax.f32 %v965, %v1574
        %v1932 = vmax.f32 %v967, %v1576
        %v1933 = vmax.f32 %v975, %v1578
        %v1934 = vmax.f32 %v983, %v1580
        %v1935 = vmax.f32 %v982, %v1582
        %v1936 = vmax.f32 %v984, %v1584
        %v1937 = vmax.f32 %v992, %v1586
        %v1938 = vmax.f32 %v1000, %v1588
        %v1939 = vmax.f32 %v999, %v1590
        %v1940 = vmax.f32 %v1001, %v1592
        %v1941 = vmax.f32 %v1009, %v1594
        %v1942 = vmax.f32 %v1017, %v1596
        %v1943 = vmax.f32 %v1016, %v1598
        %v1944 = vmax.f32 %v1018, %v1600
        %v1945 = vmax.f32 %v1026, %v1602
        %v1946 = vmax.f32 %v1034, %v1604
        %v1947 = vmax.f32 %v1033, %v1606
        %v1948 = vmax.f32 %v1035, %v1608
        %v1949 = vmax.f32 %v1043, %v1610
        %v1950 = vmax.f32 %v1051, %v1612
        %v1951 = vmax.f32 %v1050, %v1614
        %v1952 = vmax.f32 %v1052, %v1616
        %v1953 = vmax.f32 %v1060, %v1618
        %v1954 = vmax.f32 %v1068, %v1620
        %v1955 = vmax.f32 %v1067, %v1622
        %v1956 = vmax.f32 %v1069, %v1624
        %v1957 = vmax.f32 %v1077, %v1626
        %v1958 = vmax.f32 %v1085, %v1628
        %v1959 = vmax.f32 %v1084, %v1630
        %v1960 = vmax.f32 %v1086, %v1632
        %v1961 = vmax.f32 %v1094, %v1634
        %v1962 = vmax.f32 %v1102, %v1636
        %v1963 = vmax.f32 %v1101, %v1638
        %v1964 = vmax.f32 %v1103, %v1640
        %v1965 = vmax.f32 %v1111, %v1642
        %v1966 = vmax.f32 %v1119, %v1644
        %v1967 = vmax.f32 %v1118, %v1646
        %v1968 = vmax.f32 %v1120, %v1648
        %v1969 = vmax.f32 %v1128, %v1650
        %v1970 = vmax.f32 %v1136, %v1652
        %v1971 = vmax.f32 %v1135, %v1654
        %v1972 = vmax.f32 %v1137, %v1656
        %v1973 = vmax.f32 %v1145, %v1658
        %v1974 = vmax.f32 %v1153, %v1660
        %v1975 = vmax.f32 %v1152, %v1662
        %v1976 = vmax.f32 %v1154, %v1664
        %v1977 = vmax.f32 %v1162, %v1666
        %v1978 = vmax.f32 %v1170, %v1668
        %v1979 = vmax.f32 %v1169, %v1670
        %v1980 = vmax.f32 %v1171, %v1672
        %v1981 = vmax.f32 %v1179, %v1674
        %v1982 = vmax.f32 %v1187, %v1676
        %v1983 = vmax.f32 %v1186, %v1678
        %v1984 = vmax.f32 %v1188, %v1680
        %v1985 = vmax.f32 %v1196, %v1682
        %v1986 = vmax.f32 %v1204, %v1684
        %v1987 = vmax.f32 %v1203, %v1686
        %v1988 = vmax.f32 %v1205, %v1688
        %v1989 = vmax.f32 %v1213, %v1690
        %v1990 = vmax.f32 %v1221, %v1692
        %v1991 = vmax.f32 %v1220, %v1694
        %v1992 = vmax.f32 %v1222, %v1696
        %v1993 = vmax.f32 %v1230, %v1698
        %v1994 = vmax.f32 %v1238, %v1700
        %v1995 = vmax.f32 %v1237, %v1702
        %v1996 = vmax.f32 %v1239, %v1704
        %v1997 = vmax.f32 %v1247, %v1706
        %v1998 = vmax.f32 %v1255, %v1708
        %v1999 = vmax.f32 %v1254, %v1710
        %v2000 = vmax.f32 %v1256, %v1712
        %v2001 = vmax.f32 %v1264, %v1714
        %v2002 = vmax.f32 %v1272, %v1716
        %v2003 = vmax.f32 %v1271, %v1718
        %v2004 = vmax.f32 %v1273, %v1720
        %v2005 = vmax.f32 %v1281, %v1722
        %v2006 = vmax.f32 %v1289, %v1724
        %v2007 = vmax.f32 %v1288, %v1726
        %v2008 = vmax.f32 %v1290, %v1728
        %v2009 = vmax.f32 %v1298, %v1730
        %v2010 = vmax.f32 %v1306, %v1732
        %v2011 = vmax.f32 %v1305, %v1734
        %v2012 = vmax.f32 %v1307, %v1736
        %v2013 = vmax.f32 %v1315, %v1738
        %v2014 = vmax.f32 %v1323, %v1740
        %v2015 = vmax.f32 %v1322, %v1742
        %v2016 = vmax.f32 %v1324, %v1744
        %v2017 = vmax.f32 %v1332, %v1746
        %v2018 = vmax.f32 %v1340, %v1748
        %v2019 = vmax.f32 %v1339, %v1750
        %v2020 = vmax.f32 %v1341, %v1752
        %v2021 = vmax.f32 %v1349, %v1754
        %v2022 = vmax.f32 %v1357, %v1756
        %v2023 = vmax.f32 %v1356, %v1758
        %v2024 = vmax.f32 %v1358, %v1760
        %v2025 = vmax.f32 %v1366, %v1762
        %v2026 = vmax.f32 %v1374, %v1764
        %v2027 = vmax.f32 %v1373, %v1766
        %v2028 = vmax.f32 %v1375, %v1768
        %v2029 = vmax.f32 %v1383, %v1770
        %v2030 = vmax.f32 %v1391, %v1772
        %v2031 = vmax.f32 %v1390, %v1774
        %v2032 = vmax.f32 %v1392, %v1776
        %v2033 = vmax.f32 %v1905, %v1909
        %v2034 = vmax.f32 %v1906, %v1910
        %v2035 = vmax.f32 %v1907, %v1911
        %v2036 = vmax.f32 %v1908, %v1912
        %v2037 = vmax.f32 %v1913, %v1917
        %v2038 = vmax.f32 %v1914, %v1918
        %v2039 = vmax.f32 %v1915, %v1919
        %v2040 = vmax.f32 %v1916, %v1920
        %v2041 = vmax.f32 %v1921, %v1925
        %v2042 = vmax.f32 %v1922, %v1926
        %v2043 = vmax.f32 %v1923, %v1927
        %v2044 = vmax.f32 %v1924, %v1928
        %v2045 = vmax.f32 %v1929, %v1933
        %v2046 = vmax.f32 %v1930, %v1934
        %v2047 = vmax.f32 %v1931, %v1935
        %v2048 = vmax.f32 %v1932, %v1936
        %v2049 = vmax.f32 %v1937, %v1941
        %v2050 = vmax.f32 %v1938, %v1942
        %v2051 = vmax.f32 %v1939, %v1943
        %v2052 = vmax.f32 %v1940, %v1944
        %v2053 = vmax.f32 %v1945, %v1949
        %v2054 = vmax.f32 %v1946, %v1950
        %v2055 = vmax.f32 %v1947, %v1951
        %v2056 = vmax.f32 %v1948, %v1952
        %v2057 = vmax.f32 %v1953, %v1957
        %v2058 = vmax.f32 %v1954, %v1958
        %v2059 = vmax.f32 %v1955, %v1959
        %v2060 = vmax.f32 %v1956, %v1960
        %v2061 = vmax.f32 %v1961, %v1965
        %v2062 = vmax.f32 %v1962, %v1966
        %v2063 = vmax.f32 %v1963, %v1967
        %v2064 = vmax.f32 %v1964, %v1968
        %v2065 = vmax.f32 %v1969, %v1973
        %v2066 = vmax.f32 %v1970, %v1974
        %v2067 = vmax.f32 %v1971, %v1975
        %v2068 = vmax.f32 %v1972, %v1976
        %v2069 = vmax.f32 %v1977, %v1981
        %v2070 = vmax.f32 %v1978, %v1982
        %v2071 = vmax.f32 %v1979, %v1983
        %v2072 = vmax.f32 %v1980, %v1984
        %v2073 = vmax.f32 %v1985, %v1989
        %v2074 = vmax.f32 %v1986, %v1990
        %v2075 = vmax.f32 %v1987, %v1991
        %v2076 = vmax.f32 %v1988, %v1992
        %v2077 = vmax.f32 %v1993, %v1997
        %v2078 = vmax.f32 %v1994, %v1998
        %v2079 = vmax.f32 %v1995, %v1999
        %v2080 = vmax.f32 %v1996, %v2000
        %v2081 = vmax.f32 %v2001, %v2005
        %v2082 = vmax.f32 %v2002, %v2006
        %v2083 = vmax.f32 %v2003, %v2007
        %v2084 = vmax.f32 %v2004, %v2008
        %v2085 = vmax.f32 %v2009, %v2013
        %v2086 = vmax.f32 %v2010, %v2014
        %v2087 = vmax.f32 %v2011, %v2015
        %v2088 = vmax.f32 %v2012, %v2016
        %v2089 = vmax.f32 %v2017, %v2021
        %v2090 = vmax.f32 %v2018, %v2022
        %v2091 = vmax.f32 %v2019, %v2023
        %v2092 = vmax.f32 %v2020, %v2024
        %v2093 = vmax.f32 %v2025, %v2029
        %v2094 = vmax.f32 %v2026, %v2030
        %v2095 = vmax.f32 %v2027, %v2031
        %v2096 = vmax.f32 %v2028, %v2032
        %vm2097 = vcmask 256000
        %2098 = vst.msk [vmem:[#allocation2] sm:$0x7] %vm2097, 0
        %2099 = vst.msk [vmem:[#allocation2 + $0x18] sm:$0x7] %vm2097, 0
        %2100 = vst.msk [vmem:[#allocation2 + $0x30] sm:$0x7] %vm2097, 0
        %2101 = vst.msk [vmem:[#allocation2 + $0x48] sm:$0x7] %vm2097, 0
        %s2102 = scalar_lea.vmem [#allocation2], 20
        %2103 = vst.msk [vmem:[%s2102] sm:$0x7] %vm2097, 0
        %2104 = vst.msk [vmem:[%s2102 + $0x18] sm:$0x7] %vm2097, 0
        %2105 = vst.msk [vmem:[%s2102 + $0x30] sm:$0x7] %vm2097, 0
        %2106 = vst.msk [vmem:[%s2102 + $0x48] sm:$0x7] %vm2097, 0
        %vm2107 = vcmask 253952
        %vm2108 = vsmask.f32 256
        %vm2109 = vmand %vm2107, %vm2108
        %v2110 = vld [vmem:[#allocation2] sm:$0x1]
        %v2111 = vsel %vm2109, 0, %v2110
        %2112 = vst [vmem:[#allocation2] sm:$0x1] %v2111
        %v2113 = vld [vmem:[#allocation2 + $0x4] sm:$0x1]
        %v2114 = vsel %vm2109, 0, %v2113
        %2115 = vst [vmem:[#allocation2 + $0x4] sm:$0x1] %v2114
        %v2116 = vld [vmem:[#allocation2 + $0x8] sm:$0x1]
        %v2117 = vsel %vm2109, 0, %v2116
        %2118 = vst [vmem:[#allocation2 + $0x8] sm:$0x1] %v2117
        %v2119 = vld [vmem:[#allocation2 + $0xc] sm:$0x1]
        %v2120 = vsel %vm2109, 0, %v2119
        %2121 = vst [vmem:[#allocation2 + $0xc] sm:$0x1] %v2120
        %v2122 = vld [vmem:[#allocation2 + $0x10] sm:$0x1]
        %v2123 = vsel %vm2109, 0, %v2122
        %2124 = vst [vmem:[#allocation2 + $0x10] sm:$0x1] %v2123
        %v2125 = vld [vmem:[#allocation2 + $0x14] sm:$0x1]
        %v2126 = vsel %vm2109, 0, %v2125
        %2127 = vst [vmem:[#allocation2 + $0x14] sm:$0x1] %v2126
        %v2128 = vld [vmem:[#allocation2 + $0x18] sm:$0x1]
        %v2129 = vsel %vm2109, 0, %v2128
        %2130 = vst [vmem:[#allocation2 + $0x18] sm:$0x1] %v2129
        %v2131 = vld [vmem:[#allocation2 + $0x1c] sm:$0x1]
        %v2132 = vsel %vm2109, 0, %v2131
        %2133 = vst [vmem:[#allocation2 + $0x1c] sm:$0x1] %v2132
        %v2134 = vld [vmem:[#allocation2 + $0x20] sm:$0x1]
        %v2135 = vsel %vm2109, 0, %v2134
        %2136 = vst [vmem:[#allocation2 + $0x20] sm:$0x1] %v2135
        %v2137 = vld [vmem:[#allocation2 + $0x24] sm:$0x1]
        %v2138 = vsel %vm2109, 0, %v2137
        %2139 = vst [vmem:[#allocation2 + $0x24] sm:$0x1] %v2138
        %v2140 = vld [vmem:[#allocation2 + $0x28] sm:$0x1]
        %v2141 = vsel %vm2109, 0, %v2140
        %2142 = vst [vmem:[#allocation2 + $0x28] sm:$0x1] %v2141
        %v2143 = vld [vmem:[#allocation2 + $0x2c] sm:$0x1]
        %v2144 = vsel %vm2109, 0, %v2143
        %2145 = vst [vmem:[#allocation2 + $0x2c] sm:$0x1] %v2144
        %v2146 = vld [vmem:[#allocation2 + $0x30] sm:$0x1]
        %v2147 = vsel %vm2109, 0, %v2146
        %2148 = vst [vmem:[#allocation2 + $0x30] sm:$0x1] %v2147
        %v2149 = vld [vmem:[#allocation2 + $0x34] sm:$0x1]
        %v2150 = vsel %vm2109, 0, %v2149
        %2151 = vst [vmem:[#allocation2 + $0x34] sm:$0x1] %v2150
        %v2152 = vld [vmem:[#allocation2 + $0x38] sm:$0x1]
        %v2153 = vsel %vm2109, 0, %v2152
        %2154 = vst [vmem:[#allocation2 + $0x38] sm:$0x1] %v2153
        %v2155 = vld [vmem:[#allocation2 + $0x3c] sm:$0x1]
        %v2156 = vsel %vm2109, 0, %v2155
        %2157 = vst [vmem:[#allocation2 + $0x3c] sm:$0x1] %v2156
        %v2158 = vld [vmem:[#allocation2 + $0x40] sm:$0x1]
        %v2159 = vsel %vm2109, 0, %v2158
        %2160 = vst [vmem:[#allocation2 + $0x40] sm:$0x1] %v2159
        %v2161 = vld [vmem:[#allocation2 + $0x44] sm:$0x1]
        %v2162 = vsel %vm2109, 0, %v2161
        %2163 = vst [vmem:[#allocation2 + $0x44] sm:$0x1] %v2162
        %v2164 = vld [vmem:[#allocation2 + $0x48] sm:$0x1]
        %v2165 = vsel %vm2109, 0, %v2164
        %2166 = vst [vmem:[#allocation2 + $0x48] sm:$0x1] %v2165
        %v2167 = vld [vmem:[#allocation2 + $0x4c] sm:$0x1]
        %v2168 = vsel %vm2109, 0, %v2167
        %2169 = vst [vmem:[#allocation2 + $0x4c] sm:$0x1] %v2168
        %v2170 = vld [vmem:[#allocation2 + $0x50] sm:$0x1]
        %v2171 = vsel %vm2109, 0, %v2170
        %2172 = vst [vmem:[#allocation2 + $0x50] sm:$0x1] %v2171
        %v2173 = vld [vmem:[#allocation2 + $0x54] sm:$0x1]
        %v2174 = vsel %vm2109, 0, %v2173
        %2175 = vst [vmem:[#allocation2 + $0x54] sm:$0x1] %v2174
        %v2176 = vld [vmem:[#allocation2 + $0x58] sm:$0x1]
        %v2177 = vsel %vm2109, 0, %v2176
        %2178 = vst [vmem:[#allocation2 + $0x58] sm:$0x1] %v2177
        %v2179 = vld [vmem:[#allocation2 + $0x5c] sm:$0x1]
        %v2180 = vsel %vm2109, 0, %v2179
        %2181 = vst [vmem:[#allocation2 + $0x5c] sm:$0x1] %v2180
        %vm2182 = vcmask 256002
        %vm2183 = vsmask.f32 7946
        %vm2184 = vmand %vm2182, %vm2183
        %v2185 = vld [vmem:[#allocation2] sm:$0x4]
        %v2186 = vsel %vm2184, 0, %v2185
        %2187 = vst [vmem:[#allocation2] sm:$0x4] %v2186
        %v2188 = vld [vmem:[#allocation2 + $0x4] sm:$0x4]
        %v2189 = vsel %vm2184, 0, %v2188
        %2190 = vst [vmem:[#allocation2 + $0x4] sm:$0x4] %v2189
        %v2191 = vld [vmem:[#allocation2 + $0x8] sm:$0x4]
        %v2192 = vsel %vm2184, 0, %v2191
        %2193 = vst [vmem:[#allocation2 + $0x8] sm:$0x4] %v2192
        %v2194 = vld [vmem:[#allocation2 + $0xc] sm:$0x4]
        %v2195 = vsel %vm2184, 0, %v2194
        %2196 = vst [vmem:[#allocation2 + $0xc] sm:$0x4] %v2195
        %v2197 = vld [vmem:[#allocation2 + $0x10] sm:$0x4]
        %v2198 = vsel %vm2184, 0, %v2197
        %2199 = vst [vmem:[#allocation2 + $0x10] sm:$0x4] %v2198
        %v2200 = vld [vmem:[#allocation2 + $0x14] sm:$0x4]
        %v2201 = vsel %vm2184, 0, %v2200
        %2202 = vst [vmem:[#allocation2 + $0x14] sm:$0x4] %v2201
        %v2203 = vld [vmem:[#allocation2 + $0x18] sm:$0x4]
        %v2204 = vsel %vm2184, 0, %v2203
        %2205 = vst [vmem:[#allocation2 + $0x18] sm:$0x4] %v2204
        %v2206 = vld [vmem:[#allocation2 + $0x1c] sm:$0x4]
        %v2207 = vsel %vm2184, 0, %v2206
        %2208 = vst [vmem:[#allocation2 + $0x1c] sm:$0x4] %v2207
        %v2209 = vld [vmem:[#allocation2 + $0x20] sm:$0x4]
        %v2210 = vsel %vm2184, 0, %v2209
        %2211 = vst [vmem:[#allocation2 + $0x20] sm:$0x4] %v2210
        %v2212 = vld [vmem:[#allocation2 + $0x24] sm:$0x4]
        %v2213 = vsel %vm2184, 0, %v2212
        %2214 = vst [vmem:[#allocation2 + $0x24] sm:$0x4] %v2213
        %v2215 = vld [vmem:[#allocation2 + $0x28] sm:$0x4]
        %v2216 = vsel %vm2184, 0, %v2215
        %2217 = vst [vmem:[#allocation2 + $0x28] sm:$0x4] %v2216
        %v2218 = vld [vmem:[#allocation2 + $0x2c] sm:$0x4]
        %v2219 = vsel %vm2184, 0, %v2218
        %2220 = vst [vmem:[#allocation2 + $0x2c] sm:$0x4] %v2219
        %v2221 = vld [vmem:[#allocation2 + $0x30] sm:$0x4]
        %v2222 = vsel %vm2184, 0, %v2221
        %2223 = vst [vmem:[#allocation2 + $0x30] sm:$0x4] %v2222
        %v2224 = vld [vmem:[#allocation2 + $0x34] sm:$0x4]
        %v2225 = vsel %vm2184, 0, %v2224
        %2226 = vst [vmem:[#allocation2 + $0x34] sm:$0x4] %v2225
        %v2227 = vld [vmem:[#allocation2 + $0x38] sm:$0x4]
        %v2228 = vsel %vm2184, 0, %v2227
        %2229 = vst [vmem:[#allocation2 + $0x38] sm:$0x4] %v2228
        %v2230 = vld [vmem:[#allocation2 + $0x3c] sm:$0x4]
        %v2231 = vsel %vm2184, 0, %v2230
        %2232 = vst [vmem:[#allocation2 + $0x3c] sm:$0x4] %v2231
        %v2233 = vld [vmem:[#allocation2 + $0x40] sm:$0x4]
        %v2234 = vsel %vm2184, 0, %v2233
        %2235 = vst [vmem:[#allocation2 + $0x40] sm:$0x4] %v2234
        %v2236 = vld [vmem:[#allocation2 + $0x44] sm:$0x4]
        %v2237 = vsel %vm2184, 0, %v2236
        %2238 = vst [vmem:[#allocation2 + $0x44] sm:$0x4] %v2237
        %v2239 = vld [vmem:[#allocation2 + $0x48] sm:$0x4]
        %v2240 = vsel %vm2184, 0, %v2239
        %2241 = vst [vmem:[#allocation2 + $0x48] sm:$0x4] %v2240
        %v2242 = vld [vmem:[#allocation2 + $0x4c] sm:$0x4]
        %v2243 = vsel %vm2184, 0, %v2242
        %2244 = vst [vmem:[#allocation2 + $0x4c] sm:$0x4] %v2243
        %v2245 = vld [vmem:[#allocation2 + $0x50] sm:$0x4]
        %v2246 = vsel %vm2184, 0, %v2245
        %2247 = vst [vmem:[#allocation2 + $0x50] sm:$0x4] %v2246
        %v2248 = vld [vmem:[#allocation2 + $0x54] sm:$0x4]
        %v2249 = vsel %vm2184, 0, %v2248
        %2250 = vst [vmem:[#allocation2 + $0x54] sm:$0x4] %v2249
        %v2251 = vld [vmem:[#allocation2 + $0x58] sm:$0x4]
        %v2252 = vsel %vm2184, 0, %v2251
        %2253 = vst [vmem:[#allocation2 + $0x58] sm:$0x4] %v2252
        %v2254 = vld [vmem:[#allocation2 + $0x5c] sm:$0x4]
        %v2255 = vsel %vm2184, 0, %v2254
        %2256 = vst [vmem:[#allocation2 + $0x5c] sm:$0x4] %v2255
        %v2257 = vpack.c.bf16 %v2033, %v2033
        %v2258 = vpack.c.bf16 %v2034, %v2034
        %v2259 = vpack.c.bf16 %v2035, %v2035
        %v2260 = vpack.c.bf16 %v2036, %v2036
        %v2261 = vpack.c.bf16 %v2037, %v2037
        %v2262 = vpack.c.bf16 %v2038, %v2038
        %v2263 = vpack.c.bf16 %v2039, %v2039
        %v2264 = vpack.c.bf16 %v2040, %v2040
        %v2265 = vpack.c.bf16 %v2041, %v2041
        %v2266 = vpack.c.bf16 %v2042, %v2042
        %v2267 = vpack.c.bf16 %v2043, %v2043
        %v2268 = vpack.c.bf16 %v2044, %v2044
        %v2269 = vpack.c.bf16 %v2045, %v2045
        %v2270 = vpack.c.bf16 %v2046, %v2046
        %v2271 = vpack.c.bf16 %v2047, %v2047
        %v2272 = vpack.c.bf16 %v2048, %v2048
        %v2273 = vpack.c.bf16 %v2049, %v2049
        %v2274 = vpack.c.bf16 %v2050, %v2050
        %v2275 = vpack.c.bf16 %v2051, %v2051
        %v2276 = vpack.c.bf16 %v2052, %v2052
        %v2277 = vpack.c.bf16 %v2053, %v2053
        %v2278 = vpack.c.bf16 %v2054, %v2054
        %v2279 = vpack.c.bf16 %v2055, %v2055
        %v2280 = vpack.c.bf16 %v2056, %v2056
        %v2281 = vpack.c.bf16 %v2057, %v2057
        %v2282 = vpack.c.bf16 %v2058, %v2058
        %v2283 = vpack.c.bf16 %v2059, %v2059
        %v2284 = vpack.c.bf16 %v2060, %v2060
        %v2285 = vpack.c.bf16 %v2061, %v2061
        %v2286 = vpack.c.bf16 %v2062, %v2062
        %v2287 = vpack.c.bf16 %v2063, %v2063
        %v2288 = vpack.c.bf16 %v2064, %v2064
        %v2289 = vpack.c.bf16 %v2065, %v2065
        %v2290 = vpack.c.bf16 %v2066, %v2066
        %v2291 = vpack.c.bf16 %v2067, %v2067
        %v2292 = vpack.c.bf16 %v2068, %v2068
        %v2293 = vpack.c.bf16 %v2069, %v2069
        %v2294 = vpack.c.bf16 %v2070, %v2070
        %v2295 = vpack.c.bf16 %v2071, %v2071
        %v2296 = vpack.c.bf16 %v2072, %v2072
        %v2297 = vpack.c.bf16 %v2073, %v2073
        %v2298 = vpack.c.bf16 %v2074, %v2074
        %v2299 = vpack.c.bf16 %v2075, %v2075
        %v2300 = vpack.c.bf16 %v2076, %v2076
        %v2301 = vpack.c.bf16 %v2077, %v2077
        %v2302 = vpack.c.bf16 %v2078, %v2078
        %v2303 = vpack.c.bf16 %v2079, %v2079
        %v2304 = vpack.c.bf16 %v2080, %v2080
        %v2305 = vpack.c.bf16 %v2081, %v2081
        %v2306 = vpack.c.bf16 %v2082, %v2082
        %v2307 = vpack.c.bf16 %v2083, %v2083
        %v2308 = vpack.c.bf16 %v2084, %v2084
        %v2309 = vpack.c.bf16 %v2085, %v2085
        %v2310 = vpack.c.bf16 %v2086, %v2086
        %v2311 = vpack.c.bf16 %v2087, %v2087
        %v2312 = vpack.c.bf16 %v2088, %v2088
        %v2313 = vpack.c.bf16 %v2089, %v2089
        %v2314 = vpack.c.bf16 %v2090, %v2090
        %v2315 = vpack.c.bf16 %v2091, %v2091
        %v2316 = vpack.c.bf16 %v2092, %v2092
        %v2317 = vpack.c.bf16 %v2093, %v2093
        %v2318 = vpack.c.bf16 %v2094, %v2094
        %v2319 = vpack.c.bf16 %v2095, %v2095
        %v2320 = vpack.c.bf16 %v2096, %v2096
        %v2385 = vunpack.c.l.b16 %v2257
        %v2386 = vunpack.c.l.b16 %v2258
        %v2387 = vunpack.c.l.b16 %v2259
        %v2388 = vunpack.c.l.b16 %v2260
        %v2389 = vunpack.c.l.b16 %v2261
        %v2390 = vunpack.c.l.b16 %v2262
        %v2391 = vunpack.c.l.b16 %v2263
        %v2392 = vunpack.c.l.b16 %v2264
        %v2393 = vunpack.c.l.b16 %v2265
        %v2394 = vunpack.c.l.b16 %v2266
        %v2395 = vunpack.c.l.b16 %v2267
        %v2396 = vunpack.c.l.b16 %v2268
        %v2397 = vunpack.c.l.b16 %v2269
        %v2398 = vunpack.c.l.b16 %v2270
        %v2399 = vunpack.c.l.b16 %v2271
        %v2400 = vunpack.c.l.b16 %v2272
        %v2401 = vunpack.c.l.b16 %v2273
        %v2402 = vunpack.c.l.b16 %v2274
        %v2403 = vunpack.c.l.b16 %v2275
        %v2404 = vunpack.c.l.b16 %v2276
        %v2405 = vunpack.c.l.b16 %v2277
        %v2406 = vunpack.c.l.b16 %v2278
        %v2407 = vunpack.c.l.b16 %v2279
        %v2408 = vunpack.c.l.b16 %v2280
        %v2409 = vunpack.c.l.b16 %v2281
        %v2410 = vunpack.c.l.b16 %v2282
        %v2411 = vunpack.c.l.b16 %v2283
        %v2412 = vunpack.c.l.b16 %v2284
        %v2413 = vunpack.c.l.b16 %v2285
        %v2414 = vunpack.c.l.b16 %v2286
        %v2415 = vunpack.c.l.b16 %v2287
        %v2416 = vunpack.c.l.b16 %v2288
        %v2417 = vunpack.c.l.b16 %v2289
        %v2418 = vunpack.c.l.b16 %v2290
        %v2419 = vunpack.c.l.b16 %v2291
        %v2420 = vunpack.c.l.b16 %v2292
        %v2421 = vunpack.c.l.b16 %v2293
        %v2422 = vunpack.c.l.b16 %v2294
        %v2423 = vunpack.c.l.b16 %v2295
        %v2424 = vunpack.c.l.b16 %v2296
        %v2425 = vunpack.c.l.b16 %v2297
        %v2426 = vunpack.c.l.b16 %v2298
        %v2427 = vunpack.c.l.b16 %v2299
        %v2428 = vunpack.c.l.b16 %v2300
        %v2429 = vunpack.c.l.b16 %v2301
        %v2430 = vunpack.c.l.b16 %v2302
        %v2431 = vunpack.c.l.b16 %v2303
        %v2432 = vunpack.c.l.b16 %v2304
        %v2433 = vunpack.c.l.b16 %v2305
        %v2434 = vunpack.c.l.b16 %v2306
        %v2435 = vunpack.c.l.b16 %v2307
        %v2436 = vunpack.c.l.b16 %v2308
        %v2437 = vunpack.c.l.b16 %v2309
        %v2438 = vunpack.c.l.b16 %v2310
        %v2439 = vunpack.c.l.b16 %v2311
        %v2440 = vunpack.c.l.b16 %v2312
        %v2441 = vunpack.c.l.b16 %v2313
        %v2442 = vunpack.c.l.b16 %v2314
        %v2443 = vunpack.c.l.b16 %v2315
        %v2444 = vunpack.c.l.b16 %v2316
        %v2445 = vunpack.c.l.b16 %v2317
        %v2446 = vunpack.c.l.b16 %v2318
        %v2447 = vunpack.c.l.b16 %v2319
        %v2448 = vunpack.c.l.b16 %v2320
        %v2449 = vpack.c.b16 %v2385, %v2385
        %v2450 = vpack.c.b16 %v2386, %v2386
        %v2451 = vpack.c.b16 %v2387, %v2387
        %v2452 = vpack.c.b16 %v2388, %v2388
        %v2453 = vpack.c.b16 %v2389, %v2389
        %v2454 = vpack.c.b16 %v2390, %v2390
        %v2455 = vpack.c.b16 %v2391, %v2391
        %v2456 = vpack.c.b16 %v2392, %v2392
        %v2457 = vpack.c.b16 %v2393, %v2393
        %v2458 = vpack.c.b16 %v2394, %v2394
        %v2459 = vpack.c.b16 %v2395, %v2395
        %v2460 = vpack.c.b16 %v2396, %v2396
        %v2461 = vpack.c.b16 %v2397, %v2397
        %v2462 = vpack.c.b16 %v2398, %v2398
        %v2463 = vpack.c.b16 %v2399, %v2399
        %v2464 = vpack.c.b16 %v2400, %v2400
        %v2465 = vpack.c.b16 %v2401, %v2401
        %v2466 = vpack.c.b16 %v2402, %v2402
        %v2467 = vpack.c.b16 %v2403, %v2403
        %v2468 = vpack.c.b16 %v2404, %v2404
        %v2469 = vpack.c.b16 %v2405, %v2405
        %v2470 = vpack.c.b16 %v2406, %v2406
        %v2471 = vpack.c.b16 %v2407, %v2407
        %v2472 = vpack.c.b16 %v2408, %v2408
        %v2473 = vpack.c.b16 %v2409, %v2409
        %v2474 = vpack.c.b16 %v2410, %v2410
        %v2475 = vpack.c.b16 %v2411, %v2411
        %v2476 = vpack.c.b16 %v2412, %v2412
        %v2477 = vpack.c.b16 %v2413, %v2413
        %v2478 = vpack.c.b16 %v2414, %v2414
        %v2479 = vpack.c.b16 %v2415, %v2415
        %v2480 = vpack.c.b16 %v2416, %v2416
        %v2481 = vpack.c.b16 %v2417, %v2417
        %v2482 = vpack.c.b16 %v2418, %v2418
        %v2483 = vpack.c.b16 %v2419, %v2419
        %v2484 = vpack.c.b16 %v2420, %v2420
        %v2485 = vpack.c.b16 %v2421, %v2421
        %v2486 = vpack.c.b16 %v2422, %v2422
        %v2487 = vpack.c.b16 %v2423, %v2423
        %v2488 = vpack.c.b16 %v2424, %v2424
        %v2489 = vpack.c.b16 %v2425, %v2425
        %v2490 = vpack.c.b16 %v2426, %v2426
        %v2491 = vpack.c.b16 %v2427, %v2427
        %v2492 = vpack.c.b16 %v2428, %v2428
        %v2493 = vpack.c.b16 %v2429, %v2429
        %v2494 = vpack.c.b16 %v2430, %v2430
        %v2495 = vpack.c.b16 %v2431, %v2431
        %v2496 = vpack.c.b16 %v2432, %v2432
        %v2497 = vpack.c.b16 %v2433, %v2433
        %v2498 = vpack.c.b16 %v2434, %v2434
        %v2499 = vpack.c.b16 %v2435, %v2435
        %v2500 = vpack.c.b16 %v2436, %v2436
        %v2501 = vpack.c.b16 %v2437, %v2437
        %v2502 = vpack.c.b16 %v2438, %v2438
        %v2503 = vpack.c.b16 %v2439, %v2439
        %v2504 = vpack.c.b16 %v2440, %v2440
        %v2505 = vpack.c.b16 %v2441, %v2441
        %v2506 = vpack.c.b16 %v2442, %v2442
        %v2507 = vpack.c.b16 %v2443, %v2443
        %v2508 = vpack.c.b16 %v2444, %v2444
        %v2509 = vpack.c.b16 %v2445, %v2445
        %v2510 = vpack.c.b16 %v2446, %v2446
        %v2511 = vpack.c.b16 %v2447, %v2447
        %v2512 = vpack.c.b16 %v2448, %v2448
        %v2513 = vunpack.c.l.b16 %v2449
        %v2514 = vunpack.c.l.b16 %v2450
        %v2515 = vunpack.c.l.b16 %v2451
        %v2516 = vunpack.c.l.b16 %v2452
        %v2517 = vunpack.c.l.b16 %v2453
        %v2518 = vunpack.c.l.b16 %v2454
        %v2519 = vunpack.c.l.b16 %v2455
        %v2520 = vunpack.c.l.b16 %v2456
        %v2521 = vunpack.c.l.b16 %v2457
        %v2522 = vunpack.c.l.b16 %v2458
        %v2523 = vunpack.c.l.b16 %v2459
        %v2524 = vunpack.c.l.b16 %v2460
        %v2525 = vunpack.c.l.b16 %v2461
        %v2526 = vunpack.c.l.b16 %v2462
        %v2527 = vunpack.c.l.b16 %v2463
        %v2528 = vunpack.c.l.b16 %v2464
        %v2529 = vunpack.c.l.b16 %v2465
        %v2530 = vunpack.c.l.b16 %v2466
        %v2531 = vunpack.c.l.b16 %v2467
        %v2532 = vunpack.c.l.b16 %v2468
        %v2533 = vunpack.c.l.b16 %v2469
        %v2534 = vunpack.c.l.b16 %v2470
        %v2535 = vunpack.c.l.b16 %v2471
        %v2536 = vunpack.c.l.b16 %v2472
        %v2537 = vunpack.c.l.b16 %v2473
        %v2538 = vunpack.c.l.b16 %v2474
        %v2539 = vunpack.c.l.b16 %v2475
        %v2540 = vunpack.c.l.b16 %v2476
        %v2541 = vunpack.c.l.b16 %v2477
        %v2542 = vunpack.c.l.b16 %v2478
        %v2543 = vunpack.c.l.b16 %v2479
        %v2544 = vunpack.c.l.b16 %v2480
        %v2545 = vunpack.c.l.b16 %v2481
        %v2546 = vunpack.c.l.b16 %v2482
        %v2547 = vunpack.c.l.b16 %v2483
        %v2548 = vunpack.c.l.b16 %v2484
        %v2549 = vunpack.c.l.b16 %v2485
        %v2550 = vunpack.c.l.b16 %v2486
        %v2551 = vunpack.c.l.b16 %v2487
        %v2552 = vunpack.c.l.b16 %v2488
        %v2553 = vunpack.c.l.b16 %v2489
        %v2554 = vunpack.c.l.b16 %v2490
        %v2555 = vunpack.c.l.b16 %v2491
        %v2556 = vunpack.c.l.b16 %v2492
        %v2557 = vunpack.c.l.b16 %v2493
        %v2558 = vunpack.c.l.b16 %v2494
        %v2559 = vunpack.c.l.b16 %v2495
        %v2560 = vunpack.c.l.b16 %v2496
        %v2561 = vunpack.c.l.b16 %v2497
        %v2562 = vunpack.c.l.b16 %v2498
        %v2563 = vunpack.c.l.b16 %v2499
        %v2564 = vunpack.c.l.b16 %v2500
        %v2565 = vunpack.c.l.b16 %v2501
        %v2566 = vunpack.c.l.b16 %v2502
        %v2567 = vunpack.c.l.b16 %v2503
        %v2568 = vunpack.c.l.b16 %v2504
        %v2569 = vunpack.c.l.b16 %v2505
        %v2570 = vunpack.c.l.b16 %v2506
        %v2571 = vunpack.c.l.b16 %v2507
        %v2572 = vunpack.c.l.b16 %v2508
        %v2573 = vunpack.c.l.b16 %v2509
        %v2574 = vunpack.c.l.b16 %v2510
        %v2575 = vunpack.c.l.b16 %v2511
        %v2576 = vunpack.c.l.b16 %v2512
        %v2577 = vrot.slane %v2513, 7
        %v2578 = vrot.slane %v2514, 6
        %vm2579 = vcmask 1042434
        %v2580 = vsel %vm2579, %v2578, %v2577
        %v2581 = vrot.slane %v2515, 5
        %vm2582 = vcmask 1043459
        %v2583 = vsel %vm2582, %v2581, %v2580
        %v2584 = vrot.slane %v2516, 4
        %vm2585 = vcmask 1044484
        %v2586 = vsel %vm2585, %v2584, %v2583
        %v2587 = vrot.slane %v2517, 7
        %v2588 = vrot.slane %v2518, 6
        %v2589 = vsel %vm2579, %v2588, %v2587
        %v2590 = vrot.slane %v2519, 5
        %v2591 = vsel %vm2582, %v2590, %v2589
        %v2592 = vrot.slane %v2520, 4
        %v2593 = vsel %vm2585, %v2592, %v2591
        %v2594 = vrot.slane %v2521, 7
        %v2595 = vrot.slane %v2522, 6
        %v2596 = vsel %vm2579, %v2595, %v2594
        %v2597 = vrot.slane %v2523, 5
        %v2598 = vsel %vm2582, %v2597, %v2596
        %v2599 = vrot.slane %v2524, 4
        %v2600 = vsel %vm2585, %v2599, %v2598
        %v2601 = vrot.slane %v2525, 7
        %v2602 = vrot.slane %v2526, 6
        %v2603 = vsel %vm2579, %v2602, %v2601
        %v2604 = vrot.slane %v2527, 5
        %v2605 = vsel %vm2582, %v2604, %v2603
        %v2606 = vrot.slane %v2528, 4
        %v2607 = vsel %vm2585, %v2606, %v2605
        %v2608 = vrot.slane %v2529, 7
        %v2609 = vrot.slane %v2530, 6
        %v2610 = vsel %vm2579, %v2609, %v2608
        %v2611 = vrot.slane %v2531, 5
        %v2612 = vsel %vm2582, %v2611, %v2610
        %v2613 = vrot.slane %v2532, 4
        %v2614 = vsel %vm2585, %v2613, %v2612
        %v2615 = vrot.slane %v2533, 7
        %v2616 = vrot.slane %v2534, 6
        %v2617 = vsel %vm2579, %v2616, %v2615
        %v2618 = vrot.slane %v2535, 5
        %v2619 = vsel %vm2582, %v2618, %v2617
        %v2620 = vrot.slane %v2536, 4
        %v2621 = vsel %vm2585, %v2620, %v2619
        %v2622 = vrot.slane %v2537, 7
        %v2623 = vrot.slane %v2538, 6
        %v2624 = vsel %vm2579, %v2623, %v2622
        %v2625 = vrot.slane %v2539, 5
        %v2626 = vsel %vm2582, %v2625, %v2624
        %v2627 = vrot.slane %v2540, 4
        %v2628 = vsel %vm2585, %v2627, %v2626
        %v2629 = vrot.slane %v2541, 7
        %v2630 = vrot.slane %v2542, 6
        %v2631 = vsel %vm2579, %v2630, %v2629
        %v2632 = vrot.slane %v2543, 5
        %v2633 = vsel %vm2582, %v2632, %v2631
        %v2634 = vrot.slane %v2544, 4
        %v2635 = vsel %vm2585, %v2634, %v2633
        %v2636 = vrot.slane %v2545, 7
        %v2637 = vrot.slane %v2546, 6
        %v2638 = vsel %vm2579, %v2637, %v2636
        %v2639 = vrot.slane %v2547, 5
        %v2640 = vsel %vm2582, %v2639, %v2638
        %v2641 = vrot.slane %v2548, 4
        %v2642 = vsel %vm2585, %v2641, %v2640
        %v2643 = vrot.slane %v2549, 7
        %v2644 = vrot.slane %v2550, 6
        %v2645 = vsel %vm2579, %v2644, %v2643
        %v2646 = vrot.slane %v2551, 5
        %v2647 = vsel %vm2582, %v2646, %v2645
        %v2648 = vrot.slane %v2552, 4
        %v2649 = vsel %vm2585, %v2648, %v2647
        %v2650 = vrot.slane %v2553, 7
        %v2651 = vrot.slane %v2554, 6
        %v2652 = vsel %vm2579, %v2651, %v2650
        %v2653 = vrot.slane %v2555, 5
        %v2654 = vsel %vm2582, %v2653, %v2652
        %v2655 = vrot.slane %v2556, 4
        %v2656 = vsel %vm2585, %v2655, %v2654
        %v2657 = vrot.slane %v2557, 7
        %v2658 = vrot.slane %v2558, 6
        %v2659 = vsel %vm2579, %v2658, %v2657
        %v2660 = vrot.slane %v2559, 5
        %v2661 = vsel %vm2582, %v2660, %v2659
        %v2662 = vrot.slane %v2560, 4
        %v2663 = vsel %vm2585, %v2662, %v2661
        %v2664 = vrot.slane %v2561, 7
        %v2665 = vrot.slane %v2562, 6
        %v2666 = vsel %vm2579, %v2665, %v2664
        %v2667 = vrot.slane %v2563, 5
        %v2668 = vsel %vm2582, %v2667, %v2666
        %v2669 = vrot.slane %v2564, 4
        %v2670 = vsel %vm2585, %v2669, %v2668
        %v2671 = vrot.slane %v2565, 7
        %v2672 = vrot.slane %v2566, 6
        %v2673 = vsel %vm2579, %v2672, %v2671
        %v2674 = vrot.slane %v2567, 5
        %v2675 = vsel %vm2582, %v2674, %v2673
        %v2676 = vrot.slane %v2568, 4
        %v2677 = vsel %vm2585, %v2676, %v2675
        %v2678 = vrot.slane %v2569, 7
        %v2679 = vrot.slane %v2570, 6
        %v2680 = vsel %vm2579, %v2679, %v2678
        %v2681 = vrot.slane %v2571, 5
        %v2682 = vsel %vm2582, %v2681, %v2680
        %v2683 = vrot.slane %v2572, 4
        %v2684 = vsel %vm2585, %v2683, %v2682
        %v2685 = vrot.slane %v2573, 7
        %v2686 = vrot.slane %v2574, 6
        %v2687 = vsel %vm2579, %v2686, %v2685
        %v2688 = vrot.slane %v2575, 5
        %v2689 = vsel %vm2582, %v2688, %v2687
        %v2690 = vrot.slane %v2576, 4
        %v2691 = vsel %vm2585, %v2690, %v2689
        %v2692 = vpack.c.b16 %v2586, %v2586
        %v2693 = vpack.c.b16 %v2593, %v2593
        %v2694 = vpack.c.b16 %v2600, %v2600
        %v2695 = vpack.c.b16 %v2607, %v2607
        %v2696 = vpack.c.b16 %v2614, %v2614
        %v2697 = vpack.c.b16 %v2621, %v2621
        %v2698 = vpack.c.b16 %v2628, %v2628
        %v2699 = vpack.c.b16 %v2635, %v2635
        %v2700 = vpack.c.b16 %v2642, %v2642
        %v2701 = vpack.c.b16 %v2649, %v2649
        %v2702 = vpack.c.b16 %v2656, %v2656
        %v2703 = vpack.c.b16 %v2663, %v2663
        %v2704 = vpack.c.b16 %v2670, %v2670
        %v2705 = vpack.c.b16 %v2677, %v2677
        %v2706 = vpack.c.b16 %v2684, %v2684
        %v2707 = vpack.c.b16 %v2691, %v2691
        %s2724 = scalar_lea.vmem [#allocation2], 4
        %vm2725 = vcmask 256000
        %vm2726 = vsmask.f32 2306
        %vm2727 = vmand %vm2725, %vm2726
        %v2728 = vld [vmem:[%s2724] sm:$0x7]
        %v2729 = vsel %vm2727, %v2692, %v2728
        %2730 = vst [vmem:[%s2724] sm:$0x7] %v2729
        %v2731 = vld [vmem:[%s2724 + $0x4] sm:$0x7]
        %v2732 = vsel %vm2727, %v2693, %v2731
        %2733 = vst [vmem:[%s2724 + $0x4] sm:$0x7] %v2732
        %v2734 = vld [vmem:[%s2724 + $0x8] sm:$0x7]
        %v2735 = vsel %vm2727, %v2694, %v2734
        %2736 = vst [vmem:[%s2724 + $0x8] sm:$0x7] %v2735
        %v2737 = vld [vmem:[%s2724 + $0xc] sm:$0x7]
        %v2738 = vsel %vm2727, %v2695, %v2737
        %2739 = vst [vmem:[%s2724 + $0xc] sm:$0x7] %v2738
        %v2740 = vld [vmem:[%s2724 + $0x18] sm:$0x7]
        %v2741 = vsel %vm2727, %v2696, %v2740
        %2742 = vst [vmem:[%s2724 + $0x18] sm:$0x7] %v2741
        %v2743 = vld [vmem:[%s2724 + $0x1c] sm:$0x7]
        %v2744 = vsel %vm2727, %v2697, %v2743
        %2745 = vst [vmem:[%s2724 + $0x1c] sm:$0x7] %v2744
        %v2746 = vld [vmem:[%s2724 + $0x20] sm:$0x7]
        %v2747 = vsel %vm2727, %v2698, %v2746
        %2748 = vst [vmem:[%s2724 + $0x20] sm:$0x7] %v2747
        %v2749 = vld [vmem:[%s2724 + $0x24] sm:$0x7]
        %v2750 = vsel %vm2727, %v2699, %v2749
        %2751 = vst [vmem:[%s2724 + $0x24] sm:$0x7] %v2750
        %v2752 = vld [vmem:[%s2724 + $0x30] sm:$0x7]
        %v2753 = vsel %vm2727, %v2700, %v2752
        %2754 = vst [vmem:[%s2724 + $0x30] sm:$0x7] %v2753
        %v2755 = vld [vmem:[%s2724 + $0x34] sm:$0x7]
        %v2756 = vsel %vm2727, %v2701, %v2755
        %2757 = vst [vmem:[%s2724 + $0x34] sm:$0x7] %v2756
        %v2758 = vld [vmem:[%s2724 + $0x38] sm:$0x7]
        %v2759 = vsel %vm2727, %v2702, %v2758
        %2760 = vst [vmem:[%s2724 + $0x38] sm:$0x7] %v2759
        %v2761 = vld [vmem:[%s2724 + $0x3c] sm:$0x7]
        %v2762 = vsel %vm2727, %v2703, %v2761
        %2763 = vst [vmem:[%s2724 + $0x3c] sm:$0x7] %v2762
        %v2764 = vld [vmem:[%s2724 + $0x48] sm:$0x7]
        %v2765 = vsel %vm2727, %v2704, %v2764
        %2766 = vst [vmem:[%s2724 + $0x48] sm:$0x7] %v2765
        %v2767 = vld [vmem:[%s2724 + $0x4c] sm:$0x7]
        %v2768 = vsel %vm2727, %v2705, %v2767
        %2769 = vst [vmem:[%s2724 + $0x4c] sm:$0x7] %v2768
        %v2770 = vld [vmem:[%s2724 + $0x50] sm:$0x7]
        %v2771 = vsel %vm2727, %v2706, %v2770
        %2772 = vst [vmem:[%s2724 + $0x50] sm:$0x7] %v2771
        %v2773 = vld [vmem:[%s2724 + $0x54] sm:$0x7]
        %v2774 = vsel %vm2727, %v2707, %v2773
        %2775 = vst [vmem:[%s2724 + $0x54] sm:$0x7] %v2774
        %v2776 = vld [vmem:[#allocation2] sm:$0x3]
        %v2777 = vld [vmem:[#allocation2 + $0x4] sm:$0x3]
        %v2778 = vld [vmem:[#allocation2 + $0x8] sm:$0x3]
        %v2779 = vld [vmem:[#allocation2 + $0xc] sm:$0x3]
        %v2780 = vld [vmem:[#allocation2 + $0x18] sm:$0x3]
        %v2781 = vld [vmem:[#allocation2 + $0x1c] sm:$0x3]
        %v2782 = vld [vmem:[#allocation2 + $0x20] sm:$0x3]
        %v2783 = vld [vmem:[#allocation2 + $0x24] sm:$0x3]
        %v2784 = vld [vmem:[#allocation2 + $0x30] sm:$0x3]
        %v2785 = vld [vmem:[#allocation2 + $0x34] sm:$0x3]
        %v2786 = vld [vmem:[#allocation2 + $0x38] sm:$0x3]
        %v2787 = vld [vmem:[#allocation2 + $0x3c] sm:$0x3]
        %v2788 = vld [vmem:[#allocation2 + $0x48] sm:$0x3]
        %v2789 = vld [vmem:[#allocation2 + $0x4c] sm:$0x3]
        %v2790 = vld [vmem:[#allocation2 + $0x50] sm:$0x3]
        %v2791 = vld [vmem:[#allocation2 + $0x54] sm:$0x3]
        %v2808 = vcombine.low %v2776, %v2777
        %v2809 = vcombine.low %v2778, %v2779
        %v2811 = vunpack.c.l.s4 1983009808
        %v2812 = vunpack.c.0.s8 %v2811
        %v2813 = vlaneseq
        %v2814 = vshrl.u32 %v2813, 7
        %v2815 = vsub.s32 %v2812, %v2814
        %v2816 = vrot.slane %v2808, %v2815
        %v2818 = vunpack.c.l.s4 1983009808
        %v2819 = vunpack.c.0.s8 %v2818
        %v2820 = vlaneseq
        %v2821 = vshrl.u32 %v2820, 7
        %v2822 = vsub.s32 %v2819, %v2821
        %v2823 = vrot.slane %v2809, %v2822
        %v2824 = vcombine.low %v2816, %v2823
        %v2825 = vcombine.low %v2780, %v2781
        %v2826 = vcombine.low %v2782, %v2783
        %v2828 = vunpack.c.l.s4 1983009808
        %v2829 = vunpack.c.0.s8 %v2828
        %v2830 = vlaneseq
        %v2831 = vshrl.u32 %v2830, 7
        %v2832 = vsub.s32 %v2829, %v2831
        %v2833 = vrot.slane %v2825, %v2832
        %v2835 = vunpack.c.l.s4 1983009808
        %v2836 = vunpack.c.0.s8 %v2835
        %v2837 = vlaneseq
        %v2838 = vshrl.u32 %v2837, 7
        %v2839 = vsub.s32 %v2836, %v2838
        %v2840 = vrot.slane %v2826, %v2839
        %v2841 = vcombine.low %v2833, %v2840
        %v2842 = vcombine.low %v2784, %v2785
        %v2843 = vcombine.low %v2786, %v2787
        %v2845 = vunpack.c.l.s4 1983009808
        %v2846 = vunpack.c.0.s8 %v2845
        %v2847 = vlaneseq
        %v2848 = vshrl.u32 %v2847, 7
        %v2849 = vsub.s32 %v2846, %v2848
        %v2850 = vrot.slane %v2842, %v2849
        %v2852 = vunpack.c.l.s4 1983009808
        %v2853 = vunpack.c.0.s8 %v2852
        %v2854 = vlaneseq
        %v2855 = vshrl.u32 %v2854, 7
        %v2856 = vsub.s32 %v2853, %v2855
        %v2857 = vrot.slane %v2843, %v2856
        %v2858 = vcombine.low %v2850, %v2857
        %v2859 = vcombine.low %v2788, %v2789
        %v2860 = vcombine.low %v2790, %v2791
        %v2862 = vunpack.c.l.s4 1983009808
        %v2863 = vunpack.c.0.s8 %v2862
        %v2864 = vlaneseq
        %v2865 = vshrl.u32 %v2864, 7
        %v2866 = vsub.s32 %v2863, %v2865
        %v2867 = vrot.slane %v2859, %v2866
        %v2869 = vunpack.c.l.s4 1983009808
        %v2870 = vunpack.c.0.s8 %v2869
        %v2871 = vlaneseq
        %v2872 = vshrl.u32 %v2871, 7
        %v2873 = vsub.s32 %v2870, %v2872
        %v2874 = vrot.slane %v2860, %v2873
        %v2875 = vcombine.low %v2867, %v2874
        %2880 = vst.msk [vmem:[#allocation3] sm:$0xff] %vm575, %v2824
        %2881 = vst.msk [vmem:[#allocation3 + $0x18] sm:$0xff] %vm575, %v2841
        %2882 = vst.msk [vmem:[#allocation3 + $0x30] sm:$0xff] %vm575, %v2858
        %2883 = vst.msk [vmem:[#allocation3 + $0x48] sm:$0xff] %vm575, %v2875
        %v2884 = vld [vmem:[#allocation2] sm:$0x7]
        %v2885 = vld [vmem:[#allocation2 + $0x4] sm:$0x7]
        %v2886 = vld [vmem:[#allocation2 + $0x8] sm:$0x7]
        %v2887 = vld [vmem:[#allocation2 + $0xc] sm:$0x7]
        %v2888 = vld [vmem:[#allocation2 + $0x18] sm:$0x7]
        %v2889 = vld [vmem:[#allocation2 + $0x1c] sm:$0x7]
        %v2890 = vld [vmem:[#allocation2 + $0x20] sm:$0x7]
        %v2891 = vld [vmem:[#allocation2 + $0x24] sm:$0x7]
        %v2892 = vld [vmem:[#allocation2 + $0x30] sm:$0x7]
        %v2893 = vld [vmem:[#allocation2 + $0x34] sm:$0x7]
        %v2894 = vld [vmem:[#allocation2 + $0x38] sm:$0x7]
        %v2895 = vld [vmem:[#allocation2 + $0x3c] sm:$0x7]
        %v2896 = vld [vmem:[#allocation2 + $0x48] sm:$0x7]
        %v2897 = vld [vmem:[#allocation2 + $0x4c] sm:$0x7]
        %v2898 = vld [vmem:[#allocation2 + $0x50] sm:$0x7]
        %v2899 = vld [vmem:[#allocation2 + $0x54] sm:$0x7]
        %v2917 = vunpack.c.l.s4 1983009808
        %v2918 = vunpack.c.0.s8 %v2917
        %v2919 = vlaneseq
        %v2920 = vshrl.u32 %v2919, 7
        %v2921 = vsub.s32 %v2918, %v2920
        %v2922 = vrot.slane %v2884, %v2921
        %v2923 = vcombine.high %v2922, %v2922
        %v2925 = vunpack.c.l.s4 1983009808
        %v2926 = vunpack.c.0.s8 %v2925
        %v2927 = vlaneseq
        %v2928 = vshrl.u32 %v2927, 7
        %v2929 = vsub.s32 %v2926, %v2928
        %v2930 = vrot.slane %v2885, %v2929
        %v2931 = vcombine.high %v2930, %v2930
        %v2933 = vunpack.c.l.s4 1983009808
        %v2934 = vunpack.c.0.s8 %v2933
        %v2935 = vlaneseq
        %v2936 = vshrl.u32 %v2935, 7
        %v2937 = vsub.s32 %v2934, %v2936
        %v2938 = vrot.slane %v2886, %v2937
        %v2939 = vcombine.high %v2938, %v2938
        %v2941 = vunpack.c.l.s4 1983009808
        %v2942 = vunpack.c.0.s8 %v2941
        %v2943 = vlaneseq
        %v2944 = vshrl.u32 %v2943, 7
        %v2945 = vsub.s32 %v2942, %v2944
        %v2946 = vrot.slane %v2887, %v2945
        %v2947 = vcombine.high %v2946, %v2946
        %v2949 = vunpack.c.l.s4 1983009808
        %v2950 = vunpack.c.0.s8 %v2949
        %v2951 = vlaneseq
        %v2952 = vshrl.u32 %v2951, 7
        %v2953 = vsub.s32 %v2950, %v2952
        %v2954 = vrot.slane %v2888, %v2953
        %v2955 = vcombine.high %v2954, %v2954
        %v2957 = vunpack.c.l.s4 1983009808
        %v2958 = vunpack.c.0.s8 %v2957
        %v2959 = vlaneseq
        %v2960 = vshrl.u32 %v2959, 7
        %v2961 = vsub.s32 %v2958, %v2960
        %v2962 = vrot.slane %v2889, %v2961
        %v2963 = vcombine.high %v2962, %v2962
        %v2965 = vunpack.c.l.s4 1983009808
        %v2966 = vunpack.c.0.s8 %v2965
        %v2967 = vlaneseq
        %v2968 = vshrl.u32 %v2967, 7
        %v2969 = vsub.s32 %v2966, %v2968
        %v2970 = vrot.slane %v2890, %v2969
        %v2971 = vcombine.high %v2970, %v2970
        %v2973 = vunpack.c.l.s4 1983009808
        %v2974 = vunpack.c.0.s8 %v2973
        %v2975 = vlaneseq
        %v2976 = vshrl.u32 %v2975, 7
        %v2977 = vsub.s32 %v2974, %v2976
        %v2978 = vrot.slane %v2891, %v2977
        %v2979 = vcombine.high %v2978, %v2978
        %v2981 = vunpack.c.l.s4 1983009808
        %v2982 = vunpack.c.0.s8 %v2981
        %v2983 = vlaneseq
        %v2984 = vshrl.u32 %v2983, 7
        %v2985 = vsub.s32 %v2982, %v2984
        %v2986 = vrot.slane %v2892, %v2985
        %v2987 = vcombine.high %v2986, %v2986
        %v2989 = vunpack.c.l.s4 1983009808
        %v2990 = vunpack.c.0.s8 %v2989
        %v2991 = vlaneseq
        %v2992 = vshrl.u32 %v2991, 7
        %v2993 = vsub.s32 %v2990, %v2992
        %v2994 = vrot.slane %v2893, %v2993
        %v2995 = vcombine.high %v2994, %v2994
        %v2997 = vunpack.c.l.s4 1983009808
        %v2998 = vunpack.c.0.s8 %v2997
        %v2999 = vlaneseq
        %v3000 = vshrl.u32 %v2999, 7
        %v3001 = vsub.s32 %v2998, %v3000
        %v3002 = vrot.slane %v2894, %v3001
        %v3003 = vcombine.high %v3002, %v3002
        %v3005 = vunpack.c.l.s4 1983009808
        %v3006 = vunpack.c.0.s8 %v3005
        %v3007 = vlaneseq
        %v3008 = vshrl.u32 %v3007, 7
        %v3009 = vsub.s32 %v3006, %v3008
        %v3010 = vrot.slane %v2895, %v3009
        %v3011 = vcombine.high %v3010, %v3010
        %v3013 = vunpack.c.l.s4 1983009808
        %v3014 = vunpack.c.0.s8 %v3013
        %v3015 = vlaneseq
        %v3016 = vshrl.u32 %v3015, 7
        %v3017 = vsub.s32 %v3014, %v3016
        %v3018 = vrot.slane %v2896, %v3017
        %v3019 = vcombine.high %v3018, %v3018
        %v3021 = vunpack.c.l.s4 1983009808
        %v3022 = vunpack.c.0.s8 %v3021
        %v3023 = vlaneseq
        %v3024 = vshrl.u32 %v3023, 7
        %v3025 = vsub.s32 %v3022, %v3024
        %v3026 = vrot.slane %v2897, %v3025
        %v3027 = vcombine.high %v3026, %v3026
        %v3029 = vunpack.c.l.s4 1983009808
        %v3030 = vunpack.c.0.s8 %v3029
        %v3031 = vlaneseq
        %v3032 = vshrl.u32 %v3031, 7
        %v3033 = vsub.s32 %v3030, %v3032
        %v3034 = vrot.slane %v2898, %v3033
        %v3035 = vcombine.high %v3034, %v3034
        %v3037 = vunpack.c.l.s4 1983009808
        %v3038 = vunpack.c.0.s8 %v3037
        %v3039 = vlaneseq
        %v3040 = vshrl.u32 %v3039, 7
        %v3041 = vsub.s32 %v3038, %v3040
        %v3042 = vrot.slane %v2899, %v3041
        %v3043 = vcombine.high %v3042, %v3042
        %vm3044 = vsmask.f32 1280
        %vm3045 = vsmask.f32 3336
        %vm3046 = vmor %vm3044, %vm3045
        %vm3047 = vsmask.f32 5392
        %vm3048 = vmor %vm3046, %vm3047
        %vm3049 = vsmask.f32 7448
        %vm3050 = vmor %vm3048, %vm3049
        %v3052 = vshrl.u32 %v2922, 16
        %v3054 = vrot.slane %v3052, 6
        %v3055 = vshll.u32 %v2922, 16
        %v3057 = vrot.slane %v3055, 7
        %v3058 = vor.u32 %v3054, %v3057
        %v3059 = vrot.slane %v3058, 2
        %v3061 = vshll.u32 %v2923, 16
        %v3063 = vrot.slane %v3061, 7
        %v3064 = vsel %vm3050, %v3059, %v3063
        %v3066 = vshrl.u32 %v2930, 16
        %v3068 = vrot.slane %v3066, 6
        %v3069 = vshll.u32 %v2930, 16
        %v3071 = vrot.slane %v3069, 7
        %v3072 = vor.u32 %v3068, %v3071
        %v3073 = vrot.slane %v3072, 2
        %v3075 = vshll.u32 %v2931, 16
        %v3077 = vrot.slane %v3075, 7
        %v3078 = vsel %vm3050, %v3073, %v3077
        %v3080 = vshrl.u32 %v2938, 16
        %v3082 = vrot.slane %v3080, 6
        %v3083 = vshll.u32 %v2938, 16
        %v3085 = vrot.slane %v3083, 7
        %v3086 = vor.u32 %v3082, %v3085
        %v3087 = vrot.slane %v3086, 2
        %v3089 = vshll.u32 %v2939, 16
        %v3091 = vrot.slane %v3089, 7
        %v3092 = vsel %vm3050, %v3087, %v3091
        %v3094 = vshrl.u32 %v2946, 16
        %v3096 = vrot.slane %v3094, 6
        %v3097 = vshll.u32 %v2946, 16
        %v3099 = vrot.slane %v3097, 7
        %v3100 = vor.u32 %v3096, %v3099
        %v3101 = vrot.slane %v3100, 2
        %v3103 = vshll.u32 %v2947, 16
        %v3105 = vrot.slane %v3103, 7
        %v3106 = vsel %vm3050, %v3101, %v3105
        %v3108 = vshrl.u32 %v2954, 16
        %v3110 = vrot.slane %v3108, 6
        %v3111 = vshll.u32 %v2954, 16
        %v3113 = vrot.slane %v3111, 7
        %v3114 = vor.u32 %v3110, %v3113
        %v3115 = vrot.slane %v3114, 2
        %v3117 = vshll.u32 %v2955, 16
        %v3119 = vrot.slane %v3117, 7
        %v3120 = vsel %vm3050, %v3115, %v3119
        %v3122 = vshrl.u32 %v2962, 16
        %v3124 = vrot.slane %v3122, 6
        %v3125 = vshll.u32 %v2962, 16
        %v3127 = vrot.slane %v3125, 7
        %v3128 = vor.u32 %v3124, %v3127
        %v3129 = vrot.slane %v3128, 2
        %v3131 = vshll.u32 %v2963, 16
        %v3133 = vrot.slane %v3131, 7
        %v3134 = vsel %vm3050, %v3129, %v3133
        %v3136 = vshrl.u32 %v2970, 16
        %v3138 = vrot.slane %v3136, 6
        %v3139 = vshll.u32 %v2970, 16
        %v3141 = vrot.slane %v3139, 7
        %v3142 = vor.u32 %v3138, %v3141
        %v3143 = vrot.slane %v3142, 2
        %v3145 = vshll.u32 %v2971, 16
        %v3147 = vrot.slane %v3145, 7
        %v3148 = vsel %vm3050, %v3143, %v3147
        %v3150 = vshrl.u32 %v2978, 16
        %v3152 = vrot.slane %v3150, 6
        %v3153 = vshll.u32 %v2978, 16
        %v3155 = vrot.slane %v3153, 7
        %v3156 = vor.u32 %v3152, %v3155
        %v3157 = vrot.slane %v3156, 2
        %v3159 = vshll.u32 %v2979, 16
        %v3161 = vrot.slane %v3159, 7
        %v3162 = vsel %vm3050, %v3157, %v3161
        %v3164 = vshrl.u32 %v2986, 16
        %v3166 = vrot.slane %v3164, 6
        %v3167 = vshll.u32 %v2986, 16
        %v3169 = vrot.slane %v3167, 7
        %v3170 = vor.u32 %v3166, %v3169
        %v3171 = vrot.slane %v3170, 2
        %v3173 = vshll.u32 %v2987, 16
        %v3175 = vrot.slane %v3173, 7
        %v3176 = vsel %vm3050, %v3171, %v3175
        %v3178 = vshrl.u32 %v2994, 16
        %v3180 = vrot.slane %v3178, 6
        %v3181 = vshll.u32 %v2994, 16
        %v3183 = vrot.slane %v3181, 7
        %v3184 = vor.u32 %v3180, %v3183
        %v3185 = vrot.slane %v3184, 2
        %v3187 = vshll.u32 %v2995, 16
        %v3189 = vrot.slane %v3187, 7
        %v3190 = vsel %vm3050, %v3185, %v3189
        %v3192 = vshrl.u32 %v3002, 16
        %v3194 = vrot.slane %v3192, 6
        %v3195 = vshll.u32 %v3002, 16
        %v3197 = vrot.slane %v3195, 7
        %v3198 = vor.u32 %v3194, %v3197
        %v3199 = vrot.slane %v3198, 2
        %v3201 = vshll.u32 %v3003, 16
        %v3203 = vrot.slane %v3201, 7
        %v3204 = vsel %vm3050, %v3199, %v3203
        %v3206 = vshrl.u32 %v3010, 16
        %v3208 = vrot.slane %v3206, 6
        %v3209 = vshll.u32 %v3010, 16
        %v3211 = vrot.slane %v3209, 7
        %v3212 = vor.u32 %v3208, %v3211
        %v3213 = vrot.slane %v3212, 2
        %v3215 = vshll.u32 %v3011, 16
        %v3217 = vrot.slane %v3215, 7
        %v3218 = vsel %vm3050, %v3213, %v3217
        %v3220 = vshrl.u32 %v3018, 16
        %v3222 = vrot.slane %v3220, 6
        %v3223 = vshll.u32 %v3018, 16
        %v3225 = vrot.slane %v3223, 7
        %v3226 = vor.u32 %v3222, %v3225
        %v3227 = vrot.slane %v3226, 2
        %v3229 = vshll.u32 %v3019, 16
        %v3231 = vrot.slane %v3229, 7
        %v3232 = vsel %vm3050, %v3227, %v3231
        %v3234 = vshrl.u32 %v3026, 16
        %v3236 = vrot.slane %v3234, 6
        %v3237 = vshll.u32 %v3026, 16
        %v3239 = vrot.slane %v3237, 7
        %v3240 = vor.u32 %v3236, %v3239
        %v3241 = vrot.slane %v3240, 2
        %v3243 = vshll.u32 %v3027, 16
        %v3245 = vrot.slane %v3243, 7
        %v3246 = vsel %vm3050, %v3241, %v3245
        %v3248 = vshrl.u32 %v3034, 16
        %v3250 = vrot.slane %v3248, 6
        %v3251 = vshll.u32 %v3034, 16
        %v3253 = vrot.slane %v3251, 7
        %v3254 = vor.u32 %v3250, %v3253
        %v3255 = vrot.slane %v3254, 2
        %v3257 = vshll.u32 %v3035, 16
        %v3259 = vrot.slane %v3257, 7
        %v3260 = vsel %vm3050, %v3255, %v3259
        %v3262 = vshrl.u32 %v3042, 16
        %v3264 = vrot.slane %v3262, 6
        %v3265 = vshll.u32 %v3042, 16
        %v3267 = vrot.slane %v3265, 7
        %v3268 = vor.u32 %v3264, %v3267
        %v3269 = vrot.slane %v3268, 2
        %v3271 = vshll.u32 %v3043, 16
        %v3273 = vrot.slane %v3271, 7
        %v3274 = vsel %vm3050, %v3269, %v3273
        %v3275 = vcombine.low %v3064, %v3078
        %v3276 = vcombine.low %v3092, %v3106
        %v3278 = vunpack.c.l.s4 1983009808
        %v3279 = vunpack.c.0.s8 %v3278
        %v3280 = vlaneseq
        %v3281 = vshrl.u32 %v3280, 7
        %v3282 = vsub.s32 %v3279, %v3281
        %v3283 = vrot.slane %v3275, %v3282
        %v3285 = vunpack.c.l.s4 1983009808
        %v3286 = vunpack.c.0.s8 %v3285
        %v3287 = vlaneseq
        %v3288 = vshrl.u32 %v3287, 7
        %v3289 = vsub.s32 %v3286, %v3288
        %v3290 = vrot.slane %v3276, %v3289
        %v3291 = vcombine.low %v3283, %v3290
        %v3292 = vcombine.low %v3120, %v3134
        %v3293 = vcombine.low %v3148, %v3162
        %v3295 = vunpack.c.l.s4 1983009808
        %v3296 = vunpack.c.0.s8 %v3295
        %v3297 = vlaneseq
        %v3298 = vshrl.u32 %v3297, 7
        %v3299 = vsub.s32 %v3296, %v3298
        %v3300 = vrot.slane %v3292, %v3299
        %v3302 = vunpack.c.l.s4 1983009808
        %v3303 = vunpack.c.0.s8 %v3302
        %v3304 = vlaneseq
        %v3305 = vshrl.u32 %v3304, 7
        %v3306 = vsub.s32 %v3303, %v3305
        %v3307 = vrot.slane %v3293, %v3306
        %v3308 = vcombine.low %v3300, %v3307
        %v3309 = vcombine.low %v3176, %v3190
        %v3310 = vcombine.low %v3204, %v3218
        %v3312 = vunpack.c.l.s4 1983009808
        %v3313 = vunpack.c.0.s8 %v3312
        %v3314 = vlaneseq
        %v3315 = vshrl.u32 %v3314, 7
        %v3316 = vsub.s32 %v3313, %v3315
        %v3317 = vrot.slane %v3309, %v3316
        %v3319 = vunpack.c.l.s4 1983009808
        %v3320 = vunpack.c.0.s8 %v3319
        %v3321 = vlaneseq
        %v3322 = vshrl.u32 %v3321, 7
        %v3323 = vsub.s32 %v3320, %v3322
        %v3324 = vrot.slane %v3310, %v3323
        %v3325 = vcombine.low %v3317, %v3324
        %v3326 = vcombine.low %v3232, %v3246
        %v3327 = vcombine.low %v3260, %v3274
        %v3329 = vunpack.c.l.s4 1983009808
        %v3330 = vunpack.c.0.s8 %v3329
        %v3331 = vlaneseq
        %v3332 = vshrl.u32 %v3331, 7
        %v3333 = vsub.s32 %v3330, %v3332
        %v3334 = vrot.slane %v3326, %v3333
        %v3336 = vunpack.c.l.s4 1983009808
        %v3337 = vunpack.c.0.s8 %v3336
        %v3338 = vlaneseq
        %v3339 = vshrl.u32 %v3338, 7
        %v3340 = vsub.s32 %v3337, %v3339
        %v3341 = vrot.slane %v3327, %v3340
        %v3342 = vcombine.low %v3334, %v3341
        %3343 = vrot.lane.b32.xlu0 %v3291, 32
        %v3344 = vpop.permute.xlu0 %3343
        %3345 = vrot.lane.b32.xlu0 %v3308, 32
        %v3346 = vpop.permute.xlu0 %3345
        %3347 = vrot.lane.b32.xlu0 %v3325, 32
        %v3348 = vpop.permute.xlu0 %3347
        %3349 = vrot.lane.b32.xlu0 %v3342, 32
        %v3350 = vpop.permute.xlu0 %3349
        %vm3355 = vcmask 523520
        %3356 = vst.msk [vmem:[#allocation3] sm:$0xff] %vm3355, %v3344
        %3357 = vst.msk [vmem:[#allocation3 + $0x18] sm:$0xff] %vm3355, %v3346
        %3358 = vst.msk [vmem:[#allocation3 + $0x30] sm:$0xff] %vm3355, %v3348
        %3359 = vst.msk [vmem:[#allocation3 + $0x48] sm:$0xff] %vm3355, %v3350
        %v3360 = vld [vmem:[#allocation2] sm:$0x6]
        %v3361 = vld [vmem:[#allocation2 + $0x4] sm:$0x6]
        %v3362 = vld [vmem:[#allocation2 + $0x8] sm:$0x6]
        %v3363 = vld [vmem:[#allocation2 + $0xc] sm:$0x6]
        %v3364 = vld [vmem:[#allocation2 + $0x18] sm:$0x6]
        %v3365 = vld [vmem:[#allocation2 + $0x1c] sm:$0x6]
        %v3366 = vld [vmem:[#allocation2 + $0x20] sm:$0x6]
        %v3367 = vld [vmem:[#allocation2 + $0x24] sm:$0x6]
        %v3368 = vld [vmem:[#allocation2 + $0x30] sm:$0x6]
        %v3369 = vld [vmem:[#allocation2 + $0x34] sm:$0x6]
        %v3370 = vld [vmem:[#allocation2 + $0x38] sm:$0x6]
        %v3371 = vld [vmem:[#allocation2 + $0x3c] sm:$0x6]
        %v3372 = vld [vmem:[#allocation2 + $0x48] sm:$0x6]
        %v3373 = vld [vmem:[#allocation2 + $0x4c] sm:$0x6]
        %v3374 = vld [vmem:[#allocation2 + $0x50] sm:$0x6]
        %v3375 = vld [vmem:[#allocation2 + $0x54] sm:$0x6]
        %v3393 = vunpack.c.l.s4 1983009808
        %v3394 = vunpack.c.0.s8 %v3393
        %v3395 = vlaneseq
        %v3396 = vshrl.u32 %v3395, 7
        %v3397 = vsub.s32 %v3394, %v3396
        %v3398 = vrot.slane %v3360, %v3397
        %v3399 = vcombine.high %v3398, %v3398
        %v3401 = vunpack.c.l.s4 1983009808
        %v3402 = vunpack.c.0.s8 %v3401
        %v3403 = vlaneseq
        %v3404 = vshrl.u32 %v3403, 7
        %v3405 = vsub.s32 %v3402, %v3404
        %v3406 = vrot.slane %v3361, %v3405
        %v3407 = vcombine.high %v3406, %v3406
        %v3409 = vunpack.c.l.s4 1983009808
        %v3410 = vunpack.c.0.s8 %v3409
        %v3411 = vlaneseq
        %v3412 = vshrl.u32 %v3411, 7
        %v3413 = vsub.s32 %v3410, %v3412
        %v3414 = vrot.slane %v3362, %v3413
        %v3415 = vcombine.high %v3414, %v3414
        %v3417 = vunpack.c.l.s4 1983009808
        %v3418 = vunpack.c.0.s8 %v3417
        %v3419 = vlaneseq
        %v3420 = vshrl.u32 %v3419, 7
        %v3421 = vsub.s32 %v3418, %v3420
        %v3422 = vrot.slane %v3363, %v3421
        %v3423 = vcombine.high %v3422, %v3422
        %v3425 = vunpack.c.l.s4 1983009808
        %v3426 = vunpack.c.0.s8 %v3425
        %v3427 = vlaneseq
        %v3428 = vshrl.u32 %v3427, 7
        %v3429 = vsub.s32 %v3426, %v3428
        %v3430 = vrot.slane %v3364, %v3429
        %v3431 = vcombine.high %v3430, %v3430
        %v3433 = vunpack.c.l.s4 1983009808
        %v3434 = vunpack.c.0.s8 %v3433
        %v3435 = vlaneseq
        %v3436 = vshrl.u32 %v3435, 7
        %v3437 = vsub.s32 %v3434, %v3436
        %v3438 = vrot.slane %v3365, %v3437
        %v3439 = vcombine.high %v3438, %v3438
        %v3441 = vunpack.c.l.s4 1983009808
        %v3442 = vunpack.c.0.s8 %v3441
        %v3443 = vlaneseq
        %v3444 = vshrl.u32 %v3443, 7
        %v3445 = vsub.s32 %v3442, %v3444
        %v3446 = vrot.slane %v3366, %v3445
        %v3447 = vcombine.high %v3446, %v3446
        %v3449 = vunpack.c.l.s4 1983009808
        %v3450 = vunpack.c.0.s8 %v3449
        %v3451 = vlaneseq
        %v3452 = vshrl.u32 %v3451, 7
        %v3453 = vsub.s32 %v3450, %v3452
        %v3454 = vrot.slane %v3367, %v3453
        %v3455 = vcombine.high %v3454, %v3454
        %v3457 = vunpack.c.l.s4 1983009808
        %v3458 = vunpack.c.0.s8 %v3457
        %v3459 = vlaneseq
        %v3460 = vshrl.u32 %v3459, 7
        %v3461 = vsub.s32 %v3458, %v3460
        %v3462 = vrot.slane %v3368, %v3461
        %v3463 = vcombine.high %v3462, %v3462
        %v3465 = vunpack.c.l.s4 1983009808
        %v3466 = vunpack.c.0.s8 %v3465
        %v3467 = vlaneseq
        %v3468 = vshrl.u32 %v3467, 7
        %v3469 = vsub.s32 %v3466, %v3468
        %v3470 = vrot.slane %v3369, %v3469
        %v3471 = vcombine.high %v3470, %v3470
        %v3473 = vunpack.c.l.s4 1983009808
        %v3474 = vunpack.c.0.s8 %v3473
        %v3475 = vlaneseq
        %v3476 = vshrl.u32 %v3475, 7
        %v3477 = vsub.s32 %v3474, %v3476
        %v3478 = vrot.slane %v3370, %v3477
        %v3479 = vcombine.high %v3478, %v3478
        %v3481 = vunpack.c.l.s4 1983009808
        %v3482 = vunpack.c.0.s8 %v3481
        %v3483 = vlaneseq
        %v3484 = vshrl.u32 %v3483, 7
        %v3485 = vsub.s32 %v3482, %v3484
        %v3486 = vrot.slane %v3371, %v3485
        %v3487 = vcombine.high %v3486, %v3486
        %v3489 = vunpack.c.l.s4 1983009808
        %v3490 = vunpack.c.0.s8 %v3489
        %v3491 = vlaneseq
        %v3492 = vshrl.u32 %v3491, 7
        %v3493 = vsub.s32 %v3490, %v3492
        %v3494 = vrot.slane %v3372, %v3493
        %v3495 = vcombine.high %v3494, %v3494
        %v3497 = vunpack.c.l.s4 1983009808
        %v3498 = vunpack.c.0.s8 %v3497
        %v3499 = vlaneseq
        %v3500 = vshrl.u32 %v3499, 7
        %v3501 = vsub.s32 %v3498, %v3500
        %v3502 = vrot.slane %v3373, %v3501
        %v3503 = vcombine.high %v3502, %v3502
        %v3505 = vunpack.c.l.s4 1983009808
        %v3506 = vunpack.c.0.s8 %v3505
        %v3507 = vlaneseq
        %v3508 = vshrl.u32 %v3507, 7
        %v3509 = vsub.s32 %v3506, %v3508
        %v3510 = vrot.slane %v3374, %v3509
        %v3511 = vcombine.high %v3510, %v3510
        %v3513 = vunpack.c.l.s4 1983009808
        %v3514 = vunpack.c.0.s8 %v3513
        %v3515 = vlaneseq
        %v3516 = vshrl.u32 %v3515, 7
        %v3517 = vsub.s32 %v3514, %v3516
        %v3518 = vrot.slane %v3375, %v3517
        %v3519 = vcombine.high %v3518, %v3518
        %vm3520 = vcmask 1040384
        %vm3521 = vcmask 1042434
        %vm3522 = vmor %vm3520, %vm3521
        %vm3523 = vcmask 1044484
        %vm3524 = vmor %vm3522, %vm3523
        %vm3525 = vcmask 1046534
        %vm3526 = vmor %vm3524, %vm3525
        %v3527 = vrot.slane %v3398, 7
        %v3528 = vrot.slane %v3527, 2
        %v3529 = vrot.slane %v3399, 7
        %v3530 = vsel %vm3526, %v3528, %v3529
        %v3531 = vrot.slane %v3406, 7
        %v3532 = vrot.slane %v3531, 2
        %v3533 = vrot.slane %v3407, 7
        %v3534 = vsel %vm3526, %v3532, %v3533
        %v3535 = vrot.slane %v3414, 7
        %v3536 = vrot.slane %v3535, 2
        %v3537 = vrot.slane %v3415, 7
        %v3538 = vsel %vm3526, %v3536, %v3537
        %v3539 = vrot.slane %v3422, 7
        %v3540 = vrot.slane %v3539, 2
        %v3541 = vrot.slane %v3423, 7
        %v3542 = vsel %vm3526, %v3540, %v3541
        %v3543 = vrot.slane %v3430, 7
        %v3544 = vrot.slane %v3543, 2
        %v3545 = vrot.slane %v3431, 7
        %v3546 = vsel %vm3526, %v3544, %v3545
        %v3547 = vrot.slane %v3438, 7
        %v3548 = vrot.slane %v3547, 2
        %v3549 = vrot.slane %v3439, 7
        %v3550 = vsel %vm3526, %v3548, %v3549
        %v3551 = vrot.slane %v3446, 7
        %v3552 = vrot.slane %v3551, 2
        %v3553 = vrot.slane %v3447, 7
        %v3554 = vsel %vm3526, %v3552, %v3553
        %v3555 = vrot.slane %v3454, 7
        %v3556 = vrot.slane %v3555, 2
        %v3557 = vrot.slane %v3455, 7
        %v3558 = vsel %vm3526, %v3556, %v3557
        %v3559 = vrot.slane %v3462, 7
        %v3560 = vrot.slane %v3559, 2
        %v3561 = vrot.slane %v3463, 7
        %v3562 = vsel %vm3526, %v3560, %v3561
        %v3563 = vrot.slane %v3470, 7
        %v3564 = vrot.slane %v3563, 2
        %v3565 = vrot.slane %v3471, 7
        %v3566 = vsel %vm3526, %v3564, %v3565
        %v3567 = vrot.slane %v3478, 7
        %v3568 = vrot.slane %v3567, 2
        %v3569 = vrot.slane %v3479, 7
        %v3570 = vsel %vm3526, %v3568, %v3569
        %v3571 = vrot.slane %v3486, 7
        %v3572 = vrot.slane %v3571, 2
        %v3573 = vrot.slane %v3487, 7
        %v3574 = vsel %vm3526, %v3572, %v3573
        %v3575 = vrot.slane %v3494, 7
        %v3576 = vrot.slane %v3575, 2
        %v3577 = vrot.slane %v3495, 7
        %v3578 = vsel %vm3526, %v3576, %v3577
        %v3579 = vrot.slane %v3502, 7
        %v3580 = vrot.slane %v3579, 2
        %v3581 = vrot.slane %v3503, 7
        %v3582 = vsel %vm3526, %v3580, %v3581
        %v3583 = vrot.slane %v3510, 7
        %v3584 = vrot.slane %v3583, 2
        %v3585 = vrot.slane %v3511, 7
        %v3586 = vsel %vm3526, %v3584, %v3585
        %v3587 = vrot.slane %v3518, 7
        %v3588 = vrot.slane %v3587, 2
        %v3589 = vrot.slane %v3519, 7
        %v3590 = vsel %vm3526, %v3588, %v3589
        %v3591 = vcombine.low %v3530, %v3534
        %v3592 = vcombine.low %v3538, %v3542
        %v3594 = vunpack.c.l.s4 1983009808
        %v3595 = vunpack.c.0.s8 %v3594
        %v3596 = vlaneseq
        %v3597 = vshrl.u32 %v3596, 7
        %v3598 = vsub.s32 %v3595, %v3597
        %v3599 = vrot.slane %v3591, %v3598
        %v3601 = vunpack.c.l.s4 1983009808
        %v3602 = vunpack.c.0.s8 %v3601
        %v3603 = vlaneseq
        %v3604 = vshrl.u32 %v3603, 7
        %v3605 = vsub.s32 %v3602, %v3604
        %v3606 = vrot.slane %v3592, %v3605
        %v3607 = vcombine.low %v3599, %v3606
        %v3608 = vcombine.low %v3546, %v3550
        %v3609 = vcombine.low %v3554, %v3558
        %v3611 = vunpack.c.l.s4 1983009808
        %v3612 = vunpack.c.0.s8 %v3611
        %v3613 = vlaneseq
        %v3614 = vshrl.u32 %v3613, 7
        %v3615 = vsub.s32 %v3612, %v3614
        %v3616 = vrot.slane %v3608, %v3615
        %v3618 = vunpack.c.l.s4 1983009808
        %v3619 = vunpack.c.0.s8 %v3618
        %v3620 = vlaneseq
        %v3621 = vshrl.u32 %v3620, 7
        %v3622 = vsub.s32 %v3619, %v3621
        %v3623 = vrot.slane %v3609, %v3622
        %v3624 = vcombine.low %v3616, %v3623
        %v3625 = vcombine.low %v3562, %v3566
        %v3626 = vcombine.low %v3570, %v3574
        %v3628 = vunpack.c.l.s4 1983009808
        %v3629 = vunpack.c.0.s8 %v3628
        %v3630 = vlaneseq
        %v3631 = vshrl.u32 %v3630, 7
        %v3632 = vsub.s32 %v3629, %v3631
        %v3633 = vrot.slane %v3625, %v3632
        %v3635 = vunpack.c.l.s4 1983009808
        %v3636 = vunpack.c.0.s8 %v3635
        %v3637 = vlaneseq
        %v3638 = vshrl.u32 %v3637, 7
        %v3639 = vsub.s32 %v3636, %v3638
        %v3640 = vrot.slane %v3626, %v3639
        %v3641 = vcombine.low %v3633, %v3640
        %v3642 = vcombine.low %v3578, %v3582
        %v3643 = vcombine.low %v3586, %v3590
        %v3645 = vunpack.c.l.s4 1983009808
        %v3646 = vunpack.c.0.s8 %v3645
        %v3647 = vlaneseq
        %v3648 = vshrl.u32 %v3647, 7
        %v3649 = vsub.s32 %v3646, %v3648
        %v3650 = vrot.slane %v3642, %v3649
        %v3652 = vunpack.c.l.s4 1983009808
        %v3653 = vunpack.c.0.s8 %v3652
        %v3654 = vlaneseq
        %v3655 = vshrl.u32 %v3654, 7
        %v3656 = vsub.s32 %v3653, %v3655
        %v3657 = vrot.slane %v3643, %v3656
        %v3658 = vcombine.low %v3650, %v3657
        %3659 = vrot.lane.b32.xlu0 %v3607, 64
        %v3660 = vpop.permute.xlu0 %3659
        %3661 = vrot.lane.b32.xlu0 %v3624, 64
        %v3662 = vpop.permute.xlu0 %3661
        %3663 = vrot.lane.b32.xlu0 %v3641, 64
        %v3664 = vpop.permute.xlu0 %3663
        %3665 = vrot.lane.b32.xlu0 %v3658, 64
        %v3666 = vpop.permute.xlu0 %3665
        %vm3671 = vcmask 785920
        %3672 = vst.msk [vmem:[#allocation3] sm:$0xff] %vm3671, %v3660
        %3673 = vst.msk [vmem:[#allocation3 + $0x18] sm:$0xff] %vm3671, %v3662
        %3674 = vst.msk [vmem:[#allocation3 + $0x30] sm:$0xff] %vm3671, %v3664
        %3675 = vst.msk [vmem:[#allocation3 + $0x48] sm:$0xff] %vm3671, %v3666
        %v3676 = vld [vmem:[%s2724] sm:$0x3]
        %v3677 = vld [vmem:[%s2724 + $0x4] sm:$0x3]
        %v3678 = vld [vmem:[%s2724 + $0x8] sm:$0x3]
        %v3679 = vld [vmem:[%s2724 + $0xc] sm:$0x3]
        %v3680 = vld [vmem:[%s2724 + $0x18] sm:$0x3]
        %v3681 = vld [vmem:[%s2724 + $0x1c] sm:$0x3]
        %v3682 = vld [vmem:[%s2724 + $0x20] sm:$0x3]
        %v3683 = vld [vmem:[%s2724 + $0x24] sm:$0x3]
        %v3684 = vld [vmem:[%s2724 + $0x30] sm:$0x3]
        %v3685 = vld [vmem:[%s2724 + $0x34] sm:$0x3]
        %v3686 = vld [vmem:[%s2724 + $0x38] sm:$0x3]
        %v3687 = vld [vmem:[%s2724 + $0x3c] sm:$0x3]
        %v3688 = vld [vmem:[%s2724 + $0x48] sm:$0x3]
        %v3689 = vld [vmem:[%s2724 + $0x4c] sm:$0x3]
        %v3690 = vld [vmem:[%s2724 + $0x50] sm:$0x3]
        %v3691 = vld [vmem:[%s2724 + $0x54] sm:$0x3]
        %v3708 = vcombine.low %v3676, %v3677
        %v3709 = vcombine.low %v3678, %v3679
        %v3711 = vunpack.c.l.s4 1983009808
        %v3712 = vunpack.c.0.s8 %v3711
        %v3713 = vlaneseq
        %v3714 = vshrl.u32 %v3713, 7
        %v3715 = vsub.s32 %v3712, %v3714
        %v3716 = vrot.slane %v3708, %v3715
        %v3718 = vunpack.c.l.s4 1983009808
        %v3719 = vunpack.c.0.s8 %v3718
        %v3720 = vlaneseq
        %v3721 = vshrl.u32 %v3720, 7
        %v3722 = vsub.s32 %v3719, %v3721
        %v3723 = vrot.slane %v3709, %v3722
        %v3724 = vcombine.low %v3716, %v3723
        %v3725 = vcombine.low %v3680, %v3681
        %v3726 = vcombine.low %v3682, %v3683
        %v3728 = vunpack.c.l.s4 1983009808
        %v3729 = vunpack.c.0.s8 %v3728
        %v3730 = vlaneseq
        %v3731 = vshrl.u32 %v3730, 7
        %v3732 = vsub.s32 %v3729, %v3731
        %v3733 = vrot.slane %v3725, %v3732
        %v3735 = vunpack.c.l.s4 1983009808
        %v3736 = vunpack.c.0.s8 %v3735
        %v3737 = vlaneseq
        %v3738 = vshrl.u32 %v3737, 7
        %v3739 = vsub.s32 %v3736, %v3738
        %v3740 = vrot.slane %v3726, %v3739
        %v3741 = vcombine.low %v3733, %v3740
        %v3742 = vcombine.low %v3684, %v3685
        %v3743 = vcombine.low %v3686, %v3687
        %v3745 = vunpack.c.l.s4 1983009808
        %v3746 = vunpack.c.0.s8 %v3745
        %v3747 = vlaneseq
        %v3748 = vshrl.u32 %v3747, 7
        %v3749 = vsub.s32 %v3746, %v3748
        %v3750 = vrot.slane %v3742, %v3749
        %v3752 = vunpack.c.l.s4 1983009808
        %v3753 = vunpack.c.0.s8 %v3752
        %v3754 = vlaneseq
        %v3755 = vshrl.u32 %v3754, 7
        %v3756 = vsub.s32 %v3753, %v3755
        %v3757 = vrot.slane %v3743, %v3756
        %v3758 = vcombine.low %v3750, %v3757
        %v3759 = vcombine.low %v3688, %v3689
        %v3760 = vcombine.low %v3690, %v3691
        %v3762 = vunpack.c.l.s4 1983009808
        %v3763 = vunpack.c.0.s8 %v3762
        %v3764 = vlaneseq
        %v3765 = vshrl.u32 %v3764, 7
        %v3766 = vsub.s32 %v3763, %v3765
        %v3767 = vrot.slane %v3759, %v3766
        %v3769 = vunpack.c.l.s4 1983009808
        %v3770 = vunpack.c.0.s8 %v3769
        %v3771 = vlaneseq
        %v3772 = vshrl.u32 %v3771, 7
        %v3773 = vsub.s32 %v3770, %v3772
        %v3774 = vrot.slane %v3760, %v3773
        %v3775 = vcombine.low %v3767, %v3774
        %3776 = vrot.lane.b32.xlu0 %v3724, 96
        %v3777 = vpop.permute.xlu0 %3776
        %3778 = vrot.lane.b32.xlu0 %v3741, 96
        %v3779 = vpop.permute.xlu0 %3778
        %3780 = vrot.lane.b32.xlu0 %v3758, 96
        %v3781 = vpop.permute.xlu0 %3780
        %3782 = vrot.lane.b32.xlu0 %v3775, 96
        %v3783 = vpop.permute.xlu0 %3782
        %vm3788 = vcmask 1048320
        %3789 = vst.msk [vmem:[#allocation3] sm:$0xff] %vm3788, %v3777
        %3790 = vst.msk [vmem:[#allocation3 + $0x18] sm:$0xff] %vm3788, %v3779
        %3791 = vst.msk [vmem:[#allocation3 + $0x30] sm:$0xff] %vm3788, %v3781
        %3792 = vst.msk [vmem:[#allocation3 + $0x48] sm:$0xff] %vm3788, %v3783
        %v3793 = vld [vmem:[%s2724] sm:$0x7]
        %v3794 = vld [vmem:[%s2724 + $0x4] sm:$0x7]
        %v3795 = vld [vmem:[%s2724 + $0x8] sm:$0x7]
        %v3796 = vld [vmem:[%s2724 + $0xc] sm:$0x7]
        %v3797 = vld [vmem:[%s2724 + $0x18] sm:$0x7]
        %v3798 = vld [vmem:[%s2724 + $0x1c] sm:$0x7]
        %v3799 = vld [vmem:[%s2724 + $0x20] sm:$0x7]
        %v3800 = vld [vmem:[%s2724 + $0x24] sm:$0x7]
        %v3801 = vld [vmem:[%s2724 + $0x30] sm:$0x7]
        %v3802 = vld [vmem:[%s2724 + $0x34] sm:$0x7]
        %v3803 = vld [vmem:[%s2724 + $0x38] sm:$0x7]
        %v3804 = vld [vmem:[%s2724 + $0x3c] sm:$0x7]
        %v3805 = vld [vmem:[%s2724 + $0x48] sm:$0x7]
        %v3806 = vld [vmem:[%s2724 + $0x4c] sm:$0x7]
        %v3807 = vld [vmem:[%s2724 + $0x50] sm:$0x7]
        %v3808 = vld [vmem:[%s2724 + $0x54] sm:$0x7]
        %v3826 = vunpack.c.l.s4 1983009808
        %v3827 = vunpack.c.0.s8 %v3826
        %v3828 = vlaneseq
        %v3829 = vshrl.u32 %v3828, 7
        %v3830 = vsub.s32 %v3827, %v3829
        %v3831 = vrot.slane %v3793, %v3830
        %v3832 = vcombine.high %v3831, %v3831
        %v3834 = vunpack.c.l.s4 1983009808
        %v3835 = vunpack.c.0.s8 %v3834
        %v3836 = vlaneseq
        %v3837 = vshrl.u32 %v3836, 7
        %v3838 = vsub.s32 %v3835, %v3837
        %v3839 = vrot.slane %v3794, %v3838
        %v3840 = vcombine.high %v3839, %v3839
        %v3842 = vunpack.c.l.s4 1983009808
        %v3843 = vunpack.c.0.s8 %v3842
        %v3844 = vlaneseq
        %v3845 = vshrl.u32 %v3844, 7
        %v3846 = vsub.s32 %v3843, %v3845
        %v3847 = vrot.slane %v3795, %v3846
        %v3848 = vcombine.high %v3847, %v3847
        %v3850 = vunpack.c.l.s4 1983009808
        %v3851 = vunpack.c.0.s8 %v3850
        %v3852 = vlaneseq
        %v3853 = vshrl.u32 %v3852, 7
        %v3854 = vsub.s32 %v3851, %v3853
        %v3855 = vrot.slane %v3796, %v3854
        %v3856 = vcombine.high %v3855, %v3855
        %v3858 = vunpack.c.l.s4 1983009808
        %v3859 = vunpack.c.0.s8 %v3858
        %v3860 = vlaneseq
        %v3861 = vshrl.u32 %v3860, 7
        %v3862 = vsub.s32 %v3859, %v3861
        %v3863 = vrot.slane %v3797, %v3862
        %v3864 = vcombine.high %v3863, %v3863
        %v3866 = vunpack.c.l.s4 1983009808
        %v3867 = vunpack.c.0.s8 %v3866
        %v3868 = vlaneseq
        %v3869 = vshrl.u32 %v3868, 7
        %v3870 = vsub.s32 %v3867, %v3869
        %v3871 = vrot.slane %v3798, %v3870
        %v3872 = vcombine.high %v3871, %v3871
        %v3874 = vunpack.c.l.s4 1983009808
        %v3875 = vunpack.c.0.s8 %v3874
        %v3876 = vlaneseq
        %v3877 = vshrl.u32 %v3876, 7
        %v3878 = vsub.s32 %v3875, %v3877
        %v3879 = vrot.slane %v3799, %v3878
        %v3880 = vcombine.high %v3879, %v3879
        %v3882 = vunpack.c.l.s4 1983009808
        %v3883 = vunpack.c.0.s8 %v3882
        %v3884 = vlaneseq
        %v3885 = vshrl.u32 %v3884, 7
        %v3886 = vsub.s32 %v3883, %v3885
        %v3887 = vrot.slane %v3800, %v3886
        %v3888 = vcombine.high %v3887, %v3887
        %v3890 = vunpack.c.l.s4 1983009808
        %v3891 = vunpack.c.0.s8 %v3890
        %v3892 = vlaneseq
        %v3893 = vshrl.u32 %v3892, 7
        %v3894 = vsub.s32 %v3891, %v3893
        %v3895 = vrot.slane %v3801, %v3894
        %v3896 = vcombine.high %v3895, %v3895
        %v3898 = vunpack.c.l.s4 1983009808
        %v3899 = vunpack.c.0.s8 %v3898
        %v3900 = vlaneseq
        %v3901 = vshrl.u32 %v3900, 7
        %v3902 = vsub.s32 %v3899, %v3901
        %v3903 = vrot.slane %v3802, %v3902
        %v3904 = vcombine.high %v3903, %v3903
        %v3906 = vunpack.c.l.s4 1983009808
        %v3907 = vunpack.c.0.s8 %v3906
        %v3908 = vlaneseq
        %v3909 = vshrl.u32 %v3908, 7
        %v3910 = vsub.s32 %v3907, %v3909
        %v3911 = vrot.slane %v3803, %v3910
        %v3912 = vcombine.high %v3911, %v3911
        %v3914 = vunpack.c.l.s4 1983009808
        %v3915 = vunpack.c.0.s8 %v3914
        %v3916 = vlaneseq
        %v3917 = vshrl.u32 %v3916, 7
        %v3918 = vsub.s32 %v3915, %v3917
        %v3919 = vrot.slane %v3804, %v3918
        %v3920 = vcombine.high %v3919, %v3919
        %v3922 = vunpack.c.l.s4 1983009808
        %v3923 = vunpack.c.0.s8 %v3922
        %v3924 = vlaneseq
        %v3925 = vshrl.u32 %v3924, 7
        %v3926 = vsub.s32 %v3923, %v3925
        %v3927 = vrot.slane %v3805, %v3926
        %v3928 = vcombine.high %v3927, %v3927
        %v3930 = vunpack.c.l.s4 1983009808
        %v3931 = vunpack.c.0.s8 %v3930
        %v3932 = vlaneseq
        %v3933 = vshrl.u32 %v3932, 7
        %v3934 = vsub.s32 %v3931, %v3933
        %v3935 = vrot.slane %v3806, %v3934
        %v3936 = vcombine.high %v3935, %v3935
        %v3938 = vunpack.c.l.s4 1983009808
        %v3939 = vunpack.c.0.s8 %v3938
        %v3940 = vlaneseq
        %v3941 = vshrl.u32 %v3940, 7
        %v3942 = vsub.s32 %v3939, %v3941
        %v3943 = vrot.slane %v3807, %v3942
        %v3944 = vcombine.high %v3943, %v3943
        %v3946 = vunpack.c.l.s4 1983009808
        %v3947 = vunpack.c.0.s8 %v3946
        %v3948 = vlaneseq
        %v3949 = vshrl.u32 %v3948, 7
        %v3950 = vsub.s32 %v3947, %v3949
        %v3951 = vrot.slane %v3808, %v3950
        %v3952 = vcombine.high %v3951, %v3951
        %v3954 = vshrl.u32 %v3831, 16
        %v3956 = vrot.slane %v3954, 6
        %v3957 = vshll.u32 %v3831, 16
        %v3959 = vrot.slane %v3957, 7
        %v3960 = vor.u32 %v3956, %v3959
        %v3961 = vrot.slane %v3960, 2
        %v3963 = vshll.u32 %v3832, 16
        %v3965 = vrot.slane %v3963, 7
        %v3966 = vsel %vm3050, %v3961, %v3965
        %v3968 = vshrl.u32 %v3839, 16
        %v3970 = vrot.slane %v3968, 6
        %v3971 = vshll.u32 %v3839, 16
        %v3973 = vrot.slane %v3971, 7
        %v3974 = vor.u32 %v3970, %v3973
        %v3975 = vrot.slane %v3974, 2
        %v3977 = vshll.u32 %v3840, 16
        %v3979 = vrot.slane %v3977, 7
        %v3980 = vsel %vm3050, %v3975, %v3979
        %v3982 = vshrl.u32 %v3847, 16
        %v3984 = vrot.slane %v3982, 6
        %v3985 = vshll.u32 %v3847, 16
        %v3987 = vrot.slane %v3985, 7
        %v3988 = vor.u32 %v3984, %v3987
        %v3989 = vrot.slane %v3988, 2
        %v3991 = vshll.u32 %v3848, 16
        %v3993 = vrot.slane %v3991, 7
        %v3994 = vsel %vm3050, %v3989, %v3993
        %v3996 = vshrl.u32 %v3855, 16
        %v3998 = vrot.slane %v3996, 6
        %v3999 = vshll.u32 %v3855, 16
        %v4001 = vrot.slane %v3999, 7
        %v4002 = vor.u32 %v3998, %v4001
        %v4003 = vrot.slane %v4002, 2
        %v4005 = vshll.u32 %v3856, 16
        %v4007 = vrot.slane %v4005, 7
        %v4008 = vsel %vm3050, %v4003, %v4007
        %v4010 = vshrl.u32 %v3863, 16
        %v4012 = vrot.slane %v4010, 6
        %v4013 = vshll.u32 %v3863, 16
        %v4015 = vrot.slane %v4013, 7
        %v4016 = vor.u32 %v4012, %v4015
        %v4017 = vrot.slane %v4016, 2
        %v4019 = vshll.u32 %v3864, 16
        %v4021 = vrot.slane %v4019, 7
        %v4022 = vsel %vm3050, %v4017, %v4021
        %v4024 = vshrl.u32 %v3871, 16
        %v4026 = vrot.slane %v4024, 6
        %v4027 = vshll.u32 %v3871, 16
        %v4029 = vrot.slane %v4027, 7
        %v4030 = vor.u32 %v4026, %v4029
        %v4031 = vrot.slane %v4030, 2
        %v4033 = vshll.u32 %v3872, 16
        %v4035 = vrot.slane %v4033, 7
        %v4036 = vsel %vm3050, %v4031, %v4035
        %v4038 = vshrl.u32 %v3879, 16
        %v4040 = vrot.slane %v4038, 6
        %v4041 = vshll.u32 %v3879, 16
        %v4043 = vrot.slane %v4041, 7
        %v4044 = vor.u32 %v4040, %v4043
        %v4045 = vrot.slane %v4044, 2
        %v4047 = vshll.u32 %v3880, 16
        %v4049 = vrot.slane %v4047, 7
        %v4050 = vsel %vm3050, %v4045, %v4049
        %v4052 = vshrl.u32 %v3887, 16
        %v4054 = vrot.slane %v4052, 6
        %v4055 = vshll.u32 %v3887, 16
        %v4057 = vrot.slane %v4055, 7
        %v4058 = vor.u32 %v4054, %v4057
        %v4059 = vrot.slane %v4058, 2
        %v4061 = vshll.u32 %v3888, 16
        %v4063 = vrot.slane %v4061, 7
        %v4064 = vsel %vm3050, %v4059, %v4063
        %v4066 = vshrl.u32 %v3895, 16
        %v4068 = vrot.slane %v4066, 6
        %v4069 = vshll.u32 %v3895, 16
        %v4071 = vrot.slane %v4069, 7
        %v4072 = vor.u32 %v4068, %v4071
        %v4073 = vrot.slane %v4072, 2
        %v4075 = vshll.u32 %v3896, 16
        %v4077 = vrot.slane %v4075, 7
        %v4078 = vsel %vm3050, %v4073, %v4077
        %v4080 = vshrl.u32 %v3903, 16
        %v4082 = vrot.slane %v4080, 6
        %v4083 = vshll.u32 %v3903, 16
        %v4085 = vrot.slane %v4083, 7
        %v4086 = vor.u32 %v4082, %v4085
        %v4087 = vrot.slane %v4086, 2
        %v4089 = vshll.u32 %v3904, 16
        %v4091 = vrot.slane %v4089, 7
        %v4092 = vsel %vm3050, %v4087, %v4091
        %v4094 = vshrl.u32 %v3911, 16
        %v4096 = vrot.slane %v4094, 6
        %v4097 = vshll.u32 %v3911, 16
        %v4099 = vrot.slane %v4097, 7
        %v4100 = vor.u32 %v4096, %v4099
        %v4101 = vrot.slane %v4100, 2
        %v4103 = vshll.u32 %v3912, 16
        %v4105 = vrot.slane %v4103, 7
        %v4106 = vsel %vm3050, %v4101, %v4105
        %v4108 = vshrl.u32 %v3919, 16
        %v4110 = vrot.slane %v4108, 6
        %v4111 = vshll.u32 %v3919, 16
        %v4113 = vrot.slane %v4111, 7
        %v4114 = vor.u32 %v4110, %v4113
        %v4115 = vrot.slane %v4114, 2
        %v4117 = vshll.u32 %v3920, 16
        %v4119 = vrot.slane %v4117, 7
        %v4120 = vsel %vm3050, %v4115, %v4119
        %v4122 = vshrl.u32 %v3927, 16
        %v4124 = vrot.slane %v4122, 6
        %v4125 = vshll.u32 %v3927, 16
        %v4127 = vrot.slane %v4125, 7
        %v4128 = vor.u32 %v4124, %v4127
        %v4129 = vrot.slane %v4128, 2
        %v4131 = vshll.u32 %v3928, 16
        %v4133 = vrot.slane %v4131, 7
        %v4134 = vsel %vm3050, %v4129, %v4133
        %v4136 = vshrl.u32 %v3935, 16
        %v4138 = vrot.slane %v4136, 6
        %v4139 = vshll.u32 %v3935, 16
        %v4141 = vrot.slane %v4139, 7
        %v4142 = vor.u32 %v4138, %v4141
        %v4143 = vrot.slane %v4142, 2
        %v4145 = vshll.u32 %v3936, 16
        %v4147 = vrot.slane %v4145, 7
        %v4148 = vsel %vm3050, %v4143, %v4147
        %v4150 = vshrl.u32 %v3943, 16
        %v4152 = vrot.slane %v4150, 6
        %v4153 = vshll.u32 %v3943, 16
        %v4155 = vrot.slane %v4153, 7
        %v4156 = vor.u32 %v4152, %v4155
        %v4157 = vrot.slane %v4156, 2
        %v4159 = vshll.u32 %v3944, 16
        %v4161 = vrot.slane %v4159, 7
        %v4162 = vsel %vm3050, %v4157, %v4161
        %v4164 = vshrl.u32 %v3951, 16
        %v4166 = vrot.slane %v4164, 6
        %v4167 = vshll.u32 %v3951, 16
        %v4169 = vrot.slane %v4167, 7
        %v4170 = vor.u32 %v4166, %v4169
        %v4171 = vrot.slane %v4170, 2
        %v4173 = vshll.u32 %v3952, 16
        %v4175 = vrot.slane %v4173, 7
        %v4176 = vsel %vm3050, %v4171, %v4175
        %v4177 = vcombine.low %v3966, %v3980
        %v4178 = vcombine.low %v3994, %v4008
        %v4180 = vunpack.c.l.s4 1983009808
        %v4181 = vunpack.c.0.s8 %v4180
        %v4182 = vlaneseq
        %v4183 = vshrl.u32 %v4182, 7
        %v4184 = vsub.s32 %v4181, %v4183
        %v4185 = vrot.slane %v4177, %v4184
        %v4187 = vunpack.c.l.s4 1983009808
        %v4188 = vunpack.c.0.s8 %v4187
        %v4189 = vlaneseq
        %v4190 = vshrl.u32 %v4189, 7
        %v4191 = vsub.s32 %v4188, %v4190
        %v4192 = vrot.slane %v4178, %v4191
        %v4193 = vcombine.low %v4185, %v4192
        %v4194 = vcombine.low %v4022, %v4036
        %v4195 = vcombine.low %v4050, %v4064
        %v4197 = vunpack.c.l.s4 1983009808
        %v4198 = vunpack.c.0.s8 %v4197
        %v4199 = vlaneseq
        %v4200 = vshrl.u32 %v4199, 7
        %v4201 = vsub.s32 %v4198, %v4200
        %v4202 = vrot.slane %v4194, %v4201
        %v4204 = vunpack.c.l.s4 1983009808
        %v4205 = vunpack.c.0.s8 %v4204
        %v4206 = vlaneseq
        %v4207 = vshrl.u32 %v4206, 7
        %v4208 = vsub.s32 %v4205, %v4207
        %v4209 = vrot.slane %v4195, %v4208
        %v4210 = vcombine.low %v4202, %v4209
        %v4211 = vcombine.low %v4078, %v4092
        %v4212 = vcombine.low %v4106, %v4120
        %v4214 = vunpack.c.l.s4 1983009808
        %v4215 = vunpack.c.0.s8 %v4214
        %v4216 = vlaneseq
        %v4217 = vshrl.u32 %v4216, 7
        %v4218 = vsub.s32 %v4215, %v4217
        %v4219 = vrot.slane %v4211, %v4218
        %v4221 = vunpack.c.l.s4 1983009808
        %v4222 = vunpack.c.0.s8 %v4221
        %v4223 = vlaneseq
        %v4224 = vshrl.u32 %v4223, 7
        %v4225 = vsub.s32 %v4222, %v4224
        %v4226 = vrot.slane %v4212, %v4225
        %v4227 = vcombine.low %v4219, %v4226
        %v4228 = vcombine.low %v4134, %v4148
        %v4229 = vcombine.low %v4162, %v4176
        %v4231 = vunpack.c.l.s4 1983009808
        %v4232 = vunpack.c.0.s8 %v4231
        %v4233 = vlaneseq
        %v4234 = vshrl.u32 %v4233, 7
        %v4235 = vsub.s32 %v4232, %v4234
        %v4236 = vrot.slane %v4228, %v4235
        %v4238 = vunpack.c.l.s4 1983009808
        %v4239 = vunpack.c.0.s8 %v4238
        %v4240 = vlaneseq
        %v4241 = vshrl.u32 %v4240, 7
        %v4242 = vsub.s32 %v4239, %v4241
        %v4243 = vrot.slane %v4229, %v4242
        %v4244 = vcombine.low %v4236, %v4243
        %4249 = vst.msk [vmem:[#allocation3 + $0x8] sm:$0xff] %vm575, %v4193
        %4250 = vst.msk [vmem:[#allocation3 + $0x20] sm:$0xff] %vm575, %v4210
        %4251 = vst.msk [vmem:[#allocation3 + $0x38] sm:$0xff] %vm575, %v4227
        %4252 = vst.msk [vmem:[#allocation3 + $0x50] sm:$0xff] %vm575, %v4244
        %v4253 = vld [vmem:[%s2724] sm:$0x6]
        %v4254 = vld [vmem:[%s2724 + $0x4] sm:$0x6]
        %v4255 = vld [vmem:[%s2724 + $0x8] sm:$0x6]
        %v4256 = vld [vmem:[%s2724 + $0xc] sm:$0x6]
        %v4257 = vld [vmem:[%s2724 + $0x18] sm:$0x6]
        %v4258 = vld [vmem:[%s2724 + $0x1c] sm:$0x6]
        %v4259 = vld [vmem:[%s2724 + $0x20] sm:$0x6]
        %v4260 = vld [vmem:[%s2724 + $0x24] sm:$0x6]
        %v4261 = vld [vmem:[%s2724 + $0x30] sm:$0x6]
        %v4262 = vld [vmem:[%s2724 + $0x34] sm:$0x6]
        %v4263 = vld [vmem:[%s2724 + $0x38] sm:$0x6]
        %v4264 = vld [vmem:[%s2724 + $0x3c] sm:$0x6]
        %v4265 = vld [vmem:[%s2724 + $0x48] sm:$0x6]
        %v4266 = vld [vmem:[%s2724 + $0x4c] sm:$0x6]
        %v4267 = vld [vmem:[%s2724 + $0x50] sm:$0x6]
        %v4268 = vld [vmem:[%s2724 + $0x54] sm:$0x6]
        %v4286 = vunpack.c.l.s4 1983009808
        %v4287 = vunpack.c.0.s8 %v4286
        %v4288 = vlaneseq
        %v4289 = vshrl.u32 %v4288, 7
        %v4290 = vsub.s32 %v4287, %v4289
        %v4291 = vrot.slane %v4253, %v4290
        %v4292 = vcombine.high %v4291, %v4291
        %v4294 = vunpack.c.l.s4 1983009808
        %v4295 = vunpack.c.0.s8 %v4294
        %v4296 = vlaneseq
        %v4297 = vshrl.u32 %v4296, 7
        %v4298 = vsub.s32 %v4295, %v4297
        %v4299 = vrot.slane %v4254, %v4298
        %v4300 = vcombine.high %v4299, %v4299
        %v4302 = vunpack.c.l.s4 1983009808
        %v4303 = vunpack.c.0.s8 %v4302
        %v4304 = vlaneseq
        %v4305 = vshrl.u32 %v4304, 7
        %v4306 = vsub.s32 %v4303, %v4305
        %v4307 = vrot.slane %v4255, %v4306
        %v4308 = vcombine.high %v4307, %v4307
        %v4310 = vunpack.c.l.s4 1983009808
        %v4311 = vunpack.c.0.s8 %v4310
        %v4312 = vlaneseq
        %v4313 = vshrl.u32 %v4312, 7
        %v4314 = vsub.s32 %v4311, %v4313
        %v4315 = vrot.slane %v4256, %v4314
        %v4316 = vcombine.high %v4315, %v4315
        %v4318 = vunpack.c.l.s4 1983009808
        %v4319 = vunpack.c.0.s8 %v4318
        %v4320 = vlaneseq
        %v4321 = vshrl.u32 %v4320, 7
        %v4322 = vsub.s32 %v4319, %v4321
        %v4323 = vrot.slane %v4257, %v4322
        %v4324 = vcombine.high %v4323, %v4323
        %v4326 = vunpack.c.l.s4 1983009808
        %v4327 = vunpack.c.0.s8 %v4326
        %v4328 = vlaneseq
        %v4329 = vshrl.u32 %v4328, 7
        %v4330 = vsub.s32 %v4327, %v4329
        %v4331 = vrot.slane %v4258, %v4330
        %v4332 = vcombine.high %v4331, %v4331
        %v4334 = vunpack.c.l.s4 1983009808
        %v4335 = vunpack.c.0.s8 %v4334
        %v4336 = vlaneseq
        %v4337 = vshrl.u32 %v4336, 7
        %v4338 = vsub.s32 %v4335, %v4337
        %v4339 = vrot.slane %v4259, %v4338
        %v4340 = vcombine.high %v4339, %v4339
        %v4342 = vunpack.c.l.s4 1983009808
        %v4343 = vunpack.c.0.s8 %v4342
        %v4344 = vlaneseq
        %v4345 = vshrl.u32 %v4344, 7
        %v4346 = vsub.s32 %v4343, %v4345
        %v4347 = vrot.slane %v4260, %v4346
        %v4348 = vcombine.high %v4347, %v4347
        %v4350 = vunpack.c.l.s4 1983009808
        %v4351 = vunpack.c.0.s8 %v4350
        %v4352 = vlaneseq
        %v4353 = vshrl.u32 %v4352, 7
        %v4354 = vsub.s32 %v4351, %v4353
        %v4355 = vrot.slane %v4261, %v4354
        %v4356 = vcombine.high %v4355, %v4355
        %v4358 = vunpack.c.l.s4 1983009808
        %v4359 = vunpack.c.0.s8 %v4358
        %v4360 = vlaneseq
        %v4361 = vshrl.u32 %v4360, 7
        %v4362 = vsub.s32 %v4359, %v4361
        %v4363 = vrot.slane %v4262, %v4362
        %v4364 = vcombine.high %v4363, %v4363
        %v4366 = vunpack.c.l.s4 1983009808
        %v4367 = vunpack.c.0.s8 %v4366
        %v4368 = vlaneseq
        %v4369 = vshrl.u32 %v4368, 7
        %v4370 = vsub.s32 %v4367, %v4369
        %v4371 = vrot.slane %v4263, %v4370
        %v4372 = vcombine.high %v4371, %v4371
        %v4374 = vunpack.c.l.s4 1983009808
        %v4375 = vunpack.c.0.s8 %v4374
        %v4376 = vlaneseq
        %v4377 = vshrl.u32 %v4376, 7
        %v4378 = vsub.s32 %v4375, %v4377
        %v4379 = vrot.slane %v4264, %v4378
        %v4380 = vcombine.high %v4379, %v4379
        %v4382 = vunpack.c.l.s4 1983009808
        %v4383 = vunpack.c.0.s8 %v4382
        %v4384 = vlaneseq
        %v4385 = vshrl.u32 %v4384, 7
        %v4386 = vsub.s32 %v4383, %v4385
        %v4387 = vrot.slane %v4265, %v4386
        %v4388 = vcombine.high %v4387, %v4387
        %v4390 = vunpack.c.l.s4 1983009808
        %v4391 = vunpack.c.0.s8 %v4390
        %v4392 = vlaneseq
        %v4393 = vshrl.u32 %v4392, 7
        %v4394 = vsub.s32 %v4391, %v4393
        %v4395 = vrot.slane %v4266, %v4394
        %v4396 = vcombine.high %v4395, %v4395
        %v4398 = vunpack.c.l.s4 1983009808
        %v4399 = vunpack.c.0.s8 %v4398
        %v4400 = vlaneseq
        %v4401 = vshrl.u32 %v4400, 7
        %v4402 = vsub.s32 %v4399, %v4401
        %v4403 = vrot.slane %v4267, %v4402
        %v4404 = vcombine.high %v4403, %v4403
        %v4406 = vunpack.c.l.s4 1983009808
        %v4407 = vunpack.c.0.s8 %v4406
        %v4408 = vlaneseq
        %v4409 = vshrl.u32 %v4408, 7
        %v4410 = vsub.s32 %v4407, %v4409
        %v4411 = vrot.slane %v4268, %v4410
        %v4412 = vcombine.high %v4411, %v4411
        %v4413 = vrot.slane %v4291, 7
        %v4414 = vrot.slane %v4413, 2
        %v4415 = vrot.slane %v4292, 7
        %v4416 = vsel %vm3526, %v4414, %v4415
        %v4417 = vrot.slane %v4299, 7
        %v4418 = vrot.slane %v4417, 2
        %v4419 = vrot.slane %v4300, 7
        %v4420 = vsel %vm3526, %v4418, %v4419
        %v4421 = vrot.slane %v4307, 7
        %v4422 = vrot.slane %v4421, 2
        %v4423 = vrot.slane %v4308, 7
        %v4424 = vsel %vm3526, %v4422, %v4423
        %v4425 = vrot.slane %v4315, 7
        %v4426 = vrot.slane %v4425, 2
        %v4427 = vrot.slane %v4316, 7
        %v4428 = vsel %vm3526, %v4426, %v4427
        %v4429 = vrot.slane %v4323, 7
        %v4430 = vrot.slane %v4429, 2
        %v4431 = vrot.slane %v4324, 7
        %v4432 = vsel %vm3526, %v4430, %v4431
        %v4433 = vrot.slane %v4331, 7
        %v4434 = vrot.slane %v4433, 2
        %v4435 = vrot.slane %v4332, 7
        %v4436 = vsel %vm3526, %v4434, %v4435
        %v4437 = vrot.slane %v4339, 7
        %v4438 = vrot.slane %v4437, 2
        %v4439 = vrot.slane %v4340, 7
        %v4440 = vsel %vm3526, %v4438, %v4439
        %v4441 = vrot.slane %v4347, 7
        %v4442 = vrot.slane %v4441, 2
        %v4443 = vrot.slane %v4348, 7
        %v4444 = vsel %vm3526, %v4442, %v4443
        %v4445 = vrot.slane %v4355, 7
        %v4446 = vrot.slane %v4445, 2
        %v4447 = vrot.slane %v4356, 7
        %v4448 = vsel %vm3526, %v4446, %v4447
        %v4449 = vrot.slane %v4363, 7
        %v4450 = vrot.slane %v4449, 2
        %v4451 = vrot.slane %v4364, 7
        %v4452 = vsel %vm3526, %v4450, %v4451
        %v4453 = vrot.slane %v4371, 7
        %v4454 = vrot.slane %v4453, 2
        %v4455 = vrot.slane %v4372, 7
        %v4456 = vsel %vm3526, %v4454, %v4455
        %v4457 = vrot.slane %v4379, 7
        %v4458 = vrot.slane %v4457, 2
        %v4459 = vrot.slane %v4380, 7
        %v4460 = vsel %vm3526, %v4458, %v4459
        %v4461 = vrot.slane %v4387, 7
        %v4462 = vrot.slane %v4461, 2
        %v4463 = vrot.slane %v4388, 7
        %v4464 = vsel %vm3526, %v4462, %v4463
        %v4465 = vrot.slane %v4395, 7
        %v4466 = vrot.slane %v4465, 2
        %v4467 = vrot.slane %v4396, 7
        %v4468 = vsel %vm3526, %v4466, %v4467
        %v4469 = vrot.slane %v4403, 7
        %v4470 = vrot.slane %v4469, 2
        %v4471 = vrot.slane %v4404, 7
        %v4472 = vsel %vm3526, %v4470, %v4471
        %v4473 = vrot.slane %v4411, 7
        %v4474 = vrot.slane %v4473, 2
        %v4475 = vrot.slane %v4412, 7
        %v4476 = vsel %vm3526, %v4474, %v4475
        %v4477 = vcombine.low %v4416, %v4420
        %v4478 = vcombine.low %v4424, %v4428
        %v4480 = vunpack.c.l.s4 1983009808
        %v4481 = vunpack.c.0.s8 %v4480
        %v4482 = vlaneseq
        %v4483 = vshrl.u32 %v4482, 7
        %v4484 = vsub.s32 %v4481, %v4483
        %v4485 = vrot.slane %v4477, %v4484
        %v4487 = vunpack.c.l.s4 1983009808
        %v4488 = vunpack.c.0.s8 %v4487
        %v4489 = vlaneseq
        %v4490 = vshrl.u32 %v4489, 7
        %v4491 = vsub.s32 %v4488, %v4490
        %v4492 = vrot.slane %v4478, %v4491
        %v4493 = vcombine.low %v4485, %v4492
        %v4494 = vcombine.low %v4432, %v4436
        %v4495 = vcombine.low %v4440, %v4444
        %v4497 = vunpack.c.l.s4 1983009808
        %v4498 = vunpack.c.0.s8 %v4497
        %v4499 = vlaneseq
        %v4500 = vshrl.u32 %v4499, 7
        %v4501 = vsub.s32 %v4498, %v4500
        %v4502 = vrot.slane %v4494, %v4501
        %v4504 = vunpack.c.l.s4 1983009808
        %v4505 = vunpack.c.0.s8 %v4504
        %v4506 = vlaneseq
        %v4507 = vshrl.u32 %v4506, 7
        %v4508 = vsub.s32 %v4505, %v4507
        %v4509 = vrot.slane %v4495, %v4508
        %v4510 = vcombine.low %v4502, %v4509
        %v4511 = vcombine.low %v4448, %v4452
        %v4512 = vcombine.low %v4456, %v4460
        %v4514 = vunpack.c.l.s4 1983009808
        %v4515 = vunpack.c.0.s8 %v4514
        %v4516 = vlaneseq
        %v4517 = vshrl.u32 %v4516, 7
        %v4518 = vsub.s32 %v4515, %v4517
        %v4519 = vrot.slane %v4511, %v4518
        %v4521 = vunpack.c.l.s4 1983009808
        %v4522 = vunpack.c.0.s8 %v4521
        %v4523 = vlaneseq
        %v4524 = vshrl.u32 %v4523, 7
        %v4525 = vsub.s32 %v4522, %v4524
        %v4526 = vrot.slane %v4512, %v4525
        %v4527 = vcombine.low %v4519, %v4526
        %v4528 = vcombine.low %v4464, %v4468
        %v4529 = vcombine.low %v4472, %v4476
        %v4531 = vunpack.c.l.s4 1983009808
        %v4532 = vunpack.c.0.s8 %v4531
        %v4533 = vlaneseq
        %v4534 = vshrl.u32 %v4533, 7
        %v4535 = vsub.s32 %v4532, %v4534
        %v4536 = vrot.slane %v4528, %v4535
        %v4538 = vunpack.c.l.s4 1983009808
        %v4539 = vunpack.c.0.s8 %v4538
        %v4540 = vlaneseq
        %v4541 = vshrl.u32 %v4540, 7
        %v4542 = vsub.s32 %v4539, %v4541
        %v4543 = vrot.slane %v4529, %v4542
        %v4544 = vcombine.low %v4536, %v4543
        %4545 = vrot.lane.b32.xlu0 %v4493, 32
        %v4546 = vpop.permute.xlu0 %4545
        %4547 = vrot.lane.b32.xlu0 %v4510, 32
        %v4548 = vpop.permute.xlu0 %4547
        %4549 = vrot.lane.b32.xlu0 %v4527, 32
        %v4550 = vpop.permute.xlu0 %4549
        %4551 = vrot.lane.b32.xlu0 %v4544, 32
        %v4552 = vpop.permute.xlu0 %4551
        %4557 = vst.msk [vmem:[#allocation3 + $0x8] sm:$0xff] %vm3355, %v4546
        %4558 = vst.msk [vmem:[#allocation3 + $0x20] sm:$0xff] %vm3355, %v4548
        %4559 = vst.msk [vmem:[#allocation3 + $0x38] sm:$0xff] %vm3355, %v4550
        %4560 = vst.msk [vmem:[#allocation3 + $0x50] sm:$0xff] %vm3355, %v4552
        %s4561 = scalar_lea.vmem [#allocation2], 8
        %v4562 = vld [vmem:[%s4561] sm:$0x3]
        %v4563 = vld [vmem:[%s4561 + $0x4] sm:$0x3]
        %v4564 = vld [vmem:[%s4561 + $0x8] sm:$0x3]
        %v4565 = vld [vmem:[%s4561 + $0xc] sm:$0x3]
        %v4566 = vld [vmem:[%s4561 + $0x18] sm:$0x3]
        %v4567 = vld [vmem:[%s4561 + $0x1c] sm:$0x3]
        %v4568 = vld [vmem:[%s4561 + $0x20] sm:$0x3]
        %v4569 = vld [vmem:[%s4561 + $0x24] sm:$0x3]
        %v4570 = vld [vmem:[%s4561 + $0x30] sm:$0x3]
        %v4571 = vld [vmem:[%s4561 + $0x34] sm:$0x3]
        %v4572 = vld [vmem:[%s4561 + $0x38] sm:$0x3]
        %v4573 = vld [vmem:[%s4561 + $0x3c] sm:$0x3]
        %v4574 = vld [vmem:[%s4561 + $0x48] sm:$0x3]
        %v4575 = vld [vmem:[%s4561 + $0x4c] sm:$0x3]
        %v4576 = vld [vmem:[%s4561 + $0x50] sm:$0x3]
        %v4577 = vld [vmem:[%s4561 + $0x54] sm:$0x3]
        %v4594 = vcombine.low %v4562, %v4563
        %v4595 = vcombine.low %v4564, %v4565
        %v4597 = vunpack.c.l.s4 1983009808
        %v4598 = vunpack.c.0.s8 %v4597
        %v4599 = vlaneseq
        %v4600 = vshrl.u32 %v4599, 7
        %v4601 = vsub.s32 %v4598, %v4600
        %v4602 = vrot.slane %v4594, %v4601
        %v4604 = vunpack.c.l.s4 1983009808
        %v4605 = vunpack.c.0.s8 %v4604
        %v4606 = vlaneseq
        %v4607 = vshrl.u32 %v4606, 7
        %v4608 = vsub.s32 %v4605, %v4607
        %v4609 = vrot.slane %v4595, %v4608
        %v4610 = vcombine.low %v4602, %v4609
        %v4611 = vcombine.low %v4566, %v4567
        %v4612 = vcombine.low %v4568, %v4569
        %v4614 = vunpack.c.l.s4 1983009808
        %v4615 = vunpack.c.0.s8 %v4614
        %v4616 = vlaneseq
        %v4617 = vshrl.u32 %v4616, 7
        %v4618 = vsub.s32 %v4615, %v4617
        %v4619 = vrot.slane %v4611, %v4618
        %v4621 = vunpack.c.l.s4 1983009808
        %v4622 = vunpack.c.0.s8 %v4621
        %v4623 = vlaneseq
        %v4624 = vshrl.u32 %v4623, 7
        %v4625 = vsub.s32 %v4622, %v4624
        %v4626 = vrot.slane %v4612, %v4625
        %v4627 = vcombine.low %v4619, %v4626
        %v4628 = vcombine.low %v4570, %v4571
        %v4629 = vcombine.low %v4572, %v4573
        %v4631 = vunpack.c.l.s4 1983009808
        %v4632 = vunpack.c.0.s8 %v4631
        %v4633 = vlaneseq
        %v4634 = vshrl.u32 %v4633, 7
        %v4635 = vsub.s32 %v4632, %v4634
        %v4636 = vrot.slane %v4628, %v4635
        %v4638 = vunpack.c.l.s4 1983009808
        %v4639 = vunpack.c.0.s8 %v4638
        %v4640 = vlaneseq
        %v4641 = vshrl.u32 %v4640, 7
        %v4642 = vsub.s32 %v4639, %v4641
        %v4643 = vrot.slane %v4629, %v4642
        %v4644 = vcombine.low %v4636, %v4643
        %v4645 = vcombine.low %v4574, %v4575
        %v4646 = vcombine.low %v4576, %v4577
        %v4648 = vunpack.c.l.s4 1983009808
        %v4649 = vunpack.c.0.s8 %v4648
        %v4650 = vlaneseq
        %v4651 = vshrl.u32 %v4650, 7
        %v4652 = vsub.s32 %v4649, %v4651
        %v4653 = vrot.slane %v4645, %v4652
        %v4655 = vunpack.c.l.s4 1983009808
        %v4656 = vunpack.c.0.s8 %v4655
        %v4657 = vlaneseq
        %v4658 = vshrl.u32 %v4657, 7
        %v4659 = vsub.s32 %v4656, %v4658
        %v4660 = vrot.slane %v4646, %v4659
        %v4661 = vcombine.low %v4653, %v4660
        %4662 = vrot.lane.b32.xlu0 %v4610, 64
        %v4663 = vpop.permute.xlu0 %4662
        %4664 = vrot.lane.b32.xlu0 %v4627, 64
        %v4665 = vpop.permute.xlu0 %4664
        %4666 = vrot.lane.b32.xlu0 %v4644, 64
        %v4667 = vpop.permute.xlu0 %4666
        %4668 = vrot.lane.b32.xlu0 %v4661, 64
        %v4669 = vpop.permute.xlu0 %4668
        %4674 = vst.msk [vmem:[#allocation3 + $0x8] sm:$0xff] %vm3671, %v4663
        %4675 = vst.msk [vmem:[#allocation3 + $0x20] sm:$0xff] %vm3671, %v4665
        %4676 = vst.msk [vmem:[#allocation3 + $0x38] sm:$0xff] %vm3671, %v4667
        %4677 = vst.msk [vmem:[#allocation3 + $0x50] sm:$0xff] %vm3671, %v4669
        %v4678 = vld [vmem:[%s4561] sm:$0x7]
        %v4679 = vld [vmem:[%s4561 + $0x4] sm:$0x7]
        %v4680 = vld [vmem:[%s4561 + $0x8] sm:$0x7]
        %v4681 = vld [vmem:[%s4561 + $0xc] sm:$0x7]
        %v4682 = vld [vmem:[%s4561 + $0x18] sm:$0x7]
        %v4683 = vld [vmem:[%s4561 + $0x1c] sm:$0x7]
        %v4684 = vld [vmem:[%s4561 + $0x20] sm:$0x7]
        %v4685 = vld [vmem:[%s4561 + $0x24] sm:$0x7]
        %v4686 = vld [vmem:[%s4561 + $0x30] sm:$0x7]
        %v4687 = vld [vmem:[%s4561 + $0x34] sm:$0x7]
        %v4688 = vld [vmem:[%s4561 + $0x38] sm:$0x7]
        %v4689 = vld [vmem:[%s4561 + $0x3c] sm:$0x7]
        %v4690 = vld [vmem:[%s4561 + $0x48] sm:$0x7]
        %v4691 = vld [vmem:[%s4561 + $0x4c] sm:$0x7]
        %v4692 = vld [vmem:[%s4561 + $0x50] sm:$0x7]
        %v4693 = vld [vmem:[%s4561 + $0x54] sm:$0x7]
        %v4711 = vunpack.c.l.s4 1983009808
        %v4712 = vunpack.c.0.s8 %v4711
        %v4713 = vlaneseq
        %v4714 = vshrl.u32 %v4713, 7
        %v4715 = vsub.s32 %v4712, %v4714
        %v4716 = vrot.slane %v4678, %v4715
        %v4717 = vcombine.high %v4716, %v4716
        %v4719 = vunpack.c.l.s4 1983009808
        %v4720 = vunpack.c.0.s8 %v4719
        %v4721 = vlaneseq
        %v4722 = vshrl.u32 %v4721, 7
        %v4723 = vsub.s32 %v4720, %v4722
        %v4724 = vrot.slane %v4679, %v4723
        %v4725 = vcombine.high %v4724, %v4724
        %v4727 = vunpack.c.l.s4 1983009808
        %v4728 = vunpack.c.0.s8 %v4727
        %v4729 = vlaneseq
        %v4730 = vshrl.u32 %v4729, 7
        %v4731 = vsub.s32 %v4728, %v4730
        %v4732 = vrot.slane %v4680, %v4731
        %v4733 = vcombine.high %v4732, %v4732
        %v4735 = vunpack.c.l.s4 1983009808
        %v4736 = vunpack.c.0.s8 %v4735
        %v4737 = vlaneseq
        %v4738 = vshrl.u32 %v4737, 7
        %v4739 = vsub.s32 %v4736, %v4738
        %v4740 = vrot.slane %v4681, %v4739
        %v4741 = vcombine.high %v4740, %v4740
        %v4743 = vunpack.c.l.s4 1983009808
        %v4744 = vunpack.c.0.s8 %v4743
        %v4745 = vlaneseq
        %v4746 = vshrl.u32 %v4745, 7
        %v4747 = vsub.s32 %v4744, %v4746
        %v4748 = vrot.slane %v4682, %v4747
        %v4749 = vcombine.high %v4748, %v4748
        %v4751 = vunpack.c.l.s4 1983009808
        %v4752 = vunpack.c.0.s8 %v4751
        %v4753 = vlaneseq
        %v4754 = vshrl.u32 %v4753, 7
        %v4755 = vsub.s32 %v4752, %v4754
        %v4756 = vrot.slane %v4683, %v4755
        %v4757 = vcombine.high %v4756, %v4756
        %v4759 = vunpack.c.l.s4 1983009808
        %v4760 = vunpack.c.0.s8 %v4759
        %v4761 = vlaneseq
        %v4762 = vshrl.u32 %v4761, 7
        %v4763 = vsub.s32 %v4760, %v4762
        %v4764 = vrot.slane %v4684, %v4763
        %v4765 = vcombine.high %v4764, %v4764
        %v4767 = vunpack.c.l.s4 1983009808
        %v4768 = vunpack.c.0.s8 %v4767
        %v4769 = vlaneseq
        %v4770 = vshrl.u32 %v4769, 7
        %v4771 = vsub.s32 %v4768, %v4770
        %v4772 = vrot.slane %v4685, %v4771
        %v4773 = vcombine.high %v4772, %v4772
        %v4775 = vunpack.c.l.s4 1983009808
        %v4776 = vunpack.c.0.s8 %v4775
        %v4777 = vlaneseq
        %v4778 = vshrl.u32 %v4777, 7
        %v4779 = vsub.s32 %v4776, %v4778
        %v4780 = vrot.slane %v4686, %v4779
        %v4781 = vcombine.high %v4780, %v4780
        %v4783 = vunpack.c.l.s4 1983009808
        %v4784 = vunpack.c.0.s8 %v4783
        %v4785 = vlaneseq
        %v4786 = vshrl.u32 %v4785, 7
        %v4787 = vsub.s32 %v4784, %v4786
        %v4788 = vrot.slane %v4687, %v4787
        %v4789 = vcombine.high %v4788, %v4788
        %v4791 = vunpack.c.l.s4 1983009808
        %v4792 = vunpack.c.0.s8 %v4791
        %v4793 = vlaneseq
        %v4794 = vshrl.u32 %v4793, 7
        %v4795 = vsub.s32 %v4792, %v4794
        %v4796 = vrot.slane %v4688, %v4795
        %v4797 = vcombine.high %v4796, %v4796
        %v4799 = vunpack.c.l.s4 1983009808
        %v4800 = vunpack.c.0.s8 %v4799
        %v4801 = vlaneseq
        %v4802 = vshrl.u32 %v4801, 7
        %v4803 = vsub.s32 %v4800, %v4802
        %v4804 = vrot.slane %v4689, %v4803
        %v4805 = vcombine.high %v4804, %v4804
        %v4807 = vunpack.c.l.s4 1983009808
        %v4808 = vunpack.c.0.s8 %v4807
        %v4809 = vlaneseq
        %v4810 = vshrl.u32 %v4809, 7
        %v4811 = vsub.s32 %v4808, %v4810
        %v4812 = vrot.slane %v4690, %v4811
        %v4813 = vcombine.high %v4812, %v4812
        %v4815 = vunpack.c.l.s4 1983009808
        %v4816 = vunpack.c.0.s8 %v4815
        %v4817 = vlaneseq
        %v4818 = vshrl.u32 %v4817, 7
        %v4819 = vsub.s32 %v4816, %v4818
        %v4820 = vrot.slane %v4691, %v4819
        %v4821 = vcombine.high %v4820, %v4820
        %v4823 = vunpack.c.l.s4 1983009808
        %v4824 = vunpack.c.0.s8 %v4823
        %v4825 = vlaneseq
        %v4826 = vshrl.u32 %v4825, 7
        %v4827 = vsub.s32 %v4824, %v4826
        %v4828 = vrot.slane %v4692, %v4827
        %v4829 = vcombine.high %v4828, %v4828
        %v4831 = vunpack.c.l.s4 1983009808
        %v4832 = vunpack.c.0.s8 %v4831
        %v4833 = vlaneseq
        %v4834 = vshrl.u32 %v4833, 7
        %v4835 = vsub.s32 %v4832, %v4834
        %v4836 = vrot.slane %v4693, %v4835
        %v4837 = vcombine.high %v4836, %v4836
        %v4839 = vshrl.u32 %v4716, 16
        %v4841 = vrot.slane %v4839, 6
        %v4842 = vshll.u32 %v4716, 16
        %v4844 = vrot.slane %v4842, 7
        %v4845 = vor.u32 %v4841, %v4844
        %v4846 = vrot.slane %v4845, 2
        %v4848 = vshll.u32 %v4717, 16
        %v4850 = vrot.slane %v4848, 7
        %v4851 = vsel %vm3050, %v4846, %v4850
        %v4853 = vshrl.u32 %v4724, 16
        %v4855 = vrot.slane %v4853, 6
        %v4856 = vshll.u32 %v4724, 16
        %v4858 = vrot.slane %v4856, 7
        %v4859 = vor.u32 %v4855, %v4858
        %v4860 = vrot.slane %v4859, 2
        %v4862 = vshll.u32 %v4725, 16
        %v4864 = vrot.slane %v4862, 7
        %v4865 = vsel %vm3050, %v4860, %v4864
        %v4867 = vshrl.u32 %v4732, 16
        %v4869 = vrot.slane %v4867, 6
        %v4870 = vshll.u32 %v4732, 16
        %v4872 = vrot.slane %v4870, 7
        %v4873 = vor.u32 %v4869, %v4872
        %v4874 = vrot.slane %v4873, 2
        %v4876 = vshll.u32 %v4733, 16
        %v4878 = vrot.slane %v4876, 7
        %v4879 = vsel %vm3050, %v4874, %v4878
        %v4881 = vshrl.u32 %v4740, 16
        %v4883 = vrot.slane %v4881, 6
        %v4884 = vshll.u32 %v4740, 16
        %v4886 = vrot.slane %v4884, 7
        %v4887 = vor.u32 %v4883, %v4886
        %v4888 = vrot.slane %v4887, 2
        %v4890 = vshll.u32 %v4741, 16
        %v4892 = vrot.slane %v4890, 7
        %v4893 = vsel %vm3050, %v4888, %v4892
        %v4895 = vshrl.u32 %v4748, 16
        %v4897 = vrot.slane %v4895, 6
        %v4898 = vshll.u32 %v4748, 16
        %v4900 = vrot.slane %v4898, 7
        %v4901 = vor.u32 %v4897, %v4900
        %v4902 = vrot.slane %v4901, 2
        %v4904 = vshll.u32 %v4749, 16
        %v4906 = vrot.slane %v4904, 7
        %v4907 = vsel %vm3050, %v4902, %v4906
        %v4909 = vshrl.u32 %v4756, 16
        %v4911 = vrot.slane %v4909, 6
        %v4912 = vshll.u32 %v4756, 16
        %v4914 = vrot.slane %v4912, 7
        %v4915 = vor.u32 %v4911, %v4914
        %v4916 = vrot.slane %v4915, 2
        %v4918 = vshll.u32 %v4757, 16
        %v4920 = vrot.slane %v4918, 7
        %v4921 = vsel %vm3050, %v4916, %v4920
        %v4923 = vshrl.u32 %v4764, 16
        %v4925 = vrot.slane %v4923, 6
        %v4926 = vshll.u32 %v4764, 16
        %v4928 = vrot.slane %v4926, 7
        %v4929 = vor.u32 %v4925, %v4928
        %v4930 = vrot.slane %v4929, 2
        %v4932 = vshll.u32 %v4765, 16
        %v4934 = vrot.slane %v4932, 7
        %v4935 = vsel %vm3050, %v4930, %v4934
        %v4937 = vshrl.u32 %v4772, 16
        %v4939 = vrot.slane %v4937, 6
        %v4940 = vshll.u32 %v4772, 16
        %v4942 = vrot.slane %v4940, 7
        %v4943 = vor.u32 %v4939, %v4942
        %v4944 = vrot.slane %v4943, 2
        %v4946 = vshll.u32 %v4773, 16
        %v4948 = vrot.slane %v4946, 7
        %v4949 = vsel %vm3050, %v4944, %v4948
        %v4951 = vshrl.u32 %v4780, 16
        %v4953 = vrot.slane %v4951, 6
        %v4954 = vshll.u32 %v4780, 16
        %v4956 = vrot.slane %v4954, 7
        %v4957 = vor.u32 %v4953, %v4956
        %v4958 = vrot.slane %v4957, 2
        %v4960 = vshll.u32 %v4781, 16
        %v4962 = vrot.slane %v4960, 7
        %v4963 = vsel %vm3050, %v4958, %v4962
        %v4965 = vshrl.u32 %v4788, 16
        %v4967 = vrot.slane %v4965, 6
        %v4968 = vshll.u32 %v4788, 16
        %v4970 = vrot.slane %v4968, 7
        %v4971 = vor.u32 %v4967, %v4970
        %v4972 = vrot.slane %v4971, 2
        %v4974 = vshll.u32 %v4789, 16
        %v4976 = vrot.slane %v4974, 7
        %v4977 = vsel %vm3050, %v4972, %v4976
        %v4979 = vshrl.u32 %v4796, 16
        %v4981 = vrot.slane %v4979, 6
        %v4982 = vshll.u32 %v4796, 16
        %v4984 = vrot.slane %v4982, 7
        %v4985 = vor.u32 %v4981, %v4984
        %v4986 = vrot.slane %v4985, 2
        %v4988 = vshll.u32 %v4797, 16
        %v4990 = vrot.slane %v4988, 7
        %v4991 = vsel %vm3050, %v4986, %v4990
        %v4993 = vshrl.u32 %v4804, 16
        %v4995 = vrot.slane %v4993, 6
        %v4996 = vshll.u32 %v4804, 16
        %v4998 = vrot.slane %v4996, 7
        %v4999 = vor.u32 %v4995, %v4998
        %v5000 = vrot.slane %v4999, 2
        %v5002 = vshll.u32 %v4805, 16
        %v5004 = vrot.slane %v5002, 7
        %v5005 = vsel %vm3050, %v5000, %v5004
        %v5007 = vshrl.u32 %v4812, 16
        %v5009 = vrot.slane %v5007, 6
        %v5010 = vshll.u32 %v4812, 16
        %v5012 = vrot.slane %v5010, 7
        %v5013 = vor.u32 %v5009, %v5012
        %v5014 = vrot.slane %v5013, 2
        %v5016 = vshll.u32 %v4813, 16
        %v5018 = vrot.slane %v5016, 7
        %v5019 = vsel %vm3050, %v5014, %v5018
        %v5021 = vshrl.u32 %v4820, 16
        %v5023 = vrot.slane %v5021, 6
        %v5024 = vshll.u32 %v4820, 16
        %v5026 = vrot.slane %v5024, 7
        %v5027 = vor.u32 %v5023, %v5026
        %v5028 = vrot.slane %v5027, 2
        %v5030 = vshll.u32 %v4821, 16
        %v5032 = vrot.slane %v5030, 7
        %v5033 = vsel %vm3050, %v5028, %v5032
        %v5035 = vshrl.u32 %v4828, 16
        %v5037 = vrot.slane %v5035, 6
        %v5038 = vshll.u32 %v4828, 16
        %v5040 = vrot.slane %v5038, 7
        %v5041 = vor.u32 %v5037, %v5040
        %v5042 = vrot.slane %v5041, 2
        %v5044 = vshll.u32 %v4829, 16
        %v5046 = vrot.slane %v5044, 7
        %v5047 = vsel %vm3050, %v5042, %v5046
        %v5049 = vshrl.u32 %v4836, 16
        %v5051 = vrot.slane %v5049, 6
        %v5052 = vshll.u32 %v4836, 16
        %v5054 = vrot.slane %v5052, 7
        %v5055 = vor.u32 %v5051, %v5054
        %v5056 = vrot.slane %v5055, 2
        %v5058 = vshll.u32 %v4837, 16
        %v5060 = vrot.slane %v5058, 7
        %v5061 = vsel %vm3050, %v5056, %v5060
        %v5062 = vcombine.low %v4851, %v4865
        %v5063 = vcombine.low %v4879, %v4893
        %v5065 = vunpack.c.l.s4 1983009808
        %v5066 = vunpack.c.0.s8 %v5065
        %v5067 = vlaneseq
        %v5068 = vshrl.u32 %v5067, 7
        %v5069 = vsub.s32 %v5066, %v5068
        %v5070 = vrot.slane %v5062, %v5069
        %v5072 = vunpack.c.l.s4 1983009808
        %v5073 = vunpack.c.0.s8 %v5072
        %v5074 = vlaneseq
        %v5075 = vshrl.u32 %v5074, 7
        %v5076 = vsub.s32 %v5073, %v5075
        %v5077 = vrot.slane %v5063, %v5076
        %v5078 = vcombine.low %v5070, %v5077
        %v5079 = vcombine.low %v4907, %v4921
        %v5080 = vcombine.low %v4935, %v4949
        %v5082 = vunpack.c.l.s4 1983009808
        %v5083 = vunpack.c.0.s8 %v5082
        %v5084 = vlaneseq
        %v5085 = vshrl.u32 %v5084, 7
        %v5086 = vsub.s32 %v5083, %v5085
        %v5087 = vrot.slane %v5079, %v5086
        %v5089 = vunpack.c.l.s4 1983009808
        %v5090 = vunpack.c.0.s8 %v5089
        %v5091 = vlaneseq
        %v5092 = vshrl.u32 %v5091, 7
        %v5093 = vsub.s32 %v5090, %v5092
        %v5094 = vrot.slane %v5080, %v5093
        %v5095 = vcombine.low %v5087, %v5094
        %v5096 = vcombine.low %v4963, %v4977
        %v5097 = vcombine.low %v4991, %v5005
        %v5099 = vunpack.c.l.s4 1983009808
        %v5100 = vunpack.c.0.s8 %v5099
        %v5101 = vlaneseq
        %v5102 = vshrl.u32 %v5101, 7
        %v5103 = vsub.s32 %v5100, %v5102
        %v5104 = vrot.slane %v5096, %v5103
        %v5106 = vunpack.c.l.s4 1983009808
        %v5107 = vunpack.c.0.s8 %v5106
        %v5108 = vlaneseq
        %v5109 = vshrl.u32 %v5108, 7
        %v5110 = vsub.s32 %v5107, %v5109
        %v5111 = vrot.slane %v5097, %v5110
        %v5112 = vcombine.low %v5104, %v5111
        %v5113 = vcombine.low %v5019, %v5033
        %v5114 = vcombine.low %v5047, %v5061
        %v5116 = vunpack.c.l.s4 1983009808
        %v5117 = vunpack.c.0.s8 %v5116
        %v5118 = vlaneseq
        %v5119 = vshrl.u32 %v5118, 7
        %v5120 = vsub.s32 %v5117, %v5119
        %v5121 = vrot.slane %v5113, %v5120
        %v5123 = vunpack.c.l.s4 1983009808
        %v5124 = vunpack.c.0.s8 %v5123
        %v5125 = vlaneseq
        %v5126 = vshrl.u32 %v5125, 7
        %v5127 = vsub.s32 %v5124, %v5126
        %v5128 = vrot.slane %v5114, %v5127
        %v5129 = vcombine.low %v5121, %v5128
        %5130 = vrot.lane.b32.xlu0 %v5078, 96
        %v5131 = vpop.permute.xlu0 %5130
        %5132 = vrot.lane.b32.xlu0 %v5095, 96
        %v5133 = vpop.permute.xlu0 %5132
        %5134 = vrot.lane.b32.xlu0 %v5112, 96
        %v5135 = vpop.permute.xlu0 %5134
        %5136 = vrot.lane.b32.xlu0 %v5129, 96
        %v5137 = vpop.permute.xlu0 %5136
        %5142 = vst.msk [vmem:[#allocation3 + $0x8] sm:$0xff] %vm3788, %v5131
        %5143 = vst.msk [vmem:[#allocation3 + $0x20] sm:$0xff] %vm3788, %v5133
        %5144 = vst.msk [vmem:[#allocation3 + $0x38] sm:$0xff] %vm3788, %v5135
        %5145 = vst.msk [vmem:[#allocation3 + $0x50] sm:$0xff] %vm3788, %v5137
        %v5146 = vld [vmem:[%s4561] sm:$0x6]
        %v5147 = vld [vmem:[%s4561 + $0x4] sm:$0x6]
        %v5148 = vld [vmem:[%s4561 + $0x8] sm:$0x6]
        %v5149 = vld [vmem:[%s4561 + $0xc] sm:$0x6]
        %v5150 = vld [vmem:[%s4561 + $0x18] sm:$0x6]
        %v5151 = vld [vmem:[%s4561 + $0x1c] sm:$0x6]
        %v5152 = vld [vmem:[%s4561 + $0x20] sm:$0x6]
        %v5153 = vld [vmem:[%s4561 + $0x24] sm:$0x6]
        %v5154 = vld [vmem:[%s4561 + $0x30] sm:$0x6]
        %v5155 = vld [vmem:[%s4561 + $0x34] sm:$0x6]
        %v5156 = vld [vmem:[%s4561 + $0x38] sm:$0x6]
        %v5157 = vld [vmem:[%s4561 + $0x3c] sm:$0x6]
        %v5158 = vld [vmem:[%s4561 + $0x48] sm:$0x6]
        %v5159 = vld [vmem:[%s4561 + $0x4c] sm:$0x6]
        %v5160 = vld [vmem:[%s4561 + $0x50] sm:$0x6]
        %v5161 = vld [vmem:[%s4561 + $0x54] sm:$0x6]
        %v5179 = vunpack.c.l.s4 1983009808
        %v5180 = vunpack.c.0.s8 %v5179
        %v5181 = vlaneseq
        %v5182 = vshrl.u32 %v5181, 7
        %v5183 = vsub.s32 %v5180, %v5182
        %v5184 = vrot.slane %v5146, %v5183
        %v5185 = vcombine.high %v5184, %v5184
        %v5187 = vunpack.c.l.s4 1983009808
        %v5188 = vunpack.c.0.s8 %v5187
        %v5189 = vlaneseq
        %v5190 = vshrl.u32 %v5189, 7
        %v5191 = vsub.s32 %v5188, %v5190
        %v5192 = vrot.slane %v5147, %v5191
        %v5193 = vcombine.high %v5192, %v5192
        %v5195 = vunpack.c.l.s4 1983009808
        %v5196 = vunpack.c.0.s8 %v5195
        %v5197 = vlaneseq
        %v5198 = vshrl.u32 %v5197, 7
        %v5199 = vsub.s32 %v5196, %v5198
        %v5200 = vrot.slane %v5148, %v5199
        %v5201 = vcombine.high %v5200, %v5200
        %v5203 = vunpack.c.l.s4 1983009808
        %v5204 = vunpack.c.0.s8 %v5203
        %v5205 = vlaneseq
        %v5206 = vshrl.u32 %v5205, 7
        %v5207 = vsub.s32 %v5204, %v5206
        %v5208 = vrot.slane %v5149, %v5207
        %v5209 = vcombine.high %v5208, %v5208
        %v5211 = vunpack.c.l.s4 1983009808
        %v5212 = vunpack.c.0.s8 %v5211
        %v5213 = vlaneseq
        %v5214 = vshrl.u32 %v5213, 7
        %v5215 = vsub.s32 %v5212, %v5214
        %v5216 = vrot.slane %v5150, %v5215
        %v5217 = vcombine.high %v5216, %v5216
        %v5219 = vunpack.c.l.s4 1983009808
        %v5220 = vunpack.c.0.s8 %v5219
        %v5221 = vlaneseq
        %v5222 = vshrl.u32 %v5221, 7
        %v5223 = vsub.s32 %v5220, %v5222
        %v5224 = vrot.slane %v5151, %v5223
        %v5225 = vcombine.high %v5224, %v5224
        %v5227 = vunpack.c.l.s4 1983009808
        %v5228 = vunpack.c.0.s8 %v5227
        %v5229 = vlaneseq
        %v5230 = vshrl.u32 %v5229, 7
        %v5231 = vsub.s32 %v5228, %v5230
        %v5232 = vrot.slane %v5152, %v5231
        %v5233 = vcombine.high %v5232, %v5232
        %v5235 = vunpack.c.l.s4 1983009808
        %v5236 = vunpack.c.0.s8 %v5235
        %v5237 = vlaneseq
        %v5238 = vshrl.u32 %v5237, 7
        %v5239 = vsub.s32 %v5236, %v5238
        %v5240 = vrot.slane %v5153, %v5239
        %v5241 = vcombine.high %v5240, %v5240
        %v5243 = vunpack.c.l.s4 1983009808
        %v5244 = vunpack.c.0.s8 %v5243
        %v5245 = vlaneseq
        %v5246 = vshrl.u32 %v5245, 7
        %v5247 = vsub.s32 %v5244, %v5246
        %v5248 = vrot.slane %v5154, %v5247
        %v5249 = vcombine.high %v5248, %v5248
        %v5251 = vunpack.c.l.s4 1983009808
        %v5252 = vunpack.c.0.s8 %v5251
        %v5253 = vlaneseq
        %v5254 = vshrl.u32 %v5253, 7
        %v5255 = vsub.s32 %v5252, %v5254
        %v5256 = vrot.slane %v5155, %v5255
        %v5257 = vcombine.high %v5256, %v5256
        %v5259 = vunpack.c.l.s4 1983009808
        %v5260 = vunpack.c.0.s8 %v5259
        %v5261 = vlaneseq
        %v5262 = vshrl.u32 %v5261, 7
        %v5263 = vsub.s32 %v5260, %v5262
        %v5264 = vrot.slane %v5156, %v5263
        %v5265 = vcombine.high %v5264, %v5264
        %v5267 = vunpack.c.l.s4 1983009808
        %v5268 = vunpack.c.0.s8 %v5267
        %v5269 = vlaneseq
        %v5270 = vshrl.u32 %v5269, 7
        %v5271 = vsub.s32 %v5268, %v5270
        %v5272 = vrot.slane %v5157, %v5271
        %v5273 = vcombine.high %v5272, %v5272
        %v5275 = vunpack.c.l.s4 1983009808
        %v5276 = vunpack.c.0.s8 %v5275
        %v5277 = vlaneseq
        %v5278 = vshrl.u32 %v5277, 7
        %v5279 = vsub.s32 %v5276, %v5278
        %v5280 = vrot.slane %v5158, %v5279
        %v5281 = vcombine.high %v5280, %v5280
        %v5283 = vunpack.c.l.s4 1983009808
        %v5284 = vunpack.c.0.s8 %v5283
        %v5285 = vlaneseq
        %v5286 = vshrl.u32 %v5285, 7
        %v5287 = vsub.s32 %v5284, %v5286
        %v5288 = vrot.slane %v5159, %v5287
        %v5289 = vcombine.high %v5288, %v5288
        %v5291 = vunpack.c.l.s4 1983009808
        %v5292 = vunpack.c.0.s8 %v5291
        %v5293 = vlaneseq
        %v5294 = vshrl.u32 %v5293, 7
        %v5295 = vsub.s32 %v5292, %v5294
        %v5296 = vrot.slane %v5160, %v5295
        %v5297 = vcombine.high %v5296, %v5296
        %v5299 = vunpack.c.l.s4 1983009808
        %v5300 = vunpack.c.0.s8 %v5299
        %v5301 = vlaneseq
        %v5302 = vshrl.u32 %v5301, 7
        %v5303 = vsub.s32 %v5300, %v5302
        %v5304 = vrot.slane %v5161, %v5303
        %v5305 = vcombine.high %v5304, %v5304
        %v5306 = vrot.slane %v5184, 7
        %v5307 = vrot.slane %v5306, 2
        %v5308 = vrot.slane %v5185, 7
        %v5309 = vsel %vm3526, %v5307, %v5308
        %v5310 = vrot.slane %v5192, 7
        %v5311 = vrot.slane %v5310, 2
        %v5312 = vrot.slane %v5193, 7
        %v5313 = vsel %vm3526, %v5311, %v5312
        %v5314 = vrot.slane %v5200, 7
        %v5315 = vrot.slane %v5314, 2
        %v5316 = vrot.slane %v5201, 7
        %v5317 = vsel %vm3526, %v5315, %v5316
        %v5318 = vrot.slane %v5208, 7
        %v5319 = vrot.slane %v5318, 2
        %v5320 = vrot.slane %v5209, 7
        %v5321 = vsel %vm3526, %v5319, %v5320
        %v5322 = vrot.slane %v5216, 7
        %v5323 = vrot.slane %v5322, 2
        %v5324 = vrot.slane %v5217, 7
        %v5325 = vsel %vm3526, %v5323, %v5324
        %v5326 = vrot.slane %v5224, 7
        %v5327 = vrot.slane %v5326, 2
        %v5328 = vrot.slane %v5225, 7
        %v5329 = vsel %vm3526, %v5327, %v5328
        %v5330 = vrot.slane %v5232, 7
        %v5331 = vrot.slane %v5330, 2
        %v5332 = vrot.slane %v5233, 7
        %v5333 = vsel %vm3526, %v5331, %v5332
        %v5334 = vrot.slane %v5240, 7
        %v5335 = vrot.slane %v5334, 2
        %v5336 = vrot.slane %v5241, 7
        %v5337 = vsel %vm3526, %v5335, %v5336
        %v5338 = vrot.slane %v5248, 7
        %v5339 = vrot.slane %v5338, 2
        %v5340 = vrot.slane %v5249, 7
        %v5341 = vsel %vm3526, %v5339, %v5340
        %v5342 = vrot.slane %v5256, 7
        %v5343 = vrot.slane %v5342, 2
        %v5344 = vrot.slane %v5257, 7
        %v5345 = vsel %vm3526, %v5343, %v5344
        %v5346 = vrot.slane %v5264, 7
        %v5347 = vrot.slane %v5346, 2
        %v5348 = vrot.slane %v5265, 7
        %v5349 = vsel %vm3526, %v5347, %v5348
        %v5350 = vrot.slane %v5272, 7
        %v5351 = vrot.slane %v5350, 2
        %v5352 = vrot.slane %v5273, 7
        %v5353 = vsel %vm3526, %v5351, %v5352
        %v5354 = vrot.slane %v5280, 7
        %v5355 = vrot.slane %v5354, 2
        %v5356 = vrot.slane %v5281, 7
        %v5357 = vsel %vm3526, %v5355, %v5356
        %v5358 = vrot.slane %v5288, 7
        %v5359 = vrot.slane %v5358, 2
        %v5360 = vrot.slane %v5289, 7
        %v5361 = vsel %vm3526, %v5359, %v5360
        %v5362 = vrot.slane %v5296, 7
        %v5363 = vrot.slane %v5362, 2
        %v5364 = vrot.slane %v5297, 7
        %v5365 = vsel %vm3526, %v5363, %v5364
        %v5366 = vrot.slane %v5304, 7
        %v5367 = vrot.slane %v5366, 2
        %v5368 = vrot.slane %v5305, 7
        %v5369 = vsel %vm3526, %v5367, %v5368
        %v5370 = vcombine.low %v5309, %v5313
        %v5371 = vcombine.low %v5317, %v5321
        %v5373 = vunpack.c.l.s4 1983009808
        %v5374 = vunpack.c.0.s8 %v5373
        %v5375 = vlaneseq
        %v5376 = vshrl.u32 %v5375, 7
        %v5377 = vsub.s32 %v5374, %v5376
        %v5378 = vrot.slane %v5370, %v5377
        %v5380 = vunpack.c.l.s4 1983009808
        %v5381 = vunpack.c.0.s8 %v5380
        %v5382 = vlaneseq
        %v5383 = vshrl.u32 %v5382, 7
        %v5384 = vsub.s32 %v5381, %v5383
        %v5385 = vrot.slane %v5371, %v5384
        %v5386 = vcombine.low %v5378, %v5385
        %v5387 = vcombine.low %v5325, %v5329
        %v5388 = vcombine.low %v5333, %v5337
        %v5390 = vunpack.c.l.s4 1983009808
        %v5391 = vunpack.c.0.s8 %v5390
        %v5392 = vlaneseq
        %v5393 = vshrl.u32 %v5392, 7
        %v5394 = vsub.s32 %v5391, %v5393
        %v5395 = vrot.slane %v5387, %v5394
        %v5397 = vunpack.c.l.s4 1983009808
        %v5398 = vunpack.c.0.s8 %v5397
        %v5399 = vlaneseq
        %v5400 = vshrl.u32 %v5399, 7
        %v5401 = vsub.s32 %v5398, %v5400
        %v5402 = vrot.slane %v5388, %v5401
        %v5403 = vcombine.low %v5395, %v5402
        %v5404 = vcombine.low %v5341, %v5345
        %v5405 = vcombine.low %v5349, %v5353
        %v5407 = vunpack.c.l.s4 1983009808
        %v5408 = vunpack.c.0.s8 %v5407
        %v5409 = vlaneseq
        %v5410 = vshrl.u32 %v5409, 7
        %v5411 = vsub.s32 %v5408, %v5410
        %v5412 = vrot.slane %v5404, %v5411
        %v5414 = vunpack.c.l.s4 1983009808
        %v5415 = vunpack.c.0.s8 %v5414
        %v5416 = vlaneseq
        %v5417 = vshrl.u32 %v5416, 7
        %v5418 = vsub.s32 %v5415, %v5417
        %v5419 = vrot.slane %v5405, %v5418
        %v5420 = vcombine.low %v5412, %v5419
        %v5421 = vcombine.low %v5357, %v5361
        %v5422 = vcombine.low %v5365, %v5369
        %v5424 = vunpack.c.l.s4 1983009808
        %v5425 = vunpack.c.0.s8 %v5424
        %v5426 = vlaneseq
        %v5427 = vshrl.u32 %v5426, 7
        %v5428 = vsub.s32 %v5425, %v5427
        %v5429 = vrot.slane %v5421, %v5428
        %v5431 = vunpack.c.l.s4 1983009808
        %v5432 = vunpack.c.0.s8 %v5431
        %v5433 = vlaneseq
        %v5434 = vshrl.u32 %v5433, 7
        %v5435 = vsub.s32 %v5432, %v5434
        %v5436 = vrot.slane %v5422, %v5435
        %v5437 = vcombine.low %v5429, %v5436
        %5442 = vst.msk [vmem:[#allocation3 + $0x10] sm:$0xff] %vm575, %v5386
        %5443 = vst.msk [vmem:[#allocation3 + $0x28] sm:$0xff] %vm575, %v5403
        %5444 = vst.msk [vmem:[#allocation3 + $0x40] sm:$0xff] %vm575, %v5420
        %5445 = vst.msk [vmem:[#allocation3 + $0x58] sm:$0xff] %vm575, %v5437
        %v5446 = vld [vmem:[#allocation3] sm:$0xff]
        %v5447 = vld [vmem:[#allocation3 + $0x8] sm:$0xff]
        %v5448 = vld [vmem:[#allocation3 + $0x10] sm:$0xff]
        %v5449 = vld [vmem:[#allocation3 + $0x18] sm:$0xff]
        %v5450 = vld [vmem:[#allocation3 + $0x20] sm:$0xff]
        %v5451 = vld [vmem:[#allocation3 + $0x28] sm:$0xff]
        %v5452 = vld [vmem:[#allocation3 + $0x30] sm:$0xff]
        %v5453 = vld [vmem:[#allocation3 + $0x38] sm:$0xff]
        %v5454 = vld [vmem:[#allocation3 + $0x40] sm:$0xff]
        %v5455 = vld [vmem:[#allocation3 + $0x48] sm:$0xff]
        %v5456 = vld [vmem:[#allocation3 + $0x50] sm:$0xff]
        %v5457 = vld [vmem:[#allocation3 + $0x58] sm:$0xff]
        %v5458 = vld [vmem:[%s3] sm:$0xf]
        %v5459 = vld [vmem:[%s3 + $0x4] sm:$0xf]
        %v5460 = vld [vmem:[%s3 + $0x8] sm:$0xf]
        %v5461 = vld [vmem:[%s3 + $0xc] sm:$0xf]
        %v5462 = vld [vmem:[%s3 + $0x10] sm:$0xf]
        %v5463 = vld [vmem:[%s3 + $0x14] sm:$0xf]
        %v5464 = vld [vmem:[%s3 + $0x18] sm:$0xf]
        %v5465 = vld [vmem:[%s3 + $0x1c] sm:$0xf]
        %v5466 = vld [vmem:[%s3 + $0x20] sm:$0xf]
        %v5467 = vld [vmem:[%s3 + $0x24] sm:$0xf]
        %v5468 = vld [vmem:[%s3 + $0x28] sm:$0xf]
        %v5469 = vld [vmem:[%s3 + $0x2c] sm:$0xf]
        %v5470 = vld [vmem:[%s3 + $0x30] sm:$0xf]
        %v5471 = vld [vmem:[%s3 + $0x34] sm:$0xf]
        %v5472 = vld [vmem:[%s3 + $0x38] sm:$0xf]
        %v5473 = vld [vmem:[%s3 + $0x3c] sm:$0xf]
        %v5474 = vld [vmem:[%s3 + $0x40] sm:$0xf]
        %v5475 = vld [vmem:[%s3 + $0x44] sm:$0xf]
        %v5476 = vld [vmem:[%s3 + $0x48] sm:$0xf]
        %v5477 = vld [vmem:[%s3 + $0x4c] sm:$0xf]
        %v5478 = vld [vmem:[%s3 + $0x50] sm:$0xf]
        %v5479 = vld [vmem:[%s3 + $0x54] sm:$0xf]
        %v5480 = vld [vmem:[%s3 + $0x58] sm:$0xf]
        %v5481 = vld [vmem:[%s3 + $0x5c] sm:$0xf]
        %v5482 = vld [vmem:[%s3 + $0x60] sm:$0xf]
        %v5483 = vld [vmem:[%s3 + $0x64] sm:$0xf]
        %v5484 = vld [vmem:[%s3 + $0x68] sm:$0xf]
        %v5485 = vld [vmem:[%s3 + $0x6c] sm:$0xf]
        %v5486 = vld [vmem:[%s3 + $0x70] sm:$0xf]
        %v5487 = vld [vmem:[%s3 + $0x74] sm:$0xf]
        %v5488 = vld [vmem:[%s3 + $0x78] sm:$0xf]
        %v5489 = vld [vmem:[%s3 + $0x7c] sm:$0xf]
        %v5490 = vld [vmem:[%s3 + $0x80] sm:$0xf]
        %v5491 = vld [vmem:[%s3 + $0x84] sm:$0xf]
        %v5492 = vld [vmem:[%s3 + $0x88] sm:$0xf]
        %v5493 = vld [vmem:[%s3 + $0x8c] sm:$0xf]
        %v5494 = vld [vmem:[%s4] sm:$0x1]
        %v5496 = vlaneseq
        %v5497 = vshrl.u32 %v5496, 7
        %v5498 = vsub.s32 0, %v5497
        %v5499 = vrot.slane %v5494, %v5498
        %v5537 = vunpack.c.l.b16 %v5458
        %v5538 = vunpack.c.l.b16 %v5459
        %v5539 = vunpack.c.l.b16 %v5460
        %v5540 = vunpack.c.l.b16 %v5461
        %v5541 = vunpack.c.l.b16 %v5462
        %v5542 = vunpack.c.l.b16 %v5463
        %v5543 = vunpack.c.l.b16 %v5464
        %v5544 = vunpack.c.l.b16 %v5465
        %v5545 = vunpack.c.l.b16 %v5466
        %v5546 = vunpack.c.l.b16 %v5467
        %v5547 = vunpack.c.l.b16 %v5468
        %v5548 = vunpack.c.l.b16 %v5469
        %v5549 = vunpack.c.l.b16 %v5470
        %v5550 = vunpack.c.l.b16 %v5471
        %v5551 = vunpack.c.l.b16 %v5472
        %v5552 = vunpack.c.l.b16 %v5473
        %v5553 = vunpack.c.l.b16 %v5474
        %v5554 = vunpack.c.l.b16 %v5475
        %v5555 = vunpack.c.l.b16 %v5476
        %v5556 = vunpack.c.l.b16 %v5477
        %v5557 = vunpack.c.l.b16 %v5478
        %v5558 = vunpack.c.l.b16 %v5479
        %v5559 = vunpack.c.l.b16 %v5480
        %v5560 = vunpack.c.l.b16 %v5481
        %v5561 = vunpack.c.l.b16 %v5482
        %v5562 = vunpack.c.l.b16 %v5483
        %v5563 = vunpack.c.l.b16 %v5484
        %v5564 = vunpack.c.l.b16 %v5485
        %v5565 = vunpack.c.l.b16 %v5486
        %v5566 = vunpack.c.l.b16 %v5487
        %v5567 = vunpack.c.l.b16 %v5488
        %v5568 = vunpack.c.l.b16 %v5489
        %v5569 = vunpack.c.l.b16 %v5490
        %v5570 = vunpack.c.l.b16 %v5491
        %v5571 = vunpack.c.l.b16 %v5492
        %v5572 = vunpack.c.l.b16 %v5493
        %v5573 = vpack.c.b16 %v5538, %v5537
        %v5574 = vpack.c.b16 %v5540, %v5539
        %v5575 = vpack.c.b16 %v5542, %v5541
        %v5576 = vpack.c.b16 %v5544, %v5543
        %v5577 = vpack.c.b16 %v5546, %v5545
        %v5578 = vpack.c.b16 %v5548, %v5547
        %v5579 = vpack.c.b16 %v5550, %v5549
        %v5580 = vpack.c.b16 %v5552, %v5551
        %v5581 = vpack.c.b16 %v5554, %v5553
        %v5582 = vpack.c.b16 %v5556, %v5555
        %v5583 = vpack.c.b16 %v5558, %v5557
        %v5584 = vpack.c.b16 %v5560, %v5559
        %v5585 = vpack.c.b16 %v5562, %v5561
        %v5586 = vpack.c.b16 %v5564, %v5563
        %v5587 = vpack.c.b16 %v5566, %v5565
        %v5588 = vpack.c.b16 %v5568, %v5567
        %v5589 = vpack.c.b16 %v5570, %v5569
        %v5590 = vpack.c.b16 %v5572, %v5571
        %v5610 = vsel %vm575, %v5448, 0
        %v5613 = vsel %vm575, %v5451, 0
        %v5616 = vsel %vm575, %v5454, 0
        %v5619 = vsel %vm575, %v5457, 0
        %5621 = vmatprep.subr.bf16.mxu0 0
        %5622 = vmatpush1.bf16.msra.mxu0 %v5573
        %5623 = vmatprep.subr.bf16.mxu0 0
        %5624 = vmatpush1.bf16.msra.mxu0 %v5574
        %5625 = vmatprep.subr.bf16.mxu0 0
        %5626 = vmatpush1.bf16.msra.mxu0 %v5575
        %5627 = vmatprep.subr.bf16.mxu0 0
        %5628 = vmatpush1.bf16.msra.mxu0 %v5576
        %5629 = vmatprep.subr.bf16.mxu0 0
        %5630 = vmatpush1.bf16.msra.mxu0 %v5577
        %5631 = vmatprep.subr.bf16.mxu0 0
        %5632 = vmatpush1.bf16.msra.mxu0 %v5578
        %5633 = vmatprep.subr.bf16.mxu0 0
        %5634 = vmatpush1.bf16.msra.mxu0 %v5579
        %5635 = vmatprep.subr.bf16.mxu0 0
        %5636 = vmatpush1.bf16.msra.mxu0 %v5580
        %5637 = vmatprep.subr.bf16.mxu0 0
        %5638 = vmatpush1.bf16.msra.mxu0 %v5581
        %5639 = vmatprep.subr.bf16.mxu0 0
        %5640 = vmatpush1.bf16.msra.mxu0 %v5582
        %5641 = vmatprep.subr.bf16.mxu0 0
        %5642 = vmatpush1.bf16.msra.mxu0 %v5583
        %5643 = vmatprep.subr.bf16.mxu0 0
        %5644 = vmatpush1.bf16.msra.mxu0 %v5584
        %5645 = vmatprep.subr.bf16.mxu0 0
        %5646 = vmatpush1.bf16.msra.mxu0 %v5585
        %5647 = vmatprep.subr.bf16.mxu0 0
        %5648 = vmatpush1.bf16.msra.mxu0 %v5586
        %5649 = vmatprep.subr.bf16.mxu0 0
        %5650 = vmatpush1.bf16.msra.mxu0 %v5587
        %5651 = vmatprep.subr.bf16.mxu0 0
        %5652 = vmatpush1.bf16.msra.mxu0 %v5588
        %5653 = vmatprep.mubr.bf16.mxu0 %v5447
        %5654 = vmatmul.mubr.bf16.gmra.mrb[0].mxu0 %v5446
        %v5655 = vpop.f32.mrb[0].mxu0
        %v5656 = vadd.f32 %v5499, %v5655
        %v5657 = vpop.f32.mrb[0].mxu0
        %v5658 = vpop.f32.mrb[0].mxu0
        %v5659 = vadd.f32 %v5499, %v5658
        %v5660 = vpop.f32.mrb[0].mxu0
        %5661 = vmatprep.mubr.bf16.mxu0 %v5450
        %5662 = vmatmul.mubr.bf16.gmra.mrb[0].mxu0 %v5449
        %v5663 = vpop.f32.mrb[0].mxu0
        %v5664 = vadd.f32 %v5499, %v5663
        %v5665 = vpop.f32.mrb[0].mxu0
        %v5666 = vpop.f32.mrb[0].mxu0
        %v5667 = vadd.f32 %v5499, %v5666
        %v5668 = vpop.f32.mrb[0].mxu0
        %5669 = vmatprep.mubr.bf16.mxu0 %v5453
        %5670 = vmatmul.mubr.bf16.gmra.mrb[0].mxu0 %v5452
        %v5671 = vpop.f32.mrb[0].mxu0
        %v5672 = vadd.f32 %v5499, %v5671
        %v5673 = vpop.f32.mrb[0].mxu0
        %v5674 = vpop.f32.mrb[0].mxu0
        %v5675 = vadd.f32 %v5499, %v5674
        %v5676 = vpop.f32.mrb[0].mxu0
        %5677 = vmatprep.mubr.bf16.mxu0 %v5456
        %5678 = vmatmul.mubr.bf16.gmra.mrb[0].mxu0 %v5455
        %v5679 = vpop.f32.mrb[0].mxu0
        %v5680 = vadd.f32 %v5499, %v5679
        %v5681 = vpop.f32.mrb[0].mxu0
        %v5682 = vpop.f32.mrb[0].mxu0
        %v5683 = vadd.f32 %v5499, %v5682
        %v5684 = vpop.f32.mrb[0].mxu0
        %5685 = vdwg.mxu0
        %5686 = vmatprep.subr.bf16.mxu0 0
        %5687 = vmatpush1.bf16.msra.mxu0 %v5589
        %5688 = vmatprep.subr.bf16.mxu0 0
        %5689 = vmatpush1.bf16.msra.mxu0 %v5590
        %5690 = vmatprep.subr.bf16.mxu0 0
        %5691 = vmatpush1.bf16.msra.mxu0 0
        %5692 = vmatprep.subr.bf16.mxu0 0
        %5693 = vmatpush1.bf16.msra.mxu0 0
        %5694 = vmatprep.subr.bf16.mxu0 0
        %5695 = vmatpush1.bf16.msra.mxu0 0
        %5696 = vmatprep.subr.bf16.mxu0 0
        %5697 = vmatpush1.bf16.msra.mxu0 0
        %5698 = vmatprep.subr.bf16.mxu0 0
        %5699 = vmatpush1.bf16.msra.mxu0 0
        %5700 = vmatprep.subr.bf16.mxu0 0
        %5701 = vmatpush1.bf16.msra.mxu0 0
        %5702 = vmatprep.subr.bf16.mxu0 0
        %5703 = vmatpush1.bf16.msra.mxu0 0
        %5704 = vmatprep.subr.bf16.mxu0 0
        %5705 = vmatpush1.bf16.msra.mxu0 0
        %5706 = vmatprep.subr.bf16.mxu0 0
        %5707 = vmatpush1.bf16.msra.mxu0 0
        %5708 = vmatprep.subr.bf16.mxu0 0
        %5709 = vmatpush1.bf16.msra.mxu0 0
        %5710 = vmatprep.subr.bf16.mxu0 0
        %5711 = vmatpush1.bf16.msra.mxu0 0
        %5712 = vmatprep.subr.bf16.mxu0 0
        %5713 = vmatpush1.bf16.msra.mxu0 0
        %5714 = vmatprep.subr.bf16.mxu0 0
        %5715 = vmatpush1.bf16.msra.mxu0 0
        %5716 = vmatprep.subr.bf16.mxu0 0
        %5717 = vmatpush1.bf16.msra.mxu0 0
        %5718 = vmatprep.mubr.bf16.mxu0 0
        %5719 = vmatmul.mubr.bf16.gmra.mrb[0].mxu0 %v5610
        %v5720 = vpop.f32.mrb[0].mxu0
        %v5721 = vadd.f32 %v5656, %v5720
        %v5722 = vpop.f32.mrb[0].mxu0
        %v5723 = vpop.f32.mrb[0].mxu0
        %v5724 = vadd.f32 %v5659, %v5723
        %v5725 = vpop.f32.mrb[0].mxu0
        %5726 = vmatprep.mubr.bf16.mxu0 0
        %5727 = vmatmul.mubr.bf16.gmra.mrb[0].mxu0 %v5613
        %v5728 = vpop.f32.mrb[0].mxu0
        %v5729 = vadd.f32 %v5664, %v5728
        %v5730 = vpop.f32.mrb[0].mxu0
        %v5731 = vpop.f32.mrb[0].mxu0
        %v5732 = vadd.f32 %v5667, %v5731
        %v5733 = vpop.f32.mrb[0].mxu0
        %5734 = vmatprep.mubr.bf16.mxu0 0
        %5735 = vmatmul.mubr.bf16.gmra.mrb[0].mxu0 %v5616
        %v5736 = vpop.f32.mrb[0].mxu0
        %v5737 = vadd.f32 %v5672, %v5736
        %v5738 = vpop.f32.mrb[0].mxu0
        %v5739 = vpop.f32.mrb[0].mxu0
        %v5740 = vadd.f32 %v5675, %v5739
        %v5741 = vpop.f32.mrb[0].mxu0
        %5742 = vmatprep.mubr.bf16.mxu0 0
        %5743 = vmatmul.mubr.bf16.gmra.mrb[0].mxu0 %v5619
        %v5744 = vpop.f32.mrb[0].mxu0
        %v5745 = vadd.f32 %v5680, %v5744
        %v5746 = vpop.f32.mrb[0].mxu0
        %v5747 = vpop.f32.mrb[0].mxu0
        %v5748 = vadd.f32 %v5683, %v5747
        %v5749 = vpop.f32.mrb[0].mxu0
        %5750 = vdwg.mxu0
        %v5751 = vmax.f32 %v5721, 0.0
        %v5752 = vmax.f32 %v5724, 0.0
        %v5753 = vmax.f32 %v5729, 0.0
        %v5754 = vmax.f32 %v5732, 0.0
        %v5755 = vmax.f32 %v5737, 0.0
        %v5756 = vmax.f32 %v5740, 0.0
        %v5757 = vmax.f32 %v5745, 0.0
        %v5758 = vmax.f32 %v5748, 0.0
        %v5767 = vcombine.high %v5751, %v5751
        %v5769 = vunpack.c.l.s4 1983009808
        %v5770 = vunpack.c.0.s8 %v5769
        %v5771 = vlaneseq
        %v5772 = vshrl.u32 %v5771, 7
        %v5773 = vsub.s32 %v5770, %v5772
        %v5774 = vrot.slane %v5751, %v5773
        %v5776 = vunpack.c.l.s4 1983009808
        %v5777 = vunpack.c.0.s8 %v5776
        %v5778 = vlaneseq
        %v5779 = vshrl.u32 %v5778, 7
        %v5780 = vsub.s32 %v5777, %v5779
        %v5781 = vrot.slane %v5767, %v5780
        %v5782 = vcombine.high %v5774, %v5774
        %v5783 = vcombine.high %v5781, %v5781
        %v5784 = vcombine.high %v5752, %v5752
        %v5786 = vunpack.c.l.s4 1983009808
        %v5787 = vunpack.c.0.s8 %v5786
        %v5788 = vlaneseq
        %v5789 = vshrl.u32 %v5788, 7
        %v5790 = vsub.s32 %v5787, %v5789
        %v5791 = vrot.slane %v5752, %v5790
        %v5793 = vunpack.c.l.s4 1983009808
        %v5794 = vunpack.c.0.s8 %v5793
        %v5795 = vlaneseq
        %v5796 = vshrl.u32 %v5795, 7
        %v5797 = vsub.s32 %v5794, %v5796
        %v5798 = vrot.slane %v5784, %v5797
        %v5799 = vcombine.high %v5791, %v5791
        %v5800 = vcombine.high %v5798, %v5798
        %v5801 = vcombine.high %v5753, %v5753
        %v5803 = vunpack.c.l.s4 1983009808
        %v5804 = vunpack.c.0.s8 %v5803
        %v5805 = vlaneseq
        %v5806 = vshrl.u32 %v5805, 7
        %v5807 = vsub.s32 %v5804, %v5806
        %v5808 = vrot.slane %v5753, %v5807
        %v5810 = vunpack.c.l.s4 1983009808
        %v5811 = vunpack.c.0.s8 %v5810
        %v5812 = vlaneseq
        %v5813 = vshrl.u32 %v5812, 7
        %v5814 = vsub.s32 %v5811, %v5813
        %v5815 = vrot.slane %v5801, %v5814
        %v5816 = vcombine.high %v5808, %v5808
        %v5817 = vcombine.high %v5815, %v5815
        %v5818 = vcombine.high %v5754, %v5754
        %v5820 = vunpack.c.l.s4 1983009808
        %v5821 = vunpack.c.0.s8 %v5820
        %v5822 = vlaneseq
        %v5823 = vshrl.u32 %v5822, 7
        %v5824 = vsub.s32 %v5821, %v5823
        %v5825 = vrot.slane %v5754, %v5824
        %v5827 = vunpack.c.l.s4 1983009808
        %v5828 = vunpack.c.0.s8 %v5827
        %v5829 = vlaneseq
        %v5830 = vshrl.u32 %v5829, 7
        %v5831 = vsub.s32 %v5828, %v5830
        %v5832 = vrot.slane %v5818, %v5831
        %v5833 = vcombine.high %v5825, %v5825
        %v5834 = vcombine.high %v5832, %v5832
        %v5835 = vcombine.high %v5755, %v5755
        %v5837 = vunpack.c.l.s4 1983009808
        %v5838 = vunpack.c.0.s8 %v5837
        %v5839 = vlaneseq
        %v5840 = vshrl.u32 %v5839, 7
        %v5841 = vsub.s32 %v5838, %v5840
        %v5842 = vrot.slane %v5755, %v5841
        %v5844 = vunpack.c.l.s4 1983009808
        %v5845 = vunpack.c.0.s8 %v5844
        %v5846 = vlaneseq
        %v5847 = vshrl.u32 %v5846, 7
        %v5848 = vsub.s32 %v5845, %v5847
        %v5849 = vrot.slane %v5835, %v5848
        %v5850 = vcombine.high %v5842, %v5842
        %v5851 = vcombine.high %v5849, %v5849
        %v5852 = vcombine.high %v5756, %v5756
        %v5854 = vunpack.c.l.s4 1983009808
        %v5855 = vunpack.c.0.s8 %v5854
        %v5856 = vlaneseq
        %v5857 = vshrl.u32 %v5856, 7
        %v5858 = vsub.s32 %v5855, %v5857
        %v5859 = vrot.slane %v5756, %v5858
        %v5861 = vunpack.c.l.s4 1983009808
        %v5862 = vunpack.c.0.s8 %v5861
        %v5863 = vlaneseq
        %v5864 = vshrl.u32 %v5863, 7
        %v5865 = vsub.s32 %v5862, %v5864
        %v5866 = vrot.slane %v5852, %v5865
        %v5867 = vcombine.high %v5859, %v5859
        %v5868 = vcombine.high %v5866, %v5866
        %v5869 = vcombine.high %v5757, %v5757
        %v5871 = vunpack.c.l.s4 1983009808
        %v5872 = vunpack.c.0.s8 %v5871
        %v5873 = vlaneseq
        %v5874 = vshrl.u32 %v5873, 7
        %v5875 = vsub.s32 %v5872, %v5874
        %v5876 = vrot.slane %v5757, %v5875
        %v5878 = vunpack.c.l.s4 1983009808
        %v5879 = vunpack.c.0.s8 %v5878
        %v5880 = vlaneseq
        %v5881 = vshrl.u32 %v5880, 7
        %v5882 = vsub.s32 %v5879, %v5881
        %v5883 = vrot.slane %v5869, %v5882
        %v5884 = vcombine.high %v5876, %v5876
        %v5885 = vcombine.high %v5883, %v5883
        %v5886 = vcombine.high %v5758, %v5758
        %v5888 = vunpack.c.l.s4 1983009808
        %v5889 = vunpack.c.0.s8 %v5888
        %v5890 = vlaneseq
        %v5891 = vshrl.u32 %v5890, 7
        %v5892 = vsub.s32 %v5889, %v5891
        %v5893 = vrot.slane %v5758, %v5892
        %v5895 = vunpack.c.l.s4 1983009808
        %v5896 = vunpack.c.0.s8 %v5895
        %v5897 = vlaneseq
        %v5898 = vshrl.u32 %v5897, 7
        %v5899 = vsub.s32 %v5896, %v5898
        %v5900 = vrot.slane %v5886, %v5899
        %v5901 = vcombine.high %v5893, %v5893
        %v5902 = vcombine.high %v5900, %v5900
        %v5935 = vrot.slane %v5774, 7
        %v5936 = vrot.slane %v5935, 2
        %v5937 = vrot.slane %v5782, 7
        %v5938 = vrot.slane %v5937, 2
        %v5939 = vrot.slane %v5781, 7
        %v5940 = vrot.slane %v5939, 2
        %v5941 = vrot.slane %v5783, 7
        %v5942 = vrot.slane %v5941, 2
        %v5943 = vrot.slane %v5791, 7
        %v5944 = vrot.slane %v5943, 2
        %v5945 = vrot.slane %v5799, 7
        %v5946 = vrot.slane %v5945, 2
        %v5947 = vrot.slane %v5798, 7
        %v5948 = vrot.slane %v5947, 2
        %v5949 = vrot.slane %v5800, 7
        %v5950 = vrot.slane %v5949, 2
        %v5951 = vrot.slane %v5808, 7
        %v5952 = vrot.slane %v5951, 2
        %v5953 = vrot.slane %v5816, 7
        %v5954 = vrot.slane %v5953, 2
        %v5955 = vrot.slane %v5815, 7
        %v5956 = vrot.slane %v5955, 2
        %v5957 = vrot.slane %v5817, 7
        %v5958 = vrot.slane %v5957, 2
        %v5959 = vrot.slane %v5825, 7
        %v5960 = vrot.slane %v5959, 2
        %v5961 = vrot.slane %v5833, 7
        %v5962 = vrot.slane %v5961, 2
        %v5963 = vrot.slane %v5832, 7
        %v5964 = vrot.slane %v5963, 2
        %v5965 = vrot.slane %v5834, 7
        %v5966 = vrot.slane %v5965, 2
        %v5967 = vrot.slane %v5842, 7
        %v5968 = vrot.slane %v5967, 2
        %v5969 = vrot.slane %v5850, 7
        %v5970 = vrot.slane %v5969, 2
        %v5971 = vrot.slane %v5849, 7
        %v5972 = vrot.slane %v5971, 2
        %v5973 = vrot.slane %v5851, 7
        %v5974 = vrot.slane %v5973, 2
        %v5975 = vrot.slane %v5859, 7
        %v5976 = vrot.slane %v5975, 2
        %v5977 = vrot.slane %v5867, 7
        %v5978 = vrot.slane %v5977, 2
        %v5979 = vrot.slane %v5866, 7
        %v5980 = vrot.slane %v5979, 2
        %v5981 = vrot.slane %v5868, 7
        %v5982 = vrot.slane %v5981, 2
        %v5983 = vrot.slane %v5876, 7
        %v5984 = vrot.slane %v5983, 2
        %v5985 = vrot.slane %v5884, 7
        %v5986 = vrot.slane %v5985, 2
        %v5987 = vrot.slane %v5883, 7
        %v5988 = vrot.slane %v5987, 2
        %v5989 = vrot.slane %v5885, 7
        %v5990 = vrot.slane %v5989, 2
        %v5991 = vrot.slane %v5893, 7
        %v5992 = vrot.slane %v5991, 2
        %v5993 = vrot.slane %v5901, 7
        %v5994 = vrot.slane %v5993, 2
        %v5995 = vrot.slane %v5900, 7
        %v5996 = vrot.slane %v5995, 2
        %v5997 = vrot.slane %v5902, 7
        %v5998 = vrot.slane %v5997, 2
        %v6031 = vmax.f32 %v5774, %v5936
        %v6032 = vmax.f32 %v5782, %v5938
        %v6033 = vmax.f32 %v5781, %v5940
        %v6034 = vmax.f32 %v5783, %v5942
        %v6035 = vmax.f32 %v5791, %v5944
        %v6036 = vmax.f32 %v5799, %v5946
        %v6037 = vmax.f32 %v5798, %v5948
        %v6038 = vmax.f32 %v5800, %v5950
        %v6039 = vmax.f32 %v5808, %v5952
        %v6040 = vmax.f32 %v5816, %v5954
        %v6041 = vmax.f32 %v5815, %v5956
        %v6042 = vmax.f32 %v5817, %v5958
        %v6043 = vmax.f32 %v5825, %v5960
        %v6044 = vmax.f32 %v5833, %v5962
        %v6045 = vmax.f32 %v5832, %v5964
        %v6046 = vmax.f32 %v5834, %v5966
        %v6047 = vmax.f32 %v5842, %v5968
        %v6048 = vmax.f32 %v5850, %v5970
        %v6049 = vmax.f32 %v5849, %v5972
        %v6050 = vmax.f32 %v5851, %v5974
        %v6051 = vmax.f32 %v5859, %v5976
        %v6052 = vmax.f32 %v5867, %v5978
        %v6053 = vmax.f32 %v5866, %v5980
        %v6054 = vmax.f32 %v5868, %v5982
        %v6055 = vmax.f32 %v5876, %v5984
        %v6056 = vmax.f32 %v5884, %v5986
        %v6057 = vmax.f32 %v5883, %v5988
        %v6058 = vmax.f32 %v5885, %v5990
        %v6059 = vmax.f32 %v5893, %v5992
        %v6060 = vmax.f32 %v5901, %v5994
        %v6061 = vmax.f32 %v5900, %v5996
        %v6062 = vmax.f32 %v5902, %v5998
        %v6063 = vmax.f32 %v6031, %v6033
        %v6064 = vmax.f32 %v6032, %v6034
        %v6065 = vmax.f32 %v6035, %v6037
        %v6066 = vmax.f32 %v6036, %v6038
        %v6067 = vmax.f32 %v6039, %v6041
        %v6068 = vmax.f32 %v6040, %v6042
        %v6069 = vmax.f32 %v6043, %v6045
        %v6070 = vmax.f32 %v6044, %v6046
        %v6071 = vmax.f32 %v6047, %v6049
        %v6072 = vmax.f32 %v6048, %v6050
        %v6073 = vmax.f32 %v6051, %v6053
        %v6074 = vmax.f32 %v6052, %v6054
        %v6075 = vmax.f32 %v6055, %v6057
        %v6076 = vmax.f32 %v6056, %v6058
        %v6077 = vmax.f32 %v6059, %v6061
        %v6078 = vmax.f32 %v6060, %v6062
        %vm6079 = vcmask 517120
        %6080 = vst.msk [vmem:[#allocation4] sm:$0x3] %vm6079, 0
        %6081 = vst.msk [vmem:[#allocation4 + $0x8] sm:$0x3] %vm6079, 0
        %6082 = vst.msk [vmem:[#allocation4 + $0x10] sm:$0x3] %vm6079, 0
        %6083 = vst.msk [vmem:[#allocation4 + $0x18] sm:$0x3] %vm6079, 0
        %s6084 = scalar_lea.vmem [#allocation4], 6
        %6085 = vst.msk [vmem:[%s6084] sm:$0x3] %vm6079, 0
        %6086 = vst.msk [vmem:[%s6084 + $0x8] sm:$0x3] %vm6079, 0
        %6087 = vst.msk [vmem:[%s6084 + $0x10] sm:$0x3] %vm6079, 0
        %6088 = vst.msk [vmem:[%s6084 + $0x18] sm:$0x3] %vm6079, 0
        %vm6089 = vcmask 516096
        %vm6090 = vmand %vm6089, %vm2108
        %v6091 = vld [vmem:[#allocation4] sm:$0x1]
        %v6092 = vsel %vm6090, 0, %v6091
        %6093 = vst [vmem:[#allocation4] sm:$0x1] %v6092
        %v6094 = vld [vmem:[#allocation4 + $0x2] sm:$0x1]
        %v6095 = vsel %vm6090, 0, %v6094
        %6096 = vst [vmem:[#allocation4 + $0x2] sm:$0x1] %v6095
        %v6097 = vld [vmem:[#allocation4 + $0x4] sm:$0x1]
        %v6098 = vsel %vm6090, 0, %v6097
        %6099 = vst [vmem:[#allocation4 + $0x4] sm:$0x1] %v6098
        %v6100 = vld [vmem:[#allocation4 + $0x6] sm:$0x1]
        %v6101 = vsel %vm6090, 0, %v6100
        %6102 = vst [vmem:[#allocation4 + $0x6] sm:$0x1] %v6101
        %v6103 = vld [vmem:[#allocation4 + $0x8] sm:$0x1]
        %v6104 = vsel %vm6090, 0, %v6103
        %6105 = vst [vmem:[#allocation4 + $0x8] sm:$0x1] %v6104
        %v6106 = vld [vmem:[#allocation4 + $0xa] sm:$0x1]
        %v6107 = vsel %vm6090, 0, %v6106
        %6108 = vst [vmem:[#allocation4 + $0xa] sm:$0x1] %v6107
        %v6109 = vld [vmem:[#allocation4 + $0xc] sm:$0x1]
        %v6110 = vsel %vm6090, 0, %v6109
        %6111 = vst [vmem:[#allocation4 + $0xc] sm:$0x1] %v6110
        %v6112 = vld [vmem:[#allocation4 + $0xe] sm:$0x1]
        %v6113 = vsel %vm6090, 0, %v6112
        %6114 = vst [vmem:[#allocation4 + $0xe] sm:$0x1] %v6113
        %v6115 = vld [vmem:[#allocation4 + $0x10] sm:$0x1]
        %v6116 = vsel %vm6090, 0, %v6115
        %6117 = vst [vmem:[#allocation4 + $0x10] sm:$0x1] %v6116
        %v6118 = vld [vmem:[#allocation4 + $0x12] sm:$0x1]
        %v6119 = vsel %vm6090, 0, %v6118
        %6120 = vst [vmem:[#allocation4 + $0x12] sm:$0x1] %v6119
        %v6121 = vld [vmem:[#allocation4 + $0x14] sm:$0x1]
        %v6122 = vsel %vm6090, 0, %v6121
        %6123 = vst [vmem:[#allocation4 + $0x14] sm:$0x1] %v6122
        %v6124 = vld [vmem:[#allocation4 + $0x16] sm:$0x1]
        %v6125 = vsel %vm6090, 0, %v6124
        %6126 = vst [vmem:[#allocation4 + $0x16] sm:$0x1] %v6125
        %v6127 = vld [vmem:[#allocation4 + $0x18] sm:$0x1]
        %v6128 = vsel %vm6090, 0, %v6127
        %6129 = vst [vmem:[#allocation4 + $0x18] sm:$0x1] %v6128
        %v6130 = vld [vmem:[#allocation4 + $0x1a] sm:$0x1]
        %v6131 = vsel %vm6090, 0, %v6130
        %6132 = vst [vmem:[#allocation4 + $0x1a] sm:$0x1] %v6131
        %v6133 = vld [vmem:[#allocation4 + $0x1c] sm:$0x1]
        %v6134 = vsel %vm6090, 0, %v6133
        %6135 = vst [vmem:[#allocation4 + $0x1c] sm:$0x1] %v6134
        %v6136 = vld [vmem:[#allocation4 + $0x1e] sm:$0x1]
        %v6137 = vsel %vm6090, 0, %v6136
        %6138 = vst [vmem:[#allocation4 + $0x1e] sm:$0x1] %v6137
        %vm6139 = vcmask 517121
        %vm6140 = vsmask.f32 7942
        %vm6141 = vmand %vm6139, %vm6140
        %v6142 = vld [vmem:[#allocation4] sm:$0x2]
        %v6143 = vsel %vm6141, 0, %v6142
        %6144 = vst [vmem:[#allocation4] sm:$0x2] %v6143
        %v6145 = vld [vmem:[#allocation4 + $0x2] sm:$0x2]
        %v6146 = vsel %vm6141, 0, %v6145
        %6147 = vst [vmem:[#allocation4 + $0x2] sm:$0x2] %v6146
        %v6148 = vld [vmem:[#allocation4 + $0x4] sm:$0x2]
        %v6149 = vsel %vm6141, 0, %v6148
        %6150 = vst [vmem:[#allocation4 + $0x4] sm:$0x2] %v6149
        %v6151 = vld [vmem:[#allocation4 + $0x6] sm:$0x2]
        %v6152 = vsel %vm6141, 0, %v6151
        %6153 = vst [vmem:[#allocation4 + $0x6] sm:$0x2] %v6152
        %v6154 = vld [vmem:[#allocation4 + $0x8] sm:$0x2]
        %v6155 = vsel %vm6141, 0, %v6154
        %6156 = vst [vmem:[#allocation4 + $0x8] sm:$0x2] %v6155
        %v6157 = vld [vmem:[#allocation4 + $0xa] sm:$0x2]
        %v6158 = vsel %vm6141, 0, %v6157
        %6159 = vst [vmem:[#allocation4 + $0xa] sm:$0x2] %v6158
        %v6160 = vld [vmem:[#allocation4 + $0xc] sm:$0x2]
        %v6161 = vsel %vm6141, 0, %v6160
        %6162 = vst [vmem:[#allocation4 + $0xc] sm:$0x2] %v6161
        %v6163 = vld [vmem:[#allocation4 + $0xe] sm:$0x2]
        %v6164 = vsel %vm6141, 0, %v6163
        %6165 = vst [vmem:[#allocation4 + $0xe] sm:$0x2] %v6164
        %v6166 = vld [vmem:[#allocation4 + $0x10] sm:$0x2]
        %v6167 = vsel %vm6141, 0, %v6166
        %6168 = vst [vmem:[#allocation4 + $0x10] sm:$0x2] %v6167
        %v6169 = vld [vmem:[#allocation4 + $0x12] sm:$0x2]
        %v6170 = vsel %vm6141, 0, %v6169
        %6171 = vst [vmem:[#allocation4 + $0x12] sm:$0x2] %v6170
        %v6172 = vld [vmem:[#allocation4 + $0x14] sm:$0x2]
        %v6173 = vsel %vm6141, 0, %v6172
        %6174 = vst [vmem:[#allocation4 + $0x14] sm:$0x2] %v6173
        %v6175 = vld [vmem:[#allocation4 + $0x16] sm:$0x2]
        %v6176 = vsel %vm6141, 0, %v6175
        %6177 = vst [vmem:[#allocation4 + $0x16] sm:$0x2] %v6176
        %v6178 = vld [vmem:[#allocation4 + $0x18] sm:$0x2]
        %v6179 = vsel %vm6141, 0, %v6178
        %6180 = vst [vmem:[#allocation4 + $0x18] sm:$0x2] %v6179
        %v6181 = vld [vmem:[#allocation4 + $0x1a] sm:$0x2]
        %v6182 = vsel %vm6141, 0, %v6181
        %6183 = vst [vmem:[#allocation4 + $0x1a] sm:$0x2] %v6182
        %v6184 = vld [vmem:[#allocation4 + $0x1c] sm:$0x2]
        %v6185 = vsel %vm6141, 0, %v6184
        %6186 = vst [vmem:[#allocation4 + $0x1c] sm:$0x2] %v6185
        %v6187 = vld [vmem:[#allocation4 + $0x1e] sm:$0x2]
        %v6188 = vsel %vm6141, 0, %v6187
        %6189 = vst [vmem:[#allocation4 + $0x1e] sm:$0x2] %v6188
        %v6190 = vpack.c.bf16 %v6063, %v6063
        %v6191 = vpack.c.bf16 %v6064, %v6064
        %v6192 = vpack.c.bf16 %v6065, %v6065
        %v6193 = vpack.c.bf16 %v6066, %v6066
        %v6194 = vpack.c.bf16 %v6067, %v6067
        %v6195 = vpack.c.bf16 %v6068, %v6068
        %v6196 = vpack.c.bf16 %v6069, %v6069
        %v6197 = vpack.c.bf16 %v6070, %v6070
        %v6198 = vpack.c.bf16 %v6071, %v6071
        %v6199 = vpack.c.bf16 %v6072, %v6072
        %v6200 = vpack.c.bf16 %v6073, %v6073
        %v6201 = vpack.c.bf16 %v6074, %v6074
        %v6202 = vpack.c.bf16 %v6075, %v6075
        %v6203 = vpack.c.bf16 %v6076, %v6076
        %v6204 = vpack.c.bf16 %v6077, %v6077
        %v6205 = vpack.c.bf16 %v6078, %v6078
        %v6223 = vunpack.c.l.s4 1983009808
        %v6224 = vunpack.c.0.s8 %v6223
        %v6225 = vlaneseq
        %v6226 = vshrl.u32 %v6225, 7
        %v6227 = vsub.s32 %v6224, %v6226
        %v6228 = vrot.slane %v6190, %v6227
        %v6230 = vunpack.c.l.s4 1983009808
        %v6231 = vunpack.c.0.s8 %v6230
        %v6232 = vlaneseq
        %v6233 = vshrl.u32 %v6232, 7
        %v6234 = vsub.s32 %v6231, %v6233
        %v6235 = vrot.slane %v6191, %v6234
        %v6237 = vunpack.c.l.s4 1983009808
        %v6238 = vunpack.c.0.s8 %v6237
        %v6239 = vlaneseq
        %v6240 = vshrl.u32 %v6239, 7
        %v6241 = vsub.s32 %v6238, %v6240
        %v6242 = vrot.slane %v6192, %v6241
        %v6244 = vunpack.c.l.s4 1983009808
        %v6245 = vunpack.c.0.s8 %v6244
        %v6246 = vlaneseq
        %v6247 = vshrl.u32 %v6246, 7
        %v6248 = vsub.s32 %v6245, %v6247
        %v6249 = vrot.slane %v6193, %v6248
        %v6251 = vunpack.c.l.s4 1983009808
        %v6252 = vunpack.c.0.s8 %v6251
        %v6253 = vlaneseq
        %v6254 = vshrl.u32 %v6253, 7
        %v6255 = vsub.s32 %v6252, %v6254
        %v6256 = vrot.slane %v6194, %v6255
        %v6258 = vunpack.c.l.s4 1983009808
        %v6259 = vunpack.c.0.s8 %v6258
        %v6260 = vlaneseq
        %v6261 = vshrl.u32 %v6260, 7
        %v6262 = vsub.s32 %v6259, %v6261
        %v6263 = vrot.slane %v6195, %v6262
        %v6265 = vunpack.c.l.s4 1983009808
        %v6266 = vunpack.c.0.s8 %v6265
        %v6267 = vlaneseq
        %v6268 = vshrl.u32 %v6267, 7
        %v6269 = vsub.s32 %v6266, %v6268
        %v6270 = vrot.slane %v6196, %v6269
        %v6272 = vunpack.c.l.s4 1983009808
        %v6273 = vunpack.c.0.s8 %v6272
        %v6274 = vlaneseq
        %v6275 = vshrl.u32 %v6274, 7
        %v6276 = vsub.s32 %v6273, %v6275
        %v6277 = vrot.slane %v6197, %v6276
        %v6279 = vunpack.c.l.s4 1983009808
        %v6280 = vunpack.c.0.s8 %v6279
        %v6281 = vlaneseq
        %v6282 = vshrl.u32 %v6281, 7
        %v6283 = vsub.s32 %v6280, %v6282
        %v6284 = vrot.slane %v6198, %v6283
        %v6286 = vunpack.c.l.s4 1983009808
        %v6287 = vunpack.c.0.s8 %v6286
        %v6288 = vlaneseq
        %v6289 = vshrl.u32 %v6288, 7
        %v6290 = vsub.s32 %v6287, %v6289
        %v6291 = vrot.slane %v6199, %v6290
        %v6293 = vunpack.c.l.s4 1983009808
        %v6294 = vunpack.c.0.s8 %v6293
        %v6295 = vlaneseq
        %v6296 = vshrl.u32 %v6295, 7
        %v6297 = vsub.s32 %v6294, %v6296
        %v6298 = vrot.slane %v6200, %v6297
        %v6300 = vunpack.c.l.s4 1983009808
        %v6301 = vunpack.c.0.s8 %v6300
        %v6302 = vlaneseq
        %v6303 = vshrl.u32 %v6302, 7
        %v6304 = vsub.s32 %v6301, %v6303
        %v6305 = vrot.slane %v6201, %v6304
        %v6307 = vunpack.c.l.s4 1983009808
        %v6308 = vunpack.c.0.s8 %v6307
        %v6309 = vlaneseq
        %v6310 = vshrl.u32 %v6309, 7
        %v6311 = vsub.s32 %v6308, %v6310
        %v6312 = vrot.slane %v6202, %v6311
        %v6314 = vunpack.c.l.s4 1983009808
        %v6315 = vunpack.c.0.s8 %v6314
        %v6316 = vlaneseq
        %v6317 = vshrl.u32 %v6316, 7
        %v6318 = vsub.s32 %v6315, %v6317
        %v6319 = vrot.slane %v6203, %v6318
        %v6321 = vunpack.c.l.s4 1983009808
        %v6322 = vunpack.c.0.s8 %v6321
        %v6323 = vlaneseq
        %v6324 = vshrl.u32 %v6323, 7
        %v6325 = vsub.s32 %v6322, %v6324
        %v6326 = vrot.slane %v6204, %v6325
        %v6328 = vunpack.c.l.s4 1983009808
        %v6329 = vunpack.c.0.s8 %v6328
        %v6330 = vlaneseq
        %v6331 = vshrl.u32 %v6330, 7
        %v6332 = vsub.s32 %v6329, %v6331
        %v6333 = vrot.slane %v6205, %v6332
        %v6335 = vunpack.c.l.s4 1983009808
        %v6336 = vunpack.c.0.s8 %v6335
        %v6337 = vlaneseq
        %v6338 = vshrl.u32 %v6337, 7
        %v6339 = vsub.s32 %v6336, %v6338
        %v6340 = vrot.slane %v6228, %v6339
        %v6342 = vunpack.c.l.s4 1983009808
        %v6343 = vunpack.c.0.s8 %v6342
        %v6344 = vlaneseq
        %v6345 = vshrl.u32 %v6344, 7
        %v6346 = vsub.s32 %v6343, %v6345
        %v6347 = vrot.slane %v6235, %v6346
        %v6349 = vunpack.c.l.s4 1983009808
        %v6350 = vunpack.c.0.s8 %v6349
        %v6351 = vlaneseq
        %v6352 = vshrl.u32 %v6351, 7
        %v6353 = vsub.s32 %v6350, %v6352
        %v6354 = vrot.slane %v6242, %v6353
        %v6356 = vunpack.c.l.s4 1983009808
        %v6357 = vunpack.c.0.s8 %v6356
        %v6358 = vlaneseq
        %v6359 = vshrl.u32 %v6358, 7
        %v6360 = vsub.s32 %v6357, %v6359
        %v6361 = vrot.slane %v6249, %v6360
        %v6363 = vunpack.c.l.s4 1983009808
        %v6364 = vunpack.c.0.s8 %v6363
        %v6365 = vlaneseq
        %v6366 = vshrl.u32 %v6365, 7
        %v6367 = vsub.s32 %v6364, %v6366
        %v6368 = vrot.slane %v6256, %v6367
        %v6370 = vunpack.c.l.s4 1983009808
        %v6371 = vunpack.c.0.s8 %v6370
        %v6372 = vlaneseq
        %v6373 = vshrl.u32 %v6372, 7
        %v6374 = vsub.s32 %v6371, %v6373
        %v6375 = vrot.slane %v6263, %v6374
        %v6377 = vunpack.c.l.s4 1983009808
        %v6378 = vunpack.c.0.s8 %v6377
        %v6379 = vlaneseq
        %v6380 = vshrl.u32 %v6379, 7
        %v6381 = vsub.s32 %v6378, %v6380
        %v6382 = vrot.slane %v6270, %v6381
        %v6384 = vunpack.c.l.s4 1983009808
        %v6385 = vunpack.c.0.s8 %v6384
        %v6386 = vlaneseq
        %v6387 = vshrl.u32 %v6386, 7
        %v6388 = vsub.s32 %v6385, %v6387
        %v6389 = vrot.slane %v6277, %v6388
        %v6391 = vunpack.c.l.s4 1983009808
        %v6392 = vunpack.c.0.s8 %v6391
        %v6393 = vlaneseq
        %v6394 = vshrl.u32 %v6393, 7
        %v6395 = vsub.s32 %v6392, %v6394
        %v6396 = vrot.slane %v6284, %v6395
        %v6398 = vunpack.c.l.s4 1983009808
        %v6399 = vunpack.c.0.s8 %v6398
        %v6400 = vlaneseq
        %v6401 = vshrl.u32 %v6400, 7
        %v6402 = vsub.s32 %v6399, %v6401
        %v6403 = vrot.slane %v6291, %v6402
        %v6405 = vunpack.c.l.s4 1983009808
        %v6406 = vunpack.c.0.s8 %v6405
        %v6407 = vlaneseq
        %v6408 = vshrl.u32 %v6407, 7
        %v6409 = vsub.s32 %v6406, %v6408
        %v6410 = vrot.slane %v6298, %v6409
        %v6412 = vunpack.c.l.s4 1983009808
        %v6413 = vunpack.c.0.s8 %v6412
        %v6414 = vlaneseq
        %v6415 = vshrl.u32 %v6414, 7
        %v6416 = vsub.s32 %v6413, %v6415
        %v6417 = vrot.slane %v6305, %v6416
        %v6419 = vunpack.c.l.s4 1983009808
        %v6420 = vunpack.c.0.s8 %v6419
        %v6421 = vlaneseq
        %v6422 = vshrl.u32 %v6421, 7
        %v6423 = vsub.s32 %v6420, %v6422
        %v6424 = vrot.slane %v6312, %v6423
        %v6426 = vunpack.c.l.s4 1983009808
        %v6427 = vunpack.c.0.s8 %v6426
        %v6428 = vlaneseq
        %v6429 = vshrl.u32 %v6428, 7
        %v6430 = vsub.s32 %v6427, %v6429
        %v6431 = vrot.slane %v6319, %v6430
        %v6433 = vunpack.c.l.s4 1983009808
        %v6434 = vunpack.c.0.s8 %v6433
        %v6435 = vlaneseq
        %v6436 = vshrl.u32 %v6435, 7
        %v6437 = vsub.s32 %v6434, %v6436
        %v6438 = vrot.slane %v6326, %v6437
        %v6440 = vunpack.c.l.s4 1983009808
        %v6441 = vunpack.c.0.s8 %v6440
        %v6442 = vlaneseq
        %v6443 = vshrl.u32 %v6442, 7
        %v6444 = vsub.s32 %v6441, %v6443
        %v6445 = vrot.slane %v6333, %v6444
        %v6446 = vunpack.c.l.b16 %v6340
        %v6447 = vunpack.c.l.b16 %v6347
        %v6448 = vunpack.c.l.b16 %v6354
        %v6449 = vunpack.c.l.b16 %v6361
        %v6450 = vunpack.c.l.b16 %v6368
        %v6451 = vunpack.c.l.b16 %v6375
        %v6452 = vunpack.c.l.b16 %v6382
        %v6453 = vunpack.c.l.b16 %v6389
        %v6454 = vunpack.c.l.b16 %v6396
        %v6455 = vunpack.c.l.b16 %v6403
        %v6456 = vunpack.c.l.b16 %v6410
        %v6457 = vunpack.c.l.b16 %v6417
        %v6458 = vunpack.c.l.b16 %v6424
        %v6459 = vunpack.c.l.b16 %v6431
        %v6460 = vunpack.c.l.b16 %v6438
        %v6461 = vunpack.c.l.b16 %v6445
        %v6462 = vrot.slane %v6446, 7
        %v6463 = vrot.slane %v6447, 6
        %v6464 = vsel %vm2579, %v6463, %v6462
        %v6465 = vrot.slane %v6448, 7
        %v6466 = vrot.slane %v6449, 6
        %v6467 = vsel %vm2579, %v6466, %v6465
        %v6468 = vrot.slane %v6450, 7
        %v6469 = vrot.slane %v6451, 6
        %v6470 = vsel %vm2579, %v6469, %v6468
        %v6471 = vrot.slane %v6452, 7
        %v6472 = vrot.slane %v6453, 6
        %v6473 = vsel %vm2579, %v6472, %v6471
        %v6474 = vrot.slane %v6454, 7
        %v6475 = vrot.slane %v6455, 6
        %v6476 = vsel %vm2579, %v6475, %v6474
        %v6477 = vrot.slane %v6456, 7
        %v6478 = vrot.slane %v6457, 6
        %v6479 = vsel %vm2579, %v6478, %v6477
        %v6480 = vrot.slane %v6458, 7
        %v6481 = vrot.slane %v6459, 6
        %v6482 = vsel %vm2579, %v6481, %v6480
        %v6483 = vrot.slane %v6460, 7
        %v6484 = vrot.slane %v6461, 6
        %v6485 = vsel %vm2579, %v6484, %v6483
        %v6486 = vpack.c.b16 %v6464, %v6464
        %v6487 = vpack.c.b16 %v6467, %v6467
        %v6488 = vpack.c.b16 %v6470, %v6470
        %v6489 = vpack.c.b16 %v6473, %v6473
        %v6490 = vpack.c.b16 %v6476, %v6476
        %v6491 = vpack.c.b16 %v6479, %v6479
        %v6492 = vpack.c.b16 %v6482, %v6482
        %v6493 = vpack.c.b16 %v6485, %v6485
        %v6495 = vunpack.c.l.s4 1983009808
        %v6496 = vunpack.c.0.s8 %v6495
        %v6497 = vlaneseq
        %v6498 = vshrl.u32 %v6497, 7
        %v6499 = vsub.s32 %v6496, %v6498
        %v6500 = vrot.slane %v6486, %v6499
        %v6502 = vunpack.c.l.s4 1983009808
        %v6503 = vunpack.c.0.s8 %v6502
        %v6504 = vlaneseq
        %v6505 = vshrl.u32 %v6504, 7
        %v6506 = vsub.s32 %v6503, %v6505
        %v6507 = vrot.slane %v6487, %v6506
        %v6509 = vunpack.c.l.s4 1983009808
        %v6510 = vunpack.c.0.s8 %v6509
        %v6511 = vlaneseq
        %v6512 = vshrl.u32 %v6511, 7
        %v6513 = vsub.s32 %v6510, %v6512
        %v6514 = vrot.slane %v6488, %v6513
        %v6516 = vunpack.c.l.s4 1983009808
        %v6517 = vunpack.c.0.s8 %v6516
        %v6518 = vlaneseq
        %v6519 = vshrl.u32 %v6518, 7
        %v6520 = vsub.s32 %v6517, %v6519
        %v6521 = vrot.slane %v6489, %v6520
        %v6523 = vunpack.c.l.s4 1983009808
        %v6524 = vunpack.c.0.s8 %v6523
        %v6525 = vlaneseq
        %v6526 = vshrl.u32 %v6525, 7
        %v6527 = vsub.s32 %v6524, %v6526
        %v6528 = vrot.slane %v6490, %v6527
        %v6530 = vunpack.c.l.s4 1983009808
        %v6531 = vunpack.c.0.s8 %v6530
        %v6532 = vlaneseq
        %v6533 = vshrl.u32 %v6532, 7
        %v6534 = vsub.s32 %v6531, %v6533
        %v6535 = vrot.slane %v6491, %v6534
        %v6537 = vunpack.c.l.s4 1983009808
        %v6538 = vunpack.c.0.s8 %v6537
        %v6539 = vlaneseq
        %v6540 = vshrl.u32 %v6539, 7
        %v6541 = vsub.s32 %v6538, %v6540
        %v6542 = vrot.slane %v6492, %v6541
        %v6544 = vunpack.c.l.s4 1983009808
        %v6545 = vunpack.c.0.s8 %v6544
        %v6546 = vlaneseq
        %v6547 = vshrl.u32 %v6546, 7
        %v6548 = vsub.s32 %v6545, %v6547
        %v6549 = vrot.slane %v6493, %v6548
        %s6558 = scalar_lea.vmem [#allocation4], 2
        %vm6559 = vcmask 517120
        %vm6560 = vsmask.f32 1282
        %vm6561 = vmand %vm6559, %vm6560
        %v6562 = vld [vmem:[%s6558] sm:$0x3]
        %v6563 = vsel %vm6561, %v6500, %v6562
        %6564 = vst [vmem:[%s6558] sm:$0x3] %v6563
        %v6565 = vld [vmem:[%s6558 + $0x2] sm:$0x3]
        %v6566 = vsel %vm6561, %v6507, %v6565
        %6567 = vst [vmem:[%s6558 + $0x2] sm:$0x3] %v6566
        %v6568 = vld [vmem:[%s6558 + $0x8] sm:$0x3]
        %v6569 = vsel %vm6561, %v6514, %v6568
        %6570 = vst [vmem:[%s6558 + $0x8] sm:$0x3] %v6569
        %v6571 = vld [vmem:[%s6558 + $0xa] sm:$0x3]
        %v6572 = vsel %vm6561, %v6521, %v6571
        %6573 = vst [vmem:[%s6558 + $0xa] sm:$0x3] %v6572
        %v6574 = vld [vmem:[%s6558 + $0x10] sm:$0x3]
        %v6575 = vsel %vm6561, %v6528, %v6574
        %6576 = vst [vmem:[%s6558 + $0x10] sm:$0x3] %v6575
        %v6577 = vld [vmem:[%s6558 + $0x12] sm:$0x3]
        %v6578 = vsel %vm6561, %v6535, %v6577
        %6579 = vst [vmem:[%s6558 + $0x12] sm:$0x3] %v6578
        %v6580 = vld [vmem:[%s6558 + $0x18] sm:$0x3]
        %v6581 = vsel %vm6561, %v6542, %v6580
        %6582 = vst [vmem:[%s6558 + $0x18] sm:$0x3] %v6581
        %v6583 = vld [vmem:[%s6558 + $0x1a] sm:$0x3]
        %v6584 = vsel %vm6561, %v6549, %v6583
        %6585 = vst [vmem:[%s6558 + $0x1a] sm:$0x3] %v6584
        %v6586 = vld [vmem:[#allocation4] sm:$0x1]
        %v6587 = vld [vmem:[#allocation4 + $0x2] sm:$0x1]
        %v6588 = vld [vmem:[#allocation4 + $0x8] sm:$0x1]
        %v6589 = vld [vmem:[#allocation4 + $0xa] sm:$0x1]
        %v6590 = vld [vmem:[#allocation4 + $0x10] sm:$0x1]
        %v6591 = vld [vmem:[#allocation4 + $0x12] sm:$0x1]
        %v6592 = vld [vmem:[#allocation4 + $0x18] sm:$0x1]
        %v6593 = vld [vmem:[#allocation4 + $0x1a] sm:$0x1]
        %v6602 = vcombine.low %v6586, %v6587
        %v6603 = vcombine.low %v6588, %v6589
        %v6604 = vcombine.low %v6590, %v6591
        %v6605 = vcombine.low %v6592, %v6593
        %v6607 = vunpack.c.l.s4 1966171168
        %v6608 = vunpack.c.0.s8 %v6607
        %v6609 = vlaneseq
        %v6610 = vshrl.u32 %v6609, 7
        %v6611 = vsub.s32 %v6608, %v6610
        %v6612 = vrot.slane %v6602, %v6611
        %v6614 = vunpack.c.l.s4 1966171168
        %v6615 = vunpack.c.0.s8 %v6614
        %v6616 = vlaneseq
        %v6617 = vshrl.u32 %v6616, 7
        %v6618 = vsub.s32 %v6615, %v6617
        %v6619 = vrot.slane %v6603, %v6618
        %v6621 = vunpack.c.l.s4 1966171168
        %v6622 = vunpack.c.0.s8 %v6621
        %v6623 = vlaneseq
        %v6624 = vshrl.u32 %v6623, 7
        %v6625 = vsub.s32 %v6622, %v6624
        %v6626 = vrot.slane %v6604, %v6625
        %v6628 = vunpack.c.l.s4 1966171168
        %v6629 = vunpack.c.0.s8 %v6628
        %v6630 = vlaneseq
        %v6631 = vshrl.u32 %v6630, 7
        %v6632 = vsub.s32 %v6629, %v6631
        %v6633 = vrot.slane %v6605, %v6632
        %v6634 = vcombine.low %v6612, %v6619
        %v6635 = vcombine.low %v6626, %v6633
        %v6637 = vunpack.c.l.s4 1966171168
        %v6638 = vunpack.c.0.s8 %v6637
        %v6639 = vlaneseq
        %v6640 = vshrl.u32 %v6639, 7
        %v6641 = vsub.s32 %v6638, %v6640
        %v6642 = vrot.slane %v6634, %v6641
        %v6644 = vunpack.c.l.s4 1966171168
        %v6645 = vunpack.c.0.s8 %v6644
        %v6646 = vlaneseq
        %v6647 = vshrl.u32 %v6646, 7
        %v6648 = vsub.s32 %v6645, %v6647
        %v6649 = vrot.slane %v6635, %v6648
        %v6650 = vcombine.low %v6642, %v6649
        %vm6652 = vcmask 523264
        %6653 = vst.msk [vmem:[#allocation5] sm:$0xff] %vm6652, %v6650
        %v6654 = vld [vmem:[#allocation4] sm:$0x3]
        %v6655 = vld [vmem:[#allocation4 + $0x2] sm:$0x3]
        %v6656 = vld [vmem:[#allocation4 + $0x8] sm:$0x3]
        %v6657 = vld [vmem:[#allocation4 + $0xa] sm:$0x3]
        %v6658 = vld [vmem:[#allocation4 + $0x10] sm:$0x3]
        %v6659 = vld [vmem:[#allocation4 + $0x12] sm:$0x3]
        %v6660 = vld [vmem:[#allocation4 + $0x18] sm:$0x3]
        %v6661 = vld [vmem:[#allocation4 + $0x1a] sm:$0x3]
        %v6671 = vunpack.c.l.s4 1966171168
        %v6672 = vunpack.c.0.s8 %v6671
        %v6673 = vlaneseq
        %v6674 = vshrl.u32 %v6673, 7
        %v6675 = vsub.s32 %v6672, %v6674
        %v6676 = vrot.slane %v6654, %v6675
        %v6677 = vcombine.high %v6676, %v6676
        %v6679 = vunpack.c.l.s4 1966171168
        %v6680 = vunpack.c.0.s8 %v6679
        %v6681 = vlaneseq
        %v6682 = vshrl.u32 %v6681, 7
        %v6683 = vsub.s32 %v6680, %v6682
        %v6684 = vrot.slane %v6655, %v6683
        %v6685 = vcombine.high %v6684, %v6684
        %v6687 = vunpack.c.l.s4 1966171168
        %v6688 = vunpack.c.0.s8 %v6687
        %v6689 = vlaneseq
        %v6690 = vshrl.u32 %v6689, 7
        %v6691 = vsub.s32 %v6688, %v6690
        %v6692 = vrot.slane %v6656, %v6691
        %v6693 = vcombine.high %v6692, %v6692
        %v6695 = vunpack.c.l.s4 1966171168
        %v6696 = vunpack.c.0.s8 %v6695
        %v6697 = vlaneseq
        %v6698 = vshrl.u32 %v6697, 7
        %v6699 = vsub.s32 %v6696, %v6698
        %v6700 = vrot.slane %v6657, %v6699
        %v6701 = vcombine.high %v6700, %v6700
        %v6703 = vunpack.c.l.s4 1966171168
        %v6704 = vunpack.c.0.s8 %v6703
        %v6705 = vlaneseq
        %v6706 = vshrl.u32 %v6705, 7
        %v6707 = vsub.s32 %v6704, %v6706
        %v6708 = vrot.slane %v6658, %v6707
        %v6709 = vcombine.high %v6708, %v6708
        %v6711 = vunpack.c.l.s4 1966171168
        %v6712 = vunpack.c.0.s8 %v6711
        %v6713 = vlaneseq
        %v6714 = vshrl.u32 %v6713, 7
        %v6715 = vsub.s32 %v6712, %v6714
        %v6716 = vrot.slane %v6659, %v6715
        %v6717 = vcombine.high %v6716, %v6716
        %v6719 = vunpack.c.l.s4 1966171168
        %v6720 = vunpack.c.0.s8 %v6719
        %v6721 = vlaneseq
        %v6722 = vshrl.u32 %v6721, 7
        %v6723 = vsub.s32 %v6720, %v6722
        %v6724 = vrot.slane %v6660, %v6723
        %v6725 = vcombine.high %v6724, %v6724
        %v6727 = vunpack.c.l.s4 1966171168
        %v6728 = vunpack.c.0.s8 %v6727
        %v6729 = vlaneseq
        %v6730 = vshrl.u32 %v6729, 7
        %v6731 = vsub.s32 %v6728, %v6730
        %v6732 = vrot.slane %v6661, %v6731
        %v6733 = vcombine.high %v6732, %v6732
        %vm6734 = vsmask.f32 1284
        %vm6735 = vmor %vm2108, %vm6734
        %vm6736 = vsmask.f32 2312
        %vm6737 = vmor %vm6735, %vm6736
        %vm6738 = vsmask.f32 3340
        %vm6739 = vmor %vm6737, %vm6738
        %vm6740 = vsmask.f32 4368
        %vm6741 = vmor %vm6739, %vm6740
        %vm6742 = vsmask.f32 5396
        %vm6743 = vmor %vm6741, %vm6742
        %vm6744 = vsmask.f32 6424
        %vm6745 = vmor %vm6743, %vm6744
        %vm6746 = vsmask.f32 7452
        %vm6747 = vmor %vm6745, %vm6746
        %v6749 = vshrl.u32 %v6676, 16
        %v6751 = vrot.slane %v6749, 7
        %v6752 = vrot.slane %v6751, 1
        %v6754 = vshll.u32 %v6677, 16
        %v6756 = vsel %vm6747, %v6752, %v6754
        %v6758 = vshrl.u32 %v6684, 16
        %v6760 = vrot.slane %v6758, 7
        %v6761 = vrot.slane %v6760, 1
        %v6763 = vshll.u32 %v6685, 16
        %v6765 = vsel %vm6747, %v6761, %v6763
        %v6767 = vshrl.u32 %v6692, 16
        %v6769 = vrot.slane %v6767, 7
        %v6770 = vrot.slane %v6769, 1
        %v6772 = vshll.u32 %v6693, 16
        %v6774 = vsel %vm6747, %v6770, %v6772
        %v6776 = vshrl.u32 %v6700, 16
        %v6778 = vrot.slane %v6776, 7
        %v6779 = vrot.slane %v6778, 1
        %v6781 = vshll.u32 %v6701, 16
        %v6783 = vsel %vm6747, %v6779, %v6781
        %v6785 = vshrl.u32 %v6708, 16
        %v6787 = vrot.slane %v6785, 7
        %v6788 = vrot.slane %v6787, 1
        %v6790 = vshll.u32 %v6709, 16
        %v6792 = vsel %vm6747, %v6788, %v6790
        %v6794 = vshrl.u32 %v6716, 16
        %v6796 = vrot.slane %v6794, 7
        %v6797 = vrot.slane %v6796, 1
        %v6799 = vshll.u32 %v6717, 16
        %v6801 = vsel %vm6747, %v6797, %v6799
        %v6803 = vshrl.u32 %v6724, 16
        %v6805 = vrot.slane %v6803, 7
        %v6806 = vrot.slane %v6805, 1
        %v6808 = vshll.u32 %v6725, 16
        %v6810 = vsel %vm6747, %v6806, %v6808
        %v6812 = vshrl.u32 %v6732, 16
        %v6814 = vrot.slane %v6812, 7
        %v6815 = vrot.slane %v6814, 1
        %v6817 = vshll.u32 %v6733, 16
        %v6819 = vsel %vm6747, %v6815, %v6817
        %v6820 = vcombine.low %v6756, %v6765
        %v6821 = vcombine.low %v6774, %v6783
        %v6822 = vcombine.low %v6792, %v6801
        %v6823 = vcombine.low %v6810, %v6819
        %v6825 = vunpack.c.l.s4 1966171168
        %v6826 = vunpack.c.0.s8 %v6825
        %v6827 = vlaneseq
        %v6828 = vshrl.u32 %v6827, 7
        %v6829 = vsub.s32 %v6826, %v6828
        %v6830 = vrot.slane %v6820, %v6829
        %v6832 = vunpack.c.l.s4 1966171168
        %v6833 = vunpack.c.0.s8 %v6832
        %v6834 = vlaneseq
        %v6835 = vshrl.u32 %v6834, 7
        %v6836 = vsub.s32 %v6833, %v6835
        %v6837 = vrot.slane %v6821, %v6836
        %v6839 = vunpack.c.l.s4 1966171168
        %v6840 = vunpack.c.0.s8 %v6839
        %v6841 = vlaneseq
        %v6842 = vshrl.u32 %v6841, 7
        %v6843 = vsub.s32 %v6840, %v6842
        %v6844 = vrot.slane %v6822, %v6843
        %v6846 = vunpack.c.l.s4 1966171168
        %v6847 = vunpack.c.0.s8 %v6846
        %v6848 = vlaneseq
        %v6849 = vshrl.u32 %v6848, 7
        %v6850 = vsub.s32 %v6847, %v6849
        %v6851 = vrot.slane %v6823, %v6850
        %v6852 = vcombine.low %v6830, %v6837
        %v6853 = vcombine.low %v6844, %v6851
        %v6855 = vunpack.c.l.s4 1966171168
        %v6856 = vunpack.c.0.s8 %v6855
        %v6857 = vlaneseq
        %v6858 = vshrl.u32 %v6857, 7
        %v6859 = vsub.s32 %v6856, %v6858
        %v6860 = vrot.slane %v6852, %v6859
        %v6862 = vunpack.c.l.s4 1966171168
        %v6863 = vunpack.c.0.s8 %v6862
        %v6864 = vlaneseq
        %v6865 = vshrl.u32 %v6864, 7
        %v6866 = vsub.s32 %v6863, %v6865
        %v6867 = vrot.slane %v6853, %v6866
        %v6868 = vcombine.low %v6860, %v6867
        %6869 = vrot.lane.b32.xlu0 %v6868, 64
        %v6870 = vpop.permute.xlu0 %6869
        %vm6872 = vcmask 1048064
        %6873 = vst.msk [vmem:[#allocation5] sm:$0xff] %vm6872, %v6870
        %v6874 = vld [vmem:[#allocation4] sm:$0x2]
        %v6875 = vld [vmem:[#allocation4 + $0x2] sm:$0x2]
        %v6876 = vld [vmem:[#allocation4 + $0x8] sm:$0x2]
        %v6877 = vld [vmem:[#allocation4 + $0xa] sm:$0x2]
        %v6878 = vld [vmem:[#allocation4 + $0x10] sm:$0x2]
        %v6879 = vld [vmem:[#allocation4 + $0x12] sm:$0x2]
        %v6880 = vld [vmem:[#allocation4 + $0x18] sm:$0x2]
        %v6881 = vld [vmem:[#allocation4 + $0x1a] sm:$0x2]
        %v6891 = vunpack.c.l.s4 1966171168
        %v6892 = vunpack.c.0.s8 %v6891
        %v6893 = vlaneseq
        %v6894 = vshrl.u32 %v6893, 7
        %v6895 = vsub.s32 %v6892, %v6894
        %v6896 = vrot.slane %v6874, %v6895
        %v6897 = vcombine.high %v6896, %v6896
        %v6899 = vunpack.c.l.s4 1966171168
        %v6900 = vunpack.c.0.s8 %v6899
        %v6901 = vlaneseq
        %v6902 = vshrl.u32 %v6901, 7
        %v6903 = vsub.s32 %v6900, %v6902
        %v6904 = vrot.slane %v6875, %v6903
        %v6905 = vcombine.high %v6904, %v6904
        %v6907 = vunpack.c.l.s4 1966171168
        %v6908 = vunpack.c.0.s8 %v6907
        %v6909 = vlaneseq
        %v6910 = vshrl.u32 %v6909, 7
        %v6911 = vsub.s32 %v6908, %v6910
        %v6912 = vrot.slane %v6876, %v6911
        %v6913 = vcombine.high %v6912, %v6912
        %v6915 = vunpack.c.l.s4 1966171168
        %v6916 = vunpack.c.0.s8 %v6915
        %v6917 = vlaneseq
        %v6918 = vshrl.u32 %v6917, 7
        %v6919 = vsub.s32 %v6916, %v6918
        %v6920 = vrot.slane %v6877, %v6919
        %v6921 = vcombine.high %v6920, %v6920
        %v6923 = vunpack.c.l.s4 1966171168
        %v6924 = vunpack.c.0.s8 %v6923
        %v6925 = vlaneseq
        %v6926 = vshrl.u32 %v6925, 7
        %v6927 = vsub.s32 %v6924, %v6926
        %v6928 = vrot.slane %v6878, %v6927
        %v6929 = vcombine.high %v6928, %v6928
        %v6931 = vunpack.c.l.s4 1966171168
        %v6932 = vunpack.c.0.s8 %v6931
        %v6933 = vlaneseq
        %v6934 = vshrl.u32 %v6933, 7
        %v6935 = vsub.s32 %v6932, %v6934
        %v6936 = vrot.slane %v6879, %v6935
        %v6937 = vcombine.high %v6936, %v6936
        %v6939 = vunpack.c.l.s4 1966171168
        %v6940 = vunpack.c.0.s8 %v6939
        %v6941 = vlaneseq
        %v6942 = vshrl.u32 %v6941, 7
        %v6943 = vsub.s32 %v6940, %v6942
        %v6944 = vrot.slane %v6880, %v6943
        %v6945 = vcombine.high %v6944, %v6944
        %v6947 = vunpack.c.l.s4 1966171168
        %v6948 = vunpack.c.0.s8 %v6947
        %v6949 = vlaneseq
        %v6950 = vshrl.u32 %v6949, 7
        %v6951 = vsub.s32 %v6948, %v6950
        %v6952 = vrot.slane %v6881, %v6951
        %v6953 = vcombine.high %v6952, %v6952
        %v6954 = vcombine.low %v6897, %v6905
        %v6955 = vcombine.low %v6913, %v6921
        %v6956 = vcombine.low %v6929, %v6937
        %v6957 = vcombine.low %v6945, %v6953
        %v6959 = vunpack.c.l.s4 1966171168
        %v6960 = vunpack.c.0.s8 %v6959
        %v6961 = vlaneseq
        %v6962 = vshrl.u32 %v6961, 7
        %v6963 = vsub.s32 %v6960, %v6962
        %v6964 = vrot.slane %v6954, %v6963
        %v6966 = vunpack.c.l.s4 1966171168
        %v6967 = vunpack.c.0.s8 %v6966
        %v6968 = vlaneseq
        %v6969 = vshrl.u32 %v6968, 7
        %v6970 = vsub.s32 %v6967, %v6969
        %v6971 = vrot.slane %v6955, %v6970
        %v6973 = vunpack.c.l.s4 1966171168
        %v6974 = vunpack.c.0.s8 %v6973
        %v6975 = vlaneseq
        %v6976 = vshrl.u32 %v6975, 7
        %v6977 = vsub.s32 %v6974, %v6976
        %v6978 = vrot.slane %v6956, %v6977
        %v6980 = vunpack.c.l.s4 1966171168
        %v6981 = vunpack.c.0.s8 %v6980
        %v6982 = vlaneseq
        %v6983 = vshrl.u32 %v6982, 7
        %v6984 = vsub.s32 %v6981, %v6983
        %v6985 = vrot.slane %v6957, %v6984
        %v6986 = vcombine.low %v6964, %v6971
        %v6987 = vcombine.low %v6978, %v6985
        %v6989 = vunpack.c.l.s4 1966171168
        %v6990 = vunpack.c.0.s8 %v6989
        %v6991 = vlaneseq
        %v6992 = vshrl.u32 %v6991, 7
        %v6993 = vsub.s32 %v6990, %v6992
        %v6994 = vrot.slane %v6986, %v6993
        %v6996 = vunpack.c.l.s4 1966171168
        %v6997 = vunpack.c.0.s8 %v6996
        %v6998 = vlaneseq
        %v6999 = vshrl.u32 %v6998, 7
        %v7000 = vsub.s32 %v6997, %v6999
        %v7001 = vrot.slane %v6987, %v7000
        %v7002 = vcombine.low %v6994, %v7001
        %7004 = vst.msk [vmem:[#allocation5 + $0x8] sm:$0xff] %vm6652, %v7002
        %v7005 = vld [vmem:[%s6558] sm:$0x1]
        %v7006 = vld [vmem:[%s6558 + $0x2] sm:$0x1]
        %v7007 = vld [vmem:[%s6558 + $0x8] sm:$0x1]
        %v7008 = vld [vmem:[%s6558 + $0xa] sm:$0x1]
        %v7009 = vld [vmem:[%s6558 + $0x10] sm:$0x1]
        %v7010 = vld [vmem:[%s6558 + $0x12] sm:$0x1]
        %v7011 = vld [vmem:[%s6558 + $0x18] sm:$0x1]
        %v7012 = vld [vmem:[%s6558 + $0x1a] sm:$0x1]
        %v7021 = vcombine.low %v7005, %v7006
        %v7022 = vcombine.low %v7007, %v7008
        %v7023 = vcombine.low %v7009, %v7010
        %v7024 = vcombine.low %v7011, %v7012
        %v7026 = vunpack.c.l.s4 1966171168
        %v7027 = vunpack.c.0.s8 %v7026
        %v7028 = vlaneseq
        %v7029 = vshrl.u32 %v7028, 7
        %v7030 = vsub.s32 %v7027, %v7029
        %v7031 = vrot.slane %v7021, %v7030
        %v7033 = vunpack.c.l.s4 1966171168
        %v7034 = vunpack.c.0.s8 %v7033
        %v7035 = vlaneseq
        %v7036 = vshrl.u32 %v7035, 7
        %v7037 = vsub.s32 %v7034, %v7036
        %v7038 = vrot.slane %v7022, %v7037
        %v7040 = vunpack.c.l.s4 1966171168
        %v7041 = vunpack.c.0.s8 %v7040
        %v7042 = vlaneseq
        %v7043 = vshrl.u32 %v7042, 7
        %v7044 = vsub.s32 %v7041, %v7043
        %v7045 = vrot.slane %v7023, %v7044
        %v7047 = vunpack.c.l.s4 1966171168
        %v7048 = vunpack.c.0.s8 %v7047
        %v7049 = vlaneseq
        %v7050 = vshrl.u32 %v7049, 7
        %v7051 = vsub.s32 %v7048, %v7050
        %v7052 = vrot.slane %v7024, %v7051
        %v7053 = vcombine.low %v7031, %v7038
        %v7054 = vcombine.low %v7045, %v7052
        %v7056 = vunpack.c.l.s4 1966171168
        %v7057 = vunpack.c.0.s8 %v7056
        %v7058 = vlaneseq
        %v7059 = vshrl.u32 %v7058, 7
        %v7060 = vsub.s32 %v7057, %v7059
        %v7061 = vrot.slane %v7053, %v7060
        %v7063 = vunpack.c.l.s4 1966171168
        %v7064 = vunpack.c.0.s8 %v7063
        %v7065 = vlaneseq
        %v7066 = vshrl.u32 %v7065, 7
        %v7067 = vsub.s32 %v7064, %v7066
        %v7068 = vrot.slane %v7054, %v7067
        %v7069 = vcombine.low %v7061, %v7068
        %7070 = vrot.lane.b32.xlu0 %v7069, 64
        %v7071 = vpop.permute.xlu0 %7070
        %7073 = vst.msk [vmem:[#allocation5 + $0x8] sm:$0xff] %vm6872, %v7071
        %v7074 = vld [vmem:[%s6558] sm:$0x3]
        %v7075 = vld [vmem:[%s6558 + $0x2] sm:$0x3]
        %v7076 = vld [vmem:[%s6558 + $0x8] sm:$0x3]
        %v7077 = vld [vmem:[%s6558 + $0xa] sm:$0x3]
        %v7078 = vld [vmem:[%s6558 + $0x10] sm:$0x3]
        %v7079 = vld [vmem:[%s6558 + $0x12] sm:$0x3]
        %v7080 = vld [vmem:[%s6558 + $0x18] sm:$0x3]
        %v7081 = vld [vmem:[%s6558 + $0x1a] sm:$0x3]
        %v7091 = vunpack.c.l.s4 1966171168
        %v7092 = vunpack.c.0.s8 %v7091
        %v7093 = vlaneseq
        %v7094 = vshrl.u32 %v7093, 7
        %v7095 = vsub.s32 %v7092, %v7094
        %v7096 = vrot.slane %v7074, %v7095
        %v7097 = vcombine.high %v7096, %v7096
        %v7099 = vunpack.c.l.s4 1966171168
        %v7100 = vunpack.c.0.s8 %v7099
        %v7101 = vlaneseq
        %v7102 = vshrl.u32 %v7101, 7
        %v7103 = vsub.s32 %v7100, %v7102
        %v7104 = vrot.slane %v7075, %v7103
        %v7105 = vcombine.high %v7104, %v7104
        %v7107 = vunpack.c.l.s4 1966171168
        %v7108 = vunpack.c.0.s8 %v7107
        %v7109 = vlaneseq
        %v7110 = vshrl.u32 %v7109, 7
        %v7111 = vsub.s32 %v7108, %v7110
        %v7112 = vrot.slane %v7076, %v7111
        %v7113 = vcombine.high %v7112, %v7112
        %v7115 = vunpack.c.l.s4 1966171168
        %v7116 = vunpack.c.0.s8 %v7115
        %v7117 = vlaneseq
        %v7118 = vshrl.u32 %v7117, 7
        %v7119 = vsub.s32 %v7116, %v7118
        %v7120 = vrot.slane %v7077, %v7119
        %v7121 = vcombine.high %v7120, %v7120
        %v7123 = vunpack.c.l.s4 1966171168
        %v7124 = vunpack.c.0.s8 %v7123
        %v7125 = vlaneseq
        %v7126 = vshrl.u32 %v7125, 7
        %v7127 = vsub.s32 %v7124, %v7126
        %v7128 = vrot.slane %v7078, %v7127
        %v7129 = vcombine.high %v7128, %v7128
        %v7131 = vunpack.c.l.s4 1966171168
        %v7132 = vunpack.c.0.s8 %v7131
        %v7133 = vlaneseq
        %v7134 = vshrl.u32 %v7133, 7
        %v7135 = vsub.s32 %v7132, %v7134
        %v7136 = vrot.slane %v7079, %v7135
        %v7137 = vcombine.high %v7136, %v7136
        %v7139 = vunpack.c.l.s4 1966171168
        %v7140 = vunpack.c.0.s8 %v7139
        %v7141 = vlaneseq
        %v7142 = vshrl.u32 %v7141, 7
        %v7143 = vsub.s32 %v7140, %v7142
        %v7144 = vrot.slane %v7080, %v7143
        %v7145 = vcombine.high %v7144, %v7144
        %v7147 = vunpack.c.l.s4 1966171168
        %v7148 = vunpack.c.0.s8 %v7147
        %v7149 = vlaneseq
        %v7150 = vshrl.u32 %v7149, 7
        %v7151 = vsub.s32 %v7148, %v7150
        %v7152 = vrot.slane %v7081, %v7151
        %v7153 = vcombine.high %v7152, %v7152
        %v7155 = vshrl.u32 %v7096, 16
        %v7157 = vrot.slane %v7155, 7
        %v7158 = vrot.slane %v7157, 1
        %v7160 = vshll.u32 %v7097, 16
        %v7162 = vsel %vm6747, %v7158, %v7160
        %v7164 = vshrl.u32 %v7104, 16
        %v7166 = vrot.slane %v7164, 7
        %v7167 = vrot.slane %v7166, 1
        %v7169 = vshll.u32 %v7105, 16
        %v7171 = vsel %vm6747, %v7167, %v7169
        %v7173 = vshrl.u32 %v7112, 16
        %v7175 = vrot.slane %v7173, 7
        %v7176 = vrot.slane %v7175, 1
        %v7178 = vshll.u32 %v7113, 16
        %v7180 = vsel %vm6747, %v7176, %v7178
        %v7182 = vshrl.u32 %v7120, 16
        %v7184 = vrot.slane %v7182, 7
        %v7185 = vrot.slane %v7184, 1
        %v7187 = vshll.u32 %v7121, 16
        %v7189 = vsel %vm6747, %v7185, %v7187
        %v7191 = vshrl.u32 %v7128, 16
        %v7193 = vrot.slane %v7191, 7
        %v7194 = vrot.slane %v7193, 1
        %v7196 = vshll.u32 %v7129, 16
        %v7198 = vsel %vm6747, %v7194, %v7196
        %v7200 = vshrl.u32 %v7136, 16
        %v7202 = vrot.slane %v7200, 7
        %v7203 = vrot.slane %v7202, 1
        %v7205 = vshll.u32 %v7137, 16
        %v7207 = vsel %vm6747, %v7203, %v7205
        %v7209 = vshrl.u32 %v7144, 16
        %v7211 = vrot.slane %v7209, 7
        %v7212 = vrot.slane %v7211, 1
        %v7214 = vshll.u32 %v7145, 16
        %v7216 = vsel %vm6747, %v7212, %v7214
        %v7218 = vshrl.u32 %v7152, 16
        %v7220 = vrot.slane %v7218, 7
        %v7221 = vrot.slane %v7220, 1
        %v7223 = vshll.u32 %v7153, 16
        %v7225 = vsel %vm6747, %v7221, %v7223
        %v7226 = vcombine.low %v7162, %v7171
        %v7227 = vcombine.low %v7180, %v7189
        %v7228 = vcombine.low %v7198, %v7207
        %v7229 = vcombine.low %v7216, %v7225
        %v7231 = vunpack.c.l.s4 1966171168
        %v7232 = vunpack.c.0.s8 %v7231
        %v7233 = vlaneseq
        %v7234 = vshrl.u32 %v7233, 7
        %v7235 = vsub.s32 %v7232, %v7234
        %v7236 = vrot.slane %v7226, %v7235
        %v7238 = vunpack.c.l.s4 1966171168
        %v7239 = vunpack.c.0.s8 %v7238
        %v7240 = vlaneseq
        %v7241 = vshrl.u32 %v7240, 7
        %v7242 = vsub.s32 %v7239, %v7241
        %v7243 = vrot.slane %v7227, %v7242
        %v7245 = vunpack.c.l.s4 1966171168
        %v7246 = vunpack.c.0.s8 %v7245
        %v7247 = vlaneseq
        %v7248 = vshrl.u32 %v7247, 7
        %v7249 = vsub.s32 %v7246, %v7248
        %v7250 = vrot.slane %v7228, %v7249
        %v7252 = vunpack.c.l.s4 1966171168
        %v7253 = vunpack.c.0.s8 %v7252
        %v7254 = vlaneseq
        %v7255 = vshrl.u32 %v7254, 7
        %v7256 = vsub.s32 %v7253, %v7255
        %v7257 = vrot.slane %v7229, %v7256
        %v7258 = vcombine.low %v7236, %v7243
        %v7259 = vcombine.low %v7250, %v7257
        %v7261 = vunpack.c.l.s4 1966171168
        %v7262 = vunpack.c.0.s8 %v7261
        %v7263 = vlaneseq
        %v7264 = vshrl.u32 %v7263, 7
        %v7265 = vsub.s32 %v7262, %v7264
        %v7266 = vrot.slane %v7258, %v7265
        %v7268 = vunpack.c.l.s4 1966171168
        %v7269 = vunpack.c.0.s8 %v7268
        %v7270 = vlaneseq
        %v7271 = vshrl.u32 %v7270, 7
        %v7272 = vsub.s32 %v7269, %v7271
        %v7273 = vrot.slane %v7259, %v7272
        %v7274 = vcombine.low %v7266, %v7273
        %7276 = vst.msk [vmem:[#allocation5 + $0x10] sm:$0xff] %vm6652, %v7274
        %v7277 = vld [vmem:[%s6558] sm:$0x2]
        %v7278 = vld [vmem:[%s6558 + $0x2] sm:$0x2]
        %v7279 = vld [vmem:[%s6558 + $0x8] sm:$0x2]
        %v7280 = vld [vmem:[%s6558 + $0xa] sm:$0x2]
        %v7281 = vld [vmem:[%s6558 + $0x10] sm:$0x2]
        %v7282 = vld [vmem:[%s6558 + $0x12] sm:$0x2]
        %v7283 = vld [vmem:[%s6558 + $0x18] sm:$0x2]
        %v7284 = vld [vmem:[%s6558 + $0x1a] sm:$0x2]
        %v7294 = vunpack.c.l.s4 1966171168
        %v7295 = vunpack.c.0.s8 %v7294
        %v7296 = vlaneseq
        %v7297 = vshrl.u32 %v7296, 7
        %v7298 = vsub.s32 %v7295, %v7297
        %v7299 = vrot.slane %v7277, %v7298
        %v7300 = vcombine.high %v7299, %v7299
        %v7302 = vunpack.c.l.s4 1966171168
        %v7303 = vunpack.c.0.s8 %v7302
        %v7304 = vlaneseq
        %v7305 = vshrl.u32 %v7304, 7
        %v7306 = vsub.s32 %v7303, %v7305
        %v7307 = vrot.slane %v7278, %v7306
        %v7308 = vcombine.high %v7307, %v7307
        %v7310 = vunpack.c.l.s4 1966171168
        %v7311 = vunpack.c.0.s8 %v7310
        %v7312 = vlaneseq
        %v7313 = vshrl.u32 %v7312, 7
        %v7314 = vsub.s32 %v7311, %v7313
        %v7315 = vrot.slane %v7279, %v7314
        %v7316 = vcombine.high %v7315, %v7315
        %v7318 = vunpack.c.l.s4 1966171168
        %v7319 = vunpack.c.0.s8 %v7318
        %v7320 = vlaneseq
        %v7321 = vshrl.u32 %v7320, 7
        %v7322 = vsub.s32 %v7319, %v7321
        %v7323 = vrot.slane %v7280, %v7322
        %v7324 = vcombine.high %v7323, %v7323
        %v7326 = vunpack.c.l.s4 1966171168
        %v7327 = vunpack.c.0.s8 %v7326
        %v7328 = vlaneseq
        %v7329 = vshrl.u32 %v7328, 7
        %v7330 = vsub.s32 %v7327, %v7329
        %v7331 = vrot.slane %v7281, %v7330
        %v7332 = vcombine.high %v7331, %v7331
        %v7334 = vunpack.c.l.s4 1966171168
        %v7335 = vunpack.c.0.s8 %v7334
        %v7336 = vlaneseq
        %v7337 = vshrl.u32 %v7336, 7
        %v7338 = vsub.s32 %v7335, %v7337
        %v7339 = vrot.slane %v7282, %v7338
        %v7340 = vcombine.high %v7339, %v7339
        %v7342 = vunpack.c.l.s4 1966171168
        %v7343 = vunpack.c.0.s8 %v7342
        %v7344 = vlaneseq
        %v7345 = vshrl.u32 %v7344, 7
        %v7346 = vsub.s32 %v7343, %v7345
        %v7347 = vrot.slane %v7283, %v7346
        %v7348 = vcombine.high %v7347, %v7347
        %v7350 = vunpack.c.l.s4 1966171168
        %v7351 = vunpack.c.0.s8 %v7350
        %v7352 = vlaneseq
        %v7353 = vshrl.u32 %v7352, 7
        %v7354 = vsub.s32 %v7351, %v7353
        %v7355 = vrot.slane %v7284, %v7354
        %v7356 = vcombine.high %v7355, %v7355
        %v7357 = vcombine.low %v7300, %v7308
        %v7358 = vcombine.low %v7316, %v7324
        %v7359 = vcombine.low %v7332, %v7340
        %v7360 = vcombine.low %v7348, %v7356
        %v7362 = vunpack.c.l.s4 1966171168
        %v7363 = vunpack.c.0.s8 %v7362
        %v7364 = vlaneseq
        %v7365 = vshrl.u32 %v7364, 7
        %v7366 = vsub.s32 %v7363, %v7365
        %v7367 = vrot.slane %v7357, %v7366
        %v7369 = vunpack.c.l.s4 1966171168
        %v7370 = vunpack.c.0.s8 %v7369
        %v7371 = vlaneseq
        %v7372 = vshrl.u32 %v7371, 7
        %v7373 = vsub.s32 %v7370, %v7372
        %v7374 = vrot.slane %v7358, %v7373
        %v7376 = vunpack.c.l.s4 1966171168
        %v7377 = vunpack.c.0.s8 %v7376
        %v7378 = vlaneseq
        %v7379 = vshrl.u32 %v7378, 7
        %v7380 = vsub.s32 %v7377, %v7379
        %v7381 = vrot.slane %v7359, %v7380
        %v7383 = vunpack.c.l.s4 1966171168
        %v7384 = vunpack.c.0.s8 %v7383
        %v7385 = vlaneseq
        %v7386 = vshrl.u32 %v7385, 7
        %v7387 = vsub.s32 %v7384, %v7386
        %v7388 = vrot.slane %v7360, %v7387
        %v7389 = vcombine.low %v7367, %v7374
        %v7390 = vcombine.low %v7381, %v7388
        %v7392 = vunpack.c.l.s4 1966171168
        %v7393 = vunpack.c.0.s8 %v7392
        %v7394 = vlaneseq
        %v7395 = vshrl.u32 %v7394, 7
        %v7396 = vsub.s32 %v7393, %v7395
        %v7397 = vrot.slane %v7389, %v7396
        %v7399 = vunpack.c.l.s4 1966171168
        %v7400 = vunpack.c.0.s8 %v7399
        %v7401 = vlaneseq
        %v7402 = vshrl.u32 %v7401, 7
        %v7403 = vsub.s32 %v7400, %v7402
        %v7404 = vrot.slane %v7390, %v7403
        %v7405 = vcombine.low %v7397, %v7404
        %7406 = vrot.lane.b32.xlu0 %v7405, 64
        %v7407 = vpop.permute.xlu0 %7406
        %7409 = vst.msk [vmem:[#allocation5 + $0x10] sm:$0xff] %vm6872, %v7407
        %s7410 = scalar_lea.vmem [#allocation4], 4
        %v7411 = vld [vmem:[%s7410] sm:$0x1]
        %v7412 = vld [vmem:[%s7410 + $0x2] sm:$0x1]
        %v7413 = vld [vmem:[%s7410 + $0x8] sm:$0x1]
        %v7414 = vld [vmem:[%s7410 + $0xa] sm:$0x1]
        %v7415 = vld [vmem:[%s7410 + $0x10] sm:$0x1]
        %v7416 = vld [vmem:[%s7410 + $0x12] sm:$0x1]
        %v7417 = vld [vmem:[%s7410 + $0x18] sm:$0x1]
        %v7418 = vld [vmem:[%s7410 + $0x1a] sm:$0x1]
        %v7427 = vcombine.low %v7411, %v7412
        %v7428 = vcombine.low %v7413, %v7414
        %v7429 = vcombine.low %v7415, %v7416
        %v7430 = vcombine.low %v7417, %v7418
        %v7432 = vunpack.c.l.s4 1966171168
        %v7433 = vunpack.c.0.s8 %v7432
        %v7434 = vlaneseq
        %v7435 = vshrl.u32 %v7434, 7
        %v7436 = vsub.s32 %v7433, %v7435
        %v7437 = vrot.slane %v7427, %v7436
        %v7439 = vunpack.c.l.s4 1966171168
        %v7440 = vunpack.c.0.s8 %v7439
        %v7441 = vlaneseq
        %v7442 = vshrl.u32 %v7441, 7
        %v7443 = vsub.s32 %v7440, %v7442
        %v7444 = vrot.slane %v7428, %v7443
        %v7446 = vunpack.c.l.s4 1966171168
        %v7447 = vunpack.c.0.s8 %v7446
        %v7448 = vlaneseq
        %v7449 = vshrl.u32 %v7448, 7
        %v7450 = vsub.s32 %v7447, %v7449
        %v7451 = vrot.slane %v7429, %v7450
        %v7453 = vunpack.c.l.s4 1966171168
        %v7454 = vunpack.c.0.s8 %v7453
        %v7455 = vlaneseq
        %v7456 = vshrl.u32 %v7455, 7
        %v7457 = vsub.s32 %v7454, %v7456
        %v7458 = vrot.slane %v7430, %v7457
        %v7459 = vcombine.low %v7437, %v7444
        %v7460 = vcombine.low %v7451, %v7458
        %v7462 = vunpack.c.l.s4 1966171168
        %v7463 = vunpack.c.0.s8 %v7462
        %v7464 = vlaneseq
        %v7465 = vshrl.u32 %v7464, 7
        %v7466 = vsub.s32 %v7463, %v7465
        %v7467 = vrot.slane %v7459, %v7466
        %v7469 = vunpack.c.l.s4 1966171168
        %v7470 = vunpack.c.0.s8 %v7469
        %v7471 = vlaneseq
        %v7472 = vshrl.u32 %v7471, 7
        %v7473 = vsub.s32 %v7470, %v7472
        %v7474 = vrot.slane %v7460, %v7473
        %v7475 = vcombine.low %v7467, %v7474
        %7477 = vst.msk [vmem:[#allocation5 + $0x18] sm:$0xff] %vm6652, %v7475
        %v7478 = vld [vmem:[%s7410] sm:$0x3]
        %v7479 = vld [vmem:[%s7410 + $0x2] sm:$0x3]
        %v7480 = vld [vmem:[%s7410 + $0x8] sm:$0x3]
        %v7481 = vld [vmem:[%s7410 + $0xa] sm:$0x3]
        %v7482 = vld [vmem:[%s7410 + $0x10] sm:$0x3]
        %v7483 = vld [vmem:[%s7410 + $0x12] sm:$0x3]
        %v7484 = vld [vmem:[%s7410 + $0x18] sm:$0x3]
        %v7485 = vld [vmem:[%s7410 + $0x1a] sm:$0x3]
        %v7495 = vunpack.c.l.s4 1966171168
        %v7496 = vunpack.c.0.s8 %v7495
        %v7497 = vlaneseq
        %v7498 = vshrl.u32 %v7497, 7
        %v7499 = vsub.s32 %v7496, %v7498
        %v7500 = vrot.slane %v7478, %v7499
        %v7501 = vcombine.high %v7500, %v7500
        %v7503 = vunpack.c.l.s4 1966171168
        %v7504 = vunpack.c.0.s8 %v7503
        %v7505 = vlaneseq
        %v7506 = vshrl.u32 %v7505, 7
        %v7507 = vsub.s32 %v7504, %v7506
        %v7508 = vrot.slane %v7479, %v7507
        %v7509 = vcombine.high %v7508, %v7508
        %v7511 = vunpack.c.l.s4 1966171168
        %v7512 = vunpack.c.0.s8 %v7511
        %v7513 = vlaneseq
        %v7514 = vshrl.u32 %v7513, 7
        %v7515 = vsub.s32 %v7512, %v7514
        %v7516 = vrot.slane %v7480, %v7515
        %v7517 = vcombine.high %v7516, %v7516
        %v7519 = vunpack.c.l.s4 1966171168
        %v7520 = vunpack.c.0.s8 %v7519
        %v7521 = vlaneseq
        %v7522 = vshrl.u32 %v7521, 7
        %v7523 = vsub.s32 %v7520, %v7522
        %v7524 = vrot.slane %v7481, %v7523
        %v7525 = vcombine.high %v7524, %v7524
        %v7527 = vunpack.c.l.s4 1966171168
        %v7528 = vunpack.c.0.s8 %v7527
        %v7529 = vlaneseq
        %v7530 = vshrl.u32 %v7529, 7
        %v7531 = vsub.s32 %v7528, %v7530
        %v7532 = vrot.slane %v7482, %v7531
        %v7533 = vcombine.high %v7532, %v7532
        %v7535 = vunpack.c.l.s4 1966171168
        %v7536 = vunpack.c.0.s8 %v7535
        %v7537 = vlaneseq
        %v7538 = vshrl.u32 %v7537, 7
        %v7539 = vsub.s32 %v7536, %v7538
        %v7540 = vrot.slane %v7483, %v7539
        %v7541 = vcombine.high %v7540, %v7540
        %v7543 = vunpack.c.l.s4 1966171168
        %v7544 = vunpack.c.0.s8 %v7543
        %v7545 = vlaneseq
        %v7546 = vshrl.u32 %v7545, 7
        %v7547 = vsub.s32 %v7544, %v7546
        %v7548 = vrot.slane %v7484, %v7547
        %v7549 = vcombine.high %v7548, %v7548
        %v7551 = vunpack.c.l.s4 1966171168
        %v7552 = vunpack.c.0.s8 %v7551
        %v7553 = vlaneseq
        %v7554 = vshrl.u32 %v7553, 7
        %v7555 = vsub.s32 %v7552, %v7554
        %v7556 = vrot.slane %v7485, %v7555
        %v7557 = vcombine.high %v7556, %v7556
        %v7559 = vshrl.u32 %v7500, 16
        %v7561 = vrot.slane %v7559, 7
        %v7562 = vrot.slane %v7561, 1
        %v7564 = vshll.u32 %v7501, 16
        %v7566 = vsel %vm6747, %v7562, %v7564
        %v7568 = vshrl.u32 %v7508, 16
        %v7570 = vrot.slane %v7568, 7
        %v7571 = vrot.slane %v7570, 1
        %v7573 = vshll.u32 %v7509, 16
        %v7575 = vsel %vm6747, %v7571, %v7573
        %v7577 = vshrl.u32 %v7516, 16
        %v7579 = vrot.slane %v7577, 7
        %v7580 = vrot.slane %v7579, 1
        %v7582 = vshll.u32 %v7517, 16
        %v7584 = vsel %vm6747, %v7580, %v7582
        %v7586 = vshrl.u32 %v7524, 16
        %v7588 = vrot.slane %v7586, 7
        %v7589 = vrot.slane %v7588, 1
        %v7591 = vshll.u32 %v7525, 16
        %v7593 = vsel %vm6747, %v7589, %v7591
        %v7595 = vshrl.u32 %v7532, 16
        %v7597 = vrot.slane %v7595, 7
        %v7598 = vrot.slane %v7597, 1
        %v7600 = vshll.u32 %v7533, 16
        %v7602 = vsel %vm6747, %v7598, %v7600
        %v7604 = vshrl.u32 %v7540, 16
        %v7606 = vrot.slane %v7604, 7
        %v7607 = vrot.slane %v7606, 1
        %v7609 = vshll.u32 %v7541, 16
        %v7611 = vsel %vm6747, %v7607, %v7609
        %v7613 = vshrl.u32 %v7548, 16
        %v7615 = vrot.slane %v7613, 7
        %v7616 = vrot.slane %v7615, 1
        %v7618 = vshll.u32 %v7549, 16
        %v7620 = vsel %vm6747, %v7616, %v7618
        %v7622 = vshrl.u32 %v7556, 16
        %v7624 = vrot.slane %v7622, 7
        %v7625 = vrot.slane %v7624, 1
        %v7627 = vshll.u32 %v7557, 16
        %v7629 = vsel %vm6747, %v7625, %v7627
        %v7630 = vcombine.low %v7566, %v7575
        %v7631 = vcombine.low %v7584, %v7593
        %v7632 = vcombine.low %v7602, %v7611
        %v7633 = vcombine.low %v7620, %v7629
        %v7635 = vunpack.c.l.s4 1966171168
        %v7636 = vunpack.c.0.s8 %v7635
        %v7637 = vlaneseq
        %v7638 = vshrl.u32 %v7637, 7
        %v7639 = vsub.s32 %v7636, %v7638
        %v7640 = vrot.slane %v7630, %v7639
        %v7642 = vunpack.c.l.s4 1966171168
        %v7643 = vunpack.c.0.s8 %v7642
        %v7644 = vlaneseq
        %v7645 = vshrl.u32 %v7644, 7
        %v7646 = vsub.s32 %v7643, %v7645
        %v7647 = vrot.slane %v7631, %v7646
        %v7649 = vunpack.c.l.s4 1966171168
        %v7650 = vunpack.c.0.s8 %v7649
        %v7651 = vlaneseq
        %v7652 = vshrl.u32 %v7651, 7
        %v7653 = vsub.s32 %v7650, %v7652
        %v7654 = vrot.slane %v7632, %v7653
        %v7656 = vunpack.c.l.s4 1966171168
        %v7657 = vunpack.c.0.s8 %v7656
        %v7658 = vlaneseq
        %v7659 = vshrl.u32 %v7658, 7
        %v7660 = vsub.s32 %v7657, %v7659
        %v7661 = vrot.slane %v7633, %v7660
        %v7662 = vcombine.low %v7640, %v7647
        %v7663 = vcombine.low %v7654, %v7661
        %v7665 = vunpack.c.l.s4 1966171168
        %v7666 = vunpack.c.0.s8 %v7665
        %v7667 = vlaneseq
        %v7668 = vshrl.u32 %v7667, 7
        %v7669 = vsub.s32 %v7666, %v7668
        %v7670 = vrot.slane %v7662, %v7669
        %v7672 = vunpack.c.l.s4 1966171168
        %v7673 = vunpack.c.0.s8 %v7672
        %v7674 = vlaneseq
        %v7675 = vshrl.u32 %v7674, 7
        %v7676 = vsub.s32 %v7673, %v7675
        %v7677 = vrot.slane %v7663, %v7676
        %v7678 = vcombine.low %v7670, %v7677
        %7679 = vrot.lane.b32.xlu0 %v7678, 64
        %v7680 = vpop.permute.xlu0 %7679
        %7682 = vst.msk [vmem:[#allocation5 + $0x18] sm:$0xff] %vm6872, %v7680
        %v7683 = vld [vmem:[%s7410] sm:$0x2]
        %v7684 = vld [vmem:[%s7410 + $0x2] sm:$0x2]
        %v7685 = vld [vmem:[%s7410 + $0x8] sm:$0x2]
        %v7686 = vld [vmem:[%s7410 + $0xa] sm:$0x2]
        %v7687 = vld [vmem:[%s7410 + $0x10] sm:$0x2]
        %v7688 = vld [vmem:[%s7410 + $0x12] sm:$0x2]
        %v7689 = vld [vmem:[%s7410 + $0x18] sm:$0x2]
        %v7690 = vld [vmem:[%s7410 + $0x1a] sm:$0x2]
        %v7700 = vunpack.c.l.s4 1966171168
        %v7701 = vunpack.c.0.s8 %v7700
        %v7702 = vlaneseq
        %v7703 = vshrl.u32 %v7702, 7
        %v7704 = vsub.s32 %v7701, %v7703
        %v7705 = vrot.slane %v7683, %v7704
        %v7706 = vcombine.high %v7705, %v7705
        %v7708 = vunpack.c.l.s4 1966171168
        %v7709 = vunpack.c.0.s8 %v7708
        %v7710 = vlaneseq
        %v7711 = vshrl.u32 %v7710, 7
        %v7712 = vsub.s32 %v7709, %v7711
        %v7713 = vrot.slane %v7684, %v7712
        %v7714 = vcombine.high %v7713, %v7713
        %v7716 = vunpack.c.l.s4 1966171168
        %v7717 = vunpack.c.0.s8 %v7716
        %v7718 = vlaneseq
        %v7719 = vshrl.u32 %v7718, 7
        %v7720 = vsub.s32 %v7717, %v7719
        %v7721 = vrot.slane %v7685, %v7720
        %v7722 = vcombine.high %v7721, %v7721
        %v7724 = vunpack.c.l.s4 1966171168
        %v7725 = vunpack.c.0.s8 %v7724
        %v7726 = vlaneseq
        %v7727 = vshrl.u32 %v7726, 7
        %v7728 = vsub.s32 %v7725, %v7727
        %v7729 = vrot.slane %v7686, %v7728
        %v7730 = vcombine.high %v7729, %v7729
        %v7732 = vunpack.c.l.s4 1966171168
        %v7733 = vunpack.c.0.s8 %v7732
        %v7734 = vlaneseq
        %v7735 = vshrl.u32 %v7734, 7
        %v7736 = vsub.s32 %v7733, %v7735
        %v7737 = vrot.slane %v7687, %v7736
        %v7738 = vcombine.high %v7737, %v7737
        %v7740 = vunpack.c.l.s4 1966171168
        %v7741 = vunpack.c.0.s8 %v7740
        %v7742 = vlaneseq
        %v7743 = vshrl.u32 %v7742, 7
        %v7744 = vsub.s32 %v7741, %v7743
        %v7745 = vrot.slane %v7688, %v7744
        %v7746 = vcombine.high %v7745, %v7745
        %v7748 = vunpack.c.l.s4 1966171168
        %v7749 = vunpack.c.0.s8 %v7748
        %v7750 = vlaneseq
        %v7751 = vshrl.u32 %v7750, 7
        %v7752 = vsub.s32 %v7749, %v7751
        %v7753 = vrot.slane %v7689, %v7752
        %v7754 = vcombine.high %v7753, %v7753
        %v7756 = vunpack.c.l.s4 1966171168
        %v7757 = vunpack.c.0.s8 %v7756
        %v7758 = vlaneseq
        %v7759 = vshrl.u32 %v7758, 7
        %v7760 = vsub.s32 %v7757, %v7759
        %v7761 = vrot.slane %v7690, %v7760
        %v7762 = vcombine.high %v7761, %v7761
        %v7763 = vcombine.low %v7706, %v7714
        %v7764 = vcombine.low %v7722, %v7730
        %v7765 = vcombine.low %v7738, %v7746
        %v7766 = vcombine.low %v7754, %v7762
        %v7768 = vunpack.c.l.s4 1966171168
        %v7769 = vunpack.c.0.s8 %v7768
        %v7770 = vlaneseq
        %v7771 = vshrl.u32 %v7770, 7
        %v7772 = vsub.s32 %v7769, %v7771
        %v7773 = vrot.slane %v7763, %v7772
        %v7775 = vunpack.c.l.s4 1966171168
        %v7776 = vunpack.c.0.s8 %v7775
        %v7777 = vlaneseq
        %v7778 = vshrl.u32 %v7777, 7
        %v7779 = vsub.s32 %v7776, %v7778
        %v7780 = vrot.slane %v7764, %v7779
        %v7782 = vunpack.c.l.s4 1966171168
        %v7783 = vunpack.c.0.s8 %v7782
        %v7784 = vlaneseq
        %v7785 = vshrl.u32 %v7784, 7
        %v7786 = vsub.s32 %v7783, %v7785
        %v7787 = vrot.slane %v7765, %v7786
        %v7789 = vunpack.c.l.s4 1966171168
        %v7790 = vunpack.c.0.s8 %v7789
        %v7791 = vlaneseq
        %v7792 = vshrl.u32 %v7791, 7
        %v7793 = vsub.s32 %v7790, %v7792
        %v7794 = vrot.slane %v7766, %v7793
        %v7795 = vcombine.low %v7773, %v7780
        %v7796 = vcombine.low %v7787, %v7794
        %v7798 = vunpack.c.l.s4 1966171168
        %v7799 = vunpack.c.0.s8 %v7798
        %v7800 = vlaneseq
        %v7801 = vshrl.u32 %v7800, 7
        %v7802 = vsub.s32 %v7799, %v7801
        %v7803 = vrot.slane %v7795, %v7802
        %v7805 = vunpack.c.l.s4 1966171168
        %v7806 = vunpack.c.0.s8 %v7805
        %v7807 = vlaneseq
        %v7808 = vshrl.u32 %v7807, 7
        %v7809 = vsub.s32 %v7806, %v7808
        %v7810 = vrot.slane %v7796, %v7809
        %v7811 = vcombine.low %v7803, %v7810
        %7813 = vst.msk [vmem:[#allocation5 + $0x20] sm:$0xff] %vm6652, %v7811
        %v7814 = vld [vmem:[#allocation5] sm:$0xff]
        %v7815 = vld [vmem:[#allocation5 + $0x8] sm:$0xff]
        %v7816 = vld [vmem:[#allocation5 + $0x10] sm:$0xff]
        %v7817 = vld [vmem:[#allocation5 + $0x18] sm:$0xff]
        %v7818 = vld [vmem:[#allocation5 + $0x20] sm:$0xff]
        %v7819 = vld [vmem:[%s5] sm:$0xff]
        %v7820 = vld [vmem:[%s5 + $0x8] sm:$0xff]
        %v7821 = vld [vmem:[%s5 + $0x10] sm:$0xff]
        %v7822 = vld [vmem:[%s5 + $0x18] sm:$0xff]
        %v7823 = vld [vmem:[%s5 + $0x20] sm:$0xff]
        %v7824 = vld [vmem:[%s5 + $0x28] sm:$0xff]
        %v7825 = vld [vmem:[%s5 + $0x30] sm:$0xff]
        %v7826 = vld [vmem:[%s5 + $0x38] sm:$0xff]
        %v7827 = vld [vmem:[%s5 + $0x40] sm:$0xff]
        %v7828 = vld [vmem:[%s5 + $0x48] sm:$0xff]
        %v7829 = vld [vmem:[%s5 + $0x50] sm:$0xff]
        %v7830 = vld [vmem:[%s5 + $0x58] sm:$0xff]
        %v7831 = vld [vmem:[%s5 + $0x60] sm:$0xff]
        %v7832 = vld [vmem:[%s5 + $0x68] sm:$0xff]
        %v7833 = vld [vmem:[%s5 + $0x70] sm:$0xff]
        %v7834 = vld [vmem:[%s5 + $0x78] sm:$0xff]
        %v7835 = vld [vmem:[%s5 + $0x80] sm:$0xff]
        %v7836 = vld [vmem:[%s5 + $0x88] sm:$0xff]
        %v7837 = vld [vmem:[%s5 + $0x90] sm:$0xff]
        %v7838 = vld [vmem:[%s5 + $0x98] sm:$0xff]
        %v7839 = vld [vmem:[%s5 + $0xa0] sm:$0xff]
        %v7840 = vld [vmem:[%s5 + $0xa8] sm:$0xff]
        %v7841 = vld [vmem:[%s5 + $0xb0] sm:$0xff]
        %v7842 = vld [vmem:[%s5 + $0xb8] sm:$0xff]
        %v7843 = vld [vmem:[%s5 + $0xc0] sm:$0xff]
        %v7844 = vld [vmem:[%s5 + $0xc8] sm:$0xff]
        %v7845 = vld [vmem:[%s5 + $0xd0] sm:$0xff]
        %v7846 = vld [vmem:[%s5 + $0xd8] sm:$0xff]
        %v7847 = vld [vmem:[%s5 + $0xe0] sm:$0xff]
        %v7848 = vld [vmem:[%s5 + $0xe8] sm:$0xff]
        %v7849 = vld [vmem:[%s5 + $0xf0] sm:$0xff]
        %v7850 = vld [vmem:[%s5 + $0xf8] sm:$0xff]
        %v7851 = vld [vmem:[%s5 + $0x100] sm:$0xff]
        %v7852 = vld [vmem:[%s5 + $0x108] sm:$0xff]
        %v7853 = vld [vmem:[%s5 + $0x110] sm:$0xff]
        %v7854 = vld [vmem:[%s5 + $0x118] sm:$0xff]
        %v7855 = vld [vmem:[%s5 + $0x120] sm:$0xff]
        %v7856 = vld [vmem:[%s5 + $0x128] sm:$0xff]
        %v7857 = vld [vmem:[%s5 + $0x130] sm:$0xff]
        %v7858 = vld [vmem:[%s5 + $0x138] sm:$0xff]
        %v7859 = vld [vmem:[%s5 + $0x140] sm:$0xff]
        %v7860 = vld [vmem:[%s5 + $0x148] sm:$0xff]
        %v7861 = vld [vmem:[%s5 + $0x150] sm:$0xff]
        %v7862 = vld [vmem:[%s5 + $0x158] sm:$0xff]
        %v7863 = vld [vmem:[%s5 + $0x160] sm:$0xff]
        %v7864 = vld [vmem:[%s5 + $0x168] sm:$0xff]
        %v7865 = vld [vmem:[%s5 + $0x170] sm:$0xff]
        %v7866 = vld [vmem:[%s5 + $0x178] sm:$0xff]
        %v7867 = vld [vmem:[%s5 + $0x180] sm:$0xff]
        %v7868 = vld [vmem:[%s5 + $0x188] sm:$0xff]
        %v7869 = vld [vmem:[%s5 + $0x190] sm:$0xff]
        %v7870 = vld [vmem:[%s5 + $0x198] sm:$0xff]
        %v7871 = vld [vmem:[%s5 + $0x1a0] sm:$0xff]
        %v7872 = vld [vmem:[%s5 + $0x1a8] sm:$0xff]
        %v7873 = vld [vmem:[%s5 + $0x1b0] sm:$0xff]
        %v7874 = vld [vmem:[%s5 + $0x1b8] sm:$0xff]
        %v7875 = vld [vmem:[%s5 + $0x1c0] sm:$0xff]
        %v7876 = vld [vmem:[%s5 + $0x1c8] sm:$0xff]
        %v7877 = vld [vmem:[%s5 + $0x1d0] sm:$0xff]
        %v7878 = vld [vmem:[%s5 + $0x1d8] sm:$0xff]
        %v7879 = vld [vmem:[%s5 + $0x1e0] sm:$0xff]
        %v7880 = vld [vmem:[%s5 + $0x1e8] sm:$0xff]
        %v7881 = vld [vmem:[%s5 + $0x1f0] sm:$0xff]
        %v7882 = vld [vmem:[%s5 + $0x1f8] sm:$0xff]
        %v7883 = vld [vmem:[%s5 + $0x200] sm:$0xff]
        %v7884 = vld [vmem:[%s5 + $0x208] sm:$0xff]
        %v7885 = vld [vmem:[%s5 + $0x210] sm:$0xff]
        %v7886 = vld [vmem:[%s5 + $0x218] sm:$0xff]
        %v7887 = vld [vmem:[%s5 + $0x220] sm:$0xff]
        %v7888 = vld [vmem:[%s5 + $0x228] sm:$0xff]
        %v7889 = vld [vmem:[%s5 + $0x230] sm:$0xff]
        %v7890 = vld [vmem:[%s5 + $0x238] sm:$0xff]
        %v7891 = vld [vmem:[%s5 + $0x240] sm:$0xff]
        %v7892 = vld [vmem:[%s5 + $0x248] sm:$0xff]
        %v7893 = vld [vmem:[%s5 + $0x250] sm:$0xff]
        %v7894 = vld [vmem:[%s5 + $0x258] sm:$0xff]
        %v7895 = vld [vmem:[%s5 + $0x260] sm:$0xff]
        %v7896 = vld [vmem:[%s5 + $0x268] sm:$0xff]
        %v7897 = vld [vmem:[%s5 + $0x270] sm:$0xff]
        %v7898 = vld [vmem:[%s5 + $0x278] sm:$0xff]
        %v7899 = vld [vmem:[%s5 + $0x280] sm:$0xff]
        %v7900 = vld [vmem:[%s5 + $0x288] sm:$0xff]
        %v7901 = vld [vmem:[%s5 + $0x290] sm:$0xff]
        %v7902 = vld [vmem:[%s5 + $0x298] sm:$0xff]
        %v7903 = vld [vmem:[%s5 + $0x2a0] sm:$0xff]
        %v7904 = vld [vmem:[%s5 + $0x2a8] sm:$0xff]
        %v7905 = vld [vmem:[%s5 + $0x2b0] sm:$0xff]
        %v7906 = vld [vmem:[%s5 + $0x2b8] sm:$0xff]
        %v7907 = vld [vmem:[%s5 + $0x2c0] sm:$0xff]
        %v7908 = vld [vmem:[%s5 + $0x2c8] sm:$0xff]
        %v7909 = vld [vmem:[%s5 + $0x2d0] sm:$0xff]
        %v7910 = vld [vmem:[%s5 + $0x2d8] sm:$0xff]
        %v7911 = vld [vmem:[%s5 + $0x2e0] sm:$0xff]
        %v7912 = vld [vmem:[%s5 + $0x2e8] sm:$0xff]
        %v7913 = vld [vmem:[%s5 + $0x2f0] sm:$0xff]
        %v7914 = vld [vmem:[%s5 + $0x2f8] sm:$0xff]
        %v7915 = vld [vmem:[%s5 + $0x300] sm:$0xff]
        %v7916 = vld [vmem:[%s5 + $0x308] sm:$0xff]
        %v7917 = vld [vmem:[%s5 + $0x310] sm:$0xff]
        %v7918 = vld [vmem:[%s5 + $0x318] sm:$0xff]
        %v7919 = vld [vmem:[%s5 + $0x320] sm:$0xff]
        %v7920 = vld [vmem:[%s5 + $0x328] sm:$0xff]
        %v7921 = vld [vmem:[%s5 + $0x330] sm:$0xff]
        %v7922 = vld [vmem:[%s5 + $0x338] sm:$0xff]
        %v7923 = vld [vmem:[%s5 + $0x340] sm:$0xff]
        %v7924 = vld [vmem:[%s5 + $0x348] sm:$0xff]
        %v7925 = vld [vmem:[%s5 + $0x350] sm:$0xff]
        %v7926 = vld [vmem:[%s5 + $0x358] sm:$0xff]
        %v7927 = vld [vmem:[%s5 + $0x360] sm:$0xff]
        %v7928 = vld [vmem:[%s5 + $0x368] sm:$0xff]
        %v7929 = vld [vmem:[%s5 + $0x370] sm:$0xff]
        %v7930 = vld [vmem:[%s5 + $0x378] sm:$0xff]
        %v7931 = vld [vmem:[%s5 + $0x380] sm:$0xff]
        %v7932 = vld [vmem:[%s5 + $0x388] sm:$0xff]
        %v7933 = vld [vmem:[%s5 + $0x390] sm:$0xff]
        %v7934 = vld [vmem:[%s5 + $0x398] sm:$0xff]
        %v7935 = vld [vmem:[%s5 + $0x3a0] sm:$0xff]
        %v7936 = vld [vmem:[%s5 + $0x3a8] sm:$0xff]
        %v7937 = vld [vmem:[%s5 + $0x3b0] sm:$0xff]
        %v7938 = vld [vmem:[%s5 + $0x3b8] sm:$0xff]
        %v7939 = vld [vmem:[%s5 + $0x3c0] sm:$0xff]
        %v7940 = vld [vmem:[%s5 + $0x3c8] sm:$0xff]
        %v7941 = vld [vmem:[%s5 + $0x3d0] sm:$0xff]
        %v7942 = vld [vmem:[%s5 + $0x3d8] sm:$0xff]
        %v7943 = vld [vmem:[%s5 + $0x3e0] sm:$0xff]
        %v7944 = vld [vmem:[%s5 + $0x3e8] sm:$0xff]
        %v7945 = vld [vmem:[%s5 + $0x3f0] sm:$0xff]
        %v7946 = vld [vmem:[%s5 + $0x3f8] sm:$0xff]
        %v7947 = vld [vmem:[%s5 + $0x400] sm:$0xff]
        %v7948 = vld [vmem:[%s5 + $0x408] sm:$0xff]
        %v7949 = vld [vmem:[%s5 + $0x410] sm:$0xff]
        %v7950 = vld [vmem:[%s5 + $0x418] sm:$0xff]
        %v7951 = vld [vmem:[%s5 + $0x420] sm:$0xff]
        %v7952 = vld [vmem:[%s5 + $0x428] sm:$0xff]
        %v7953 = vld [vmem:[%s5 + $0x430] sm:$0xff]
        %v7954 = vld [vmem:[%s5 + $0x438] sm:$0xff]
        %v7955 = vld [vmem:[%s5 + $0x440] sm:$0xff]
        %v7956 = vld [vmem:[%s5 + $0x448] sm:$0xff]
        %v7957 = vld [vmem:[%s5 + $0x450] sm:$0xff]
        %v7958 = vld [vmem:[%s5 + $0x458] sm:$0xff]
        %v7959 = vld [vmem:[%s5 + $0x460] sm:$0xff]
        %v7960 = vld [vmem:[%s5 + $0x468] sm:$0xff]
        %v7961 = vld [vmem:[%s5 + $0x470] sm:$0xff]
        %v7962 = vld [vmem:[%s5 + $0x478] sm:$0xff]
        %v7963 = vld [vmem:[%s6] sm:$0xf]
        %v7965 = vlaneseq
        %v7966 = vshrl.u32 %v7965, 7
        %v7967 = vsub.s32 0, %v7966
        %v7968 = vrot.slane %v7963, %v7967
        %v7969 = vlaneseq
        %v7970 = vshrl.u32 %v7969, 7
        %v7971 = vsub.s32 1, %v7970
        %v7972 = vrot.slane %v7963, %v7971
        %v7973 = vlaneseq
        %v7974 = vshrl.u32 %v7973, 7
        %v7975 = vsub.s32 2, %v7974
        %v7976 = vrot.slane %v7963, %v7975
        %v7977 = vlaneseq
        %v7978 = vshrl.u32 %v7977, 7
        %v7979 = vsub.s32 3, %v7978
        %v7980 = vrot.slane %v7963, %v7979
        %v8129 = vunpack.c.l.b16 %v7819
        %v8130 = vunpack.c.h.b16 %v7819
        %v8131 = vunpack.c.l.b16 %v7820
        %v8132 = vunpack.c.h.b16 %v7820
        %v8133 = vunpack.c.l.b16 %v7821
        %v8134 = vunpack.c.h.b16 %v7821
        %v8135 = vunpack.c.l.b16 %v7822
        %v8136 = vunpack.c.h.b16 %v7822
        %v8137 = vunpack.c.l.b16 %v7823
        %v8138 = vunpack.c.h.b16 %v7823
        %v8139 = vunpack.c.l.b16 %v7824
        %v8140 = vunpack.c.h.b16 %v7824
        %v8141 = vunpack.c.l.b16 %v7825
        %v8142 = vunpack.c.h.b16 %v7825
        %v8143 = vunpack.c.l.b16 %v7826
        %v8144 = vunpack.c.h.b16 %v7826
        %v8145 = vunpack.c.l.b16 %v7827
        %v8146 = vunpack.c.h.b16 %v7827
        %v8147 = vunpack.c.l.b16 %v7828
        %v8148 = vunpack.c.h.b16 %v7828
        %v8149 = vunpack.c.l.b16 %v7829
        %v8150 = vunpack.c.h.b16 %v7829
        %v8151 = vunpack.c.l.b16 %v7830
        %v8152 = vunpack.c.h.b16 %v7830
        %v8153 = vunpack.c.l.b16 %v7831
        %v8154 = vunpack.c.h.b16 %v7831
        %v8155 = vunpack.c.l.b16 %v7832
        %v8156 = vunpack.c.h.b16 %v7832
        %v8157 = vunpack.c.l.b16 %v7833
        %v8158 = vunpack.c.h.b16 %v7833
        %v8159 = vunpack.c.l.b16 %v7834
        %v8160 = vunpack.c.h.b16 %v7834
        %v8161 = vunpack.c.l.b16 %v7835
        %v8162 = vunpack.c.h.b16 %v7835
        %v8163 = vunpack.c.l.b16 %v7836
        %v8164 = vunpack.c.h.b16 %v7836
        %v8165 = vunpack.c.l.b16 %v7837
        %v8166 = vunpack.c.h.b16 %v7837
        %v8167 = vunpack.c.l.b16 %v7838
        %v8168 = vunpack.c.h.b16 %v7838
        %v8169 = vunpack.c.l.b16 %v7839
        %v8170 = vunpack.c.h.b16 %v7839
        %v8171 = vunpack.c.l.b16 %v7840
        %v8172 = vunpack.c.h.b16 %v7840
        %v8173 = vunpack.c.l.b16 %v7841
        %v8174 = vunpack.c.h.b16 %v7841
        %v8175 = vunpack.c.l.b16 %v7842
        %v8176 = vunpack.c.h.b16 %v7842
        %v8177 = vunpack.c.l.b16 %v7843
        %v8178 = vunpack.c.h.b16 %v7843
        %v8179 = vunpack.c.l.b16 %v7844
        %v8180 = vunpack.c.h.b16 %v7844
        %v8181 = vunpack.c.l.b16 %v7845
        %v8182 = vunpack.c.h.b16 %v7845
        %v8183 = vunpack.c.l.b16 %v7846
        %v8184 = vunpack.c.h.b16 %v7846
        %v8185 = vunpack.c.l.b16 %v7847
        %v8186 = vunpack.c.h.b16 %v7847
        %v8187 = vunpack.c.l.b16 %v7848
        %v8188 = vunpack.c.h.b16 %v7848
        %v8189 = vunpack.c.l.b16 %v7849
        %v8190 = vunpack.c.h.b16 %v7849
        %v8191 = vunpack.c.l.b16 %v7850
        %v8192 = vunpack.c.h.b16 %v7850
        %v8193 = vunpack.c.l.b16 %v7851
        %v8194 = vunpack.c.h.b16 %v7851
        %v8195 = vunpack.c.l.b16 %v7852
        %v8196 = vunpack.c.h.b16 %v7852
        %v8197 = vunpack.c.l.b16 %v7853
        %v8198 = vunpack.c.h.b16 %v7853
        %v8199 = vunpack.c.l.b16 %v7854
        %v8200 = vunpack.c.h.b16 %v7854
        %v8201 = vunpack.c.l.b16 %v7855
        %v8202 = vunpack.c.h.b16 %v7855
        %v8203 = vunpack.c.l.b16 %v7856
        %v8204 = vunpack.c.h.b16 %v7856
        %v8205 = vunpack.c.l.b16 %v7857
        %v8206 = vunpack.c.h.b16 %v7857
        %v8207 = vunpack.c.l.b16 %v7858
        %v8208 = vunpack.c.h.b16 %v7858
        %v8209 = vunpack.c.l.b16 %v7859
        %v8210 = vunpack.c.h.b16 %v7859
        %v8211 = vunpack.c.l.b16 %v7860
        %v8212 = vunpack.c.h.b16 %v7860
        %v8213 = vunpack.c.l.b16 %v7861
        %v8214 = vunpack.c.h.b16 %v7861
        %v8215 = vunpack.c.l.b16 %v7862
        %v8216 = vunpack.c.h.b16 %v7862
        %v8217 = vunpack.c.l.b16 %v7863
        %v8218 = vunpack.c.h.b16 %v7863
        %v8219 = vunpack.c.l.b16 %v7864
        %v8220 = vunpack.c.h.b16 %v7864
        %v8221 = vunpack.c.l.b16 %v7865
        %v8222 = vunpack.c.h.b16 %v7865
        %v8223 = vunpack.c.l.b16 %v7866
        %v8224 = vunpack.c.h.b16 %v7866
        %v8225 = vunpack.c.l.b16 %v7867
        %v8226 = vunpack.c.h.b16 %v7867
        %v8227 = vunpack.c.l.b16 %v7868
        %v8228 = vunpack.c.h.b16 %v7868
        %v8229 = vunpack.c.l.b16 %v7869
        %v8230 = vunpack.c.h.b16 %v7869
        %v8231 = vunpack.c.l.b16 %v7870
        %v8232 = vunpack.c.h.b16 %v7870
        %v8233 = vunpack.c.l.b16 %v7871
        %v8234 = vunpack.c.h.b16 %v7871
        %v8235 = vunpack.c.l.b16 %v7872
        %v8236 = vunpack.c.h.b16 %v7872
        %v8237 = vunpack.c.l.b16 %v7873
        %v8238 = vunpack.c.h.b16 %v7873
        %v8239 = vunpack.c.l.b16 %v7874
        %v8240 = vunpack.c.h.b16 %v7874
        %v8241 = vunpack.c.l.b16 %v7875
        %v8242 = vunpack.c.h.b16 %v7875
        %v8243 = vunpack.c.l.b16 %v7876
        %v8244 = vunpack.c.h.b16 %v7876
        %v8245 = vunpack.c.l.b16 %v7877
        %v8246 = vunpack.c.h.b16 %v7877
        %v8247 = vunpack.c.l.b16 %v7878
        %v8248 = vunpack.c.h.b16 %v7878
        %v8249 = vunpack.c.l.b16 %v7879
        %v8250 = vunpack.c.h.b16 %v7879
        %v8251 = vunpack.c.l.b16 %v7880
        %v8252 = vunpack.c.h.b16 %v7880
        %v8253 = vunpack.c.l.b16 %v7881
        %v8254 = vunpack.c.h.b16 %v7881
        %v8255 = vunpack.c.l.b16 %v7882
        %v8256 = vunpack.c.h.b16 %v7882
        %v8257 = vunpack.c.l.b16 %v7883
        %v8258 = vunpack.c.h.b16 %v7883
        %v8259 = vunpack.c.l.b16 %v7884
        %v8260 = vunpack.c.h.b16 %v7884
        %v8261 = vunpack.c.l.b16 %v7885
        %v8262 = vunpack.c.h.b16 %v7885
        %v8263 = vunpack.c.l.b16 %v7886
        %v8264 = vunpack.c.h.b16 %v7886
        %v8265 = vunpack.c.l.b16 %v7887
        %v8266 = vunpack.c.h.b16 %v7887
        %v8267 = vunpack.c.l.b16 %v7888
        %v8268 = vunpack.c.h.b16 %v7888
        %v8269 = vunpack.c.l.b16 %v7889
        %v8270 = vunpack.c.h.b16 %v7889
        %v8271 = vunpack.c.l.b16 %v7890
        %v8272 = vunpack.c.h.b16 %v7890
        %v8273 = vunpack.c.l.b16 %v7891
        %v8274 = vunpack.c.h.b16 %v7891
        %v8275 = vunpack.c.l.b16 %v7892
        %v8276 = vunpack.c.h.b16 %v7892
        %v8277 = vunpack.c.l.b16 %v7893
        %v8278 = vunpack.c.h.b16 %v7893
        %v8279 = vunpack.c.l.b16 %v7894
        %v8280 = vunpack.c.h.b16 %v7894
        %v8281 = vunpack.c.l.b16 %v7895
        %v8282 = vunpack.c.h.b16 %v7895
        %v8283 = vunpack.c.l.b16 %v7896
        %v8284 = vunpack.c.h.b16 %v7896
        %v8285 = vunpack.c.l.b16 %v7897
        %v8286 = vunpack.c.h.b16 %v7897
        %v8287 = vunpack.c.l.b16 %v7898
        %v8288 = vunpack.c.h.b16 %v7898
        %v8289 = vunpack.c.l.b16 %v7899
        %v8290 = vunpack.c.h.b16 %v7899
        %v8291 = vunpack.c.l.b16 %v7900
        %v8292 = vunpack.c.h.b16 %v7900
        %v8293 = vunpack.c.l.b16 %v7901
        %v8294 = vunpack.c.h.b16 %v7901
        %v8295 = vunpack.c.l.b16 %v7902
        %v8296 = vunpack.c.h.b16 %v7902
        %v8297 = vunpack.c.l.b16 %v7903
        %v8298 = vunpack.c.h.b16 %v7903
        %v8299 = vunpack.c.l.b16 %v7904
        %v8300 = vunpack.c.h.b16 %v7904
        %v8301 = vunpack.c.l.b16 %v7905
        %v8302 = vunpack.c.h.b16 %v7905
        %v8303 = vunpack.c.l.b16 %v7906
        %v8304 = vunpack.c.h.b16 %v7906
        %v8305 = vunpack.c.l.b16 %v7907
        %v8306 = vunpack.c.h.b16 %v7907
        %v8307 = vunpack.c.l.b16 %v7908
        %v8308 = vunpack.c.h.b16 %v7908
        %v8309 = vunpack.c.l.b16 %v7909
        %v8310 = vunpack.c.h.b16 %v7909
        %v8311 = vunpack.c.l.b16 %v7910
        %v8312 = vunpack.c.h.b16 %v7910
        %v8313 = vunpack.c.l.b16 %v7911
        %v8314 = vunpack.c.h.b16 %v7911
        %v8315 = vunpack.c.l.b16 %v7912
        %v8316 = vunpack.c.h.b16 %v7912
        %v8317 = vunpack.c.l.b16 %v7913
        %v8318 = vunpack.c.h.b16 %v7913
        %v8319 = vunpack.c.l.b16 %v7914
        %v8320 = vunpack.c.h.b16 %v7914
        %v8321 = vunpack.c.l.b16 %v7915
        %v8322 = vunpack.c.h.b16 %v7915
        %v8323 = vunpack.c.l.b16 %v7916
        %v8324 = vunpack.c.h.b16 %v7916
        %v8325 = vunpack.c.l.b16 %v7917
        %v8326 = vunpack.c.h.b16 %v7917
        %v8327 = vunpack.c.l.b16 %v7918
        %v8328 = vunpack.c.h.b16 %v7918
        %v8329 = vunpack.c.l.b16 %v7919
        %v8330 = vunpack.c.h.b16 %v7919
        %v8331 = vunpack.c.l.b16 %v7920
        %v8332 = vunpack.c.h.b16 %v7920
        %v8333 = vunpack.c.l.b16 %v7921
        %v8334 = vunpack.c.h.b16 %v7921
        %v8335 = vunpack.c.l.b16 %v7922
        %v8336 = vunpack.c.h.b16 %v7922
        %v8337 = vunpack.c.l.b16 %v7923
        %v8338 = vunpack.c.h.b16 %v7923
        %v8339 = vunpack.c.l.b16 %v7924
        %v8340 = vunpack.c.h.b16 %v7924
        %v8341 = vunpack.c.l.b16 %v7925
        %v8342 = vunpack.c.h.b16 %v7925
        %v8343 = vunpack.c.l.b16 %v7926
        %v8344 = vunpack.c.h.b16 %v7926
        %v8345 = vunpack.c.l.b16 %v7927
        %v8346 = vunpack.c.h.b16 %v7927
        %v8347 = vunpack.c.l.b16 %v7928
        %v8348 = vunpack.c.h.b16 %v7928
        %v8349 = vunpack.c.l.b16 %v7929
        %v8350 = vunpack.c.h.b16 %v7929
        %v8351 = vunpack.c.l.b16 %v7930
        %v8352 = vunpack.c.h.b16 %v7930
        %v8353 = vunpack.c.l.b16 %v7931
        %v8354 = vunpack.c.h.b16 %v7931
        %v8355 = vunpack.c.l.b16 %v7932
        %v8356 = vunpack.c.h.b16 %v7932
        %v8357 = vunpack.c.l.b16 %v7933
        %v8358 = vunpack.c.h.b16 %v7933
        %v8359 = vunpack.c.l.b16 %v7934
        %v8360 = vunpack.c.h.b16 %v7934
        %v8361 = vunpack.c.l.b16 %v7935
        %v8362 = vunpack.c.h.b16 %v7935
        %v8363 = vunpack.c.l.b16 %v7936
        %v8364 = vunpack.c.h.b16 %v7936
        %v8365 = vunpack.c.l.b16 %v7937
        %v8366 = vunpack.c.h.b16 %v7937
        %v8367 = vunpack.c.l.b16 %v7938
        %v8368 = vunpack.c.h.b16 %v7938
        %v8369 = vunpack.c.l.b16 %v7939
        %v8370 = vunpack.c.h.b16 %v7939
        %v8371 = vunpack.c.l.b16 %v7940
        %v8372 = vunpack.c.h.b16 %v7940
        %v8373 = vunpack.c.l.b16 %v7941
        %v8374 = vunpack.c.h.b16 %v7941
        %v8375 = vunpack.c.l.b16 %v7942
        %v8376 = vunpack.c.h.b16 %v7942
        %v8377 = vunpack.c.l.b16 %v7943
        %v8378 = vunpack.c.h.b16 %v7943
        %v8379 = vunpack.c.l.b16 %v7944
        %v8380 = vunpack.c.h.b16 %v7944
        %v8381 = vunpack.c.l.b16 %v7945
        %v8382 = vunpack.c.h.b16 %v7945
        %v8383 = vunpack.c.l.b16 %v7946
        %v8384 = vunpack.c.h.b16 %v7946
        %v8385 = vunpack.c.l.b16 %v7947
        %v8386 = vunpack.c.h.b16 %v7947
        %v8387 = vunpack.c.l.b16 %v7948
        %v8388 = vunpack.c.h.b16 %v7948
        %v8389 = vunpack.c.l.b16 %v7949
        %v8390 = vunpack.c.h.b16 %v7949
        %v8391 = vunpack.c.l.b16 %v7950
        %v8392 = vunpack.c.h.b16 %v7950
        %v8393 = vunpack.c.l.b16 %v7951
        %v8394 = vunpack.c.h.b16 %v7951
        %v8395 = vunpack.c.l.b16 %v7952
        %v8396 = vunpack.c.h.b16 %v7952
        %v8397 = vunpack.c.l.b16 %v7953
        %v8398 = vunpack.c.h.b16 %v7953
        %v8399 = vunpack.c.l.b16 %v7954
        %v8400 = vunpack.c.h.b16 %v7954
        %v8401 = vunpack.c.l.b16 %v7955
        %v8402 = vunpack.c.h.b16 %v7955
        %v8403 = vunpack.c.l.b16 %v7956
        %v8404 = vunpack.c.h.b16 %v7956
        %v8405 = vunpack.c.l.b16 %v7957
        %v8406 = vunpack.c.h.b16 %v7957
        %v8407 = vunpack.c.l.b16 %v7958
        %v8408 = vunpack.c.h.b16 %v7958
        %v8409 = vunpack.c.l.b16 %v7959
        %v8410 = vunpack.c.h.b16 %v7959
        %v8411 = vunpack.c.l.b16 %v7960
        %v8412 = vunpack.c.h.b16 %v7960
        %v8413 = vunpack.c.l.b16 %v7961
        %v8414 = vunpack.c.h.b16 %v7961
        %v8415 = vunpack.c.l.b16 %v7962
        %v8416 = vunpack.c.h.b16 %v7962
        %v8417 = vpack.c.b16 %v8133, %v8129
        %v8418 = vpack.c.b16 %v8134, %v8130
        %v8419 = vpack.c.b16 %v8135, %v8131
        %v8420 = vpack.c.b16 %v8136, %v8132
        %v8421 = vpack.c.b16 %v8141, %v8137
        %v8422 = vpack.c.b16 %v8142, %v8138
        %v8423 = vpack.c.b16 %v8143, %v8139
        %v8424 = vpack.c.b16 %v8144, %v8140
        %v8425 = vpack.c.b16 %v8149, %v8145
        %v8426 = vpack.c.b16 %v8150, %v8146
        %v8427 = vpack.c.b16 %v8151, %v8147
        %v8428 = vpack.c.b16 %v8152, %v8148
        %v8429 = vpack.c.b16 %v8157, %v8153
        %v8430 = vpack.c.b16 %v8158, %v8154
        %v8431 = vpack.c.b16 %v8159, %v8155
        %v8432 = vpack.c.b16 %v8160, %v8156
        %v8433 = vpack.c.b16 %v8165, %v8161
        %v8434 = vpack.c.b16 %v8166, %v8162
        %v8435 = vpack.c.b16 %v8167, %v8163
        %v8436 = vpack.c.b16 %v8168, %v8164
        %v8437 = vpack.c.b16 %v8173, %v8169
        %v8438 = vpack.c.b16 %v8174, %v8170
        %v8439 = vpack.c.b16 %v8175, %v8171
        %v8440 = vpack.c.b16 %v8176, %v8172
        %v8441 = vpack.c.b16 %v8181, %v8177
        %v8442 = vpack.c.b16 %v8182, %v8178
        %v8443 = vpack.c.b16 %v8183, %v8179
        %v8444 = vpack.c.b16 %v8184, %v8180
        %v8445 = vpack.c.b16 %v8189, %v8185
        %v8446 = vpack.c.b16 %v8190, %v8186
        %v8447 = vpack.c.b16 %v8191, %v8187
        %v8448 = vpack.c.b16 %v8192, %v8188
        %v8449 = vpack.c.b16 %v8197, %v8193
        %v8450 = vpack.c.b16 %v8198, %v8194
        %v8451 = vpack.c.b16 %v8199, %v8195
        %v8452 = vpack.c.b16 %v8200, %v8196
        %v8453 = vpack.c.b16 %v8205, %v8201
        %v8454 = vpack.c.b16 %v8206, %v8202
        %v8455 = vpack.c.b16 %v8207, %v8203
        %v8456 = vpack.c.b16 %v8208, %v8204
        %v8457 = vpack.c.b16 %v8213, %v8209
        %v8458 = vpack.c.b16 %v8214, %v8210
        %v8459 = vpack.c.b16 %v8215, %v8211
        %v8460 = vpack.c.b16 %v8216, %v8212
        %v8461 = vpack.c.b16 %v8221, %v8217
        %v8462 = vpack.c.b16 %v8222, %v8218
        %v8463 = vpack.c.b16 %v8223, %v8219
        %v8464 = vpack.c.b16 %v8224, %v8220
        %v8465 = vpack.c.b16 %v8229, %v8225
        %v8466 = vpack.c.b16 %v8230, %v8226
        %v8467 = vpack.c.b16 %v8231, %v8227
        %v8468 = vpack.c.b16 %v8232, %v8228
        %v8469 = vpack.c.b16 %v8237, %v8233
        %v8470 = vpack.c.b16 %v8238, %v8234
        %v8471 = vpack.c.b16 %v8239, %v8235
        %v8472 = vpack.c.b16 %v8240, %v8236
        %v8473 = vpack.c.b16 %v8245, %v8241
        %v8474 = vpack.c.b16 %v8246, %v8242
        %v8475 = vpack.c.b16 %v8247, %v8243
        %v8476 = vpack.c.b16 %v8248, %v8244
        %v8477 = vpack.c.b16 %v8253, %v8249
        %v8478 = vpack.c.b16 %v8254, %v8250
        %v8479 = vpack.c.b16 %v8255, %v8251
        %v8480 = vpack.c.b16 %v8256, %v8252
        %v8481 = vpack.c.b16 %v8261, %v8257
        %v8482 = vpack.c.b16 %v8262, %v8258
        %v8483 = vpack.c.b16 %v8263, %v8259
        %v8484 = vpack.c.b16 %v8264, %v8260
        %v8485 = vpack.c.b16 %v8269, %v8265
        %v8486 = vpack.c.b16 %v8270, %v8266
        %v8487 = vpack.c.b16 %v8271, %v8267
        %v8488 = vpack.c.b16 %v8272, %v8268
        %v8489 = vpack.c.b16 %v8277, %v8273
        %v8490 = vpack.c.b16 %v8278, %v8274
        %v8491 = vpack.c.b16 %v8279, %v8275
        %v8492 = vpack.c.b16 %v8280, %v8276
        %v8493 = vpack.c.b16 %v8285, %v8281
        %v8494 = vpack.c.b16 %v8286, %v8282
        %v8495 = vpack.c.b16 %v8287, %v8283
        %v8496 = vpack.c.b16 %v8288, %v8284
        %v8497 = vpack.c.b16 %v8293, %v8289
        %v8498 = vpack.c.b16 %v8294, %v8290
        %v8499 = vpack.c.b16 %v8295, %v8291
        %v8500 = vpack.c.b16 %v8296, %v8292
        %v8501 = vpack.c.b16 %v8301, %v8297
        %v8502 = vpack.c.b16 %v8302, %v8298
        %v8503 = vpack.c.b16 %v8303, %v8299
        %v8504 = vpack.c.b16 %v8304, %v8300
        %v8505 = vpack.c.b16 %v8309, %v8305
        %v8506 = vpack.c.b16 %v8310, %v8306
        %v8507 = vpack.c.b16 %v8311, %v8307
        %v8508 = vpack.c.b16 %v8312, %v8308
        %v8509 = vpack.c.b16 %v8317, %v8313
        %v8510 = vpack.c.b16 %v8318, %v8314
        %v8511 = vpack.c.b16 %v8319, %v8315
        %v8512 = vpack.c.b16 %v8320, %v8316
        %v8513 = vpack.c.b16 %v8325, %v8321
        %v8514 = vpack.c.b16 %v8326, %v8322
        %v8515 = vpack.c.b16 %v8327, %v8323
        %v8516 = vpack.c.b16 %v8328, %v8324
        %v8517 = vpack.c.b16 %v8333, %v8329
        %v8518 = vpack.c.b16 %v8334, %v8330
        %v8519 = vpack.c.b16 %v8335, %v8331
        %v8520 = vpack.c.b16 %v8336, %v8332
        %v8521 = vpack.c.b16 %v8341, %v8337
        %v8522 = vpack.c.b16 %v8342, %v8338
        %v8523 = vpack.c.b16 %v8343, %v8339
        %v8524 = vpack.c.b16 %v8344, %v8340
        %v8525 = vpack.c.b16 %v8349, %v8345
        %v8526 = vpack.c.b16 %v8350, %v8346
        %v8527 = vpack.c.b16 %v8351, %v8347
        %v8528 = vpack.c.b16 %v8352, %v8348
        %v8529 = vpack.c.b16 %v8357, %v8353
        %v8530 = vpack.c.b16 %v8358, %v8354
        %v8531 = vpack.c.b16 %v8359, %v8355
        %v8532 = vpack.c.b16 %v8360, %v8356
        %v8533 = vpack.c.b16 %v8365, %v8361
        %v8534 = vpack.c.b16 %v8366, %v8362
        %v8535 = vpack.c.b16 %v8367, %v8363
        %v8536 = vpack.c.b16 %v8368, %v8364
        %v8537 = vpack.c.b16 %v8373, %v8369
        %v8538 = vpack.c.b16 %v8374, %v8370
        %v8539 = vpack.c.b16 %v8375, %v8371
        %v8540 = vpack.c.b16 %v8376, %v8372
        %v8541 = vpack.c.b16 %v8381, %v8377
        %v8542 = vpack.c.b16 %v8382, %v8378
        %v8543 = vpack.c.b16 %v8383, %v8379
        %v8544 = vpack.c.b16 %v8384, %v8380
        %v8545 = vpack.c.b16 %v8389, %v8385
        %v8546 = vpack.c.b16 %v8390, %v8386
        %v8547 = vpack.c.b16 %v8391, %v8387
        %v8548 = vpack.c.b16 %v8392, %v8388
        %v8549 = vpack.c.b16 %v8397, %v8393
        %v8550 = vpack.c.b16 %v8398, %v8394
        %v8551 = vpack.c.b16 %v8399, %v8395
        %v8552 = vpack.c.b16 %v8400, %v8396
        %v8553 = vpack.c.b16 %v8405, %v8401
        %v8554 = vpack.c.b16 %v8406, %v8402
        %v8555 = vpack.c.b16 %v8407, %v8403
        %v8556 = vpack.c.b16 %v8408, %v8404
        %v8557 = vpack.c.b16 %v8413, %v8409
        %v8558 = vpack.c.b16 %v8414, %v8410
        %v8559 = vpack.c.b16 %v8415, %v8411
        %v8560 = vpack.c.b16 %v8416, %v8412
        %v8706 = vsel %vm6652, %v7818, 0
        %8708 = vmatprep.subr.bf16.mxu0 %v8418
        %8709 = vmatpush1.bf16.msra.mxu0 %v8417
        %8710 = vmatprep.subr.bf16.mxu0 %v8422
        %8711 = vmatpush1.bf16.msra.mxu0 %v8421
        %8712 = vmatprep.subr.bf16.mxu0 %v8426
        %8713 = vmatpush1.bf16.msra.mxu0 %v8425
        %8714 = vmatprep.subr.bf16.mxu0 %v8430
        %8715 = vmatpush1.bf16.msra.mxu0 %v8429
        %8716 = vmatprep.subr.bf16.mxu0 %v8434
        %8717 = vmatpush1.bf16.msra.mxu0 %v8433
        %8718 = vmatprep.subr.bf16.mxu0 %v8438
        %8719 = vmatpush1.bf16.msra.mxu0 %v8437
        %8720 = vmatprep.subr.bf16.mxu0 %v8442
        %8721 = vmatpush1.bf16.msra.mxu0 %v8441
        %8722 = vmatprep.subr.bf16.mxu0 %v8446
        %8723 = vmatpush1.bf16.msra.mxu0 %v8445
        %8724 = vmatprep.subr.bf16.mxu0 %v8450
        %8725 = vmatpush1.bf16.msra.mxu0 %v8449
        %8726 = vmatprep.subr.bf16.mxu0 %v8454
        %8727 = vmatpush1.bf16.msra.mxu0 %v8453
        %8728 = vmatprep.subr.bf16.mxu0 %v8458
        %8729 = vmatpush1.bf16.msra.mxu0 %v8457
        %8730 = vmatprep.subr.bf16.mxu0 %v8462
        %8731 = vmatpush1.bf16.msra.mxu0 %v8461
        %8732 = vmatprep.subr.bf16.mxu0 %v8466
        %8733 = vmatpush1.bf16.msra.mxu0 %v8465
        %8734 = vmatprep.subr.bf16.mxu0 %v8470
        %8735 = vmatpush1.bf16.msra.mxu0 %v8469
        %8736 = vmatprep.subr.bf16.mxu0 %v8474
        %8737 = vmatpush1.bf16.msra.mxu0 %v8473
        %8738 = vmatprep.subr.bf16.mxu0 %v8478
        %8739 = vmatpush1.bf16.msra.mxu0 %v8477
        %8740 = vmatprep.mubr.bf16.mxu0 %v7815
        %8741 = vmatmul.mubr.bf16.gmra.mrb[0].mxu0 %v7814
        %v8742 = vpop.f32.mrb[0].mxu0
        %v8743 = vadd.f32 %v7968, %v8742
        %v8744 = vpop.f32.mrb[0].mxu0
        %v8745 = vadd.f32 %v7972, %v8744
        %v8746 = vpop.f32.mrb[0].mxu0
        %v8747 = vadd.f32 %v7968, %v8746
        %v8748 = vpop.f32.mrb[0].mxu0
        %v8749 = vadd.f32 %v7972, %v8748
        %8750 = vdwg.mxu0
        %8751 = vmatprep.subr.bf16.mxu0 %v8482
        %8752 = vmatpush1.bf16.msra.mxu0 %v8481
        %8753 = vmatprep.subr.bf16.mxu0 %v8486
        %8754 = vmatpush1.bf16.msra.mxu0 %v8485
        %8755 = vmatprep.subr.bf16.mxu0 %v8490
        %8756 = vmatpush1.bf16.msra.mxu0 %v8489
        %8757 = vmatprep.subr.bf16.mxu0 %v8494
        %8758 = vmatpush1.bf16.msra.mxu0 %v8493
        %8759 = vmatprep.subr.bf16.mxu0 %v8498
        %8760 = vmatpush1.bf16.msra.mxu0 %v8497
        %8761 = vmatprep.subr.bf16.mxu0 %v8502
        %8762 = vmatpush1.bf16.msra.mxu0 %v8501
        %8763 = vmatprep.subr.bf16.mxu0 %v8506
        %8764 = vmatpush1.bf16.msra.mxu0 %v8505
        %8765 = vmatprep.subr.bf16.mxu0 %v8510
        %8766 = vmatpush1.bf16.msra.mxu0 %v8509
        %8767 = vmatprep.subr.bf16.mxu0 %v8514
        %8768 = vmatpush1.bf16.msra.mxu0 %v8513
        %8769 = vmatprep.subr.bf16.mxu0 %v8518
        %8770 = vmatpush1.bf16.msra.mxu0 %v8517
        %8771 = vmatprep.subr.bf16.mxu0 %v8522
        %8772 = vmatpush1.bf16.msra.mxu0 %v8521
        %8773 = vmatprep.subr.bf16.mxu0 %v8526
        %8774 = vmatpush1.bf16.msra.mxu0 %v8525
        %8775 = vmatprep.subr.bf16.mxu0 %v8530
        %8776 = vmatpush1.bf16.msra.mxu0 %v8529
        %8777 = vmatprep.subr.bf16.mxu0 %v8534
        %8778 = vmatpush1.bf16.msra.mxu0 %v8533
        %8779 = vmatprep.subr.bf16.mxu0 %v8538
        %8780 = vmatpush1.bf16.msra.mxu0 %v8537
        %8781 = vmatprep.subr.bf16.mxu0 %v8542
        %8782 = vmatpush1.bf16.msra.mxu0 %v8541
        %8783 = vmatprep.mubr.bf16.mxu0 %v7817
        %8784 = vmatmul.mubr.bf16.gmra.mrb[0].mxu0 %v7816
        %v8785 = vpop.f32.mrb[0].mxu0
        %v8786 = vadd.f32 %v8743, %v8785
        %v8787 = vpop.f32.mrb[0].mxu0
        %v8788 = vadd.f32 %v8745, %v8787
        %v8789 = vpop.f32.mrb[0].mxu0
        %v8790 = vadd.f32 %v8747, %v8789
        %v8791 = vpop.f32.mrb[0].mxu0
        %v8792 = vadd.f32 %v8749, %v8791
        %8793 = vdwg.mxu0
        %8794 = vmatprep.subr.bf16.mxu0 %v8546
        %8795 = vmatpush1.bf16.msra.mxu0 %v8545
        %8796 = vmatprep.subr.bf16.mxu0 %v8550
        %8797 = vmatpush1.bf16.msra.mxu0 %v8549
        %8798 = vmatprep.subr.bf16.mxu0 %v8554
        %8799 = vmatpush1.bf16.msra.mxu0 %v8553
        %8800 = vmatprep.subr.bf16.mxu0 %v8558
        %8801 = vmatpush1.bf16.msra.mxu0 %v8557
        %8802 = vmatprep.subr.bf16.mxu0 0
        %8803 = vmatpush1.bf16.msra.mxu0 0
        %8804 = vmatprep.subr.bf16.mxu0 0
        %8805 = vmatpush1.bf16.msra.mxu0 0
        %8806 = vmatprep.subr.bf16.mxu0 0
        %8807 = vmatpush1.bf16.msra.mxu0 0
        %8808 = vmatprep.subr.bf16.mxu0 0
        %8809 = vmatpush1.bf16.msra.mxu0 0
        %8810 = vmatprep.subr.bf16.mxu0 0
        %8811 = vmatpush1.bf16.msra.mxu0 0
        %8812 = vmatprep.subr.bf16.mxu0 0
        %8813 = vmatpush1.bf16.msra.mxu0 0
        %8814 = vmatprep.subr.bf16.mxu0 0
        %8815 = vmatpush1.bf16.msra.mxu0 0
        %8816 = vmatprep.subr.bf16.mxu0 0
        %8817 = vmatpush1.bf16.msra.mxu0 0
        %8818 = vmatprep.subr.bf16.mxu0 0
        %8819 = vmatpush1.bf16.msra.mxu0 0
        %8820 = vmatprep.subr.bf16.mxu0 0
        %8821 = vmatpush1.bf16.msra.mxu0 0
        %8822 = vmatprep.subr.bf16.mxu0 0
        %8823 = vmatpush1.bf16.msra.mxu0 0
        %8824 = vmatprep.subr.bf16.mxu0 0
        %8825 = vmatpush1.bf16.msra.mxu0 0
        %8826 = vmatprep.mubr.bf16.mxu0 0
        %8827 = vmatmul.mubr.bf16.gmra.mrb[0].mxu0 %v8706
        %v8828 = vpop.f32.mrb[0].mxu0
        %v8829 = vadd.f32 %v8786, %v8828
        %v8830 = vpop.f32.mrb[0].mxu0
        %v8831 = vadd.f32 %v8788, %v8830
        %v8832 = vpop.f32.mrb[0].mxu0
        %v8833 = vadd.f32 %v8790, %v8832
        %v8834 = vpop.f32.mrb[0].mxu0
        %v8835 = vadd.f32 %v8792, %v8834
        %8836 = vdwg.mxu0
        %8837 = vmatprep.subr.bf16.mxu0 %v8420
        %8838 = vmatpush1.bf16.msra.mxu0 %v8419
        %8839 = vmatprep.subr.bf16.mxu0 %v8424
        %8840 = vmatpush1.bf16.msra.mxu0 %v8423
        %8841 = vmatprep.subr.bf16.mxu0 %v8428
        %8842 = vmatpush1.bf16.msra.mxu0 %v8427
        %8843 = vmatprep.subr.bf16.mxu0 %v8432
        %8844 = vmatpush1.bf16.msra.mxu0 %v8431
        %8845 = vmatprep.subr.bf16.mxu0 %v8436
        %8846 = vmatpush1.bf16.msra.mxu0 %v8435
        %8847 = vmatprep.subr.bf16.mxu0 %v8440
        %8848 = vmatpush1.bf16.msra.mxu0 %v8439
        %8849 = vmatprep.subr.bf16.mxu0 %v8444
        %8850 = vmatpush1.bf16.msra.mxu0 %v8443
        %8851 = vmatprep.subr.bf16.mxu0 %v8448
        %8852 = vmatpush1.bf16.msra.mxu0 %v8447
        %8853 = vmatprep.subr.bf16.mxu0 %v8452
        %8854 = vmatpush1.bf16.msra.mxu0 %v8451
        %8855 = vmatprep.subr.bf16.mxu0 %v8456
        %8856 = vmatpush1.bf16.msra.mxu0 %v8455
        %8857 = vmatprep.subr.bf16.mxu0 %v8460
        %8858 = vmatpush1.bf16.msra.mxu0 %v8459
        %8859 = vmatprep.subr.bf16.mxu0 %v8464
        %8860 = vmatpush1.bf16.msra.mxu0 %v8463
        %8861 = vmatprep.subr.bf16.mxu0 %v8468
        %8862 = vmatpush1.bf16.msra.mxu0 %v8467
        %8863 = vmatprep.subr.bf16.mxu0 %v8472
        %8864 = vmatpush1.bf16.msra.mxu0 %v8471
        %8865 = vmatprep.subr.bf16.mxu0 %v8476
        %8866 = vmatpush1.bf16.msra.mxu0 %v8475
        %8867 = vmatprep.subr.bf16.mxu0 %v8480
        %8868 = vmatpush1.bf16.msra.mxu0 %v8479
        %8869 = vmatprep.mubr.bf16.mxu0 %v7815
        %8870 = vmatmul.mubr.bf16.gmra.mrb[0].mxu0 %v7814
        %v8871 = vpop.f32.mrb[0].mxu0
        %v8872 = vadd.f32 %v7976, %v8871
        %v8873 = vpop.f32.mrb[0].mxu0
        %v8874 = vadd.f32 %v7980, %v8873
        %v8875 = vpop.f32.mrb[0].mxu0
        %v8876 = vadd.f32 %v7976, %v8875
        %v8877 = vpop.f32.mrb[0].mxu0
        %v8878 = vadd.f32 %v7980, %v8877
        %8879 = vdwg.mxu0
        %8880 = vmatprep.subr.bf16.mxu0 %v8484
        %8881 = vmatpush1.bf16.msra.mxu0 %v8483
        %8882 = vmatprep.subr.bf16.mxu0 %v8488
        %8883 = vmatpush1.bf16.msra.mxu0 %v8487
        %8884 = vmatprep.subr.bf16.mxu0 %v8492
        %8885 = vmatpush1.bf16.msra.mxu0 %v8491
        %8886 = vmatprep.subr.bf16.mxu0 %v8496
        %8887 = vmatpush1.bf16.msra.mxu0 %v8495
        %8888 = vmatprep.subr.bf16.mxu0 %v8500
        %8889 = vmatpush1.bf16.msra.mxu0 %v8499
        %8890 = vmatprep.subr.bf16.mxu0 %v8504
        %8891 = vmatpush1.bf16.msra.mxu0 %v8503
        %8892 = vmatprep.subr.bf16.mxu0 %v8508
        %8893 = vmatpush1.bf16.msra.mxu0 %v8507
        %8894 = vmatprep.subr.bf16.mxu0 %v8512
        %8895 = vmatpush1.bf16.msra.mxu0 %v8511
        %8896 = vmatprep.subr.bf16.mxu0 %v8516
        %8897 = vmatpush1.bf16.msra.mxu0 %v8515
        %8898 = vmatprep.subr.bf16.mxu0 %v8520
        %8899 = vmatpush1.bf16.msra.mxu0 %v8519
        %8900 = vmatprep.subr.bf16.mxu0 %v8524
        %8901 = vmatpush1.bf16.msra.mxu0 %v8523
        %8902 = vmatprep.subr.bf16.mxu0 %v8528
        %8903 = vmatpush1.bf16.msra.mxu0 %v8527
        %8904 = vmatprep.subr.bf16.mxu0 %v8532
        %8905 = vmatpush1.bf16.msra.mxu0 %v8531
        %8906 = vmatprep.subr.bf16.mxu0 %v8536
        %8907 = vmatpush1.bf16.msra.mxu0 %v8535
        %8908 = vmatprep.subr.bf16.mxu0 %v8540
        %8909 = vmatpush1.bf16.msra.mxu0 %v8539
        %8910 = vmatprep.subr.bf16.mxu0 %v8544
        %8911 = vmatpush1.bf16.msra.mxu0 %v8543
        %8912 = vmatprep.mubr.bf16.mxu0 %v7817
        %8913 = vmatmul.mubr.bf16.gmra.mrb[0].mxu0 %v7816
        %v8914 = vpop.f32.mrb[0].mxu0
        %v8915 = vadd.f32 %v8872, %v8914
        %v8916 = vpop.f32.mrb[0].mxu0
        %v8917 = vadd.f32 %v8874, %v8916
        %v8918 = vpop.f32.mrb[0].mxu0
        %v8919 = vadd.f32 %v8876, %v8918
        %v8920 = vpop.f32.mrb[0].mxu0
        %v8921 = vadd.f32 %v8878, %v8920
        %8922 = vdwg.mxu0
        %8923 = vmatprep.subr.bf16.mxu0 %v8548
        %8924 = vmatpush1.bf16.msra.mxu0 %v8547
        %8925 = vmatprep.subr.bf16.mxu0 %v8552
        %8926 = vmatpush1.bf16.msra.mxu0 %v8551
        %8927 = vmatprep.subr.bf16.mxu0 %v8556
        %8928 = vmatpush1.bf16.msra.mxu0 %v8555
        %8929 = vmatprep.subr.bf16.mxu0 %v8560
        %8930 = vmatpush1.bf16.msra.mxu0 %v8559
        %8931 = vmatprep.subr.bf16.mxu0 0
        %8932 = vmatpush1.bf16.msra.mxu0 0
        %8933 = vmatprep.subr.bf16.mxu0 0
        %8934 = vmatpush1.bf16.msra.mxu0 0
        %8935 = vmatprep.subr.bf16.mxu0 0
        %8936 = vmatpush1.bf16.msra.mxu0 0
        %8937 = vmatprep.subr.bf16.mxu0 0
        %8938 = vmatpush1.bf16.msra.mxu0 0
        %8939 = vmatprep.subr.bf16.mxu0 0
        %8940 = vmatpush1.bf16.msra.mxu0 0
        %8941 = vmatprep.subr.bf16.mxu0 0
        %8942 = vmatpush1.bf16.msra.mxu0 0
        %8943 = vmatprep.subr.bf16.mxu0 0
        %8944 = vmatpush1.bf16.msra.mxu0 0
        %8945 = vmatprep.subr.bf16.mxu0 0
        %8946 = vmatpush1.bf16.msra.mxu0 0
        %8947 = vmatprep.subr.bf16.mxu0 0
        %8948 = vmatpush1.bf16.msra.mxu0 0
        %8949 = vmatprep.subr.bf16.mxu0 0
        %8950 = vmatpush1.bf16.msra.mxu0 0
        %8951 = vmatprep.subr.bf16.mxu0 0
        %8952 = vmatpush1.bf16.msra.mxu0 0
        %8953 = vmatprep.subr.bf16.mxu0 0
        %8954 = vmatpush1.bf16.msra.mxu0 0
        %8955 = vmatprep.mubr.bf16.mxu0 0
        %8956 = vmatmul.mubr.bf16.gmra.mrb[0].mxu0 %v8706
        %v8957 = vpop.f32.mrb[0].mxu0
        %v8958 = vadd.f32 %v8915, %v8957
        %v8959 = vpop.f32.mrb[0].mxu0
        %v8960 = vadd.f32 %v8917, %v8959
        %v8961 = vpop.f32.mrb[0].mxu0
        %v8962 = vadd.f32 %v8919, %v8961
        %v8963 = vpop.f32.mrb[0].mxu0
        %v8964 = vadd.f32 %v8921, %v8963
        %8965 = vdwg.mxu0
        %v8966 = vmax.f32 %v8829, 0.0
        %v8967 = vmax.f32 %v8831, 0.0
        %v8968 = vmax.f32 %v8958, 0.0
        %v8969 = vmax.f32 %v8960, 0.0
        %v8970 = vmax.f32 %v8833, 0.0
        %v8971 = vmax.f32 %v8835, 0.0
        %v8972 = vmax.f32 %v8962, 0.0
        %v8973 = vmax.f32 %v8964, 0.0
        %v8982 = vcombine.low %v8966, %v8967
        %v8983 = vcombine.high %v8966, %v8967
        %v8984 = vcombine.low %v8968, %v8969
        %v8985 = vcombine.high %v8968, %v8969
        %v8987 = vunpack.c.l.s4 1983009808
        %v8988 = vunpack.c.0.s8 %v8987
        %v8989 = vlaneseq
        %v8990 = vshrl.u32 %v8989, 7
        %v8991 = vsub.s32 %v8988, %v8990
        %v8992 = vrot.slane %v8982, %v8991
        %v8994 = vunpack.c.l.s4 1983009808
        %v8995 = vunpack.c.0.s8 %v8994
        %v8996 = vlaneseq
        %v8997 = vshrl.u32 %v8996, 7
        %v8998 = vsub.s32 %v8995, %v8997
        %v8999 = vrot.slane %v8983, %v8998
        %v9001 = vunpack.c.l.s4 1983009808
        %v9002 = vunpack.c.0.s8 %v9001
        %v9003 = vlaneseq
        %v9004 = vshrl.u32 %v9003, 7
        %v9005 = vsub.s32 %v9002, %v9004
        %v9006 = vrot.slane %v8984, %v9005
        %v9008 = vunpack.c.l.s4 1983009808
        %v9009 = vunpack.c.0.s8 %v9008
        %v9010 = vlaneseq
        %v9011 = vshrl.u32 %v9010, 7
        %v9012 = vsub.s32 %v9009, %v9011
        %v9013 = vrot.slane %v8985, %v9012
        %v9014 = vcombine.low %v8992, %v9006
        %v9015 = vcombine.high %v8992, %v9006
        %v9016 = vcombine.low %v8999, %v9013
        %v9017 = vcombine.high %v8999, %v9013
        %v9018 = vcombine.low %v8970, %v8971
        %v9019 = vcombine.high %v8970, %v8971
        %v9020 = vcombine.low %v8972, %v8973
        %v9021 = vcombine.high %v8972, %v8973
        %v9023 = vunpack.c.l.s4 1983009808
        %v9024 = vunpack.c.0.s8 %v9023
        %v9025 = vlaneseq
        %v9026 = vshrl.u32 %v9025, 7
        %v9027 = vsub.s32 %v9024, %v9026
        %v9028 = vrot.slane %v9018, %v9027
        %v9030 = vunpack.c.l.s4 1983009808
        %v9031 = vunpack.c.0.s8 %v9030
        %v9032 = vlaneseq
        %v9033 = vshrl.u32 %v9032, 7
        %v9034 = vsub.s32 %v9031, %v9033
        %v9035 = vrot.slane %v9019, %v9034
        %v9037 = vunpack.c.l.s4 1983009808
        %v9038 = vunpack.c.0.s8 %v9037
        %v9039 = vlaneseq
        %v9040 = vshrl.u32 %v9039, 7
        %v9041 = vsub.s32 %v9038, %v9040
        %v9042 = vrot.slane %v9020, %v9041
        %v9044 = vunpack.c.l.s4 1983009808
        %v9045 = vunpack.c.0.s8 %v9044
        %v9046 = vlaneseq
        %v9047 = vshrl.u32 %v9046, 7
        %v9048 = vsub.s32 %v9045, %v9047
        %v9049 = vrot.slane %v9021, %v9048
        %v9050 = vcombine.low %v9028, %v9042
        %v9051 = vcombine.high %v9028, %v9042
        %v9052 = vcombine.low %v9035, %v9049
        %v9053 = vcombine.high %v9035, %v9049
        %v9062 = vrot.slane %v9014, 7
        %v9063 = vrot.slane %v9062, 2
        %v9064 = vrot.slane %v9015, 7
        %v9065 = vrot.slane %v9064, 2
        %v9066 = vrot.slane %v9016, 7
        %v9067 = vrot.slane %v9066, 2
        %v9068 = vrot.slane %v9017, 7
        %v9069 = vrot.slane %v9068, 2
        %v9070 = vrot.slane %v9050, 7
        %v9071 = vrot.slane %v9070, 2
        %v9072 = vrot.slane %v9051, 7
        %v9073 = vrot.slane %v9072, 2
        %v9074 = vrot.slane %v9052, 7
        %v9075 = vrot.slane %v9074, 2
        %v9076 = vrot.slane %v9053, 7
        %v9077 = vrot.slane %v9076, 2
        %v9086 = vmax.f32 %v9014, %v9063
        %v9087 = vmax.f32 %v9015, %v9065
        %v9088 = vmax.f32 %v9016, %v9067
        %v9089 = vmax.f32 %v9017, %v9069
        %v9090 = vmax.f32 %v9050, %v9071
        %v9091 = vmax.f32 %v9051, %v9073
        %v9092 = vmax.f32 %v9052, %v9075
        %v9093 = vmax.f32 %v9053, %v9077
        %v9094 = vmax.f32 %v9086, %v9087
        %v9095 = vmax.f32 %v9088, %v9089
        %v9096 = vmax.f32 %v9090, %v9091
        %v9097 = vmax.f32 %v9092, %v9093
        %v9102 = vlaneseq
        %v9103 = vshrl.u32 %v9102, 7
        %v9104 = vsub.s32 0, %v9103
        %v9105 = vrot.slane %v9094, %v9104
        %v9106 = vlaneseq
        %v9107 = vshrl.u32 %v9106, 7
        %v9108 = vsub.s32 2, %v9107
        %v9109 = vrot.slane %v9094, %v9108
        %v9110 = vlaneseq
        %v9111 = vshrl.u32 %v9110, 7
        %v9112 = vsub.s32 4, %v9111
        %v9113 = vrot.slane %v9094, %v9112
        %v9114 = vlaneseq
        %v9115 = vshrl.u32 %v9114, 7
        %v9116 = vsub.s32 6, %v9115
        %v9117 = vrot.slane %v9094, %v9116
        %v9118 = vlaneseq
        %v9119 = vshrl.u32 %v9118, 7
        %v9120 = vsub.s32 0, %v9119
        %v9121 = vrot.slane %v9095, %v9120
        %v9122 = vlaneseq
        %v9123 = vshrl.u32 %v9122, 7
        %v9124 = vsub.s32 2, %v9123
        %v9125 = vrot.slane %v9095, %v9124
        %v9126 = vlaneseq
        %v9127 = vshrl.u32 %v9126, 7
        %v9128 = vsub.s32 4, %v9127
        %v9129 = vrot.slane %v9095, %v9128
        %v9130 = vlaneseq
        %v9131 = vshrl.u32 %v9130, 7
        %v9132 = vsub.s32 6, %v9131
        %v9133 = vrot.slane %v9095, %v9132
        %v9134 = vlaneseq
        %v9135 = vshrl.u32 %v9134, 7
        %v9136 = vsub.s32 0, %v9135
        %v9137 = vrot.slane %v9096, %v9136
        %v9138 = vlaneseq
        %v9139 = vshrl.u32 %v9138, 7
        %v9140 = vsub.s32 2, %v9139
        %v9141 = vrot.slane %v9096, %v9140
        %v9142 = vlaneseq
        %v9143 = vshrl.u32 %v9142, 7
        %v9144 = vsub.s32 4, %v9143
        %v9145 = vrot.slane %v9096, %v9144
        %v9146 = vlaneseq
        %v9147 = vshrl.u32 %v9146, 7
        %v9148 = vsub.s32 6, %v9147
        %v9149 = vrot.slane %v9096, %v9148
        %v9150 = vlaneseq
        %v9151 = vshrl.u32 %v9150, 7
        %v9152 = vsub.s32 0, %v9151
        %v9153 = vrot.slane %v9097, %v9152
        %v9154 = vlaneseq
        %v9155 = vshrl.u32 %v9154, 7
        %v9156 = vsub.s32 2, %v9155
        %v9157 = vrot.slane %v9097, %v9156
        %v9158 = vlaneseq
        %v9159 = vshrl.u32 %v9158, 7
        %v9160 = vsub.s32 4, %v9159
        %v9161 = vrot.slane %v9097, %v9160
        %v9162 = vlaneseq
        %v9163 = vshrl.u32 %v9162, 7
        %v9164 = vsub.s32 6, %v9163
        %v9165 = vrot.slane %v9097, %v9164
        %v9182 = vpack.c.bf16 %v9105, %v9105
        %v9183 = vpack.c.bf16 %v9109, %v9109
        %v9184 = vpack.c.bf16 %v9113, %v9113
        %v9185 = vpack.c.bf16 %v9117, %v9117
        %v9186 = vpack.c.bf16 %v9121, %v9121
        %v9187 = vpack.c.bf16 %v9125, %v9125
        %v9188 = vpack.c.bf16 %v9129, %v9129
        %v9189 = vpack.c.bf16 %v9133, %v9133
        %v9190 = vpack.c.bf16 %v9137, %v9137
        %v9191 = vpack.c.bf16 %v9141, %v9141
        %v9192 = vpack.c.bf16 %v9145, %v9145
        %v9193 = vpack.c.bf16 %v9149, %v9149
        %v9194 = vpack.c.bf16 %v9153, %v9153
        %v9195 = vpack.c.bf16 %v9157, %v9157
        %v9196 = vpack.c.bf16 %v9161, %v9161
        %v9197 = vpack.c.bf16 %v9165, %v9165
        %v9198 = vld [vmem:[%s7] sm:$0xff]
        %v9199 = vld [vmem:[%s7 + $0x8] sm:$0xff]
        %v9200 = vld [vmem:[%s7 + $0x10] sm:$0xff]
        %v9201 = vld [vmem:[%s7 + $0x18] sm:$0xff]
        %v9202 = vld [vmem:[%s7 + $0x20] sm:$0xff]
        %v9203 = vld [vmem:[%s7 + $0x28] sm:$0xff]
        %v9204 = vld [vmem:[%s7 + $0x30] sm:$0xff]
        %v9205 = vld [vmem:[%s7 + $0x38] sm:$0xff]
        %v9206 = vld [vmem:[%s7 + $0x40] sm:$0xff]
        %v9207 = vld [vmem:[%s7 + $0x48] sm:$0xff]
        %v9208 = vld [vmem:[%s7 + $0x50] sm:$0xff]
        %v9209 = vld [vmem:[%s7 + $0x58] sm:$0xff]
        %v9210 = vld [vmem:[%s7 + $0x60] sm:$0xff]
        %v9211 = vld [vmem:[%s7 + $0x68] sm:$0xff]
        %v9212 = vld [vmem:[%s7 + $0x70] sm:$0xff]
        %v9213 = vld [vmem:[%s7 + $0x78] sm:$0xff]
        %v9214 = vld [vmem:[%s7 + $0x80] sm:$0xff]
        %v9215 = vld [vmem:[%s7 + $0x88] sm:$0xff]
        %v9216 = vld [vmem:[%s7 + $0x90] sm:$0xff]
        %v9217 = vld [vmem:[%s7 + $0x98] sm:$0xff]
        %v9218 = vld [vmem:[%s7 + $0xa0] sm:$0xff]
        %v9219 = vld [vmem:[%s7 + $0xa8] sm:$0xff]
        %v9220 = vld [vmem:[%s7 + $0xb0] sm:$0xff]
        %v9221 = vld [vmem:[%s7 + $0xb8] sm:$0xff]
        %v9222 = vld [vmem:[%s7 + $0xc0] sm:$0xff]
        %v9223 = vld [vmem:[%s7 + $0xc8] sm:$0xff]
        %v9224 = vld [vmem:[%s7 + $0xd0] sm:$0xff]
        %v9225 = vld [vmem:[%s7 + $0xd8] sm:$0xff]
        %v9226 = vld [vmem:[%s7 + $0xe0] sm:$0xff]
        %v9227 = vld [vmem:[%s7 + $0xe8] sm:$0xff]
        %v9228 = vld [vmem:[%s7 + $0xf0] sm:$0xff]
        %v9229 = vld [vmem:[%s7 + $0xf8] sm:$0xff]
        %v9230 = vld [vmem:[%s7 + $0x100] sm:$0xff]
        %v9231 = vld [vmem:[%s7 + $0x108] sm:$0xff]
        %v9232 = vld [vmem:[%s7 + $0x110] sm:$0xff]
        %v9233 = vld [vmem:[%s7 + $0x118] sm:$0xff]
        %v9234 = vld [vmem:[%s7 + $0x120] sm:$0xff]
        %v9235 = vld [vmem:[%s7 + $0x128] sm:$0xff]
        %v9236 = vld [vmem:[%s7 + $0x130] sm:$0xff]
        %v9237 = vld [vmem:[%s7 + $0x138] sm:$0xff]
        %v9238 = vld [vmem:[%s7 + $0x140] sm:$0xff]
        %v9239 = vld [vmem:[%s7 + $0x148] sm:$0xff]
        %v9240 = vld [vmem:[%s7 + $0x150] sm:$0xff]
        %v9241 = vld [vmem:[%s7 + $0x158] sm:$0xff]
        %v9242 = vld [vmem:[%s7 + $0x160] sm:$0xff]
        %v9243 = vld [vmem:[%s7 + $0x168] sm:$0xff]
        %v9244 = vld [vmem:[%s7 + $0x170] sm:$0xff]
        %v9245 = vld [vmem:[%s7 + $0x178] sm:$0xff]
        %v9246 = vld [vmem:[%s7 + $0x180] sm:$0xff]
        %v9247 = vld [vmem:[%s7 + $0x188] sm:$0xff]
        %v9248 = vld [vmem:[%s7 + $0x190] sm:$0xff]
        %v9249 = vld [vmem:[%s7 + $0x198] sm:$0xff]
        %v9250 = vld [vmem:[%s7 + $0x1a0] sm:$0xff]
        %v9251 = vld [vmem:[%s7 + $0x1a8] sm:$0xff]
        %v9252 = vld [vmem:[%s7 + $0x1b0] sm:$0xff]
        %v9253 = vld [vmem:[%s7 + $0x1b8] sm:$0xff]
        %v9254 = vld [vmem:[%s7 + $0x1c0] sm:$0xff]
        %v9255 = vld [vmem:[%s7 + $0x1c8] sm:$0xff]
        %v9256 = vld [vmem:[%s7 + $0x1d0] sm:$0xff]
        %v9257 = vld [vmem:[%s7 + $0x1d8] sm:$0xff]
        %v9258 = vld [vmem:[%s7 + $0x1e0] sm:$0xff]
        %v9259 = vld [vmem:[%s7 + $0x1e8] sm:$0xff]
        %v9260 = vld [vmem:[%s7 + $0x1f0] sm:$0xff]
        %v9261 = vld [vmem:[%s7 + $0x1f8] sm:$0xff]
        %v9262 = vld [vmem:[%s7 + $0x200] sm:$0xff]
        %v9263 = vld [vmem:[%s7 + $0x208] sm:$0xff]
        %v9264 = vld [vmem:[%s7 + $0x210] sm:$0xff]
        %v9265 = vld [vmem:[%s7 + $0x218] sm:$0xff]
        %v9266 = vld [vmem:[%s7 + $0x220] sm:$0xff]
        %v9267 = vld [vmem:[%s7 + $0x228] sm:$0xff]
        %v9268 = vld [vmem:[%s7 + $0x230] sm:$0xff]
        %v9269 = vld [vmem:[%s7 + $0x238] sm:$0xff]
        %v9270 = vld [vmem:[%s7 + $0x240] sm:$0xff]
        %v9271 = vld [vmem:[%s7 + $0x248] sm:$0xff]
        %v9272 = vld [vmem:[%s7 + $0x250] sm:$0xff]
        %v9273 = vld [vmem:[%s7 + $0x258] sm:$0xff]
        %v9274 = vld [vmem:[%s7 + $0x260] sm:$0xff]
        %v9275 = vld [vmem:[%s7 + $0x268] sm:$0xff]
        %v9276 = vld [vmem:[%s7 + $0x270] sm:$0xff]
        %v9277 = vld [vmem:[%s7 + $0x278] sm:$0xff]
        %v9278 = vld [vmem:[%s7 + $0x280] sm:$0xff]
        %v9279 = vld [vmem:[%s7 + $0x288] sm:$0xff]
        %v9280 = vld [vmem:[%s7 + $0x290] sm:$0xff]
        %v9281 = vld [vmem:[%s7 + $0x298] sm:$0xff]
        %v9282 = vld [vmem:[%s7 + $0x2a0] sm:$0xff]
        %v9283 = vld [vmem:[%s7 + $0x2a8] sm:$0xff]
        %v9284 = vld [vmem:[%s7 + $0x2b0] sm:$0xff]
        %v9285 = vld [vmem:[%s7 + $0x2b8] sm:$0xff]
        %v9286 = vld [vmem:[%s7 + $0x2c0] sm:$0xff]
        %v9287 = vld [vmem:[%s7 + $0x2c8] sm:$0xff]
        %v9288 = vld [vmem:[%s7 + $0x2d0] sm:$0xff]
        %v9289 = vld [vmem:[%s7 + $0x2d8] sm:$0xff]
        %v9290 = vld [vmem:[%s7 + $0x2e0] sm:$0xff]
        %v9291 = vld [vmem:[%s7 + $0x2e8] sm:$0xff]
        %v9292 = vld [vmem:[%s7 + $0x2f0] sm:$0xff]
        %v9293 = vld [vmem:[%s7 + $0x2f8] sm:$0xff]
        %v9294 = vld [vmem:[%s7 + $0x300] sm:$0xff]
        %v9295 = vld [vmem:[%s7 + $0x308] sm:$0xff]
        %v9296 = vld [vmem:[%s7 + $0x310] sm:$0xff]
        %v9297 = vld [vmem:[%s7 + $0x318] sm:$0xff]
        %v9298 = vld [vmem:[%s7 + $0x320] sm:$0xff]
        %v9299 = vld [vmem:[%s7 + $0x328] sm:$0xff]
        %v9300 = vld [vmem:[%s7 + $0x330] sm:$0xff]
        %v9301 = vld [vmem:[%s7 + $0x338] sm:$0xff]
        %v9302 = vld [vmem:[%s7 + $0x340] sm:$0xff]
        %v9303 = vld [vmem:[%s7 + $0x348] sm:$0xff]
        %v9304 = vld [vmem:[%s7 + $0x350] sm:$0xff]
        %v9305 = vld [vmem:[%s7 + $0x358] sm:$0xff]
        %v9306 = vld [vmem:[%s7 + $0x360] sm:$0xff]
        %v9307 = vld [vmem:[%s7 + $0x368] sm:$0xff]
        %v9308 = vld [vmem:[%s7 + $0x370] sm:$0xff]
        %v9309 = vld [vmem:[%s7 + $0x378] sm:$0xff]
        %v9310 = vld [vmem:[%s7 + $0x380] sm:$0xff]
        %v9311 = vld [vmem:[%s7 + $0x388] sm:$0xff]
        %v9312 = vld [vmem:[%s7 + $0x390] sm:$0xff]
        %v9313 = vld [vmem:[%s7 + $0x398] sm:$0xff]
        %v9314 = vld [vmem:[%s7 + $0x3a0] sm:$0xff]
        %v9315 = vld [vmem:[%s7 + $0x3a8] sm:$0xff]
        %v9316 = vld [vmem:[%s7 + $0x3b0] sm:$0xff]
        %v9317 = vld [vmem:[%s7 + $0x3b8] sm:$0xff]
        %v9318 = vld [vmem:[%s7 + $0x3c0] sm:$0xff]
        %v9319 = vld [vmem:[%s7 + $0x3c8] sm:$0xff]
        %v9320 = vld [vmem:[%s7 + $0x3d0] sm:$0xff]
        %v9321 = vld [vmem:[%s7 + $0x3d8] sm:$0xff]
        %v9322 = vld [vmem:[%s7 + $0x3e0] sm:$0xff]
        %v9323 = vld [vmem:[%s7 + $0x3e8] sm:$0xff]
        %v9324 = vld [vmem:[%s7 + $0x3f0] sm:$0xff]
        %v9325 = vld [vmem:[%s7 + $0x3f8] sm:$0xff]
        %v9326 = vld [vmem:[%s8] sm:$0xf]
        %v9328 = vlaneseq
        %v9329 = vshrl.u32 %v9328, 7
        %v9330 = vsub.s32 0, %v9329
        %v9331 = vrot.slane %v9326, %v9330
        %v9332 = vlaneseq
        %v9333 = vshrl.u32 %v9332, 7
        %v9334 = vsub.s32 1, %v9333
        %v9335 = vrot.slane %v9326, %v9334
        %v9336 = vlaneseq
        %v9337 = vshrl.u32 %v9336, 7
        %v9338 = vsub.s32 2, %v9337
        %v9339 = vrot.slane %v9326, %v9338
        %v9340 = vlaneseq
        %v9341 = vshrl.u32 %v9340, 7
        %v9342 = vsub.s32 3, %v9341
        %v9343 = vrot.slane %v9326, %v9342
        %v9364 = vunpack.c.l.b16 %v9182
        %v9365 = vunpack.c.l.b16 %v9183
        %v9366 = vunpack.c.l.b16 %v9184
        %v9367 = vunpack.c.l.b16 %v9185
        %v9368 = vunpack.c.l.b16 %v9186
        %v9369 = vunpack.c.l.b16 %v9187
        %v9370 = vunpack.c.l.b16 %v9188
        %v9371 = vunpack.c.l.b16 %v9189
        %v9372 = vunpack.c.l.b16 %v9190
        %v9373 = vunpack.c.l.b16 %v9191
        %v9374 = vunpack.c.l.b16 %v9192
        %v9375 = vunpack.c.l.b16 %v9193
        %v9376 = vunpack.c.l.b16 %v9194
        %v9377 = vunpack.c.l.b16 %v9195
        %v9378 = vunpack.c.l.b16 %v9196
        %v9379 = vunpack.c.l.b16 %v9197
        %v9380 = vrot.slane %v9368, 7
        %vm9381 = vcmask 1041409
        %v9382 = vsel %vm9381, %v9380, %v9364
        %v9383 = vrot.slane %v9372, 6
        %v9384 = vsel %vm2579, %v9383, %v9382
        %v9385 = vrot.slane %v9376, 5
        %v9386 = vsel %vm2582, %v9385, %v9384
        %v9387 = vrot.slane %v9369, 7
        %v9388 = vsel %vm9381, %v9387, %v9365
        %v9389 = vrot.slane %v9373, 6
        %v9390 = vsel %vm2579, %v9389, %v9388
        %v9391 = vrot.slane %v9377, 5
        %v9392 = vsel %vm2582, %v9391, %v9390
        %v9393 = vrot.slane %v9370, 7
        %v9394 = vsel %vm9381, %v9393, %v9366
        %v9395 = vrot.slane %v9374, 6
        %v9396 = vsel %vm2579, %v9395, %v9394
        %v9397 = vrot.slane %v9378, 5
        %v9398 = vsel %vm2582, %v9397, %v9396
        %v9399 = vrot.slane %v9371, 7
        %v9400 = vsel %vm9381, %v9399, %v9367
        %v9401 = vrot.slane %v9375, 6
        %v9402 = vsel %vm2579, %v9401, %v9400
        %v9403 = vrot.slane %v9379, 5
        %v9404 = vsel %vm2582, %v9403, %v9402
        %v9405 = vpack.c.b16 %v9386, %v9386
        %v9406 = vpack.c.b16 %v9392, %v9392
        %v9407 = vpack.c.b16 %v9398, %v9398
        %v9408 = vpack.c.b16 %v9404, %v9404
        %v9541 = vunpack.c.l.b16 %v9198
        %v9542 = vunpack.c.h.b16 %v9198
        %v9543 = vunpack.c.l.b16 %v9199
        %v9544 = vunpack.c.h.b16 %v9199
        %v9545 = vunpack.c.l.b16 %v9200
        %v9546 = vunpack.c.h.b16 %v9200
        %v9547 = vunpack.c.l.b16 %v9201
        %v9548 = vunpack.c.h.b16 %v9201
        %v9549 = vunpack.c.l.b16 %v9202
        %v9550 = vunpack.c.h.b16 %v9202
        %v9551 = vunpack.c.l.b16 %v9203
        %v9552 = vunpack.c.h.b16 %v9203
        %v9553 = vunpack.c.l.b16 %v9204
        %v9554 = vunpack.c.h.b16 %v9204
        %v9555 = vunpack.c.l.b16 %v9205
        %v9556 = vunpack.c.h.b16 %v9205
        %v9557 = vunpack.c.l.b16 %v9206
        %v9558 = vunpack.c.h.b16 %v9206
        %v9559 = vunpack.c.l.b16 %v9207
        %v9560 = vunpack.c.h.b16 %v9207
        %v9561 = vunpack.c.l.b16 %v9208
        %v9562 = vunpack.c.h.b16 %v9208
        %v9563 = vunpack.c.l.b16 %v9209
        %v9564 = vunpack.c.h.b16 %v9209
        %v9565 = vunpack.c.l.b16 %v9210
        %v9566 = vunpack.c.h.b16 %v9210
        %v9567 = vunpack.c.l.b16 %v9211
        %v9568 = vunpack.c.h.b16 %v9211
        %v9569 = vunpack.c.l.b16 %v9212
        %v9570 = vunpack.c.h.b16 %v9212
        %v9571 = vunpack.c.l.b16 %v9213
        %v9572 = vunpack.c.h.b16 %v9213
        %v9573 = vunpack.c.l.b16 %v9214
        %v9574 = vunpack.c.h.b16 %v9214
        %v9575 = vunpack.c.l.b16 %v9215
        %v9576 = vunpack.c.h.b16 %v9215
        %v9577 = vunpack.c.l.b16 %v9216
        %v9578 = vunpack.c.h.b16 %v9216
        %v9579 = vunpack.c.l.b16 %v9217
        %v9580 = vunpack.c.h.b16 %v9217
        %v9581 = vunpack.c.l.b16 %v9218
        %v9582 = vunpack.c.h.b16 %v9218
        %v9583 = vunpack.c.l.b16 %v9219
        %v9584 = vunpack.c.h.b16 %v9219
        %v9585 = vunpack.c.l.b16 %v9220
        %v9586 = vunpack.c.h.b16 %v9220
        %v9587 = vunpack.c.l.b16 %v9221
        %v9588 = vunpack.c.h.b16 %v9221
        %v9589 = vunpack.c.l.b16 %v9222
        %v9590 = vunpack.c.h.b16 %v9222
        %v9591 = vunpack.c.l.b16 %v9223
        %v9592 = vunpack.c.h.b16 %v9223
        %v9593 = vunpack.c.l.b16 %v9224
        %v9594 = vunpack.c.h.b16 %v9224
        %v9595 = vunpack.c.l.b16 %v9225
        %v9596 = vunpack.c.h.b16 %v9225
        %v9597 = vunpack.c.l.b16 %v9226
        %v9598 = vunpack.c.h.b16 %v9226
        %v9599 = vunpack.c.l.b16 %v9227
        %v9600 = vunpack.c.h.b16 %v9227
        %v9601 = vunpack.c.l.b16 %v9228
        %v9602 = vunpack.c.h.b16 %v9228
        %v9603 = vunpack.c.l.b16 %v9229
        %v9604 = vunpack.c.h.b16 %v9229
        %v9605 = vunpack.c.l.b16 %v9230
        %v9606 = vunpack.c.h.b16 %v9230
        %v9607 = vunpack.c.l.b16 %v9231
        %v9608 = vunpack.c.h.b16 %v9231
        %v9609 = vunpack.c.l.b16 %v9232
        %v9610 = vunpack.c.h.b16 %v9232
        %v9611 = vunpack.c.l.b16 %v9233
        %v9612 = vunpack.c.h.b16 %v9233
        %v9613 = vunpack.c.l.b16 %v9234
        %v9614 = vunpack.c.h.b16 %v9234
        %v9615 = vunpack.c.l.b16 %v9235
        %v9616 = vunpack.c.h.b16 %v9235
        %v9617 = vunpack.c.l.b16 %v9236
        %v9618 = vunpack.c.h.b16 %v9236
        %v9619 = vunpack.c.l.b16 %v9237
        %v9620 = vunpack.c.h.b16 %v9237
        %v9621 = vunpack.c.l.b16 %v9238
        %v9622 = vunpack.c.h.b16 %v9238
        %v9623 = vunpack.c.l.b16 %v9239
        %v9624 = vunpack.c.h.b16 %v9239
        %v9625 = vunpack.c.l.b16 %v9240
        %v9626 = vunpack.c.h.b16 %v9240
        %v9627 = vunpack.c.l.b16 %v9241
        %v9628 = vunpack.c.h.b16 %v9241
        %v9629 = vunpack.c.l.b16 %v9242
        %v9630 = vunpack.c.h.b16 %v9242
        %v9631 = vunpack.c.l.b16 %v9243
        %v9632 = vunpack.c.h.b16 %v9243
        %v9633 = vunpack.c.l.b16 %v9244
        %v9634 = vunpack.c.h.b16 %v9244
        %v9635 = vunpack.c.l.b16 %v9245
        %v9636 = vunpack.c.h.b16 %v9245
        %v9637 = vunpack.c.l.b16 %v9246
        %v9638 = vunpack.c.h.b16 %v9246
        %v9639 = vunpack.c.l.b16 %v9247
        %v9640 = vunpack.c.h.b16 %v9247
        %v9641 = vunpack.c.l.b16 %v9248
        %v9642 = vunpack.c.h.b16 %v9248
        %v9643 = vunpack.c.l.b16 %v9249
        %v9644 = vunpack.c.h.b16 %v9249
        %v9645 = vunpack.c.l.b16 %v9250
        %v9646 = vunpack.c.h.b16 %v9250
        %v9647 = vunpack.c.l.b16 %v9251
        %v9648 = vunpack.c.h.b16 %v9251
        %v9649 = vunpack.c.l.b16 %v9252
        %v9650 = vunpack.c.h.b16 %v9252
        %v9651 = vunpack.c.l.b16 %v9253
        %v9652 = vunpack.c.h.b16 %v9253
        %v9653 = vunpack.c.l.b16 %v9254
        %v9654 = vunpack.c.h.b16 %v9254
        %v9655 = vunpack.c.l.b16 %v9255
        %v9656 = vunpack.c.h.b16 %v9255
        %v9657 = vunpack.c.l.b16 %v9256
        %v9658 = vunpack.c.h.b16 %v9256
        %v9659 = vunpack.c.l.b16 %v9257
        %v9660 = vunpack.c.h.b16 %v9257
        %v9661 = vunpack.c.l.b16 %v9258
        %v9662 = vunpack.c.h.b16 %v9258
        %v9663 = vunpack.c.l.b16 %v9259
        %v9664 = vunpack.c.h.b16 %v9259
        %v9665 = vunpack.c.l.b16 %v9260
        %v9666 = vunpack.c.h.b16 %v9260
        %v9667 = vunpack.c.l.b16 %v9261
        %v9668 = vunpack.c.h.b16 %v9261
        %v9669 = vunpack.c.l.b16 %v9262
        %v9670 = vunpack.c.h.b16 %v9262
        %v9671 = vunpack.c.l.b16 %v9263
        %v9672 = vunpack.c.h.b16 %v9263
        %v9673 = vunpack.c.l.b16 %v9264
        %v9674 = vunpack.c.h.b16 %v9264
        %v9675 = vunpack.c.l.b16 %v9265
        %v9676 = vunpack.c.h.b16 %v9265
        %v9677 = vunpack.c.l.b16 %v9266
        %v9678 = vunpack.c.h.b16 %v9266
        %v9679 = vunpack.c.l.b16 %v9267
        %v9680 = vunpack.c.h.b16 %v9267
        %v9681 = vunpack.c.l.b16 %v9268
        %v9682 = vunpack.c.h.b16 %v9268
        %v9683 = vunpack.c.l.b16 %v9269
        %v9684 = vunpack.c.h.b16 %v9269
        %v9685 = vunpack.c.l.b16 %v9270
        %v9686 = vunpack.c.h.b16 %v9270
        %v9687 = vunpack.c.l.b16 %v9271
        %v9688 = vunpack.c.h.b16 %v9271
        %v9689 = vunpack.c.l.b16 %v9272
        %v9690 = vunpack.c.h.b16 %v9272
        %v9691 = vunpack.c.l.b16 %v9273
        %v9692 = vunpack.c.h.b16 %v9273
        %v9693 = vunpack.c.l.b16 %v9274
        %v9694 = vunpack.c.h.b16 %v9274
        %v9695 = vunpack.c.l.b16 %v9275
        %v9696 = vunpack.c.h.b16 %v9275
        %v9697 = vunpack.c.l.b16 %v9276
        %v9698 = vunpack.c.h.b16 %v9276
        %v9699 = vunpack.c.l.b16 %v9277
        %v9700 = vunpack.c.h.b16 %v9277
        %v9701 = vunpack.c.l.b16 %v9278
        %v9702 = vunpack.c.h.b16 %v9278
        %v9703 = vunpack.c.l.b16 %v9279
        %v9704 = vunpack.c.h.b16 %v9279
        %v9705 = vunpack.c.l.b16 %v9280
        %v9706 = vunpack.c.h.b16 %v9280
        %v9707 = vunpack.c.l.b16 %v9281
        %v9708 = vunpack.c.h.b16 %v9281
        %v9709 = vunpack.c.l.b16 %v9282
        %v9710 = vunpack.c.h.b16 %v9282
        %v9711 = vunpack.c.l.b16 %v9283
        %v9712 = vunpack.c.h.b16 %v9283
        %v9713 = vunpack.c.l.b16 %v9284
        %v9714 = vunpack.c.h.b16 %v9284
        %v9715 = vunpack.c.l.b16 %v9285
        %v9716 = vunpack.c.h.b16 %v9285
        %v9717 = vunpack.c.l.b16 %v9286
        %v9718 = vunpack.c.h.b16 %v9286
        %v9719 = vunpack.c.l.b16 %v9287
        %v9720 = vunpack.c.h.b16 %v9287
        %v9721 = vunpack.c.l.b16 %v9288
        %v9722 = vunpack.c.h.b16 %v9288
        %v9723 = vunpack.c.l.b16 %v9289
        %v9724 = vunpack.c.h.b16 %v9289
        %v9725 = vunpack.c.l.b16 %v9290
        %v9726 = vunpack.c.h.b16 %v9290
        %v9727 = vunpack.c.l.b16 %v9291
        %v9728 = vunpack.c.h.b16 %v9291
        %v9729 = vunpack.c.l.b16 %v9292
        %v9730 = vunpack.c.h.b16 %v9292
        %v9731 = vunpack.c.l.b16 %v9293
        %v9732 = vunpack.c.h.b16 %v9293
        %v9733 = vunpack.c.l.b16 %v9294
        %v9734 = vunpack.c.h.b16 %v9294
        %v9735 = vunpack.c.l.b16 %v9295
        %v9736 = vunpack.c.h.b16 %v9295
        %v9737 = vunpack.c.l.b16 %v9296
        %v9738 = vunpack.c.h.b16 %v9296
        %v9739 = vunpack.c.l.b16 %v9297
        %v9740 = vunpack.c.h.b16 %v9297
        %v9741 = vunpack.c.l.b16 %v9298
        %v9742 = vunpack.c.h.b16 %v9298
        %v9743 = vunpack.c.l.b16 %v9299
        %v9744 = vunpack.c.h.b16 %v9299
        %v9745 = vunpack.c.l.b16 %v9300
        %v9746 = vunpack.c.h.b16 %v9300
        %v9747 = vunpack.c.l.b16 %v9301
        %v9748 = vunpack.c.h.b16 %v9301
        %v9749 = vunpack.c.l.b16 %v9302
        %v9750 = vunpack.c.h.b16 %v9302
        %v9751 = vunpack.c.l.b16 %v9303
        %v9752 = vunpack.c.h.b16 %v9303
        %v9753 = vunpack.c.l.b16 %v9304
        %v9754 = vunpack.c.h.b16 %v9304
        %v9755 = vunpack.c.l.b16 %v9305
        %v9756 = vunpack.c.h.b16 %v9305
        %v9757 = vunpack.c.l.b16 %v9306
        %v9758 = vunpack.c.h.b16 %v9306
        %v9759 = vunpack.c.l.b16 %v9307
        %v9760 = vunpack.c.h.b16 %v9307
        %v9761 = vunpack.c.l.b16 %v9308
        %v9762 = vunpack.c.h.b16 %v9308
        %v9763 = vunpack.c.l.b16 %v9309
        %v9764 = vunpack.c.h.b16 %v9309
        %v9765 = vunpack.c.l.b16 %v9310
        %v9766 = vunpack.c.h.b16 %v9310
        %v9767 = vunpack.c.l.b16 %v9311
        %v9768 = vunpack.c.h.b16 %v9311
        %v9769 = vunpack.c.l.b16 %v9312
        %v9770 = vunpack.c.h.b16 %v9312
        %v9771 = vunpack.c.l.b16 %v9313
        %v9772 = vunpack.c.h.b16 %v9313
        %v9773 = vunpack.c.l.b16 %v9314
        %v9774 = vunpack.c.h.b16 %v9314
        %v9775 = vunpack.c.l.b16 %v9315
        %v9776 = vunpack.c.h.b16 %v9315
        %v9777 = vunpack.c.l.b16 %v9316
        %v9778 = vunpack.c.h.b16 %v9316
        %v9779 = vunpack.c.l.b16 %v9317
        %v9780 = vunpack.c.h.b16 %v9317
        %v9781 = vunpack.c.l.b16 %v9318
        %v9782 = vunpack.c.h.b16 %v9318
        %v9783 = vunpack.c.l.b16 %v9319
        %v9784 = vunpack.c.h.b16 %v9319
        %v9785 = vunpack.c.l.b16 %v9320
        %v9786 = vunpack.c.h.b16 %v9320
        %v9787 = vunpack.c.l.b16 %v9321
        %v9788 = vunpack.c.h.b16 %v9321
        %v9789 = vunpack.c.l.b16 %v9322
        %v9790 = vunpack.c.h.b16 %v9322
        %v9791 = vunpack.c.l.b16 %v9323
        %v9792 = vunpack.c.h.b16 %v9323
        %v9793 = vunpack.c.l.b16 %v9324
        %v9794 = vunpack.c.h.b16 %v9324
        %v9795 = vunpack.c.l.b16 %v9325
        %v9796 = vunpack.c.h.b16 %v9325
        %v9797 = vpack.c.b16 %v9545, %v9541
        %v9798 = vpack.c.b16 %v9546, %v9542
        %v9799 = vpack.c.b16 %v9547, %v9543
        %v9800 = vpack.c.b16 %v9548, %v9544
        %v9801 = vpack.c.b16 %v9553, %v9549
        %v9802 = vpack.c.b16 %v9554, %v9550
        %v9803 = vpack.c.b16 %v9555, %v9551
        %v9804 = vpack.c.b16 %v9556, %v9552
        %v9805 = vpack.c.b16 %v9561, %v9557
        %v9806 = vpack.c.b16 %v9562, %v9558
        %v9807 = vpack.c.b16 %v9563, %v9559
        %v9808 = vpack.c.b16 %v9564, %v9560
        %v9809 = vpack.c.b16 %v9569, %v9565
        %v9810 = vpack.c.b16 %v9570, %v9566
        %v9811 = vpack.c.b16 %v9571, %v9567
        %v9812 = vpack.c.b16 %v9572, %v9568
        %v9813 = vpack.c.b16 %v9577, %v9573
        %v9814 = vpack.c.b16 %v9578, %v9574
        %v9815 = vpack.c.b16 %v9579, %v9575
        %v9816 = vpack.c.b16 %v9580, %v9576
        %v9817 = vpack.c.b16 %v9585, %v9581
        %v9818 = vpack.c.b16 %v9586, %v9582
        %v9819 = vpack.c.b16 %v9587, %v9583
        %v9820 = vpack.c.b16 %v9588, %v9584
        %v9821 = vpack.c.b16 %v9593, %v9589
        %v9822 = vpack.c.b16 %v9594, %v9590
        %v9823 = vpack.c.b16 %v9595, %v9591
        %v9824 = vpack.c.b16 %v9596, %v9592
        %v9825 = vpack.c.b16 %v9601, %v9597
        %v9826 = vpack.c.b16 %v9602, %v9598
        %v9827 = vpack.c.b16 %v9603, %v9599
        %v9828 = vpack.c.b16 %v9604, %v9600
        %v9829 = vpack.c.b16 %v9609, %v9605
        %v9830 = vpack.c.b16 %v9610, %v9606
        %v9831 = vpack.c.b16 %v9611, %v9607
        %v9832 = vpack.c.b16 %v9612, %v9608
        %v9833 = vpack.c.b16 %v9617, %v9613
        %v9834 = vpack.c.b16 %v9618, %v9614
        %v9835 = vpack.c.b16 %v9619, %v9615
        %v9836 = vpack.c.b16 %v9620, %v9616
        %v9837 = vpack.c.b16 %v9625, %v9621
        %v9838 = vpack.c.b16 %v9626, %v9622
        %v9839 = vpack.c.b16 %v9627, %v9623
        %v9840 = vpack.c.b16 %v9628, %v9624
        %v9841 = vpack.c.b16 %v9633, %v9629
        %v9842 = vpack.c.b16 %v9634, %v9630
        %v9843 = vpack.c.b16 %v9635, %v9631
        %v9844 = vpack.c.b16 %v9636, %v9632
        %v9845 = vpack.c.b16 %v9641, %v9637
        %v9846 = vpack.c.b16 %v9642, %v9638
        %v9847 = vpack.c.b16 %v9643, %v9639
        %v9848 = vpack.c.b16 %v9644, %v9640
        %v9849 = vpack.c.b16 %v9649, %v9645
        %v9850 = vpack.c.b16 %v9650, %v9646
        %v9851 = vpack.c.b16 %v9651, %v9647
        %v9852 = vpack.c.b16 %v9652, %v9648
        %v9853 = vpack.c.b16 %v9657, %v9653
        %v9854 = vpack.c.b16 %v9658, %v9654
        %v9855 = vpack.c.b16 %v9659, %v9655
        %v9856 = vpack.c.b16 %v9660, %v9656
        %v9857 = vpack.c.b16 %v9665, %v9661
        %v9858 = vpack.c.b16 %v9666, %v9662
        %v9859 = vpack.c.b16 %v9667, %v9663
        %v9860 = vpack.c.b16 %v9668, %v9664
        %v9861 = vpack.c.b16 %v9673, %v9669
        %v9862 = vpack.c.b16 %v9674, %v9670
        %v9863 = vpack.c.b16 %v9675, %v9671
        %v9864 = vpack.c.b16 %v9676, %v9672
        %v9865 = vpack.c.b16 %v9681, %v9677
        %v9866 = vpack.c.b16 %v9682, %v9678
        %v9867 = vpack.c.b16 %v9683, %v9679
        %v9868 = vpack.c.b16 %v9684, %v9680
        %v9869 = vpack.c.b16 %v9689, %v9685
        %v9870 = vpack.c.b16 %v9690, %v9686
        %v9871 = vpack.c.b16 %v9691, %v9687
        %v9872 = vpack.c.b16 %v9692, %v9688
        %v9873 = vpack.c.b16 %v9697, %v9693
        %v9874 = vpack.c.b16 %v9698, %v9694
        %v9875 = vpack.c.b16 %v9699, %v9695
        %v9876 = vpack.c.b16 %v9700, %v9696
        %v9877 = vpack.c.b16 %v9705, %v9701
        %v9878 = vpack.c.b16 %v9706, %v9702
        %v9879 = vpack.c.b16 %v9707, %v9703
        %v9880 = vpack.c.b16 %v9708, %v9704
        %v9881 = vpack.c.b16 %v9713, %v9709
        %v9882 = vpack.c.b16 %v9714, %v9710
        %v9883 = vpack.c.b16 %v9715, %v9711
        %v9884 = vpack.c.b16 %v9716, %v9712
        %v9885 = vpack.c.b16 %v9721, %v9717
        %v9886 = vpack.c.b16 %v9722, %v9718
        %v9887 = vpack.c.b16 %v9723, %v9719
        %v9888 = vpack.c.b16 %v9724, %v9720
        %v9889 = vpack.c.b16 %v9729, %v9725
        %v9890 = vpack.c.b16 %v9730, %v9726
        %v9891 = vpack.c.b16 %v9731, %v9727
        %v9892 = vpack.c.b16 %v9732, %v9728
        %v9893 = vpack.c.b16 %v9737, %v9733
        %v9894 = vpack.c.b16 %v9738, %v9734
        %v9895 = vpack.c.b16 %v9739, %v9735
        %v9896 = vpack.c.b16 %v9740, %v9736
        %v9897 = vpack.c.b16 %v9745, %v9741
        %v9898 = vpack.c.b16 %v9746, %v9742
        %v9899 = vpack.c.b16 %v9747, %v9743
        %v9900 = vpack.c.b16 %v9748, %v9744
        %v9901 = vpack.c.b16 %v9753, %v9749
        %v9902 = vpack.c.b16 %v9754, %v9750
        %v9903 = vpack.c.b16 %v9755, %v9751
        %v9904 = vpack.c.b16 %v9756, %v9752
        %v9905 = vpack.c.b16 %v9761, %v9757
        %v9906 = vpack.c.b16 %v9762, %v9758
        %v9907 = vpack.c.b16 %v9763, %v9759
        %v9908 = vpack.c.b16 %v9764, %v9760
        %v9909 = vpack.c.b16 %v9769, %v9765
        %v9910 = vpack.c.b16 %v9770, %v9766
        %v9911 = vpack.c.b16 %v9771, %v9767
        %v9912 = vpack.c.b16 %v9772, %v9768
        %v9913 = vpack.c.b16 %v9777, %v9773
        %v9914 = vpack.c.b16 %v9778, %v9774
        %v9915 = vpack.c.b16 %v9779, %v9775
        %v9916 = vpack.c.b16 %v9780, %v9776
        %v9917 = vpack.c.b16 %v9785, %v9781
        %v9918 = vpack.c.b16 %v9786, %v9782
        %v9919 = vpack.c.b16 %v9787, %v9783
        %v9920 = vpack.c.b16 %v9788, %v9784
        %v9921 = vpack.c.b16 %v9793, %v9789
        %v9922 = vpack.c.b16 %v9794, %v9790
        %v9923 = vpack.c.b16 %v9795, %v9791
        %v9924 = vpack.c.b16 %v9796, %v9792
        %10053 = vmatprep.subr.bf16.mxu0 %v9798
        %10054 = vmatpush1.bf16.msra.mxu0 %v9797
        %10055 = vmatprep.subr.bf16.mxu0 %v9802
        %10056 = vmatpush1.bf16.msra.mxu0 %v9801
        %10057 = vmatprep.subr.bf16.mxu0 %v9806
        %10058 = vmatpush1.bf16.msra.mxu0 %v9805
        %10059 = vmatprep.subr.bf16.mxu0 %v9810
        %10060 = vmatpush1.bf16.msra.mxu0 %v9809
        %10061 = vmatprep.subr.bf16.mxu0 %v9814
        %10062 = vmatpush1.bf16.msra.mxu0 %v9813
        %10063 = vmatprep.subr.bf16.mxu0 %v9818
        %10064 = vmatpush1.bf16.msra.mxu0 %v9817
        %10065 = vmatprep.subr.bf16.mxu0 %v9822
        %10066 = vmatpush1.bf16.msra.mxu0 %v9821
        %10067 = vmatprep.subr.bf16.mxu0 %v9826
        %10068 = vmatpush1.bf16.msra.mxu0 %v9825
        %10069 = vmatprep.subr.bf16.mxu0 %v9830
        %10070 = vmatpush1.bf16.msra.mxu0 %v9829
        %10071 = vmatprep.subr.bf16.mxu0 %v9834
        %10072 = vmatpush1.bf16.msra.mxu0 %v9833
        %10073 = vmatprep.subr.bf16.mxu0 %v9838
        %10074 = vmatpush1.bf16.msra.mxu0 %v9837
        %10075 = vmatprep.subr.bf16.mxu0 %v9842
        %10076 = vmatpush1.bf16.msra.mxu0 %v9841
        %10077 = vmatprep.subr.bf16.mxu0 %v9846
        %10078 = vmatpush1.bf16.msra.mxu0 %v9845
        %10079 = vmatprep.subr.bf16.mxu0 %v9850
        %10080 = vmatpush1.bf16.msra.mxu0 %v9849
        %10081 = vmatprep.subr.bf16.mxu0 %v9854
        %10082 = vmatpush1.bf16.msra.mxu0 %v9853
        %10083 = vmatprep.subr.bf16.mxu0 %v9858
        %10084 = vmatpush1.bf16.msra.mxu0 %v9857
        %10085 = vmatprep.mubr.bf16.mxu0 %v9406
        %10086 = vmatmul.mubr.bf16.gmra.mrb[0].mxu0 %v9405
        %v10087 = vpop.f32.mrb[0].mxu0
        %v10088 = vadd.f32 %v9331, %v10087
        %v10089 = vpop.f32.mrb[0].mxu0
        %v10090 = vadd.f32 %v9335, %v10089
        %v10091 = vpop.f32.mrb[0].mxu0
        %v10092 = vpop.f32.mrb[0].mxu0
        %10093 = vdwg.mxu0
        %10094 = vmatprep.subr.bf16.mxu0 %v9862
        %10095 = vmatpush1.bf16.msra.mxu0 %v9861
        %10096 = vmatprep.subr.bf16.mxu0 %v9866
        %10097 = vmatpush1.bf16.msra.mxu0 %v9865
        %10098 = vmatprep.subr.bf16.mxu0 %v9870
        %10099 = vmatpush1.bf16.msra.mxu0 %v9869
        %10100 = vmatprep.subr.bf16.mxu0 %v9874
        %10101 = vmatpush1.bf16.msra.mxu0 %v9873
        %10102 = vmatprep.subr.bf16.mxu0 %v9878
        %10103 = vmatpush1.bf16.msra.mxu0 %v9877
        %10104 = vmatprep.subr.bf16.mxu0 %v9882
        %10105 = vmatpush1.bf16.msra.mxu0 %v9881
        %10106 = vmatprep.subr.bf16.mxu0 %v9886
        %10107 = vmatpush1.bf16.msra.mxu0 %v9885
        %10108 = vmatprep.subr.bf16.mxu0 %v9890
        %10109 = vmatpush1.bf16.msra.mxu0 %v9889
        %10110 = vmatprep.subr.bf16.mxu0 %v9894
        %10111 = vmatpush1.bf16.msra.mxu0 %v9893
        %10112 = vmatprep.subr.bf16.mxu0 %v9898
        %10113 = vmatpush1.bf16.msra.mxu0 %v9897
        %10114 = vmatprep.subr.bf16.mxu0 %v9902
        %10115 = vmatpush1.bf16.msra.mxu0 %v9901
        %10116 = vmatprep.subr.bf16.mxu0 %v9906
        %10117 = vmatpush1.bf16.msra.mxu0 %v9905
        %10118 = vmatprep.subr.bf16.mxu0 %v9910
        %10119 = vmatpush1.bf16.msra.mxu0 %v9909
        %10120 = vmatprep.subr.bf16.mxu0 %v9914
        %10121 = vmatpush1.bf16.msra.mxu0 %v9913
        %10122 = vmatprep.subr.bf16.mxu0 %v9918
        %10123 = vmatpush1.bf16.msra.mxu0 %v9917
        %10124 = vmatprep.subr.bf16.mxu0 %v9922
        %10125 = vmatpush1.bf16.msra.mxu0 %v9921
        %10126 = vmatprep.mubr.bf16.mxu0 %v9408
        %10127 = vmatmul.mubr.bf16.gmra.mrb[0].mxu0 %v9407
        %v10128 = vpop.f32.mrb[0].mxu0
        %v10129 = vadd.f32 %v10088, %v10128
        %v10130 = vpop.f32.mrb[0].mxu0
        %v10131 = vadd.f32 %v10090, %v10130
        %v10132 = vpop.f32.mrb[0].mxu0
        %v10133 = vpop.f32.mrb[0].mxu0
        %10134 = vdwg.mxu0
        %10135 = vmatprep.subr.bf16.mxu0 %v9800
        %10136 = vmatpush1.bf16.msra.mxu0 %v9799
        %10137 = vmatprep.subr.bf16.mxu0 %v9804
        %10138 = vmatpush1.bf16.msra.mxu0 %v9803
        %10139 = vmatprep.subr.bf16.mxu0 %v9808
        %10140 = vmatpush1.bf16.msra.mxu0 %v9807
        %10141 = vmatprep.subr.bf16.mxu0 %v9812
        %10142 = vmatpush1.bf16.msra.mxu0 %v9811
        %10143 = vmatprep.subr.bf16.mxu0 %v9816
        %10144 = vmatpush1.bf16.msra.mxu0 %v9815
        %10145 = vmatprep.subr.bf16.mxu0 %v9820
        %10146 = vmatpush1.bf16.msra.mxu0 %v9819
        %10147 = vmatprep.subr.bf16.mxu0 %v9824
        %10148 = vmatpush1.bf16.msra.mxu0 %v9823
        %10149 = vmatprep.subr.bf16.mxu0 %v9828
        %10150 = vmatpush1.bf16.msra.mxu0 %v9827
        %10151 = vmatprep.subr.bf16.mxu0 %v9832
        %10152 = vmatpush1.bf16.msra.mxu0 %v9831
        %10153 = vmatprep.subr.bf16.mxu0 %v9836
        %10154 = vmatpush1.bf16.msra.mxu0 %v9835
        %10155 = vmatprep.subr.bf16.mxu0 %v9840
        %10156 = vmatpush1.bf16.msra.mxu0 %v9839
        %10157 = vmatprep.subr.bf16.mxu0 %v9844
        %10158 = vmatpush1.bf16.msra.mxu0 %v9843
        %10159 = vmatprep.subr.bf16.mxu0 %v9848
        %10160 = vmatpush1.bf16.msra.mxu0 %v9847
        %10161 = vmatprep.subr.bf16.mxu0 %v9852
        %10162 = vmatpush1.bf16.msra.mxu0 %v9851
        %10163 = vmatprep.subr.bf16.mxu0 %v9856
        %10164 = vmatpush1.bf16.msra.mxu0 %v9855
        %10165 = vmatprep.subr.bf16.mxu0 %v9860
        %10166 = vmatpush1.bf16.msra.mxu0 %v9859
        %10167 = vmatprep.mubr.bf16.mxu0 %v9406
        %10168 = vmatmul.mubr.bf16.gmra.mrb[0].mxu0 %v9405
        %v10169 = vpop.f32.mrb[0].mxu0
        %v10170 = vadd.f32 %v9339, %v10169
        %v10171 = vpop.f32.mrb[0].mxu0
        %v10172 = vadd.f32 %v9343, %v10171
        %v10173 = vpop.f32.mrb[0].mxu0
        %v10174 = vpop.f32.mrb[0].mxu0
        %10175 = vdwg.mxu0
        %10176 = vmatprep.subr.bf16.mxu0 %v9864
        %10177 = vmatpush1.bf16.msra.mxu0 %v9863
        %10178 = vmatprep.subr.bf16.mxu0 %v9868
        %10179 = vmatpush1.bf16.msra.mxu0 %v9867
        %10180 = vmatprep.subr.bf16.mxu0 %v9872
        %10181 = vmatpush1.bf16.msra.mxu0 %v9871
        %10182 = vmatprep.subr.bf16.mxu0 %v9876
        %10183 = vmatpush1.bf16.msra.mxu0 %v9875
        %10184 = vmatprep.subr.bf16.mxu0 %v9880
        %10185 = vmatpush1.bf16.msra.mxu0 %v9879
        %10186 = vmatprep.subr.bf16.mxu0 %v9884
        %10187 = vmatpush1.bf16.msra.mxu0 %v9883
        %10188 = vmatprep.subr.bf16.mxu0 %v9888
        %10189 = vmatpush1.bf16.msra.mxu0 %v9887
        %10190 = vmatprep.subr.bf16.mxu0 %v9892
        %10191 = vmatpush1.bf16.msra.mxu0 %v9891
        %10192 = vmatprep.subr.bf16.mxu0 %v9896
        %10193 = vmatpush1.bf16.msra.mxu0 %v9895
        %10194 = vmatprep.subr.bf16.mxu0 %v9900
        %10195 = vmatpush1.bf16.msra.mxu0 %v9899
        %10196 = vmatprep.subr.bf16.mxu0 %v9904
        %10197 = vmatpush1.bf16.msra.mxu0 %v9903
        %10198 = vmatprep.subr.bf16.mxu0 %v9908
        %10199 = vmatpush1.bf16.msra.mxu0 %v9907
        %10200 = vmatprep.subr.bf16.mxu0 %v9912
        %10201 = vmatpush1.bf16.msra.mxu0 %v9911
        %10202 = vmatprep.subr.bf16.mxu0 %v9916
        %10203 = vmatpush1.bf16.msra.mxu0 %v9915
        %10204 = vmatprep.subr.bf16.mxu0 %v9920
        %10205 = vmatpush1.bf16.msra.mxu0 %v9919
        %10206 = vmatprep.subr.bf16.mxu0 %v9924
        %10207 = vmatpush1.bf16.msra.mxu0 %v9923
        %10208 = vmatprep.mubr.bf16.mxu0 %v9408
        %10209 = vmatmul.mubr.bf16.gmra.mrb[0].mxu0 %v9407
        %v10210 = vpop.f32.mrb[0].mxu0
        %v10211 = vadd.f32 %v10170, %v10210
        %v10212 = vpop.f32.mrb[0].mxu0
        %v10213 = vadd.f32 %v10172, %v10212
        %v10214 = vpop.f32.mrb[0].mxu0
        %v10215 = vpop.f32.mrb[0].mxu0
        %10216 = vdwg.mxu0
        %v10217 = vmax.f32 %v10129, 0.0
        %v10218 = vmax.f32 %v10131, 0.0
        %v10219 = vmax.f32 %v10211, 0.0
        %v10220 = vmax.f32 %v10213, 0.0
        %v10221 = vpack.c.bf16 %v10217, %v10217
        %v10222 = vpack.c.bf16 %v10218, %v10218
        %v10223 = vpack.c.bf16 %v10219, %v10219
        %v10224 = vpack.c.bf16 %v10220, %v10220
        %v10225 = vld [vmem:[%s9] sm:$0xff]
        %v10226 = vld [vmem:[%s9 + $0x8] sm:$0xff]
        %v10227 = vld [vmem:[%s9 + $0x10] sm:$0xff]
        %v10228 = vld [vmem:[%s9 + $0x18] sm:$0xff]
        %v10229 = vld [vmem:[%s9 + $0x20] sm:$0xff]
        %v10230 = vld [vmem:[%s9 + $0x28] sm:$0xff]
        %v10231 = vld [vmem:[%s9 + $0x30] sm:$0xff]
        %v10232 = vld [vmem:[%s9 + $0x38] sm:$0xff]
        %v10233 = vld [vmem:[%s9 + $0x40] sm:$0xff]
        %v10234 = vld [vmem:[%s9 + $0x48] sm:$0xff]
        %v10235 = vld [vmem:[%s9 + $0x50] sm:$0xff]
        %v10236 = vld [vmem:[%s9 + $0x58] sm:$0xff]
        %v10237 = vld [vmem:[%s9 + $0x60] sm:$0xff]
        %v10238 = vld [vmem:[%s9 + $0x68] sm:$0xff]
        %v10239 = vld [vmem:[%s9 + $0x70] sm:$0xff]
        %v10240 = vld [vmem:[%s9 + $0x78] sm:$0xff]
        %v10241 = vld [vmem:[%s9 + $0x80] sm:$0xff]
        %v10242 = vld [vmem:[%s9 + $0x88] sm:$0xff]
        %v10243 = vld [vmem:[%s9 + $0x90] sm:$0xff]
        %v10244 = vld [vmem:[%s9 + $0x98] sm:$0xff]
        %v10245 = vld [vmem:[%s9 + $0xa0] sm:$0xff]
        %v10246 = vld [vmem:[%s9 + $0xa8] sm:$0xff]
        %v10247 = vld [vmem:[%s9 + $0xb0] sm:$0xff]
        %v10248 = vld [vmem:[%s9 + $0xb8] sm:$0xff]
        %v10249 = vld [vmem:[%s9 + $0xc0] sm:$0xff]
        %v10250 = vld [vmem:[%s9 + $0xc8] sm:$0xff]
        %v10251 = vld [vmem:[%s9 + $0xd0] sm:$0xff]
        %v10252 = vld [vmem:[%s9 + $0xd8] sm:$0xff]
        %v10253 = vld [vmem:[%s9 + $0xe0] sm:$0xff]
        %v10254 = vld [vmem:[%s9 + $0xe8] sm:$0xff]
        %v10255 = vld [vmem:[%s9 + $0xf0] sm:$0xff]
        %v10256 = vld [vmem:[%s9 + $0xf8] sm:$0xff]
        %v10257 = vld [vmem:[%s9 + $0x100] sm:$0xff]
        %v10258 = vld [vmem:[%s9 + $0x108] sm:$0xff]
        %v10259 = vld [vmem:[%s9 + $0x110] sm:$0xff]
        %v10260 = vld [vmem:[%s9 + $0x118] sm:$0xff]
        %v10261 = vld [vmem:[%s9 + $0x120] sm:$0xff]
        %v10262 = vld [vmem:[%s9 + $0x128] sm:$0xff]
        %v10263 = vld [vmem:[%s9 + $0x130] sm:$0xff]
        %v10264 = vld [vmem:[%s9 + $0x138] sm:$0xff]
        %v10265 = vld [vmem:[%s9 + $0x140] sm:$0xff]
        %v10266 = vld [vmem:[%s9 + $0x148] sm:$0xff]
        %v10267 = vld [vmem:[%s9 + $0x150] sm:$0xff]
        %v10268 = vld [vmem:[%s9 + $0x158] sm:$0xff]
        %v10269 = vld [vmem:[%s9 + $0x160] sm:$0xff]
        %v10270 = vld [vmem:[%s9 + $0x168] sm:$0xff]
        %v10271 = vld [vmem:[%s9 + $0x170] sm:$0xff]
        %v10272 = vld [vmem:[%s9 + $0x178] sm:$0xff]
        %v10273 = vld [vmem:[%s9 + $0x180] sm:$0xff]
        %v10274 = vld [vmem:[%s9 + $0x188] sm:$0xff]
        %v10275 = vld [vmem:[%s9 + $0x190] sm:$0xff]
        %v10276 = vld [vmem:[%s9 + $0x198] sm:$0xff]
        %v10277 = vld [vmem:[%s9 + $0x1a0] sm:$0xff]
        %v10278 = vld [vmem:[%s9 + $0x1a8] sm:$0xff]
        %v10279 = vld [vmem:[%s9 + $0x1b0] sm:$0xff]
        %v10280 = vld [vmem:[%s9 + $0x1b8] sm:$0xff]
        %v10281 = vld [vmem:[%s9 + $0x1c0] sm:$0xff]
        %v10282 = vld [vmem:[%s9 + $0x1c8] sm:$0xff]
        %v10283 = vld [vmem:[%s9 + $0x1d0] sm:$0xff]
        %v10284 = vld [vmem:[%s9 + $0x1d8] sm:$0xff]
        %v10285 = vld [vmem:[%s9 + $0x1e0] sm:$0xff]
        %v10286 = vld [vmem:[%s9 + $0x1e8] sm:$0xff]
        %v10287 = vld [vmem:[%s9 + $0x1f0] sm:$0xff]
        %v10288 = vld [vmem:[%s9 + $0x1f8] sm:$0xff]
        %v10289 = vld [vmem:[%s9 + $0x200] sm:$0xff]
        %v10290 = vld [vmem:[%s9 + $0x208] sm:$0xff]
        %v10291 = vld [vmem:[%s9 + $0x210] sm:$0xff]
        %v10292 = vld [vmem:[%s9 + $0x218] sm:$0xff]
        %v10293 = vld [vmem:[%s9 + $0x220] sm:$0xff]
        %v10294 = vld [vmem:[%s9 + $0x228] sm:$0xff]
        %v10295 = vld [vmem:[%s9 + $0x230] sm:$0xff]
        %v10296 = vld [vmem:[%s9 + $0x238] sm:$0xff]
        %v10297 = vld [vmem:[%s9 + $0x240] sm:$0xff]
        %v10298 = vld [vmem:[%s9 + $0x248] sm:$0xff]
        %v10299 = vld [vmem:[%s9 + $0x250] sm:$0xff]
        %v10300 = vld [vmem:[%s9 + $0x258] sm:$0xff]
        %v10301 = vld [vmem:[%s9 + $0x260] sm:$0xff]
        %v10302 = vld [vmem:[%s9 + $0x268] sm:$0xff]
        %v10303 = vld [vmem:[%s9 + $0x270] sm:$0xff]
        %v10304 = vld [vmem:[%s9 + $0x278] sm:$0xff]
        %v10305 = vld [vmem:[%s9 + $0x280] sm:$0xff]
        %v10306 = vld [vmem:[%s9 + $0x288] sm:$0xff]
        %v10307 = vld [vmem:[%s9 + $0x290] sm:$0xff]
        %v10308 = vld [vmem:[%s9 + $0x298] sm:$0xff]
        %v10309 = vld [vmem:[%s9 + $0x2a0] sm:$0xff]
        %v10310 = vld [vmem:[%s9 + $0x2a8] sm:$0xff]
        %v10311 = vld [vmem:[%s9 + $0x2b0] sm:$0xff]
        %v10312 = vld [vmem:[%s9 + $0x2b8] sm:$0xff]
        %v10313 = vld [vmem:[%s9 + $0x2c0] sm:$0xff]
        %v10314 = vld [vmem:[%s9 + $0x2c8] sm:$0xff]
        %v10315 = vld [vmem:[%s9 + $0x2d0] sm:$0xff]
        %v10316 = vld [vmem:[%s9 + $0x2d8] sm:$0xff]
        %v10317 = vld [vmem:[%s9 + $0x2e0] sm:$0xff]
        %v10318 = vld [vmem:[%s9 + $0x2e8] sm:$0xff]
        %v10319 = vld [vmem:[%s9 + $0x2f0] sm:$0xff]
        %v10320 = vld [vmem:[%s9 + $0x2f8] sm:$0xff]
        %v10321 = vld [vmem:[%s9 + $0x300] sm:$0xff]
        %v10322 = vld [vmem:[%s9 + $0x308] sm:$0xff]
        %v10323 = vld [vmem:[%s9 + $0x310] sm:$0xff]
        %v10324 = vld [vmem:[%s9 + $0x318] sm:$0xff]
        %v10325 = vld [vmem:[%s9 + $0x320] sm:$0xff]
        %v10326 = vld [vmem:[%s9 + $0x328] sm:$0xff]
        %v10327 = vld [vmem:[%s9 + $0x330] sm:$0xff]
        %v10328 = vld [vmem:[%s9 + $0x338] sm:$0xff]
        %v10329 = vld [vmem:[%s9 + $0x340] sm:$0xff]
        %v10330 = vld [vmem:[%s9 + $0x348] sm:$0xff]
        %v10331 = vld [vmem:[%s9 + $0x350] sm:$0xff]
        %v10332 = vld [vmem:[%s9 + $0x358] sm:$0xff]
        %v10333 = vld [vmem:[%s9 + $0x360] sm:$0xff]
        %v10334 = vld [vmem:[%s9 + $0x368] sm:$0xff]
        %v10335 = vld [vmem:[%s9 + $0x370] sm:$0xff]
        %v10336 = vld [vmem:[%s9 + $0x378] sm:$0xff]
        %v10337 = vld [vmem:[%s9 + $0x380] sm:$0xff]
        %v10338 = vld [vmem:[%s9 + $0x388] sm:$0xff]
        %v10339 = vld [vmem:[%s9 + $0x390] sm:$0xff]
        %v10340 = vld [vmem:[%s9 + $0x398] sm:$0xff]
        %v10341 = vld [vmem:[%s9 + $0x3a0] sm:$0xff]
        %v10342 = vld [vmem:[%s9 + $0x3a8] sm:$0xff]
        %v10343 = vld [vmem:[%s9 + $0x3b0] sm:$0xff]
        %v10344 = vld [vmem:[%s9 + $0x3b8] sm:$0xff]
        %v10345 = vld [vmem:[%s9 + $0x3c0] sm:$0xff]
        %v10346 = vld [vmem:[%s9 + $0x3c8] sm:$0xff]
        %v10347 = vld [vmem:[%s9 + $0x3d0] sm:$0xff]
        %v10348 = vld [vmem:[%s9 + $0x3d8] sm:$0xff]
        %v10349 = vld [vmem:[%s9 + $0x3e0] sm:$0xff]
        %v10350 = vld [vmem:[%s9 + $0x3e8] sm:$0xff]
        %v10351 = vld [vmem:[%s9 + $0x3f0] sm:$0xff]
        %v10352 = vld [vmem:[%s9 + $0x3f8] sm:$0xff]
        %v10353 = vld [vmem:[%s10] sm:$0xf]
        %v10355 = vlaneseq
        %v10356 = vshrl.u32 %v10355, 7
        %v10357 = vsub.s32 0, %v10356
        %v10358 = vrot.slane %v10353, %v10357
        %v10359 = vlaneseq
        %v10360 = vshrl.u32 %v10359, 7
        %v10361 = vsub.s32 1, %v10360
        %v10362 = vrot.slane %v10353, %v10361
        %v10363 = vlaneseq
        %v10364 = vshrl.u32 %v10363, 7
        %v10365 = vsub.s32 2, %v10364
        %v10366 = vrot.slane %v10353, %v10365
        %v10367 = vlaneseq
        %v10368 = vshrl.u32 %v10367, 7
        %v10369 = vsub.s32 3, %v10368
        %v10370 = vrot.slane %v10353, %v10369
        %v10503 = vunpack.c.l.b16 %v10225
        %v10504 = vunpack.c.h.b16 %v10225
        %v10505 = vunpack.c.l.b16 %v10226
        %v10506 = vunpack.c.h.b16 %v10226
        %v10507 = vunpack.c.l.b16 %v10227
        %v10508 = vunpack.c.h.b16 %v10227
        %v10509 = vunpack.c.l.b16 %v10228
        %v10510 = vunpack.c.h.b16 %v10228
        %v10511 = vunpack.c.l.b16 %v10229
        %v10512 = vunpack.c.h.b16 %v10229
        %v10513 = vunpack.c.l.b16 %v10230
        %v10514 = vunpack.c.h.b16 %v10230
        %v10515 = vunpack.c.l.b16 %v10231
        %v10516 = vunpack.c.h.b16 %v10231
        %v10517 = vunpack.c.l.b16 %v10232
        %v10518 = vunpack.c.h.b16 %v10232
        %v10519 = vunpack.c.l.b16 %v10233
        %v10520 = vunpack.c.h.b16 %v10233
        %v10521 = vunpack.c.l.b16 %v10234
        %v10522 = vunpack.c.h.b16 %v10234
        %v10523 = vunpack.c.l.b16 %v10235
        %v10524 = vunpack.c.h.b16 %v10235
        %v10525 = vunpack.c.l.b16 %v10236
        %v10526 = vunpack.c.h.b16 %v10236
        %v10527 = vunpack.c.l.b16 %v10237
        %v10528 = vunpack.c.h.b16 %v10237
        %v10529 = vunpack.c.l.b16 %v10238
        %v10530 = vunpack.c.h.b16 %v10238
        %v10531 = vunpack.c.l.b16 %v10239
        %v10532 = vunpack.c.h.b16 %v10239
        %v10533 = vunpack.c.l.b16 %v10240
        %v10534 = vunpack.c.h.b16 %v10240
        %v10535 = vunpack.c.l.b16 %v10241
        %v10536 = vunpack.c.h.b16 %v10241
        %v10537 = vunpack.c.l.b16 %v10242
        %v10538 = vunpack.c.h.b16 %v10242
        %v10539 = vunpack.c.l.b16 %v10243
        %v10540 = vunpack.c.h.b16 %v10243
        %v10541 = vunpack.c.l.b16 %v10244
        %v10542 = vunpack.c.h.b16 %v10244
        %v10543 = vunpack.c.l.b16 %v10245
        %v10544 = vunpack.c.h.b16 %v10245
        %v10545 = vunpack.c.l.b16 %v10246
        %v10546 = vunpack.c.h.b16 %v10246
        %v10547 = vunpack.c.l.b16 %v10247
        %v10548 = vunpack.c.h.b16 %v10247
        %v10549 = vunpack.c.l.b16 %v10248
        %v10550 = vunpack.c.h.b16 %v10248
        %v10551 = vunpack.c.l.b16 %v10249
        %v10552 = vunpack.c.h.b16 %v10249
        %v10553 = vunpack.c.l.b16 %v10250
        %v10554 = vunpack.c.h.b16 %v10250
        %v10555 = vunpack.c.l.b16 %v10251
        %v10556 = vunpack.c.h.b16 %v10251
        %v10557 = vunpack.c.l.b16 %v10252
        %v10558 = vunpack.c.h.b16 %v10252
        %v10559 = vunpack.c.l.b16 %v10253
        %v10560 = vunpack.c.h.b16 %v10253
        %v10561 = vunpack.c.l.b16 %v10254
        %v10562 = vunpack.c.h.b16 %v10254
        %v10563 = vunpack.c.l.b16 %v10255
        %v10564 = vunpack.c.h.b16 %v10255
        %v10565 = vunpack.c.l.b16 %v10256
        %v10566 = vunpack.c.h.b16 %v10256
        %v10567 = vunpack.c.l.b16 %v10257
        %v10568 = vunpack.c.h.b16 %v10257
        %v10569 = vunpack.c.l.b16 %v10258
        %v10570 = vunpack.c.h.b16 %v10258
        %v10571 = vunpack.c.l.b16 %v10259
        %v10572 = vunpack.c.h.b16 %v10259
        %v10573 = vunpack.c.l.b16 %v10260
        %v10574 = vunpack.c.h.b16 %v10260
        %v10575 = vunpack.c.l.b16 %v10261
        %v10576 = vunpack.c.h.b16 %v10261
        %v10577 = vunpack.c.l.b16 %v10262
        %v10578 = vunpack.c.h.b16 %v10262
        %v10579 = vunpack.c.l.b16 %v10263
        %v10580 = vunpack.c.h.b16 %v10263
        %v10581 = vunpack.c.l.b16 %v10264
        %v10582 = vunpack.c.h.b16 %v10264
        %v10583 = vunpack.c.l.b16 %v10265
        %v10584 = vunpack.c.h.b16 %v10265
        %v10585 = vunpack.c.l.b16 %v10266
        %v10586 = vunpack.c.h.b16 %v10266
        %v10587 = vunpack.c.l.b16 %v10267
        %v10588 = vunpack.c.h.b16 %v10267
        %v10589 = vunpack.c.l.b16 %v10268
        %v10590 = vunpack.c.h.b16 %v10268
        %v10591 = vunpack.c.l.b16 %v10269
        %v10592 = vunpack.c.h.b16 %v10269
        %v10593 = vunpack.c.l.b16 %v10270
        %v10594 = vunpack.c.h.b16 %v10270
        %v10595 = vunpack.c.l.b16 %v10271
        %v10596 = vunpack.c.h.b16 %v10271
        %v10597 = vunpack.c.l.b16 %v10272
        %v10598 = vunpack.c.h.b16 %v10272
        %v10599 = vunpack.c.l.b16 %v10273
        %v10600 = vunpack.c.h.b16 %v10273
        %v10601 = vunpack.c.l.b16 %v10274
        %v10602 = vunpack.c.h.b16 %v10274
        %v10603 = vunpack.c.l.b16 %v10275
        %v10604 = vunpack.c.h.b16 %v10275
        %v10605 = vunpack.c.l.b16 %v10276
        %v10606 = vunpack.c.h.b16 %v10276
        %v10607 = vunpack.c.l.b16 %v10277
        %v10608 = vunpack.c.h.b16 %v10277
        %v10609 = vunpack.c.l.b16 %v10278
        %v10610 = vunpack.c.h.b16 %v10278
        %v10611 = vunpack.c.l.b16 %v10279
        %v10612 = vunpack.c.h.b16 %v10279
        %v10613 = vunpack.c.l.b16 %v10280
        %v10614 = vunpack.c.h.b16 %v10280
        %v10615 = vunpack.c.l.b16 %v10281
        %v10616 = vunpack.c.h.b16 %v10281
        %v10617 = vunpack.c.l.b16 %v10282
        %v10618 = vunpack.c.h.b16 %v10282
        %v10619 = vunpack.c.l.b16 %v10283
        %v10620 = vunpack.c.h.b16 %v10283
        %v10621 = vunpack.c.l.b16 %v10284
        %v10622 = vunpack.c.h.b16 %v10284
        %v10623 = vunpack.c.l.b16 %v10285
        %v10624 = vunpack.c.h.b16 %v10285
        %v10625 = vunpack.c.l.b16 %v10286
        %v10626 = vunpack.c.h.b16 %v10286
        %v10627 = vunpack.c.l.b16 %v10287
        %v10628 = vunpack.c.h.b16 %v10287
        %v10629 = vunpack.c.l.b16 %v10288
        %v10630 = vunpack.c.h.b16 %v10288
        %v10631 = vunpack.c.l.b16 %v10289
        %v10632 = vunpack.c.h.b16 %v10289
        %v10633 = vunpack.c.l.b16 %v10290
        %v10634 = vunpack.c.h.b16 %v10290
        %v10635 = vunpack.c.l.b16 %v10291
        %v10636 = vunpack.c.h.b16 %v10291
        %v10637 = vunpack.c.l.b16 %v10292
        %v10638 = vunpack.c.h.b16 %v10292
        %v10639 = vunpack.c.l.b16 %v10293
        %v10640 = vunpack.c.h.b16 %v10293
        %v10641 = vunpack.c.l.b16 %v10294
        %v10642 = vunpack.c.h.b16 %v10294
        %v10643 = vunpack.c.l.b16 %v10295
        %v10644 = vunpack.c.h.b16 %v10295
        %v10645 = vunpack.c.l.b16 %v10296
        %v10646 = vunpack.c.h.b16 %v10296
        %v10647 = vunpack.c.l.b16 %v10297
        %v10648 = vunpack.c.h.b16 %v10297
        %v10649 = vunpack.c.l.b16 %v10298
        %v10650 = vunpack.c.h.b16 %v10298
        %v10651 = vunpack.c.l.b16 %v10299
        %v10652 = vunpack.c.h.b16 %v10299
        %v10653 = vunpack.c.l.b16 %v10300
        %v10654 = vunpack.c.h.b16 %v10300
        %v10655 = vunpack.c.l.b16 %v10301
        %v10656 = vunpack.c.h.b16 %v10301
        %v10657 = vunpack.c.l.b16 %v10302
        %v10658 = vunpack.c.h.b16 %v10302
        %v10659 = vunpack.c.l.b16 %v10303
        %v10660 = vunpack.c.h.b16 %v10303
        %v10661 = vunpack.c.l.b16 %v10304
        %v10662 = vunpack.c.h.b16 %v10304
        %v10663 = vunpack.c.l.b16 %v10305
        %v10664 = vunpack.c.h.b16 %v10305
        %v10665 = vunpack.c.l.b16 %v10306
        %v10666 = vunpack.c.h.b16 %v10306
        %v10667 = vunpack.c.l.b16 %v10307
        %v10668 = vunpack.c.h.b16 %v10307
        %v10669 = vunpack.c.l.b16 %v10308
        %v10670 = vunpack.c.h.b16 %v10308
        %v10671 = vunpack.c.l.b16 %v10309
        %v10672 = vunpack.c.h.b16 %v10309
        %v10673 = vunpack.c.l.b16 %v10310
        %v10674 = vunpack.c.h.b16 %v10310
        %v10675 = vunpack.c.l.b16 %v10311
        %v10676 = vunpack.c.h.b16 %v10311
        %v10677 = vunpack.c.l.b16 %v10312
        %v10678 = vunpack.c.h.b16 %v10312
        %v10679 = vunpack.c.l.b16 %v10313
        %v10680 = vunpack.c.h.b16 %v10313
        %v10681 = vunpack.c.l.b16 %v10314
        %v10682 = vunpack.c.h.b16 %v10314
        %v10683 = vunpack.c.l.b16 %v10315
        %v10684 = vunpack.c.h.b16 %v10315
        %v10685 = vunpack.c.l.b16 %v10316
        %v10686 = vunpack.c.h.b16 %v10316
        %v10687 = vunpack.c.l.b16 %v10317
        %v10688 = vunpack.c.h.b16 %v10317
        %v10689 = vunpack.c.l.b16 %v10318
        %v10690 = vunpack.c.h.b16 %v10318
        %v10691 = vunpack.c.l.b16 %v10319
        %v10692 = vunpack.c.h.b16 %v10319
        %v10693 = vunpack.c.l.b16 %v10320
        %v10694 = vunpack.c.h.b16 %v10320
        %v10695 = vunpack.c.l.b16 %v10321
        %v10696 = vunpack.c.h.b16 %v10321
        %v10697 = vunpack.c.l.b16 %v10322
        %v10698 = vunpack.c.h.b16 %v10322
        %v10699 = vunpack.c.l.b16 %v10323
        %v10700 = vunpack.c.h.b16 %v10323
        %v10701 = vunpack.c.l.b16 %v10324
        %v10702 = vunpack.c.h.b16 %v10324
        %v10703 = vunpack.c.l.b16 %v10325
        %v10704 = vunpack.c.h.b16 %v10325
        %v10705 = vunpack.c.l.b16 %v10326
        %v10706 = vunpack.c.h.b16 %v10326
        %v10707 = vunpack.c.l.b16 %v10327
        %v10708 = vunpack.c.h.b16 %v10327
        %v10709 = vunpack.c.l.b16 %v10328
        %v10710 = vunpack.c.h.b16 %v10328
        %v10711 = vunpack.c.l.b16 %v10329
        %v10712 = vunpack.c.h.b16 %v10329
        %v10713 = vunpack.c.l.b16 %v10330
        %v10714 = vunpack.c.h.b16 %v10330
        %v10715 = vunpack.c.l.b16 %v10331
        %v10716 = vunpack.c.h.b16 %v10331
        %v10717 = vunpack.c.l.b16 %v10332
        %v10718 = vunpack.c.h.b16 %v10332
        %v10719 = vunpack.c.l.b16 %v10333
        %v10720 = vunpack.c.h.b16 %v10333
        %v10721 = vunpack.c.l.b16 %v10334
        %v10722 = vunpack.c.h.b16 %v10334
        %v10723 = vunpack.c.l.b16 %v10335
        %v10724 = vunpack.c.h.b16 %v10335
        %v10725 = vunpack.c.l.b16 %v10336
        %v10726 = vunpack.c.h.b16 %v10336
        %v10727 = vunpack.c.l.b16 %v10337
        %v10728 = vunpack.c.h.b16 %v10337
        %v10729 = vunpack.c.l.b16 %v10338
        %v10730 = vunpack.c.h.b16 %v10338
        %v10731 = vunpack.c.l.b16 %v10339
        %v10732 = vunpack.c.h.b16 %v10339
        %v10733 = vunpack.c.l.b16 %v10340
        %v10734 = vunpack.c.h.b16 %v10340
        %v10735 = vunpack.c.l.b16 %v10341
        %v10736 = vunpack.c.h.b16 %v10341
        %v10737 = vunpack.c.l.b16 %v10342
        %v10738 = vunpack.c.h.b16 %v10342
        %v10739 = vunpack.c.l.b16 %v10343
        %v10740 = vunpack.c.h.b16 %v10343
        %v10741 = vunpack.c.l.b16 %v10344
        %v10742 = vunpack.c.h.b16 %v10344
        %v10743 = vunpack.c.l.b16 %v10345
        %v10744 = vunpack.c.h.b16 %v10345
        %v10745 = vunpack.c.l.b16 %v10346
        %v10746 = vunpack.c.h.b16 %v10346
        %v10747 = vunpack.c.l.b16 %v10347
        %v10748 = vunpack.c.h.b16 %v10347
        %v10749 = vunpack.c.l.b16 %v10348
        %v10750 = vunpack.c.h.b16 %v10348
        %v10751 = vunpack.c.l.b16 %v10349
        %v10752 = vunpack.c.h.b16 %v10349
        %v10753 = vunpack.c.l.b16 %v10350
        %v10754 = vunpack.c.h.b16 %v10350
        %v10755 = vunpack.c.l.b16 %v10351
        %v10756 = vunpack.c.h.b16 %v10351
        %v10757 = vunpack.c.l.b16 %v10352
        %v10758 = vunpack.c.h.b16 %v10352
        %v10759 = vpack.c.b16 %v10507, %v10503
        %v10760 = vpack.c.b16 %v10508, %v10504
        %v10761 = vpack.c.b16 %v10509, %v10505
        %v10762 = vpack.c.b16 %v10510, %v10506
        %v10763 = vpack.c.b16 %v10515, %v10511
        %v10764 = vpack.c.b16 %v10516, %v10512
        %v10765 = vpack.c.b16 %v10517, %v10513
        %v10766 = vpack.c.b16 %v10518, %v10514
        %v10767 = vpack.c.b16 %v10523, %v10519
        %v10768 = vpack.c.b16 %v10524, %v10520
        %v10769 = vpack.c.b16 %v10525, %v10521
        %v10770 = vpack.c.b16 %v10526, %v10522
        %v10771 = vpack.c.b16 %v10531, %v10527
        %v10772 = vpack.c.b16 %v10532, %v10528
        %v10773 = vpack.c.b16 %v10533, %v10529
        %v10774 = vpack.c.b16 %v10534, %v10530
        %v10775 = vpack.c.b16 %v10539, %v10535
        %v10776 = vpack.c.b16 %v10540, %v10536
        %v10777 = vpack.c.b16 %v10541, %v10537
        %v10778 = vpack.c.b16 %v10542, %v10538
        %v10779 = vpack.c.b16 %v10547, %v10543
        %v10780 = vpack.c.b16 %v10548, %v10544
        %v10781 = vpack.c.b16 %v10549, %v10545
        %v10782 = vpack.c.b16 %v10550, %v10546
        %v10783 = vpack.c.b16 %v10555, %v10551
        %v10784 = vpack.c.b16 %v10556, %v10552
        %v10785 = vpack.c.b16 %v10557, %v10553
        %v10786 = vpack.c.b16 %v10558, %v10554
        %v10787 = vpack.c.b16 %v10563, %v10559
        %v10788 = vpack.c.b16 %v10564, %v10560
        %v10789 = vpack.c.b16 %v10565, %v10561
        %v10790 = vpack.c.b16 %v10566, %v10562
        %v10791 = vpack.c.b16 %v10571, %v10567
        %v10792 = vpack.c.b16 %v10572, %v10568
        %v10793 = vpack.c.b16 %v10573, %v10569
        %v10794 = vpack.c.b16 %v10574, %v10570
        %v10795 = vpack.c.b16 %v10579, %v10575
        %v10796 = vpack.c.b16 %v10580, %v10576
        %v10797 = vpack.c.b16 %v10581, %v10577
        %v10798 = vpack.c.b16 %v10582, %v10578
        %v10799 = vpack.c.b16 %v10587, %v10583
        %v10800 = vpack.c.b16 %v10588, %v10584
        %v10801 = vpack.c.b16 %v10589, %v10585
        %v10802 = vpack.c.b16 %v10590, %v10586
        %v10803 = vpack.c.b16 %v10595, %v10591
        %v10804 = vpack.c.b16 %v10596, %v10592
        %v10805 = vpack.c.b16 %v10597, %v10593
        %v10806 = vpack.c.b16 %v10598, %v10594
        %v10807 = vpack.c.b16 %v10603, %v10599
        %v10808 = vpack.c.b16 %v10604, %v10600
        %v10809 = vpack.c.b16 %v10605, %v10601
        %v10810 = vpack.c.b16 %v10606, %v10602
        %v10811 = vpack.c.b16 %v10611, %v10607
        %v10812 = vpack.c.b16 %v10612, %v10608
        %v10813 = vpack.c.b16 %v10613, %v10609
        %v10814 = vpack.c.b16 %v10614, %v10610
        %v10815 = vpack.c.b16 %v10619, %v10615
        %v10816 = vpack.c.b16 %v10620, %v10616
        %v10817 = vpack.c.b16 %v10621, %v10617
        %v10818 = vpack.c.b16 %v10622, %v10618
        %v10819 = vpack.c.b16 %v10627, %v10623
        %v10820 = vpack.c.b16 %v10628, %v10624
        %v10821 = vpack.c.b16 %v10629, %v10625
        %v10822 = vpack.c.b16 %v10630, %v10626
        %v10823 = vpack.c.b16 %v10635, %v10631
        %v10824 = vpack.c.b16 %v10636, %v10632
        %v10825 = vpack.c.b16 %v10637, %v10633
        %v10826 = vpack.c.b16 %v10638, %v10634
        %v10827 = vpack.c.b16 %v10643, %v10639
        %v10828 = vpack.c.b16 %v10644, %v10640
        %v10829 = vpack.c.b16 %v10645, %v10641
        %v10830 = vpack.c.b16 %v10646, %v10642
        %v10831 = vpack.c.b16 %v10651, %v10647
        %v10832 = vpack.c.b16 %v10652, %v10648
        %v10833 = vpack.c.b16 %v10653, %v10649
        %v10834 = vpack.c.b16 %v10654, %v10650
        %v10835 = vpack.c.b16 %v10659, %v10655
        %v10836 = vpack.c.b16 %v10660, %v10656
        %v10837 = vpack.c.b16 %v10661, %v10657
        %v10838 = vpack.c.b16 %v10662, %v10658
        %v10839 = vpack.c.b16 %v10667, %v10663
        %v10840 = vpack.c.b16 %v10668, %v10664
        %v10841 = vpack.c.b16 %v10669, %v10665
        %v10842 = vpack.c.b16 %v10670, %v10666
        %v10843 = vpack.c.b16 %v10675, %v10671
        %v10844 = vpack.c.b16 %v10676, %v10672
        %v10845 = vpack.c.b16 %v10677, %v10673
        %v10846 = vpack.c.b16 %v10678, %v10674
        %v10847 = vpack.c.b16 %v10683, %v10679
        %v10848 = vpack.c.b16 %v10684, %v10680
        %v10849 = vpack.c.b16 %v10685, %v10681
        %v10850 = vpack.c.b16 %v10686, %v10682
        %v10851 = vpack.c.b16 %v10691, %v10687
        %v10852 = vpack.c.b16 %v10692, %v10688
        %v10853 = vpack.c.b16 %v10693, %v10689
        %v10854 = vpack.c.b16 %v10694, %v10690
        %v10855 = vpack.c.b16 %v10699, %v10695
        %v10856 = vpack.c.b16 %v10700, %v10696
        %v10857 = vpack.c.b16 %v10701, %v10697
        %v10858 = vpack.c.b16 %v10702, %v10698
        %v10859 = vpack.c.b16 %v10707, %v10703
        %v10860 = vpack.c.b16 %v10708, %v10704
        %v10861 = vpack.c.b16 %v10709, %v10705
        %v10862 = vpack.c.b16 %v10710, %v10706
        %v10863 = vpack.c.b16 %v10715, %v10711
        %v10864 = vpack.c.b16 %v10716, %v10712
        %v10865 = vpack.c.b16 %v10717, %v10713
        %v10866 = vpack.c.b16 %v10718, %v10714
        %v10867 = vpack.c.b16 %v10723, %v10719
        %v10868 = vpack.c.b16 %v10724, %v10720
        %v10869 = vpack.c.b16 %v10725, %v10721
        %v10870 = vpack.c.b16 %v10726, %v10722
        %v10871 = vpack.c.b16 %v10731, %v10727
        %v10872 = vpack.c.b16 %v10732, %v10728
        %v10873 = vpack.c.b16 %v10733, %v10729
        %v10874 = vpack.c.b16 %v10734, %v10730
        %v10875 = vpack.c.b16 %v10739, %v10735
        %v10876 = vpack.c.b16 %v10740, %v10736
        %v10877 = vpack.c.b16 %v10741, %v10737
        %v10878 = vpack.c.b16 %v10742, %v10738
        %v10879 = vpack.c.b16 %v10747, %v10743
        %v10880 = vpack.c.b16 %v10748, %v10744
        %v10881 = vpack.c.b16 %v10749, %v10745
        %v10882 = vpack.c.b16 %v10750, %v10746
        %v10883 = vpack.c.b16 %v10755, %v10751
        %v10884 = vpack.c.b16 %v10756, %v10752
        %v10885 = vpack.c.b16 %v10757, %v10753
        %v10886 = vpack.c.b16 %v10758, %v10754
        %11015 = vmatprep.subr.bf16.mxu0 %v10760
        %11016 = vmatpush1.bf16.msra.mxu0 %v10759
        %11017 = vmatprep.subr.bf16.mxu0 %v10764
        %11018 = vmatpush1.bf16.msra.mxu0 %v10763
        %11019 = vmatprep.subr.bf16.mxu0 %v10768
        %11020 = vmatpush1.bf16.msra.mxu0 %v10767
        %11021 = vmatprep.subr.bf16.mxu0 %v10772
        %11022 = vmatpush1.bf16.msra.mxu0 %v10771
        %11023 = vmatprep.subr.bf16.mxu0 %v10776
        %11024 = vmatpush1.bf16.msra.mxu0 %v10775
        %11025 = vmatprep.subr.bf16.mxu0 %v10780
        %11026 = vmatpush1.bf16.msra.mxu0 %v10779
        %11027 = vmatprep.subr.bf16.mxu0 %v10784
        %11028 = vmatpush1.bf16.msra.mxu0 %v10783
        %11029 = vmatprep.subr.bf16.mxu0 %v10788
        %11030 = vmatpush1.bf16.msra.mxu0 %v10787
        %11031 = vmatprep.subr.bf16.mxu0 %v10792
        %11032 = vmatpush1.bf16.msra.mxu0 %v10791
        %11033 = vmatprep.subr.bf16.mxu0 %v10796
        %11034 = vmatpush1.bf16.msra.mxu0 %v10795
        %11035 = vmatprep.subr.bf16.mxu0 %v10800
        %11036 = vmatpush1.bf16.msra.mxu0 %v10799
        %11037 = vmatprep.subr.bf16.mxu0 %v10804
        %11038 = vmatpush1.bf16.msra.mxu0 %v10803
        %11039 = vmatprep.subr.bf16.mxu0 %v10808
        %11040 = vmatpush1.bf16.msra.mxu0 %v10807
        %11041 = vmatprep.subr.bf16.mxu0 %v10812
        %11042 = vmatpush1.bf16.msra.mxu0 %v10811
        %11043 = vmatprep.subr.bf16.mxu0 %v10816
        %11044 = vmatpush1.bf16.msra.mxu0 %v10815
        %11045 = vmatprep.subr.bf16.mxu0 %v10820
        %11046 = vmatpush1.bf16.msra.mxu0 %v10819
        %11047 = vmatprep.mubr.bf16.mxu0 %v10222
        %11048 = vmatmul.mubr.bf16.gmra.mrb[0].mxu0 %v10221
        %v11049 = vpop.f32.mrb[0].mxu0
        %v11050 = vadd.f32 %v10358, %v11049
        %v11051 = vpop.f32.mrb[0].mxu0
        %v11052 = vadd.f32 %v10362, %v11051
        %v11053 = vpop.f32.mrb[0].mxu0
        %v11054 = vpop.f32.mrb[0].mxu0
        %11055 = vdwg.mxu0
        %11056 = vmatprep.subr.bf16.mxu0 %v10824
        %11057 = vmatpush1.bf16.msra.mxu0 %v10823
        %11058 = vmatprep.subr.bf16.mxu0 %v10828
        %11059 = vmatpush1.bf16.msra.mxu0 %v10827
        %11060 = vmatprep.subr.bf16.mxu0 %v10832
        %11061 = vmatpush1.bf16.msra.mxu0 %v10831
        %11062 = vmatprep.subr.bf16.mxu0 %v10836
        %11063 = vmatpush1.bf16.msra.mxu0 %v10835
        %11064 = vmatprep.subr.bf16.mxu0 %v10840
        %11065 = vmatpush1.bf16.msra.mxu0 %v10839
        %11066 = vmatprep.subr.bf16.mxu0 %v10844
        %11067 = vmatpush1.bf16.msra.mxu0 %v10843
        %11068 = vmatprep.subr.bf16.mxu0 %v10848
        %11069 = vmatpush1.bf16.msra.mxu0 %v10847
        %11070 = vmatprep.subr.bf16.mxu0 %v10852
        %11071 = vmatpush1.bf16.msra.mxu0 %v10851
        %11072 = vmatprep.subr.bf16.mxu0 %v10856
        %11073 = vmatpush1.bf16.msra.mxu0 %v10855
        %11074 = vmatprep.subr.bf16.mxu0 %v10860
        %11075 = vmatpush1.bf16.msra.mxu0 %v10859
        %11076 = vmatprep.subr.bf16.mxu0 %v10864
        %11077 = vmatpush1.bf16.msra.mxu0 %v10863
        %11078 = vmatprep.subr.bf16.mxu0 %v10868
        %11079 = vmatpush1.bf16.msra.mxu0 %v10867
        %11080 = vmatprep.subr.bf16.mxu0 %v10872
        %11081 = vmatpush1.bf16.msra.mxu0 %v10871
        %11082 = vmatprep.subr.bf16.mxu0 %v10876
        %11083 = vmatpush1.bf16.msra.mxu0 %v10875
        %11084 = vmatprep.subr.bf16.mxu0 %v10880
        %11085 = vmatpush1.bf16.msra.mxu0 %v10879
        %11086 = vmatprep.subr.bf16.mxu0 %v10884
        %11087 = vmatpush1.bf16.msra.mxu0 %v10883
        %11088 = vmatprep.mubr.bf16.mxu0 %v10224
        %11089 = vmatmul.mubr.bf16.gmra.mrb[0].mxu0 %v10223
        %v11090 = vpop.f32.mrb[0].mxu0
        %v11091 = vadd.f32 %v11050, %v11090
        %v11092 = vpop.f32.mrb[0].mxu0
        %v11093 = vadd.f32 %v11052, %v11092
        %v11094 = vpop.f32.mrb[0].mxu0
        %v11095 = vpop.f32.mrb[0].mxu0
        %11096 = vdwg.mxu0
        %11097 = vmatprep.subr.bf16.mxu0 %v10762
        %11098 = vmatpush1.bf16.msra.mxu0 %v10761
        %11099 = vmatprep.subr.bf16.mxu0 %v10766
        %11100 = vmatpush1.bf16.msra.mxu0 %v10765
        %11101 = vmatprep.subr.bf16.mxu0 %v10770
        %11102 = vmatpush1.bf16.msra.mxu0 %v10769
        %11103 = vmatprep.subr.bf16.mxu0 %v10774
        %11104 = vmatpush1.bf16.msra.mxu0 %v10773
        %11105 = vmatprep.subr.bf16.mxu0 %v10778
        %11106 = vmatpush1.bf16.msra.mxu0 %v10777
        %11107 = vmatprep.subr.bf16.mxu0 %v10782
        %11108 = vmatpush1.bf16.msra.mxu0 %v10781
        %11109 = vmatprep.subr.bf16.mxu0 %v10786
        %11110 = vmatpush1.bf16.msra.mxu0 %v10785
        %11111 = vmatprep.subr.bf16.mxu0 %v10790
        %11112 = vmatpush1.bf16.msra.mxu0 %v10789
        %11113 = vmatprep.subr.bf16.mxu0 %v10794
        %11114 = vmatpush1.bf16.msra.mxu0 %v10793
        %11115 = vmatprep.subr.bf16.mxu0 %v10798
        %11116 = vmatpush1.bf16.msra.mxu0 %v10797
        %11117 = vmatprep.subr.bf16.mxu0 %v10802
        %11118 = vmatpush1.bf16.msra.mxu0 %v10801
        %11119 = vmatprep.subr.bf16.mxu0 %v10806
        %11120 = vmatpush1.bf16.msra.mxu0 %v10805
        %11121 = vmatprep.subr.bf16.mxu0 %v10810
        %11122 = vmatpush1.bf16.msra.mxu0 %v10809
        %11123 = vmatprep.subr.bf16.mxu0 %v10814
        %11124 = vmatpush1.bf16.msra.mxu0 %v10813
        %11125 = vmatprep.subr.bf16.mxu0 %v10818
        %11126 = vmatpush1.bf16.msra.mxu0 %v10817
        %11127 = vmatprep.subr.bf16.mxu0 %v10822
        %11128 = vmatpush1.bf16.msra.mxu0 %v10821
        %11129 = vmatprep.mubr.bf16.mxu0 %v10222
        %11130 = vmatmul.mubr.bf16.gmra.mrb[0].mxu0 %v10221
        %v11131 = vpop.f32.mrb[0].mxu0
        %v11132 = vadd.f32 %v10366, %v11131
        %v11133 = vpop.f32.mrb[0].mxu0
        %v11134 = vadd.f32 %v10370, %v11133
        %v11135 = vpop.f32.mrb[0].mxu0
        %v11136 = vpop.f32.mrb[0].mxu0
        %11137 = vdwg.mxu0
        %11138 = vmatprep.subr.bf16.mxu0 %v10826
        %11139 = vmatpush1.bf16.msra.mxu0 %v10825
        %11140 = vmatprep.subr.bf16.mxu0 %v10830
        %11141 = vmatpush1.bf16.msra.mxu0 %v10829
        %11142 = vmatprep.subr.bf16.mxu0 %v10834
        %11143 = vmatpush1.bf16.msra.mxu0 %v10833
        %11144 = vmatprep.subr.bf16.mxu0 %v10838
        %11145 = vmatpush1.bf16.msra.mxu0 %v10837
        %11146 = vmatprep.subr.bf16.mxu0 %v10842
        %11147 = vmatpush1.bf16.msra.mxu0 %v10841
        %11148 = vmatprep.subr.bf16.mxu0 %v10846
        %11149 = vmatpush1.bf16.msra.mxu0 %v10845
        %11150 = vmatprep.subr.bf16.mxu0 %v10850
        %11151 = vmatpush1.bf16.msra.mxu0 %v10849
        %11152 = vmatprep.subr.bf16.mxu0 %v10854
        %11153 = vmatpush1.bf16.msra.mxu0 %v10853
        %11154 = vmatprep.subr.bf16.mxu0 %v10858
        %11155 = vmatpush1.bf16.msra.mxu0 %v10857
        %11156 = vmatprep.subr.bf16.mxu0 %v10862
        %11157 = vmatpush1.bf16.msra.mxu0 %v10861
        %11158 = vmatprep.subr.bf16.mxu0 %v10866
        %11159 = vmatpush1.bf16.msra.mxu0 %v10865
        %11160 = vmatprep.subr.bf16.mxu0 %v10870
        %11161 = vmatpush1.bf16.msra.mxu0 %v10869
        %11162 = vmatprep.subr.bf16.mxu0 %v10874
        %11163 = vmatpush1.bf16.msra.mxu0 %v10873
        %11164 = vmatprep.subr.bf16.mxu0 %v10878
        %11165 = vmatpush1.bf16.msra.mxu0 %v10877
        %11166 = vmatprep.subr.bf16.mxu0 %v10882
        %11167 = vmatpush1.bf16.msra.mxu0 %v10881
        %11168 = vmatprep.subr.bf16.mxu0 %v10886
        %11169 = vmatpush1.bf16.msra.mxu0 %v10885
        %11170 = vmatprep.mubr.bf16.mxu0 %v10224
        %11171 = vmatmul.mubr.bf16.gmra.mrb[0].mxu0 %v10223
        %v11172 = vpop.f32.mrb[0].mxu0
        %v11173 = vadd.f32 %v11132, %v11172
        %v11174 = vpop.f32.mrb[0].mxu0
        %v11175 = vadd.f32 %v11134, %v11174
        %v11176 = vpop.f32.mrb[0].mxu0
        %v11177 = vpop.f32.mrb[0].mxu0
        %11178 = vdwg.mxu0
        %v11179 = vmax.f32 %v11091, 0.0
        %v11180 = vmax.f32 %v11093, 0.0
        %v11181 = vmax.f32 %v11173, 0.0
        %v11182 = vmax.f32 %v11175, 0.0
        %v11183 = vpack.c.bf16 %v11179, %v11179
        %v11184 = vpack.c.bf16 %v11180, %v11180
        %v11185 = vpack.c.bf16 %v11181, %v11181
        %v11186 = vpack.c.bf16 %v11182, %v11182
        %v11187 = vld [vmem:[%s11] sm:$0xf]
        %v11188 = vld [vmem:[%s11 + $0x4] sm:$0xf]
        %v11189 = vld [vmem:[%s11 + $0x8] sm:$0xf]
        %v11190 = vld [vmem:[%s11 + $0xc] sm:$0xf]
        %v11191 = vld [vmem:[%s11 + $0x10] sm:$0xf]
        %v11192 = vld [vmem:[%s11 + $0x14] sm:$0xf]
        %v11193 = vld [vmem:[%s11 + $0x18] sm:$0xf]
        %v11194 = vld [vmem:[%s11 + $0x1c] sm:$0xf]
        %v11195 = vld [vmem:[%s11 + $0x20] sm:$0xf]
        %v11196 = vld [vmem:[%s11 + $0x24] sm:$0xf]
        %v11197 = vld [vmem:[%s11 + $0x28] sm:$0xf]
        %v11198 = vld [vmem:[%s11 + $0x2c] sm:$0xf]
        %v11199 = vld [vmem:[%s11 + $0x30] sm:$0xf]
        %v11200 = vld [vmem:[%s11 + $0x34] sm:$0xf]
        %v11201 = vld [vmem:[%s11 + $0x38] sm:$0xf]
        %v11202 = vld [vmem:[%s11 + $0x3c] sm:$0xf]
        %v11203 = vld [vmem:[%s11 + $0x40] sm:$0xf]
        %v11204 = vld [vmem:[%s11 + $0x44] sm:$0xf]
        %v11205 = vld [vmem:[%s11 + $0x48] sm:$0xf]
        %v11206 = vld [vmem:[%s11 + $0x4c] sm:$0xf]
        %v11207 = vld [vmem:[%s11 + $0x50] sm:$0xf]
        %v11208 = vld [vmem:[%s11 + $0x54] sm:$0xf]
        %v11209 = vld [vmem:[%s11 + $0x58] sm:$0xf]
        %v11210 = vld [vmem:[%s11 + $0x5c] sm:$0xf]
        %v11211 = vld [vmem:[%s11 + $0x60] sm:$0xf]
        %v11212 = vld [vmem:[%s11 + $0x64] sm:$0xf]
        %v11213 = vld [vmem:[%s11 + $0x68] sm:$0xf]
        %v11214 = vld [vmem:[%s11 + $0x6c] sm:$0xf]
        %v11215 = vld [vmem:[%s11 + $0x70] sm:$0xf]
        %v11216 = vld [vmem:[%s11 + $0x74] sm:$0xf]
        %v11217 = vld [vmem:[%s11 + $0x78] sm:$0xf]
        %v11218 = vld [vmem:[%s11 + $0x7c] sm:$0xf]
        %v11219 = vld [vmem:[%s11 + $0x80] sm:$0xf]
        %v11220 = vld [vmem:[%s11 + $0x84] sm:$0xf]
        %v11221 = vld [vmem:[%s11 + $0x88] sm:$0xf]
        %v11222 = vld [vmem:[%s11 + $0x8c] sm:$0xf]
        %v11223 = vld [vmem:[%s11 + $0x90] sm:$0xf]
        %v11224 = vld [vmem:[%s11 + $0x94] sm:$0xf]
        %v11225 = vld [vmem:[%s11 + $0x98] sm:$0xf]
        %v11226 = vld [vmem:[%s11 + $0x9c] sm:$0xf]
        %v11227 = vld [vmem:[%s11 + $0xa0] sm:$0xf]
        %v11228 = vld [vmem:[%s11 + $0xa4] sm:$0xf]
        %v11229 = vld [vmem:[%s11 + $0xa8] sm:$0xf]
        %v11230 = vld [vmem:[%s11 + $0xac] sm:$0xf]
        %v11231 = vld [vmem:[%s11 + $0xb0] sm:$0xf]
        %v11232 = vld [vmem:[%s11 + $0xb4] sm:$0xf]
        %v11233 = vld [vmem:[%s11 + $0xb8] sm:$0xf]
        %v11234 = vld [vmem:[%s11 + $0xbc] sm:$0xf]
        %v11235 = vld [vmem:[%s11 + $0xc0] sm:$0xf]
        %v11236 = vld [vmem:[%s11 + $0xc4] sm:$0xf]
        %v11237 = vld [vmem:[%s11 + $0xc8] sm:$0xf]
        %v11238 = vld [vmem:[%s11 + $0xcc] sm:$0xf]
        %v11239 = vld [vmem:[%s11 + $0xd0] sm:$0xf]
        %v11240 = vld [vmem:[%s11 + $0xd4] sm:$0xf]
        %v11241 = vld [vmem:[%s11 + $0xd8] sm:$0xf]
        %v11242 = vld [vmem:[%s11 + $0xdc] sm:$0xf]
        %v11243 = vld [vmem:[%s11 + $0xe0] sm:$0xf]
        %v11244 = vld [vmem:[%s11 + $0xe4] sm:$0xf]
        %v11245 = vld [vmem:[%s11 + $0xe8] sm:$0xf]
        %v11246 = vld [vmem:[%s11 + $0xec] sm:$0xf]
        %v11247 = vld [vmem:[%s11 + $0xf0] sm:$0xf]
        %v11248 = vld [vmem:[%s11 + $0xf4] sm:$0xf]
        %v11249 = vld [vmem:[%s11 + $0xf8] sm:$0xf]
        %v11250 = vld [vmem:[%s11 + $0xfc] sm:$0xf]
        %v11251 = vld [vmem:[%s12] sm:$0x1]
        %v11253 = vlaneseq
        %v11254 = vshrl.u32 %v11253, 7
        %v11255 = vsub.s32 0, %v11254
        %v11256 = vrot.slane %v11251, %v11255
        %v11322 = vunpack.c.l.b16 %v11187
        %v11323 = vunpack.c.l.b16 %v11188
        %v11324 = vunpack.c.l.b16 %v11189
        %v11325 = vunpack.c.l.b16 %v11190
        %v11326 = vunpack.c.l.b16 %v11191
        %v11327 = vunpack.c.l.b16 %v11192
        %v11328 = vunpack.c.l.b16 %v11193
        %v11329 = vunpack.c.l.b16 %v11194
        %v11330 = vunpack.c.l.b16 %v11195
        %v11331 = vunpack.c.l.b16 %v11196
        %v11332 = vunpack.c.l.b16 %v11197
        %v11333 = vunpack.c.l.b16 %v11198
        %v11334 = vunpack.c.l.b16 %v11199
        %v11335 = vunpack.c.l.b16 %v11200
        %v11336 = vunpack.c.l.b16 %v11201
        %v11337 = vunpack.c.l.b16 %v11202
        %v11338 = vunpack.c.l.b16 %v11203
        %v11339 = vunpack.c.l.b16 %v11204
        %v11340 = vunpack.c.l.b16 %v11205
        %v11341 = vunpack.c.l.b16 %v11206
        %v11342 = vunpack.c.l.b16 %v11207
        %v11343 = vunpack.c.l.b16 %v11208
        %v11344 = vunpack.c.l.b16 %v11209
        %v11345 = vunpack.c.l.b16 %v11210
        %v11346 = vunpack.c.l.b16 %v11211
        %v11347 = vunpack.c.l.b16 %v11212
        %v11348 = vunpack.c.l.b16 %v11213
        %v11349 = vunpack.c.l.b16 %v11214
        %v11350 = vunpack.c.l.b16 %v11215
        %v11351 = vunpack.c.l.b16 %v11216
        %v11352 = vunpack.c.l.b16 %v11217
        %v11353 = vunpack.c.l.b16 %v11218
        %v11354 = vunpack.c.l.b16 %v11219
        %v11355 = vunpack.c.l.b16 %v11220
        %v11356 = vunpack.c.l.b16 %v11221
        %v11357 = vunpack.c.l.b16 %v11222
        %v11358 = vunpack.c.l.b16 %v11223
        %v11359 = vunpack.c.l.b16 %v11224
        %v11360 = vunpack.c.l.b16 %v11225
        %v11361 = vunpack.c.l.b16 %v11226
        %v11362 = vunpack.c.l.b16 %v11227
        %v11363 = vunpack.c.l.b16 %v11228
        %v11364 = vunpack.c.l.b16 %v11229
        %v11365 = vunpack.c.l.b16 %v11230
        %v11366 = vunpack.c.l.b16 %v11231
        %v11367 = vunpack.c.l.b16 %v11232
        %v11368 = vunpack.c.l.b16 %v11233
        %v11369 = vunpack.c.l.b16 %v11234
        %v11370 = vunpack.c.l.b16 %v11235
        %v11371 = vunpack.c.l.b16 %v11236
        %v11372 = vunpack.c.l.b16 %v11237
        %v11373 = vunpack.c.l.b16 %v11238
        %v11374 = vunpack.c.l.b16 %v11239
        %v11375 = vunpack.c.l.b16 %v11240
        %v11376 = vunpack.c.l.b16 %v11241
        %v11377 = vunpack.c.l.b16 %v11242
        %v11378 = vunpack.c.l.b16 %v11243
        %v11379 = vunpack.c.l.b16 %v11244
        %v11380 = vunpack.c.l.b16 %v11245
        %v11381 = vunpack.c.l.b16 %v11246
        %v11382 = vunpack.c.l.b16 %v11247
        %v11383 = vunpack.c.l.b16 %v11248
        %v11384 = vunpack.c.l.b16 %v11249
        %v11385 = vunpack.c.l.b16 %v11250
        %v11386 = vpack.c.b16 %v11323, %v11322
        %v11387 = vpack.c.b16 %v11325, %v11324
        %v11388 = vpack.c.b16 %v11327, %v11326
        %v11389 = vpack.c.b16 %v11329, %v11328
        %v11390 = vpack.c.b16 %v11331, %v11330
        %v11391 = vpack.c.b16 %v11333, %v11332
        %v11392 = vpack.c.b16 %v11335, %v11334
        %v11393 = vpack.c.b16 %v11337, %v11336
        %v11394 = vpack.c.b16 %v11339, %v11338
        %v11395 = vpack.c.b16 %v11341, %v11340
        %v11396 = vpack.c.b16 %v11343, %v11342
        %v11397 = vpack.c.b16 %v11345, %v11344
        %v11398 = vpack.c.b16 %v11347, %v11346
        %v11399 = vpack.c.b16 %v11349, %v11348
        %v11400 = vpack.c.b16 %v11351, %v11350
        %v11401 = vpack.c.b16 %v11353, %v11352
        %v11402 = vpack.c.b16 %v11355, %v11354
        %v11403 = vpack.c.b16 %v11357, %v11356
        %v11404 = vpack.c.b16 %v11359, %v11358
        %v11405 = vpack.c.b16 %v11361, %v11360
        %v11406 = vpack.c.b16 %v11363, %v11362
        %v11407 = vpack.c.b16 %v11365, %v11364
        %v11408 = vpack.c.b16 %v11367, %v11366
        %v11409 = vpack.c.b16 %v11369, %v11368
        %v11410 = vpack.c.b16 %v11371, %v11370
        %v11411 = vpack.c.b16 %v11373, %v11372
        %v11412 = vpack.c.b16 %v11375, %v11374
        %v11413 = vpack.c.b16 %v11377, %v11376
        %v11414 = vpack.c.b16 %v11379, %v11378
        %v11415 = vpack.c.b16 %v11381, %v11380
        %v11416 = vpack.c.b16 %v11383, %v11382
        %v11417 = vpack.c.b16 %v11385, %v11384
        %11450 = vmatprep.subr.bf16.mxu0 0
        %11451 = vmatpush1.bf16.msra.mxu0 %v11386
        %11452 = vmatprep.subr.bf16.mxu0 0
        %11453 = vmatpush1.bf16.msra.mxu0 %v11387
        %11454 = vmatprep.subr.bf16.mxu0 0
        %11455 = vmatpush1.bf16.msra.mxu0 %v11388
        %11456 = vmatprep.subr.bf16.mxu0 0
        %11457 = vmatpush1.bf16.msra.mxu0 %v11389
        %11458 = vmatprep.subr.bf16.mxu0 0
        %11459 = vmatpush1.bf16.msra.mxu0 %v11390
        %11460 = vmatprep.subr.bf16.mxu0 0
        %11461 = vmatpush1.bf16.msra.mxu0 %v11391
        %11462 = vmatprep.subr.bf16.mxu0 0
        %11463 = vmatpush1.bf16.msra.mxu0 %v11392
        %11464 = vmatprep.subr.bf16.mxu0 0
        %11465 = vmatpush1.bf16.msra.mxu0 %v11393
        %11466 = vmatprep.subr.bf16.mxu0 0
        %11467 = vmatpush1.bf16.msra.mxu0 %v11394
        %11468 = vmatprep.subr.bf16.mxu0 0
        %11469 = vmatpush1.bf16.msra.mxu0 %v11395
        %11470 = vmatprep.subr.bf16.mxu0 0
        %11471 = vmatpush1.bf16.msra.mxu0 %v11396
        %11472 = vmatprep.subr.bf16.mxu0 0
        %11473 = vmatpush1.bf16.msra.mxu0 %v11397
        %11474 = vmatprep.subr.bf16.mxu0 0
        %11475 = vmatpush1.bf16.msra.mxu0 %v11398
        %11476 = vmatprep.subr.bf16.mxu0 0
        %11477 = vmatpush1.bf16.msra.mxu0 %v11399
        %11478 = vmatprep.subr.bf16.mxu0 0
        %11479 = vmatpush1.bf16.msra.mxu0 %v11400
        %11480 = vmatprep.subr.bf16.mxu0 0
        %11481 = vmatpush1.bf16.msra.mxu0 %v11401
        %11482 = vmatprep.mubr.bf16.mxu0 %v11184
        %11483 = vmatmul.mubr.bf16.gmra.mrb[0].mxu0 %v11183
        %v11484 = vpop.f32.mrb[0].mxu0
        %v11485 = vadd.f32 %v11256, %v11484
        %v11486 = vpop.f32.mrb[0].mxu0
        %v11487 = vpop.f32.mrb[0].mxu0
        %v11488 = vpop.f32.mrb[0].mxu0
        %11489 = vdwg.mxu0
        %11490 = vmatprep.subr.bf16.mxu0 0
        %11491 = vmatpush1.bf16.msra.mxu0 %v11402
        %11492 = vmatprep.subr.bf16.mxu0 0
        %11493 = vmatpush1.bf16.msra.mxu0 %v11403
        %11494 = vmatprep.subr.bf16.mxu0 0
        %11495 = vmatpush1.bf16.msra.mxu0 %v11404
        %11496 = vmatprep.subr.bf16.mxu0 0
        %11497 = vmatpush1.bf16.msra.mxu0 %v11405
        %11498 = vmatprep.subr.bf16.mxu0 0
        %11499 = vmatpush1.bf16.msra.mxu0 %v11406
        %11500 = vmatprep.subr.bf16.mxu0 0
        %11501 = vmatpush1.bf16.msra.mxu0 %v11407
        %11502 = vmatprep.subr.bf16.mxu0 0
        %11503 = vmatpush1.bf16.msra.mxu0 %v11408
        %11504 = vmatprep.subr.bf16.mxu0 0
        %11505 = vmatpush1.bf16.msra.mxu0 %v11409
        %11506 = vmatprep.subr.bf16.mxu0 0
        %11507 = vmatpush1.bf16.msra.mxu0 %v11410
        %11508 = vmatprep.subr.bf16.mxu0 0
        %11509 = vmatpush1.bf16.msra.mxu0 %v11411
        %11510 = vmatprep.subr.bf16.mxu0 0
        %11511 = vmatpush1.bf16.msra.mxu0 %v11412
        %11512 = vmatprep.subr.bf16.mxu0 0
        %11513 = vmatpush1.bf16.msra.mxu0 %v11413
        %11514 = vmatprep.subr.bf16.mxu0 0
        %11515 = vmatpush1.bf16.msra.mxu0 %v11414
        %11516 = vmatprep.subr.bf16.mxu0 0
        %11517 = vmatpush1.bf16.msra.mxu0 %v11415
        %11518 = vmatprep.subr.bf16.mxu0 0
        %11519 = vmatpush1.bf16.msra.mxu0 %v11416
        %11520 = vmatprep.subr.bf16.mxu0 0
        %11521 = vmatpush1.bf16.msra.mxu0 %v11417
        %11522 = vmatprep.mubr.bf16.mxu0 %v11186
        %11523 = vmatmul.mubr.bf16.gmra.mrb[0].mxu0 %v11185
        %v11524 = vpop.f32.mrb[0].mxu0
        %v11525 = vadd.f32 %v11485, %v11524
        %v11526 = vpop.f32.mrb[0].mxu0
        %v11527 = vpop.f32.mrb[0].mxu0
        %v11528 = vpop.f32.mrb[0].mxu0
        %11529 = vdwg.mxu0
        %11530 = vst [vmem:[%s433] sm:$0xf] %v11525
        %s11531 = sand.u32 %s313, 1
        %s11532 = scalar_lea.sflag [#allocation7], %s11531
        %s11533 = sand.u32 %s313, 1
        %s11534 = smul.addr %s11533, 4
        %s11535 = scalar_lea.vmem [#allocation6], %s11534
        // Predicated region
        $region73: #{vgg_forward.1} parent=71 // pred_check
          %p11536 = pneg %p323
        $region74: #{vgg_forward.1} parent=71 // pred_check_branch
          %11538 = sbr.rel (%p11536) target = $region76
        $region75: #{vgg_forward.1} parent=71 // pred_region
          %s11540 = ssub.s32 64, 64
          %11541 = vsyncadd %s11532, %s11540
          %s11542 = smul.addr %s27, 64
          %s11543 = scalar_lea.hbm %s13, %s11542
          %s11545 = sshll.u32 %s11535, 4
          %s11546 = int_to_ptr.vmem [resolvable:$true] %s11545
          %11548 = dma.vmem_to_hbm [thread:$0]  %s11546, 64, %s11543, %s11532
        $region76: #{vgg_forward.1} parent=71 // pred_fallthru
          _
      $region72: #{vgg_forward.1} parent=5 // pred_fallthru
        _
      %p11549 = scmp.le.s32.totalorder 2, %s22
      // Predicated region
      $region77: #{vgg_forward.1} parent=5 // pred_check
        %p11550 = pneg %p11549
      $region78: #{vgg_forward.1} parent=5 // pred_check_branch
        %11552 = sbr.rel (%p11550) target = $region80
      $region79: #{vgg_forward.1} parent=5 // pred_region
        %s11553 = ssub.s32 %s22, 2
        // Predicated region
        $region81: #{vgg_forward.1} parent=79 // pred_check
          %p11554 = pneg %p329
        $region82: #{vgg_forward.1} parent=79 // pred_check_branch
          %11556 = sbr.rel (%p11554) target = $region84
        $region83: #{vgg_forward.1} parent=79 // pred_region
          %s11557 = sand.u32 %s314, 1
          %s11558 = scalar_lea.sflag [#allocation7], %s11557
          %s11559 = sand.u32 %s314, 1
          %s11560 = smul.addr %s11559, 4
          %s11561 = scalar_lea.vmem [#allocation6], %s11560
          %11562 = dma.done %s11558, 64
        $region84: #{vgg_forward.1} parent=79 // pred_fallthru
          _
      $region80: #{vgg_forward.1} parent=5 // pred_fallthru
        _
    $region6: #{vgg_forward.1} parent=1 // loop_footer
      %s26 = sadd.s32 1, %s22
    $region7: #{vgg_forward.1} parent=1 // loop_footer_branch
      %21 = sbr.rel target = $region3
    $region8: #{vgg_forward.1} parent=1 // loop_exit
      _
    %11563 = vsyncpa [#allocation7], 1
    %s11564 = scalar_lea.sflag [#allocation7], 1
    %11565 = vsyncpa %s11564, 1

</llo_original>
